<compile_context>
chip_gen: v7x
topology: tpu7x:2x2x1
jax: 0.10.0
libtpu: 0.0.40
codegen_flags: <defaults>
</compile_context>

<pallas_src>
import functools

import jax
import jax.numpy as jnp
from jax.experimental import pallas as pl
from jax.experimental.pallas import tpu as pltpu


def _twice_conv_kernel(x_ref, m_ref, w1_ref, s1_ref, b1_ref, t_ref, wt_ref,
                       bt_ref, w2_ref, out_ref, *, H, W, Cout):
    """One batch image. All operands channel-major: (channels, H*W)."""
    HW = H * W
    hi = jax.lax.Precision.HIGHEST

    def conv3x3(src, w_taps):
        # src: (C, HW); w_taps[k]: (Cout, C).  Tap k=3*dy+dx shifts the pixel
        # axis by (dy-1)*W + (dx-1) lanes; out-of-image pixels are masked.
        acc = jnp.zeros((Cout, HW), jnp.float32)
        for k in range(9):
            dy, dx = k // 3, k % 3
            off = (dy - 1) * W + (dx - 1)
            if off == 0:                      # centre tap: no shift, mask == 1
                patch = src
            else:
                patch = jnp.roll(src, -off, axis=1) * m_ref[k]
            acc = acc + jnp.dot(w_taps[k], patch,
                                preferred_element_type=jnp.float32,
                                precision=hi)
        return acc

    # ---- conv1 (bias-free) + folded eval-mode BatchNorm + ReLU ----
    xf = x_ref[...]                                            # (Cin, HW)
    h = jnp.maximum(conv3x3(xf, w1_ref) * s1_ref[...] + b1_ref[...], 0.0)

    # ---- time MLP: relu(W_t t + b_t), broadcast over every pixel ----
    temb = jnp.sum(wt_ref[...] * t_ref[...], axis=-1, keepdims=True) + bt_ref[...]
    h = h + jnp.maximum(temb, 0.0)                             # (Cout, HW)

    # ---- conv2 (bias-free) + ReLU, written directly in NCHW order ----
    out_ref[...] = jnp.maximum(conv3x3(h, w2_ref), 0.0)


def twice_conv(x, t, params, *, eps=1e-5):
    """Equivalent to TwiceConv(in_ch, out_ch, time_emb_dim).forward(x, t) (eval BN).

    x: (B, Cin, H, W) NCHW, t: (B, time_emb_dim).  Returns (B, Cout, H, W).
    """
    w1 = params["conv1_w"]                      # (Cout, Cin, 3, 3)
    w2 = params["conv2_w"]                      # (Cout, Cout, 3, 3)
    wt, bt = params["time_w"], params["time_b"]  # (Cout, Tdim), (Cout,)

    B, Cin, H, W = x.shape
    Cout = w1.shape[0]
    Tdim = wt.shape[1]
    HW = H * W

    # Free reshape: NCHW -> (B, Cin, H*W).  No transpose, no halo padding.
    x_flat = x.astype(jnp.float32).reshape(B, Cin, HW)

    # Conv weights -> tap-major (9, Cout, Cin) so tap k = 3*dy + dx.
    w1_t = jnp.transpose(w1, (2, 3, 0, 1)).reshape(9, Cout, Cin).astype(jnp.float32)
    w2_t = jnp.transpose(w2, (2, 3, 0, 1)).reshape(9, Cout, Cout).astype(jnp.float32)

    # Fold eval-mode BatchNorm into per-channel scale / bias (column vectors).
    scale = params["bn_gamma"] / jnp.sqrt(params["bn_var"] + eps)
    bias = params["bn_beta"] - params["bn_mean"] * scale
    s1 = scale.reshape(Cout, 1).astype(jnp.float32)
    b1 = bias.reshape(Cout, 1).astype(jnp.float32)

    wt_f = wt.astype(jnp.float32)                    # (Cout, Tdim)
    bt_f = bt.reshape(Cout, 1).astype(jnp.float32)   # (Cout, 1)
    t3 = t.astype(jnp.float32).reshape(B, 1, Tdim)   # (B, 1, Tdim)

    # Per-tap boundary masks over the flattened pixel axis (9, 1, H*W).
    yy = jnp.arange(H).reshape(H, 1)
    xx = jnp.arange(W).reshape(1, W)
    masks = []
    for dy in range(3):
        for dx in range(3):
            valid = ((yy + dy - 1 >= 0) & (yy + dy - 1 < H) &
                     (xx + dx - 1 >= 0) & (xx + dx - 1 < W))
            masks.append(valid.reshape(1, HW))
    masks = jnp.stack(masks).astype(jnp.float32)     # (9, 1, HW)

    kern = functools.partial(_twice_conv_kernel, H=H, W=W, Cout=Cout)

    out_flat = pl.pallas_call(
        kern,
        out_shape=jax.ShapeDtypeStruct((B, Cout, HW), jnp.float32),
        grid_spec=pltpu.PrefetchScalarGridSpec(
            num_scalar_prefetch=0,
            grid=(B,),
            in_specs=[
                pl.BlockSpec((None, Cin, HW), lambda b: (b, 0, 0)),   # image
                pl.BlockSpec((9, 1, HW), lambda b: (0, 0, 0)),        # tap masks
                pl.BlockSpec((9, Cout, Cin), lambda b: (0, 0, 0)),    # conv1 taps
                pl.BlockSpec((Cout, 1), lambda b: (0, 0)),            # BN scale
                pl.BlockSpec((Cout, 1), lambda b: (0, 0)),            # BN bias
                pl.BlockSpec((None, 1, Tdim), lambda b: (b, 0, 0)),   # t row
                pl.BlockSpec((Cout, Tdim), lambda b: (0, 0)),         # time W
                pl.BlockSpec((Cout, 1), lambda b: (0, 0)),            # time b
                pl.BlockSpec((9, Cout, Cout), lambda b: (0, 0, 0)),   # conv2 taps
            ],
            out_specs=pl.BlockSpec((None, Cout, HW), lambda b: (b, 0, 0)),
        ),
        compiler_params=pltpu.CompilerParams(dimension_semantics=("parallel",)),
    )(x_flat, masks, w1_t, s1, b1, t3, wt_f, bt_f, w2_t)

    return out_flat.reshape(B, Cout, H, W)           # already NCHW


def _reference(x, t, params, *, eps=1e-5):
    """Pure-JAX reference of TwiceConv.forward (eval-mode BatchNorm)."""
    dn = ("NCHW", "OIHW", "NCHW")
    hi = jax.lax.Precision.HIGHEST
    h = jax.lax.conv_general_dilated(
        x, params["conv1_w"], window_strides=(1, 1),
        padding=((1, 1), (1, 1)), dimension_numbers=dn, precision=hi)
    scale = params["bn_gamma"] / jnp.sqrt(params["bn_var"] + eps)
    bias = params["bn_beta"] - params["bn_mean"] * scale
    h = jnp.maximum(h * scale[None, :, None, None] + bias[None, :, None, None], 0.0)
    temb = jnp.maximum(
        jnp.dot(t, params["time_w"].T, precision=hi) + params["time_b"], 0.0)
    h = h + temb[:, :, None, None]
    out = jax.lax.conv_general_dilated(
        h, params["conv2_w"], window_strides=(1, 1),
        padding=((1, 1), (1, 1)), dimension_numbers=dn, precision=hi)
    return jnp.maximum(out, 0.0)


if __name__ == "__main__":
    key = jax.random.PRNGKey(0)
    B, Cin, Cout, H, W, Tdim = 2, 4, 8, 16, 16, 32
    ks = jax.random.split(key, 10)

    x = jax.random.normal(ks[0], (B, Cin, H, W), jnp.float32)
    t = jax.random.normal(ks[1], (B, Tdim), jnp.float32)
    params = {
        "conv1_w": 0.1 * jax.random.normal(ks[2], (Cout, Cin, 3, 3), jnp.float32),
        "conv2_w": 0.1 * jax.random.normal(ks[3], (Cout, Cout, 3, 3), jnp.float32),
        "bn_gamma": 1.0 + 0.1 * jax.random.normal(ks[4], (Cout,), jnp.float32),
        "bn_beta": 0.1 * jax.random.normal(ks[5], (Cout,), jnp.float32),
        "bn_mean": 0.1 * jax.random.normal(ks[6], (Cout,), jnp.float32),
        "bn_var": 1.0 + 0.1 * jnp.abs(jax.random.normal(ks[7], (Cout,), jnp.float32)),
        "time_w": 0.1 * jax.random.normal(ks[8], (Cout, Tdim), jnp.float32),
        "time_b": 0.1 * jax.random.normal(ks[9], (Cout,), jnp.float32),
    }

    out = twice_conv(x, t, params)
    out = jax.block_until_ready(out)

    ref = _reference(x, t, params)
    assert out.shape == (B, Cout, H, W)
    max_err = float(jnp.max(jnp.abs(out - ref)))
    assert jnp.allclose(out, ref, atol=1e-3, rtol=1e-3), f"mismatch, max_err={max_err}"

    print("KERNEL_OK")
</pallas_src>

<mosaic_0001>
module attributes {stable_mosaic.version = 11 : i64} {
  func.func @_twice_conv_kernel(%arg0: i32, %arg1: memref<1x4x256xf32, #tpu.memory_space<vmem>>, %arg2: memref<9x1x256xf32, #tpu.memory_space<vmem>>, %arg3: memref<9x8x4xf32, #tpu.memory_space<vmem>>, %arg4: memref<8x1xf32, #tpu.memory_space<vmem>>, %arg5: memref<8x1xf32, #tpu.memory_space<vmem>>, %arg6: memref<1x1x32xf32, #tpu.memory_space<vmem>>, %arg7: memref<8x32xf32, #tpu.memory_space<vmem>>, %arg8: memref<8x1xf32, #tpu.memory_space<vmem>>, %arg9: memref<9x8x8xf32, #tpu.memory_space<vmem>>, %arg10: memref<1x8x256xf32, #tpu.memory_space<vmem>>) attributes {dimension_semantics = [#tpu.dimension_semantics<parallel>], iteration_bounds = array<i64: 2>, scalar_prefetch = 0 : i64, scratch_operands = 0 : i64, tpu.core_type = #tpu.core_type<tc>, window_params = [{transform_indices = @transform_0, window_bounds = array<i64: 1, 4, 256>}, {pipeline_mode = #tpu.pipeline_mode<synchronous>, transform_indices = @transform_1, window_bounds = array<i64: 9, 1, 256>}, {pipeline_mode = #tpu.pipeline_mode<synchronous>, transform_indices = @transform_2, window_bounds = array<i64: 9, 8, 4>}, {pipeline_mode = #tpu.pipeline_mode<synchronous>, transform_indices = @transform_3, window_bounds = array<i64: 8, 1>}, {pipeline_mode = #tpu.pipeline_mode<synchronous>, transform_indices = @transform_4, window_bounds = array<i64: 8, 1>}, {transform_indices = @transform_5, window_bounds = array<i64: 1, 1, 32>}, {pipeline_mode = #tpu.pipeline_mode<synchronous>, transform_indices = @transform_6, window_bounds = array<i64: 8, 32>}, {pipeline_mode = #tpu.pipeline_mode<synchronous>, transform_indices = @transform_7, window_bounds = array<i64: 8, 1>}, {pipeline_mode = #tpu.pipeline_mode<synchronous>, transform_indices = @transform_8, window_bounds = array<i64: 9, 8, 8>}, {transform_indices = @transform_9, window_bounds = array<i64: 1, 8, 256>}]} {
    %c0 = arith.constant 0 : index
    %c0_0 = arith.constant 0 : index
    %c0_1 = arith.constant 0 : index
    %0 = vector.load %arg1[%c0, %c0_0, %c0_1] : memref<1x4x256xf32, #tpu.memory_space<vmem>>, vector<1x4x256xf32>
    %1 = vector.shape_cast %0 : vector<1x4x256xf32> to vector<4x256xf32>
    %cst = arith.constant 0.000000e+00 : f32
    %2 = vector.broadcast %cst : f32 to vector<8x256xf32>
    %3 = vector.extract_strided_slice %1 {offsets = [0, 239], sizes = [4, 17], strides = [1, 1]} : vector<4x256xf32> to vector<4x17xf32>
    %4 = vector.extract_strided_slice %1 {offsets = [0, 0], sizes = [4, 239], strides = [1, 1]} : vector<4x256xf32> to vector<4x239xf32>
    %5 = tpu.concatenate %3, %4 in 1 : vector<4x17xf32>, vector<4x239xf32> -> vector<4x256xf32>
    %c0_2 = arith.constant 0 : index
    %c0_3 = arith.constant 0 : index
    %c0_4 = arith.constant 0 : index
    %6 = vector.load %arg2[%c0_2, %c0_3, %c0_4] : memref<9x1x256xf32, #tpu.memory_space<vmem>>, vector<1x1x256xf32>
    %7 = vector.shape_cast %6 : vector<1x1x256xf32> to vector<1x256xf32>
    %8 = vector.broadcast %7 : vector<1x256xf32> to vector<4x256xf32>
    %9 = arith.mulf %5, %8 : vector<4x256xf32>
    %c0_5 = arith.constant 0 : index
    %c0_6 = arith.constant 0 : index
    %c0_7 = arith.constant 0 : index
    %10 = vector.load %arg3[%c0_5, %c0_6, %c0_7] : memref<9x8x4xf32, #tpu.memory_space<vmem>>, vector<1x8x4xf32>
    %11 = vector.shape_cast %10 : vector<1x8x4xf32> to vector<8x4xf32>
    %cst_8 = arith.constant dense<0.000000e+00> : vector<8x256xf32>
    %12 = tpu.matmul %11, %9, %cst_8 {dimension_numbers = #tpu.dot_dimension_numbers<[1], [0], [0], [1], [0, 0, 1, 1], [], []>, precision = #tpu.contract_precision<fp32>} : vector<8x4xf32>, vector<4x256xf32>, vector<8x256xf32> -> vector<8x256xf32>
    %13 = arith.addf %2, %12 : vector<8x256xf32>
    %14 = vector.extract_strided_slice %1 {offsets = [0, 240], sizes = [4, 16], strides = [1, 1]} : vector<4x256xf32> to vector<4x16xf32>
    %15 = vector.extract_strided_slice %1 {offsets = [0, 0], sizes = [4, 240], strides = [1, 1]} : vector<4x256xf32> to vector<4x240xf32>
    %16 = tpu.concatenate %14, %15 in 1 : vector<4x16xf32>, vector<4x240xf32> -> vector<4x256xf32>
    %c1 = arith.constant 1 : index
    %c0_9 = arith.constant 0 : index
    %c0_10 = arith.constant 0 : index
    %17 = vector.load %arg2[%c1, %c0_9, %c0_10] : memref<9x1x256xf32, #tpu.memory_space<vmem>>, vector<1x1x256xf32>
    %18 = vector.shape_cast %17 : vector<1x1x256xf32> to vector<1x256xf32>
    %19 = vector.broadcast %18 : vector<1x256xf32> to vector<4x256xf32>
    %20 = arith.mulf %16, %19 : vector<4x256xf32>
    %c1_11 = arith.constant 1 : index
    %c0_12 = arith.constant 0 : index
    %c0_13 = arith.constant 0 : index
    %21 = vector.load %arg3[%c1_11, %c0_12, %c0_13] : memref<9x8x4xf32, #tpu.memory_space<vmem>>, vector<1x8x4xf32>
    %22 = vector.shape_cast %21 : vector<1x8x4xf32> to vector<8x4xf32>
    %cst_14 = arith.constant dense<0.000000e+00> : vector<8x256xf32>
    %23 = tpu.matmul %22, %20, %cst_14 {dimension_numbers = #tpu.dot_dimension_numbers<[1], [0], [0], [1], [0, 0, 1, 1], [], []>, precision = #tpu.contract_precision<fp32>} : vector<8x4xf32>, vector<4x256xf32>, vector<8x256xf32> -> vector<8x256xf32>
    %24 = arith.addf %13, %23 : vector<8x256xf32>
    %25 = vector.extract_strided_slice %1 {offsets = [0, 241], sizes = [4, 15], strides = [1, 1]} : vector<4x256xf32> to vector<4x15xf32>
    %26 = vector.extract_strided_slice %1 {offsets = [0, 0], sizes = [4, 241], strides = [1, 1]} : vector<4x256xf32> to vector<4x241xf32>
    %27 = tpu.concatenate %25, %26 in 1 : vector<4x15xf32>, vector<4x241xf32> -> vector<4x256xf32>
    %c2 = arith.constant 2 : index
    %c0_15 = arith.constant 0 : index
    %c0_16 = arith.constant 0 : index
    %28 = vector.load %arg2[%c2, %c0_15, %c0_16] : memref<9x1x256xf32, #tpu.memory_space<vmem>>, vector<1x1x256xf32>
    %29 = vector.shape_cast %28 : vector<1x1x256xf32> to vector<1x256xf32>
    %30 = vector.broadcast %29 : vector<1x256xf32> to vector<4x256xf32>
    %31 = arith.mulf %27, %30 : vector<4x256xf32>
    %c2_17 = arith.constant 2 : index
    %c0_18 = arith.constant 0 : index
    %c0_19 = arith.constant 0 : index
    %32 = vector.load %arg3[%c2_17, %c0_18, %c0_19] : memref<9x8x4xf32, #tpu.memory_space<vmem>>, vector<1x8x4xf32>
    %33 = vector.shape_cast %32 : vector<1x8x4xf32> to vector<8x4xf32>
    %cst_20 = arith.constant dense<0.000000e+00> : vector<8x256xf32>
    %34 = tpu.matmul %33, %31, %cst_20 {dimension_numbers = #tpu.dot_dimension_numbers<[1], [0], [0], [1], [0, 0, 1, 1], [], []>, precision = #tpu.contract_precision<fp32>} : vector<8x4xf32>, vector<4x256xf32>, vector<8x256xf32> -> vector<8x256xf32>
    %35 = arith.addf %24, %34 : vector<8x256xf32>
    %36 = vector.extract_strided_slice %1 {offsets = [0, 255], sizes = [4, 1], strides = [1, 1]} : vector<4x256xf32> to vector<4x1xf32>
    %37 = vector.extract_strided_slice %1 {offsets = [0, 0], sizes = [4, 255], strides = [1, 1]} : vector<4x256xf32> to vector<4x255xf32>
    %38 = tpu.concatenate %36, %37 in 1 : vector<4x1xf32>, vector<4x255xf32> -> vector<4x256xf32>
    %c3 = arith.constant 3 : index
    %c0_21 = arith.constant 0 : index
    %c0_22 = arith.constant 0 : index
    %39 = vector.load %arg2[%c3, %c0_21, %c0_22] : memref<9x1x256xf32, #tpu.memory_space<vmem>>, vector<1x1x256xf32>
    %40 = vector.shape_cast %39 : vector<1x1x256xf32> to vector<1x256xf32>
    %41 = vector.broadcast %40 : vector<1x256xf32> to vector<4x256xf32>
    %42 = arith.mulf %38, %41 : vector<4x256xf32>
    %c3_23 = arith.constant 3 : index
    %c0_24 = arith.constant 0 : index
    %c0_25 = arith.constant 0 : index
    %43 = vector.load %arg3[%c3_23, %c0_24, %c0_25] : memref<9x8x4xf32, #tpu.memory_space<vmem>>, vector<1x8x4xf32>
    %44 = vector.shape_cast %43 : vector<1x8x4xf32> to vector<8x4xf32>
    %cst_26 = arith.constant dense<0.000000e+00> : vector<8x256xf32>
    %45 = tpu.matmul %44, %42, %cst_26 {dimension_numbers = #tpu.dot_dimension_numbers<[1], [0], [0], [1], [0, 0, 1, 1], [], []>, precision = #tpu.contract_precision<fp32>} : vector<8x4xf32>, vector<4x256xf32>, vector<8x256xf32> -> vector<8x256xf32>
    %46 = arith.addf %35, %45 : vector<8x256xf32>
    %c4 = arith.constant 4 : index
    %c0_27 = arith.constant 0 : index
    %c0_28 = arith.constant 0 : index
    %47 = vector.load %arg3[%c4, %c0_27, %c0_28] : memref<9x8x4xf32, #tpu.memory_space<vmem>>, vector<1x8x4xf32>
    %48 = vector.shape_cast %47 : vector<1x8x4xf32> to vector<8x4xf32>
    %cst_29 = arith.constant dense<0.000000e+00> : vector<8x256xf32>
    %49 = tpu.matmul %48, %1, %cst_29 {dimension_numbers = #tpu.dot_dimension_numbers<[1], [0], [0], [1], [0, 0, 1, 1], [], []>, precision = #tpu.contract_precision<fp32>} : vector<8x4xf32>, vector<4x256xf32>, vector<8x256xf32> -> vector<8x256xf32>
    %50 = arith.addf %46, %49 : vector<8x256xf32>
    %51 = vector.extract_strided_slice %1 {offsets = [0, 1], sizes = [4, 255], strides = [1, 1]} : vector<4x256xf32> to vector<4x255xf32>
    %52 = vector.extract_strided_slice %1 {offsets = [0, 0], sizes = [4, 1], strides = [1, 1]} : vector<4x256xf32> to vector<4x1xf32>
    %53 = tpu.concatenate %51, %52 in 1 : vector<4x255xf32>, vector<4x1xf32> -> vector<4x256xf32>
    %c5 = arith.constant 5 : index
    %c0_30 = arith.constant 0 : index
    %c0_31 = arith.constant 0 : index
    %54 = vector.load %arg2[%c5, %c0_30, %c0_31] : memref<9x1x256xf32, #tpu.memory_space<vmem>>, vector<1x1x256xf32>
    %55 = vector.shape_cast %54 : vector<1x1x256xf32> to vector<1x256xf32>
    %56 = vector.broadcast %55 : vector<1x256xf32> to vector<4x256xf32>
    %57 = arith.mulf %53, %56 : vector<4x256xf32>
    %c5_32 = arith.constant 5 : index
    %c0_33 = arith.constant 0 : index
    %c0_34 = arith.constant 0 : index
    %58 = vector.load %arg3[%c5_32, %c0_33, %c0_34] : memref<9x8x4xf32, #tpu.memory_space<vmem>>, vector<1x8x4xf32>
    %59 = vector.shape_cast %58 : vector<1x8x4xf32> to vector<8x4xf32>
    %cst_35 = arith.constant dense<0.000000e+00> : vector<8x256xf32>
    %60 = tpu.matmul %59, %57, %cst_35 {dimension_numbers = #tpu.dot_dimension_numbers<[1], [0], [0], [1], [0, 0, 1, 1], [], []>, precision = #tpu.contract_precision<fp32>} : vector<8x4xf32>, vector<4x256xf32>, vector<8x256xf32> -> vector<8x256xf32>
    %61 = arith.addf %50, %60 : vector<8x256xf32>
    %62 = vector.extract_strided_slice %1 {offsets = [0, 15], sizes = [4, 241], strides = [1, 1]} : vector<4x256xf32> to vector<4x241xf32>
    %63 = vector.extract_strided_slice %1 {offsets = [0, 0], sizes = [4, 15], strides = [1, 1]} : vector<4x256xf32> to vector<4x15xf32>
    %64 = tpu.concatenate %62, %63 in 1 : vector<4x241xf32>, vector<4x15xf32> -> vector<4x256xf32>
    %c6 = arith.constant 6 : index
    %c0_36 = arith.constant 0 : index
    %c0_37 = arith.constant 0 : index
    %65 = vector.load %arg2[%c6, %c0_36, %c0_37] : memref<9x1x256xf32, #tpu.memory_space<vmem>>, vector<1x1x256xf32>
    %66 = vector.shape_cast %65 : vector<1x1x256xf32> to vector<1x256xf32>
    %67 = vector.broadcast %66 : vector<1x256xf32> to vector<4x256xf32>
    %68 = arith.mulf %64, %67 : vector<4x256xf32>
    %c6_38 = arith.constant 6 : index
    %c0_39 = arith.constant 0 : index
    %c0_40 = arith.constant 0 : index
    %69 = vector.load %arg3[%c6_38, %c0_39, %c0_40] : memref<9x8x4xf32, #tpu.memory_space<vmem>>, vector<1x8x4xf32>
    %70 = vector.shape_cast %69 : vector<1x8x4xf32> to vector<8x4xf32>
    %cst_41 = arith.constant dense<0.000000e+00> : vector<8x256xf32>
    %71 = tpu.matmul %70, %68, %cst_41 {dimension_numbers = #tpu.dot_dimension_numbers<[1], [0], [0], [1], [0, 0, 1, 1], [], []>, precision = #tpu.contract_precision<fp32>} : vector<8x4xf32>, vector<4x256xf32>, vector<8x256xf32> -> vector<8x256xf32>
    %72 = arith.addf %61, %71 : vector<8x256xf32>
    %73 = vector.extract_strided_slice %1 {offsets = [0, 16], sizes = [4, 240], strides = [1, 1]} : vector<4x256xf32> to vector<4x240xf32>
    %74 = vector.extract_strided_slice %1 {offsets = [0, 0], sizes = [4, 16], strides = [1, 1]} : vector<4x256xf32> to vector<4x16xf32>
    %75 = tpu.concatenate %73, %74 in 1 : vector<4x240xf32>, vector<4x16xf32> -> vector<4x256xf32>
    %c7 = arith.constant 7 : index
    %c0_42 = arith.constant 0 : index
    %c0_43 = arith.constant 0 : index
    %76 = vector.load %arg2[%c7, %c0_42, %c0_43] : memref<9x1x256xf32, #tpu.memory_space<vmem>>, vector<1x1x256xf32>
    %77 = vector.shape_cast %76 : vector<1x1x256xf32> to vector<1x256xf32>
    %78 = vector.broadcast %77 : vector<1x256xf32> to vector<4x256xf32>
    %79 = arith.mulf %75, %78 : vector<4x256xf32>
    %c7_44 = arith.constant 7 : index
    %c0_45 = arith.constant 0 : index
    %c0_46 = arith.constant 0 : index
    %80 = vector.load %arg3[%c7_44, %c0_45, %c0_46] : memref<9x8x4xf32, #tpu.memory_space<vmem>>, vector<1x8x4xf32>
    %81 = vector.shape_cast %80 : vector<1x8x4xf32> to vector<8x4xf32>
    %cst_47 = arith.constant dense<0.000000e+00> : vector<8x256xf32>
    %82 = tpu.matmul %81, %79, %cst_47 {dimension_numbers = #tpu.dot_dimension_numbers<[1], [0], [0], [1], [0, 0, 1, 1], [], []>, precision = #tpu.contract_precision<fp32>} : vector<8x4xf32>, vector<4x256xf32>, vector<8x256xf32> -> vector<8x256xf32>
    %83 = arith.addf %72, %82 : vector<8x256xf32>
    %84 = vector.extract_strided_slice %1 {offsets = [0, 17], sizes = [4, 239], strides = [1, 1]} : vector<4x256xf32> to vector<4x239xf32>
    %85 = vector.extract_strided_slice %1 {offsets = [0, 0], sizes = [4, 17], strides = [1, 1]} : vector<4x256xf32> to vector<4x17xf32>
    %86 = tpu.concatenate %84, %85 in 1 : vector<4x239xf32>, vector<4x17xf32> -> vector<4x256xf32>
    %c8 = arith.constant 8 : index
    %c0_48 = arith.constant 0 : index
    %c0_49 = arith.constant 0 : index
    %87 = vector.load %arg2[%c8, %c0_48, %c0_49] : memref<9x1x256xf32, #tpu.memory_space<vmem>>, vector<1x1x256xf32>
    %88 = vector.shape_cast %87 : vector<1x1x256xf32> to vector<1x256xf32>
    %89 = vector.broadcast %88 : vector<1x256xf32> to vector<4x256xf32>
    %90 = arith.mulf %86, %89 : vector<4x256xf32>
    %c8_50 = arith.constant 8 : index
    %c0_51 = arith.constant 0 : index
    %c0_52 = arith.constant 0 : index
    %91 = vector.load %arg3[%c8_50, %c0_51, %c0_52] : memref<9x8x4xf32, #tpu.memory_space<vmem>>, vector<1x8x4xf32>
    %92 = vector.shape_cast %91 : vector<1x8x4xf32> to vector<8x4xf32>
    %cst_53 = arith.constant dense<0.000000e+00> : vector<8x256xf32>
    %93 = tpu.matmul %92, %90, %cst_53 {dimension_numbers = #tpu.dot_dimension_numbers<[1], [0], [0], [1], [0, 0, 1, 1], [], []>, precision = #tpu.contract_precision<fp32>} : vector<8x4xf32>, vector<4x256xf32>, vector<8x256xf32> -> vector<8x256xf32>
    %94 = arith.addf %83, %93 : vector<8x256xf32>
    %c0_54 = arith.constant 0 : index
    %c0_55 = arith.constant 0 : index
    %95 = vector.load %arg4[%c0_54, %c0_55] : memref<8x1xf32, #tpu.memory_space<vmem>>, vector<8x1xf32>
    %96 = vector.broadcast %95 : vector<8x1xf32> to vector<8x256xf32>
    %97 = arith.mulf %94, %96 : vector<8x256xf32>
    %c0_56 = arith.constant 0 : index
    %c0_57 = arith.constant 0 : index
    %98 = vector.load %arg5[%c0_56, %c0_57] : memref<8x1xf32, #tpu.memory_space<vmem>>, vector<8x1xf32>
    %99 = vector.broadcast %98 : vector<8x1xf32> to vector<8x256xf32>
    %100 = arith.addf %97, %99 : vector<8x256xf32>
    %cst_58 = arith.constant 0.000000e+00 : f32
    %101 = vector.broadcast %cst_58 : f32 to vector<8x256xf32>
    %102 = arith.maximumf %100, %101 : vector<8x256xf32>
    %c0_59 = arith.constant 0 : index
    %c0_60 = arith.constant 0 : index
    %103 = vector.load %arg7[%c0_59, %c0_60] : memref<8x32xf32, #tpu.memory_space<vmem>>, vector<8x32xf32>
    %c0_61 = arith.constant 0 : index
    %c0_62 = arith.constant 0 : index
    %c0_63 = arith.constant 0 : index
    %104 = vector.load %arg6[%c0_61, %c0_62, %c0_63] : memref<1x1x32xf32, #tpu.memory_space<vmem>>, vector<1x1x32xf32>
    %105 = vector.shape_cast %104 : vector<1x1x32xf32> to vector<1x32xf32>
    %106 = vector.broadcast %105 : vector<1x32xf32> to vector<8x32xf32>
    %107 = arith.mulf %103, %106 : vector<8x32xf32>
    %cst_64 = arith.constant dense<0.000000e+00> : vector<8xf32>
    %108 = vector.multi_reduction <add>, %107, %cst_64 [1] : vector<8x32xf32> to vector<8xf32>
    %109 = vector.shape_cast %108 : vector<8xf32> to vector<8x1xf32>
    %c0_65 = arith.constant 0 : index
    %c0_66 = arith.constant 0 : index
    %110 = vector.load %arg8[%c0_65, %c0_66] : memref<8x1xf32, #tpu.memory_space<vmem>>, vector<8x1xf32>
    %111 = arith.addf %109, %110 : vector<8x1xf32>
    %cst_67 = arith.constant 0.000000e+00 : f32
    %112 = vector.broadcast %cst_67 : f32 to vector<8x1xf32>
    %113 = arith.maximumf %111, %112 : vector<8x1xf32>
    %114 = vector.broadcast %113 : vector<8x1xf32> to vector<8x256xf32>
    %115 = arith.addf %102, %114 : vector<8x256xf32>
    %cst_68 = arith.constant 0.000000e+00 : f32
    %116 = vector.broadcast %cst_68 : f32 to vector<8x256xf32>
    %117 = vector.extract_strided_slice %115 {offsets = [0, 239], sizes = [8, 17], strides = [1, 1]} : vector<8x256xf32> to vector<8x17xf32>
    %118 = vector.extract_strided_slice %115 {offsets = [0, 0], sizes = [8, 239], strides = [1, 1]} : vector<8x256xf32> to vector<8x239xf32>
    %119 = tpu.concatenate %117, %118 in 1 : vector<8x17xf32>, vector<8x239xf32> -> vector<8x256xf32>
    %c0_69 = arith.constant 0 : index
    %c0_70 = arith.constant 0 : index
    %c0_71 = arith.constant 0 : index
    %120 = vector.load %arg2[%c0_69, %c0_70, %c0_71] : memref<9x1x256xf32, #tpu.memory_space<vmem>>, vector<1x1x256xf32>
    %121 = vector.shape_cast %120 : vector<1x1x256xf32> to vector<1x256xf32>
    %122 = vector.broadcast %121 : vector<1x256xf32> to vector<8x256xf32>
    %123 = arith.mulf %119, %122 : vector<8x256xf32>
    %c0_72 = arith.constant 0 : index
    %c0_73 = arith.constant 0 : index
    %c0_74 = arith.constant 0 : index
    %124 = vector.load %arg9[%c0_72, %c0_73, %c0_74] : memref<9x8x8xf32, #tpu.memory_space<vmem>>, vector<1x8x8xf32>
    %125 = vector.shape_cast %124 : vector<1x8x8xf32> to vector<8x8xf32>
    %cst_75 = arith.constant dense<0.000000e+00> : vector<8x256xf32>
    %126 = tpu.matmul %125, %123, %cst_75 {dimension_numbers = #tpu.dot_dimension_numbers<[1], [0], [0], [1], [0, 0, 1, 1], [], []>, precision = #tpu.contract_precision<fp32>} : vector<8x8xf32>, vector<8x256xf32>, vector<8x256xf32> -> vector<8x256xf32>
    %127 = arith.addf %116, %126 : vector<8x256xf32>
    %128 = vector.extract_strided_slice %115 {offsets = [0, 240], sizes = [8, 16], strides = [1, 1]} : vector<8x256xf32> to vector<8x16xf32>
    %129 = vector.extract_strided_slice %115 {offsets = [0, 0], sizes = [8, 240], strides = [1, 1]} : vector<8x256xf32> to vector<8x240xf32>
    %130 = tpu.concatenate %128, %129 in 1 : vector<8x16xf32>, vector<8x240xf32> -> vector<8x256xf32>
    %c1_76 = arith.constant 1 : index
    %c0_77 = arith.constant 0 : index
    %c0_78 = arith.constant 0 : index
    %131 = vector.load %arg2[%c1_76, %c0_77, %c0_78] : memref<9x1x256xf32, #tpu.memory_space<vmem>>, vector<1x1x256xf32>
    %132 = vector.shape_cast %131 : vector<1x1x256xf32> to vector<1x256xf32>
    %133 = vector.broadcast %132 : vector<1x256xf32> to vector<8x256xf32>
    %134 = arith.mulf %130, %133 : vector<8x256xf32>
    %c1_79 = arith.constant 1 : index
    %c0_80 = arith.constant 0 : index
    %c0_81 = arith.constant 0 : index
    %135 = vector.load %arg9[%c1_79, %c0_80, %c0_81] : memref<9x8x8xf32, #tpu.memory_space<vmem>>, vector<1x8x8xf32>
    %136 = vector.shape_cast %135 : vector<1x8x8xf32> to vector<8x8xf32>
    %cst_82 = arith.constant dense<0.000000e+00> : vector<8x256xf32>
    %137 = tpu.matmul %136, %134, %cst_82 {dimension_numbers = #tpu.dot_dimension_numbers<[1], [0], [0], [1], [0, 0, 1, 1], [], []>, precision = #tpu.contract_precision<fp32>} : vector<8x8xf32>, vector<8x256xf32>, vector<8x256xf32> -> vector<8x256xf32>
    %138 = arith.addf %127, %137 : vector<8x256xf32>
    %139 = vector.extract_strided_slice %115 {offsets = [0, 241], sizes = [8, 15], strides = [1, 1]} : vector<8x256xf32> to vector<8x15xf32>
    %140 = vector.extract_strided_slice %115 {offsets = [0, 0], sizes = [8, 241], strides = [1, 1]} : vector<8x256xf32> to vector<8x241xf32>
    %141 = tpu.concatenate %139, %140 in 1 : vector<8x15xf32>, vector<8x241xf32> -> vector<8x256xf32>
    %c2_83 = arith.constant 2 : index
    %c0_84 = arith.constant 0 : index
    %c0_85 = arith.constant 0 : index
    %142 = vector.load %arg2[%c2_83, %c0_84, %c0_85] : memref<9x1x256xf32, #tpu.memory_space<vmem>>, vector<1x1x256xf32>
    %143 = vector.shape_cast %142 : vector<1x1x256xf32> to vector<1x256xf32>
    %144 = vector.broadcast %143 : vector<1x256xf32> to vector<8x256xf32>
    %145 = arith.mulf %141, %144 : vector<8x256xf32>
    %c2_86 = arith.constant 2 : index
    %c0_87 = arith.constant 0 : index
    %c0_88 = arith.constant 0 : index
    %146 = vector.load %arg9[%c2_86, %c0_87, %c0_88] : memref<9x8x8xf32, #tpu.memory_space<vmem>>, vector<1x8x8xf32>
    %147 = vector.shape_cast %146 : vector<1x8x8xf32> to vector<8x8xf32>
    %cst_89 = arith.constant dense<0.000000e+00> : vector<8x256xf32>
    %148 = tpu.matmul %147, %145, %cst_89 {dimension_numbers = #tpu.dot_dimension_numbers<[1], [0], [0], [1], [0, 0, 1, 1], [], []>, precision = #tpu.contract_precision<fp32>} : vector<8x8xf32>, vector<8x256xf32>, vector<8x256xf32> -> vector<8x256xf32>
    %149 = arith.addf %138, %148 : vector<8x256xf32>
    %150 = vector.extract_strided_slice %115 {offsets = [0, 255], sizes = [8, 1], strides = [1, 1]} : vector<8x256xf32> to vector<8x1xf32>
    %151 = vector.extract_strided_slice %115 {offsets = [0, 0], sizes = [8, 255], strides = [1, 1]} : vector<8x256xf32> to vector<8x255xf32>
    %152 = tpu.concatenate %150, %151 in 1 : vector<8x1xf32>, vector<8x255xf32> -> vector<8x256xf32>
    %c3_90 = arith.constant 3 : index
    %c0_91 = arith.constant 0 : index
    %c0_92 = arith.constant 0 : index
    %153 = vector.load %arg2[%c3_90, %c0_91, %c0_92] : memref<9x1x256xf32, #tpu.memory_space<vmem>>, vector<1x1x256xf32>
    %154 = vector.shape_cast %153 : vector<1x1x256xf32> to vector<1x256xf32>
    %155 = vector.broadcast %154 : vector<1x256xf32> to vector<8x256xf32>
    %156 = arith.mulf %152, %155 : vector<8x256xf32>
    %c3_93 = arith.constant 3 : index
    %c0_94 = arith.constant 0 : index
    %c0_95 = arith.constant 0 : index
    %157 = vector.load %arg9[%c3_93, %c0_94, %c0_95] : memref<9x8x8xf32, #tpu.memory_space<vmem>>, vector<1x8x8xf32>
    %158 = vector.shape_cast %157 : vector<1x8x8xf32> to vector<8x8xf32>
    %cst_96 = arith.constant dense<0.000000e+00> : vector<8x256xf32>
    %159 = tpu.matmul %158, %156, %cst_96 {dimension_numbers = #tpu.dot_dimension_numbers<[1], [0], [0], [1], [0, 0, 1, 1], [], []>, precision = #tpu.contract_precision<fp32>} : vector<8x8xf32>, vector<8x256xf32>, vector<8x256xf32> -> vector<8x256xf32>
    %160 = arith.addf %149, %159 : vector<8x256xf32>
    %c4_97 = arith.constant 4 : index
    %c0_98 = arith.constant 0 : index
    %c0_99 = arith.constant 0 : index
    %161 = vector.load %arg9[%c4_97, %c0_98, %c0_99] : memref<9x8x8xf32, #tpu.memory_space<vmem>>, vector<1x8x8xf32>
    %162 = vector.shape_cast %161 : vector<1x8x8xf32> to vector<8x8xf32>
    %cst_100 = arith.constant dense<0.000000e+00> : vector<8x256xf32>
    %163 = tpu.matmul %162, %115, %cst_100 {dimension_numbers = #tpu.dot_dimension_numbers<[1], [0], [0], [1], [0, 0, 1, 1], [], []>, precision = #tpu.contract_precision<fp32>} : vector<8x8xf32>, vector<8x256xf32>, vector<8x256xf32> -> vector<8x256xf32>
    %164 = arith.addf %160, %163 : vector<8x256xf32>
    %165 = vector.extract_strided_slice %115 {offsets = [0, 1], sizes = [8, 255], strides = [1, 1]} : vector<8x256xf32> to vector<8x255xf32>
    %166 = vector.extract_strided_slice %115 {offsets = [0, 0], sizes = [8, 1], strides = [1, 1]} : vector<8x256xf32> to vector<8x1xf32>
    %167 = tpu.concatenate %165, %166 in 1 : vector<8x255xf32>, vector<8x1xf32> -> vector<8x256xf32>
    %c5_101 = arith.constant 5 : index
    %c0_102 = arith.constant 0 : index
    %c0_103 = arith.constant 0 : index
    %168 = vector.load %arg2[%c5_101, %c0_102, %c0_103] : memref<9x1x256xf32, #tpu.memory_space<vmem>>, vector<1x1x256xf32>
    %169 = vector.shape_cast %168 : vector<1x1x256xf32> to vector<1x256xf32>
    %170 = vector.broadcast %169 : vector<1x256xf32> to vector<8x256xf32>
    %171 = arith.mulf %167, %170 : vector<8x256xf32>
    %c5_104 = arith.constant 5 : index
    %c0_105 = arith.constant 0 : index
    %c0_106 = arith.constant 0 : index
    %172 = vector.load %arg9[%c5_104, %c0_105, %c0_106] : memref<9x8x8xf32, #tpu.memory_space<vmem>>, vector<1x8x8xf32>
    %173 = vector.shape_cast %172 : vector<1x8x8xf32> to vector<8x8xf32>
    %cst_107 = arith.constant dense<0.000000e+00> : vector<8x256xf32>
    %174 = tpu.matmul %173, %171, %cst_107 {dimension_numbers = #tpu.dot_dimension_numbers<[1], [0], [0], [1], [0, 0, 1, 1], [], []>, precision = #tpu.contract_precision<fp32>} : vector<8x8xf32>, vector<8x256xf32>, vector<8x256xf32> -> vector<8x256xf32>
    %175 = arith.addf %164, %174 : vector<8x256xf32>
    %176 = vector.extract_strided_slice %115 {offsets = [0, 15], sizes = [8, 241], strides = [1, 1]} : vector<8x256xf32> to vector<8x241xf32>
    %177 = vector.extract_strided_slice %115 {offsets = [0, 0], sizes = [8, 15], strides = [1, 1]} : vector<8x256xf32> to vector<8x15xf32>
    %178 = tpu.concatenate %176, %177 in 1 : vector<8x241xf32>, vector<8x15xf32> -> vector<8x256xf32>
    %c6_108 = arith.constant 6 : index
    %c0_109 = arith.constant 0 : index
    %c0_110 = arith.constant 0 : index
    %179 = vector.load %arg2[%c6_108, %c0_109, %c0_110] : memref<9x1x256xf32, #tpu.memory_space<vmem>>, vector<1x1x256xf32>
    %180 = vector.shape_cast %179 : vector<1x1x256xf32> to vector<1x256xf32>
    %181 = vector.broadcast %180 : vector<1x256xf32> to vector<8x256xf32>
    %182 = arith.mulf %178, %181 : vector<8x256xf32>
    %c6_111 = arith.constant 6 : index
    %c0_112 = arith.constant 0 : index
    %c0_113 = arith.constant 0 : index
    %183 = vector.load %arg9[%c6_111, %c0_112, %c0_113] : memref<9x8x8xf32, #tpu.memory_space<vmem>>, vector<1x8x8xf32>
    %184 = vector.shape_cast %183 : vector<1x8x8xf32> to vector<8x8xf32>
    %cst_114 = arith.constant dense<0.000000e+00> : vector<8x256xf32>
    %185 = tpu.matmul %184, %182, %cst_114 {dimension_numbers = #tpu.dot_dimension_numbers<[1], [0], [0], [1], [0, 0, 1, 1], [], []>, precision = #tpu.contract_precision<fp32>} : vector<8x8xf32>, vector<8x256xf32>, vector<8x256xf32> -> vector<8x256xf32>
    %186 = arith.addf %175, %185 : vector<8x256xf32>
    %187 = vector.extract_strided_slice %115 {offsets = [0, 16], sizes = [8, 240], strides = [1, 1]} : vector<8x256xf32> to vector<8x240xf32>
    %188 = vector.extract_strided_slice %115 {offsets = [0, 0], sizes = [8, 16], strides = [1, 1]} : vector<8x256xf32> to vector<8x16xf32>
    %189 = tpu.concatenate %187, %188 in 1 : vector<8x240xf32>, vector<8x16xf32> -> vector<8x256xf32>
    %c7_115 = arith.constant 7 : index
    %c0_116 = arith.constant 0 : index
    %c0_117 = arith.constant 0 : index
    %190 = vector.load %arg2[%c7_115, %c0_116, %c0_117] : memref<9x1x256xf32, #tpu.memory_space<vmem>>, vector<1x1x256xf32>
    %191 = vector.shape_cast %190 : vector<1x1x256xf32> to vector<1x256xf32>
    %192 = vector.broadcast %191 : vector<1x256xf32> to vector<8x256xf32>
    %193 = arith.mulf %189, %192 : vector<8x256xf32>
    %c7_118 = arith.constant 7 : index
    %c0_119 = arith.constant 0 : index
    %c0_120 = arith.constant 0 : index
    %194 = vector.load %arg9[%c7_118, %c0_119, %c0_120] : memref<9x8x8xf32, #tpu.memory_space<vmem>>, vector<1x8x8xf32>
    %195 = vector.shape_cast %194 : vector<1x8x8xf32> to vector<8x8xf32>
    %cst_121 = arith.constant dense<0.000000e+00> : vector<8x256xf32>
    %196 = tpu.matmul %195, %193, %cst_121 {dimension_numbers = #tpu.dot_dimension_numbers<[1], [0], [0], [1], [0, 0, 1, 1], [], []>, precision = #tpu.contract_precision<fp32>} : vector<8x8xf32>, vector<8x256xf32>, vector<8x256xf32> -> vector<8x256xf32>
    %197 = arith.addf %186, %196 : vector<8x256xf32>
    %198 = vector.extract_strided_slice %115 {offsets = [0, 17], sizes = [8, 239], strides = [1, 1]} : vector<8x256xf32> to vector<8x239xf32>
    %199 = vector.extract_strided_slice %115 {offsets = [0, 0], sizes = [8, 17], strides = [1, 1]} : vector<8x256xf32> to vector<8x17xf32>
    %200 = tpu.concatenate %198, %199 in 1 : vector<8x239xf32>, vector<8x17xf32> -> vector<8x256xf32>
    %c8_122 = arith.constant 8 : index
    %c0_123 = arith.constant 0 : index
    %c0_124 = arith.constant 0 : index
    %201 = vector.load %arg2[%c8_122, %c0_123, %c0_124] : memref<9x1x256xf32, #tpu.memory_space<vmem>>, vector<1x1x256xf32>
    %202 = vector.shape_cast %201 : vector<1x1x256xf32> to vector<1x256xf32>
    %203 = vector.broadcast %202 : vector<1x256xf32> to vector<8x256xf32>
    %204 = arith.mulf %200, %203 : vector<8x256xf32>
    %c8_125 = arith.constant 8 : index
    %c0_126 = arith.constant 0 : index
    %c0_127 = arith.constant 0 : index
    %205 = vector.load %arg9[%c8_125, %c0_126, %c0_127] : memref<9x8x8xf32, #tpu.memory_space<vmem>>, vector<1x8x8xf32>
    %206 = vector.shape_cast %205 : vector<1x8x8xf32> to vector<8x8xf32>
    %cst_128 = arith.constant dense<0.000000e+00> : vector<8x256xf32>
    %207 = tpu.matmul %206, %204, %cst_128 {dimension_numbers = #tpu.dot_dimension_numbers<[1], [0], [0], [1], [0, 0, 1, 1], [], []>, precision = #tpu.contract_precision<fp32>} : vector<8x8xf32>, vector<8x256xf32>, vector<8x256xf32> -> vector<8x256xf32>
    %208 = arith.addf %197, %207 : vector<8x256xf32>
    %cst_129 = arith.constant 0.000000e+00 : f32
    %209 = vector.broadcast %cst_129 : f32 to vector<8x256xf32>
    %210 = arith.maximumf %208, %209 : vector<8x256xf32>
    %c0_130 = arith.constant 0 : index
    %c0_131 = arith.constant 0 : index
    %c0_132 = arith.constant 0 : index
    %211 = vector.load %arg10[%c0_130, %c0_131, %c0_132] : memref<1x8x256xf32, #tpu.memory_space<vmem>>, vector<1x8x256xf32>
    %212 = vector.shape_cast %211 : vector<1x8x256xf32> to vector<8x256xf32>
    %213 = vector.shape_cast %210 : vector<8x256xf32> to vector<1x8x256xf32>
    tpu.vector_store %arg10[%c0_130, %c0_131, %c0_132], %213 {strides = array<i32>} : memref<1x8x256xf32, #tpu.memory_space<vmem>>, vector<1x8x256xf32>,
    return
  }
  func.func @transform_0(%arg0: i32) -> (i32, i32, i32) {
    %c0_i32 = arith.constant 0 : i32
    %c0_i32_0 = arith.constant 0 : i32
    %c0_i32_1 = arith.constant 0 : i32
    return %arg0, %c0_i32, %c0_i32_0 : i32, i32, i32
  }
  func.func @transform_1(%arg0: i32) -> (i32, i32, i32) {
    %c0_i32 = arith.constant 0 : i32
    %c0_i32_0 = arith.constant 0 : i32
    %c0_i32_1 = arith.constant 0 : i32
    %c0_i32_2 = arith.constant 0 : i32
    return %c0_i32, %c0_i32_0, %c0_i32_1 : i32, i32, i32
  }
  func.func @transform_2(%arg0: i32) -> (i32, i32, i32) {
    %c0_i32 = arith.constant 0 : i32
    %c0_i32_0 = arith.constant 0 : i32
    %c0_i32_1 = arith.constant 0 : i32
    %c0_i32_2 = arith.constant 0 : i32
    return %c0_i32, %c0_i32_0, %c0_i32_1 : i32, i32, i32
  }
  func.func @transform_3(%arg0: i32) -> (i32, i32) {
    %c0_i32 = arith.constant 0 : i32
    %c0_i32_0 = arith.constant 0 : i32
    %c0_i32_1 = arith.constant 0 : i32
    return %c0_i32, %c0_i32_0 : i32, i32
  }
  func.func @transform_4(%arg0: i32) -> (i32, i32) {
    %c0_i32 = arith.constant 0 : i32
    %c0_i32_0 = arith.constant 0 : i32
    %c0_i32_1 = arith.constant 0 : i32
    return %c0_i32, %c0_i32_0 : i32, i32
  }
  func.func @transform_5(%arg0: i32) -> (i32, i32, i32) {
    %c0_i32 = arith.constant 0 : i32
    %c0_i32_0 = arith.constant 0 : i32
    %c0_i32_1 = arith.constant 0 : i32
    return %arg0, %c0_i32, %c0_i32_0 : i32, i32, i32
  }
  func.func @transform_6(%arg0: i32) -> (i32, i32) {
    %c0_i32 = arith.constant 0 : i32
    %c0_i32_0 = arith.constant 0 : i32
    %c0_i32_1 = arith.constant 0 : i32
    return %c0_i32, %c0_i32_0 : i32, i32
  }
  func.func @transform_7(%arg0: i32) -> (i32, i32) {
    %c0_i32 = arith.constant 0 : i32
    %c0_i32_0 = arith.constant 0 : i32
    %c0_i32_1 = arith.constant 0 : i32
    return %c0_i32, %c0_i32_0 : i32, i32
  }
  func.func @transform_8(%arg0: i32) -> (i32, i32, i32) {
    %c0_i32 = arith.constant 0 : i32
    %c0_i32_0 = arith.constant 0 : i32
    %c0_i32_1 = arith.constant 0 : i32
    %c0_i32_2 = arith.constant 0 : i32
    return %c0_i32, %c0_i32_0, %c0_i32_1 : i32, i32, i32
  }
  func.func @transform_9(%arg0: i32) -> (i32, i32, i32) {
    %c0_i32 = arith.constant 0 : i32
    %c0_i32_0 = arith.constant 0 : i32
    %c0_i32_1 = arith.constant 0 : i32
    return %arg0, %c0_i32, %c0_i32_0 : i32, i32, i32
  }
}

</mosaic_0001>

<llo_original>
// kernel: tpu_custom_call.1
$region0: #{tpu_custom_call.1}
  #allocation0 [shape = 'u32[]', space=smem, size = 0x4, offset = 0x4, fixed_abs, tag = 'smem constant byte address 0x4 - core index']
  #allocation1 [shape = 'u32[144,128]{1,0:T(1,128)}', space=vmem, size = 0x12000, scoped, tag = 'internal scratch']
  %s0 = inlined_call_operand.vmem [shape: f32[2,4,256], index: 0, kind: input, shape index: {}]
  %s1 = inlined_call_operand.vmem [shape: f32[9,1,256], index: 1, kind: input, shape index: {}]
  %s2 = inlined_call_operand.vmem [shape: f32[9,8,4], index: 2, kind: input, shape index: {}]
  %s3 = inlined_call_operand.vmem [shape: f32[8,1], index: 3, kind: input, shape index: {}]
  %s4 = inlined_call_operand.vmem [shape: f32[8,1], index: 4, kind: input, shape index: {}]
  %s5 = inlined_call_operand.vmem [shape: f32[2,1,32], index: 5, kind: input, shape index: {}]
  %s6 = inlined_call_operand.vmem [shape: f32[8,32], index: 6, kind: input, shape index: {}]
  %s7 = inlined_call_operand.vmem [shape: f32[8,1], index: 7, kind: input, shape index: {}]
  %s8 = inlined_call_operand.vmem [shape: f32[9,8,8], index: 8, kind: input, shape index: {}]
  %s9 = inlined_call_operand.hbm [shape: f32[2,8,256], index: 9, kind: output, shape index: {}]
  %s10 = sld [smem:[#allocation0]]
  $region69: #{tpu_custom_call.1} parent=0
    _
  %s12 = ssub.s32 1, %s10
  %s13 = scalar_select 0, %s12, %s10
  $region1: #{tpu_custom_call.1} parent=0
    #allocation2 [shape = 'u8[16384]{0}', space=vmem, size = 0x4000, scoped, tag = 'output window, operand 0']
    #allocation3 [shape = 's32[2]{0}', space=sflag, size = 0x8, scoped, tag = 'scoped memory for tpu_custom_call.1']
    %14 = vsyncpa [#allocation3], 0
    %s15 = scalar_lea.sflag [#allocation3], 1
    %16 = vsyncpa %s15, 0
    loop: start=0, step=1, limit=4
    $region2: #{tpu_custom_call.1} parent=1 // loop_pre_header
      _
    $region3: #{tpu_custom_call.1} parent=1 // loop_header
      %s18 = sphi 0, %s22
      %p19 = scmp.ge.s32.totalorder %s18, 4
      %s28 = sphi 0, %s30
      %s31 = sphi 0, %s28
      %s32 = sphi 0, %s31
      %s48 = sphi 0, %s32
      %s52 = sphi 0, %s52
      %s54 = sphi 0, %s52
      %s55 = sphi 0, %s54
      %s69 = sphi 0, %s55
      %s73 = sphi 0, %s73
      %s75 = sphi 0, %s73
      %s76 = sphi 0, %s75
      %s90 = sphi 0, %s76
      %s94 = sphi 0, %s94
      %s96 = sphi 0, %s94
      %s97 = sphi 0, %s96
      %s111 = sphi 0, %s97
      %s115 = sphi 0, %s115
      %s117 = sphi 0, %s115
      %s118 = sphi 0, %s117
      %s132 = sphi 0, %s118
      %s138 = sphi 0, %s140
      %s141 = sphi 0, %s138
      %s142 = sphi 0, %s141
      %s158 = sphi 0, %s142
      %s162 = sphi 0, %s162
      %s164 = sphi 0, %s162
      %s165 = sphi 0, %s164
      %s179 = sphi 0, %s165
      %s183 = sphi 0, %s183
      %s185 = sphi 0, %s183
      %s186 = sphi 0, %s185
      %s200 = sphi 0, %s186
      %s204 = sphi 0, %s204
      %s206 = sphi 0, %s204
      %s207 = sphi 0, %s206
      %s221 = sphi 0, %s207
      %s227 = sphi 0, %s229
      %s230 = sphi 0, %s227
      %s231 = sphi 0, %s230
      %s247 = sphi 0, %s231
    $region4: #{tpu_custom_call.1} parent=1 // loop_header_branch
      %21 = sbr.rel (%p19) target = $region8
    $region5: #{tpu_custom_call.1} parent=1 // loop_body
      %s23 = ssub.s32 %s18, 1
      %s24 = ssub.s32 %s18, 2
      %s25 = sadd.s32 %s18, 1
      %s26 = ssub.s32 %s18, %s25
      %p27 = scmp.eq.s32.totalorder %s26, 0
      %s29 = sadd.s32 %s28, 1
      %s30 = scalar_select %p27, %s28, %s29
      %p33 = pneg %p27
      %p34 = scmp.eq.s32.totalorder %s18, 1
      %p35 = por %p33, %p34
      %p36 = scmp.ne.s32.totalorder %s28, %s31
      %p37 = scmp.eq.s32.totalorder %s18, 0
      %p38 = por %p36, %p37
      %p39 = scmp.ne.s32.totalorder %s28, %s31
      %p40 = scmp.eq.s32.totalorder %s23, 1
      %p41 = por %p39, %p40
      %p42 = scmp.ne.s32.totalorder %s31, %s32
      %p43 = scmp.eq.s32.totalorder %s23, 0
      %p44 = por %p42, %p43
      %p45 = scmp.ne.s32.totalorder %s31, %s32
      %p46 = scmp.eq.s32.totalorder %s24, 1
      %p47 = por %p45, %p46
      %p49 = scmp.ne.s32.totalorder %s32, %s48
      %p50 = scmp.eq.s32.totalorder %s24, 0
      %p51 = por %p49, %p50
      %s53 = sadd.s32 %s52, 1
      %p56 = scmp.eq.s32.totalorder %s18, 1
      %p57 = scmp.ne.s32.totalorder %s52, %s54
      %p58 = scmp.eq.s32.totalorder %s18, 0
      %p59 = por %p57, %p58
      %p60 = scmp.ne.s32.totalorder %s52, %s54
      %p61 = scmp.eq.s32.totalorder %s23, 1
      %p62 = por %p60, %p61
      %p63 = scmp.ne.s32.totalorder %s54, %s55
      %p64 = scmp.eq.s32.totalorder %s23, 0
      %p65 = por %p63, %p64
      %p66 = scmp.ne.s32.totalorder %s54, %s55
      %p67 = scmp.eq.s32.totalorder %s24, 1
      %p68 = por %p66, %p67
      %p70 = scmp.ne.s32.totalorder %s55, %s69
      %p71 = scmp.eq.s32.totalorder %s24, 0
      %p72 = por %p70, %p71
      %s74 = sadd.s32 %s73, 1
      %p77 = scmp.eq.s32.totalorder %s18, 1
      %p78 = scmp.ne.s32.totalorder %s73, %s75
      %p79 = scmp.eq.s32.totalorder %s18, 0
      %p80 = por %p78, %p79
      %p81 = scmp.ne.s32.totalorder %s73, %s75
      %p82 = scmp.eq.s32.totalorder %s23, 1
      %p83 = por %p81, %p82
      %p84 = scmp.ne.s32.totalorder %s75, %s76
      %p85 = scmp.eq.s32.totalorder %s23, 0
      %p86 = por %p84, %p85
      %p87 = scmp.ne.s32.totalorder %s75, %s76
      %p88 = scmp.eq.s32.totalorder %s24, 1
      %p89 = por %p87, %p88
      %p91 = scmp.ne.s32.totalorder %s76, %s90
      %p92 = scmp.eq.s32.totalorder %s24, 0
      %p93 = por %p91, %p92
      %s95 = sadd.s32 %s94, 1
      %p98 = scmp.eq.s32.totalorder %s18, 1
      %p99 = scmp.ne.s32.totalorder %s94, %s96
      %p100 = scmp.eq.s32.totalorder %s18, 0
      %p101 = por %p99, %p100
      %p102 = scmp.ne.s32.totalorder %s94, %s96
      %p103 = scmp.eq.s32.totalorder %s23, 1
      %p104 = por %p102, %p103
      %p105 = scmp.ne.s32.totalorder %s96, %s97
      %p106 = scmp.eq.s32.totalorder %s23, 0
      %p107 = por %p105, %p106
      %p108 = scmp.ne.s32.totalorder %s96, %s97
      %p109 = scmp.eq.s32.totalorder %s24, 1
      %p110 = por %p108, %p109
      %p112 = scmp.ne.s32.totalorder %s97, %s111
      %p113 = scmp.eq.s32.totalorder %s24, 0
      %p114 = por %p112, %p113
      %s116 = sadd.s32 %s115, 1
      %p119 = scmp.eq.s32.totalorder %s18, 1
      %p120 = scmp.ne.s32.totalorder %s115, %s117
      %p121 = scmp.eq.s32.totalorder %s18, 0
      %p122 = por %p120, %p121
      %p123 = scmp.ne.s32.totalorder %s115, %s117
      %p124 = scmp.eq.s32.totalorder %s23, 1
      %p125 = por %p123, %p124
      %p126 = scmp.ne.s32.totalorder %s117, %s118
      %p127 = scmp.eq.s32.totalorder %s23, 0
      %p128 = por %p126, %p127
      %p129 = scmp.ne.s32.totalorder %s117, %s118
      %p130 = scmp.eq.s32.totalorder %s24, 1
      %p131 = por %p129, %p130
      %p133 = scmp.ne.s32.totalorder %s118, %s132
      %p134 = scmp.eq.s32.totalorder %s24, 0
      %p135 = por %p133, %p134
      %s136 = ssub.s32 %s18, %s25
      %p137 = scmp.eq.s32.totalorder %s136, 0
      %s139 = sadd.s32 %s138, 1
      %s140 = scalar_select %p137, %s138, %s139
      %p143 = pneg %p137
      %p144 = scmp.eq.s32.totalorder %s18, 1
      %p145 = por %p143, %p144
      %p146 = scmp.ne.s32.totalorder %s138, %s141
      %p147 = scmp.eq.s32.totalorder %s18, 0
      %p148 = por %p146, %p147
      %p149 = scmp.ne.s32.totalorder %s138, %s141
      %p150 = scmp.eq.s32.totalorder %s23, 1
      %p151 = por %p149, %p150
      %p152 = scmp.ne.s32.totalorder %s141, %s142
      %p153 = scmp.eq.s32.totalorder %s23, 0
      %p154 = por %p152, %p153
      %p155 = scmp.ne.s32.totalorder %s141, %s142
      %p156 = scmp.eq.s32.totalorder %s24, 1
      %p157 = por %p155, %p156
      %p159 = scmp.ne.s32.totalorder %s142, %s158
      %p160 = scmp.eq.s32.totalorder %s24, 0
      %p161 = por %p159, %p160
      %s163 = sadd.s32 %s162, 1
      %p166 = scmp.eq.s32.totalorder %s18, 1
      %p167 = scmp.ne.s32.totalorder %s162, %s164
      %p168 = scmp.eq.s32.totalorder %s18, 0
      %p169 = por %p167, %p168
      %p170 = scmp.ne.s32.totalorder %s162, %s164
      %p171 = scmp.eq.s32.totalorder %s23, 1
      %p172 = por %p170, %p171
      %p173 = scmp.ne.s32.totalorder %s164, %s165
      %p174 = scmp.eq.s32.totalorder %s23, 0
      %p175 = por %p173, %p174
      %p176 = scmp.ne.s32.totalorder %s164, %s165
      %p177 = scmp.eq.s32.totalorder %s24, 1
      %p178 = por %p176, %p177
      %p180 = scmp.ne.s32.totalorder %s165, %s179
      %p181 = scmp.eq.s32.totalorder %s24, 0
      %p182 = por %p180, %p181
      %s184 = sadd.s32 %s183, 1
      %p187 = scmp.eq.s32.totalorder %s18, 1
      %p188 = scmp.ne.s32.totalorder %s183, %s185
      %p189 = scmp.eq.s32.totalorder %s18, 0
      %p190 = por %p188, %p189
      %p191 = scmp.ne.s32.totalorder %s183, %s185
      %p192 = scmp.eq.s32.totalorder %s23, 1
      %p193 = por %p191, %p192
      %p194 = scmp.ne.s32.totalorder %s185, %s186
      %p195 = scmp.eq.s32.totalorder %s23, 0
      %p196 = por %p194, %p195
      %p197 = scmp.ne.s32.totalorder %s185, %s186
      %p198 = scmp.eq.s32.totalorder %s24, 1
      %p199 = por %p197, %p198
      %p201 = scmp.ne.s32.totalorder %s186, %s200
      %p202 = scmp.eq.s32.totalorder %s24, 0
      %p203 = por %p201, %p202
      %s205 = sadd.s32 %s204, 1
      %p208 = scmp.eq.s32.totalorder %s18, 1
      %p209 = scmp.ne.s32.totalorder %s204, %s206
      %p210 = scmp.eq.s32.totalorder %s18, 0
      %p211 = por %p209, %p210
      %p212 = scmp.ne.s32.totalorder %s204, %s206
      %p213 = scmp.eq.s32.totalorder %s23, 1
      %p214 = por %p212, %p213
      %p215 = scmp.ne.s32.totalorder %s206, %s207
      %p216 = scmp.eq.s32.totalorder %s23, 0
      %p217 = por %p215, %p216
      %p218 = scmp.ne.s32.totalorder %s206, %s207
      %p219 = scmp.eq.s32.totalorder %s24, 1
      %p220 = por %p218, %p219
      %p222 = scmp.ne.s32.totalorder %s207, %s221
      %p223 = scmp.eq.s32.totalorder %s24, 0
      %p224 = por %p222, %p223
      %s225 = ssub.s32 %s18, %s25
      %p226 = scmp.eq.s32.totalorder %s225, 0
      %s228 = sadd.s32 %s227, 1
      %s229 = scalar_select %p226, %s227, %s228
      %p232 = pneg %p226
      %p233 = scmp.eq.s32.totalorder %s18, 1
      %p234 = por %p232, %p233
      %p235 = scmp.ne.s32.totalorder %s227, %s230
      %p236 = scmp.eq.s32.totalorder %s18, 0
      %p237 = por %p235, %p236
      %p238 = scmp.ne.s32.totalorder %s227, %s230
      %p239 = scmp.eq.s32.totalorder %s23, 1
      %p240 = por %p238, %p239
      %p241 = scmp.ne.s32.totalorder %s230, %s231
      %p242 = scmp.eq.s32.totalorder %s23, 0
      %p243 = por %p241, %p242
      %p244 = scmp.ne.s32.totalorder %s230, %s231
      %p245 = scmp.eq.s32.totalorder %s24, 1
      %p246 = por %p244, %p245
      %p248 = scmp.ne.s32.totalorder %s231, %s247
      %p249 = scmp.eq.s32.totalorder %s24, 0
      %p250 = por %p248, %p249
      %p251 = scmp.le.s32.totalorder 1, %s18
      %p252 = scmp.lt.s32.totalorder %s18, 3
      %p253 = pnand %p251, %p252
      %p254 = pneg %p253
      // Predicated region
      $region9: #{tpu_custom_call.1} parent=5 // pred_check
        _
      $region10: #{tpu_custom_call.1} parent=5 // pred_check_branch
        %256 = sbr.rel (%p253) target = $region12
      $region11: #{tpu_custom_call.1} parent=5 // pred_region
        %s257 = ssub.s32 %s18, 1
        // Predicated region
        $region13: #{tpu_custom_call.1} parent=11 // pred_check
          %p258 = pneg %p65
        $region14: #{tpu_custom_call.1} parent=11 // pred_check_branch
          %260 = sbr.rel (%p258) target = $region16
        $region15: #{tpu_custom_call.1} parent=11 // pred_region
          _
        $region16: #{tpu_custom_call.1} parent=11 // pred_fallthru
          _
        // Predicated region
        $region17: #{tpu_custom_call.1} parent=11 // pred_check
          %p261 = pneg %p86
        $region18: #{tpu_custom_call.1} parent=11 // pred_check_branch
          %263 = sbr.rel (%p261) target = $region20
        $region19: #{tpu_custom_call.1} parent=11 // pred_region
          _
        $region20: #{tpu_custom_call.1} parent=11 // pred_fallthru
          _
        // Predicated region
        $region21: #{tpu_custom_call.1} parent=11 // pred_check
          %p264 = pneg %p107
        $region22: #{tpu_custom_call.1} parent=11 // pred_check_branch
          %266 = sbr.rel (%p264) target = $region24
        $region23: #{tpu_custom_call.1} parent=11 // pred_region
          _
        $region24: #{tpu_custom_call.1} parent=11 // pred_fallthru
          _
        // Predicated region
        $region25: #{tpu_custom_call.1} parent=11 // pred_check
          %p267 = pneg %p128
        $region26: #{tpu_custom_call.1} parent=11 // pred_check_branch
          %269 = sbr.rel (%p267) target = $region28
        $region27: #{tpu_custom_call.1} parent=11 // pred_region
          _
        $region28: #{tpu_custom_call.1} parent=11 // pred_fallthru
          _
        // Predicated region
        $region29: #{tpu_custom_call.1} parent=11 // pred_check
          %p270 = pneg %p175
        $region30: #{tpu_custom_call.1} parent=11 // pred_check_branch
          %272 = sbr.rel (%p270) target = $region32
        $region31: #{tpu_custom_call.1} parent=11 // pred_region
          _
        $region32: #{tpu_custom_call.1} parent=11 // pred_fallthru
          _
        // Predicated region
        $region33: #{tpu_custom_call.1} parent=11 // pred_check
          %p273 = pneg %p196
        $region34: #{tpu_custom_call.1} parent=11 // pred_check_branch
          %275 = sbr.rel (%p273) target = $region36
        $region35: #{tpu_custom_call.1} parent=11 // pred_region
          _
        $region36: #{tpu_custom_call.1} parent=11 // pred_fallthru
          _
        // Predicated region
        $region37: #{tpu_custom_call.1} parent=11 // pred_check
          %p276 = pneg %p217
        $region38: #{tpu_custom_call.1} parent=11 // pred_check_branch
          %278 = sbr.rel (%p276) target = $region40
        $region39: #{tpu_custom_call.1} parent=11 // pred_region
          _
        $region40: #{tpu_custom_call.1} parent=11 // pred_fallthru
          _
      $region12: #{tpu_custom_call.1} parent=5 // pred_fallthru
        _
      %p279 = scmp.lt.s32.totalorder %s18, 2
      // Predicated region
      $region41: #{tpu_custom_call.1} parent=5 // pred_check
        %p280 = pneg %p279
      $region42: #{tpu_custom_call.1} parent=5 // pred_check_branch
        %282 = sbr.rel (%p280) target = $region44
      $region43: #{tpu_custom_call.1} parent=5 // pred_region
        // Predicated region
        $region45: #{tpu_custom_call.1} parent=43 // pred_check
          %p283 = pneg %p38
        $region46: #{tpu_custom_call.1} parent=43 // pred_check_branch
          %285 = sbr.rel (%p283) target = $region48
        $region47: #{tpu_custom_call.1} parent=43 // pred_region
          %p286 = scmp.lt.s32.totalorder %s18, 1
          %s287 = scalar_select %p286, %s18, 1
          %s288 = smul.addr %s287, 2
          %s289 = smul.addr %s288, 4
          %s290 = scalar_lea.vmem %s0, %s289
        $region48: #{tpu_custom_call.1} parent=43 // pred_fallthru
          _
        // Predicated region
        $region49: #{tpu_custom_call.1} parent=43 // pred_check
          %p291 = pneg %p148
        $region50: #{tpu_custom_call.1} parent=43 // pred_check_branch
          %293 = sbr.rel (%p291) target = $region52
        $region51: #{tpu_custom_call.1} parent=43 // pred_region
          %p294 = scmp.lt.s32.totalorder %s18, 1
          %s295 = scalar_select %p294, %s18, 1
          %s296 = scalar_lea.vmem %s5, %s295
        $region52: #{tpu_custom_call.1} parent=43 // pred_fallthru
          _
      $region44: #{tpu_custom_call.1} parent=5 // pred_fallthru
        _
      %p297 = scmp.le.s32.totalorder 1, %s18
      %p298 = scmp.lt.s32.totalorder %s18, 3
      %p299 = pnand %p297, %p298
      %p300 = pneg %p299
      // Predicated region
      $region53: #{tpu_custom_call.1} parent=5 // pred_check
        _
      $region54: #{tpu_custom_call.1} parent=5 // pred_check_branch
        %302 = sbr.rel (%p299) target = $region56
      $region55: #{tpu_custom_call.1} parent=5 // pred_region
        %s303 = ssub.s32 %s18, 1
        %p304 = scmp.lt.s32.totalorder %s23, 1
        %s305 = scalar_select %p304, %s23, 1
        %s306 = smul.addr %s305, 2
        %s307 = smul.addr %s306, 4
        %s308 = scalar_lea.vmem %s0, %s307
        %p309 = pneg %p44
        %p310 = pneg %p41
        %p311 = pneg %p65
        %p312 = pneg %p62
        %p313 = pneg %p86
        %p314 = pneg %p83
        %p315 = pneg %p107
        %p316 = pneg %p104
        %p317 = pneg %p128
        %p318 = pneg %p125
        %p319 = scmp.lt.s32.totalorder %s23, 1
        %s320 = scalar_select %p319, %s23, 1
        %s321 = scalar_lea.vmem %s5, %s320
        %p322 = pneg %p154
        %p323 = pneg %p151
        %p324 = pneg %p175
        %p325 = pneg %p172
        %p326 = pneg %p196
        %p327 = pneg %p193
        %p328 = pneg %p217
        %p329 = pneg %p214
        %p330 = pneg %p243
        %p331 = pneg %p240
        %s332 = sand.u32 %s230, 1
        %s333 = scalar_lea.sflag [#allocation3], %s332
        %s334 = sand.u32 %s230, 1
        %s335 = smul.addr %s334, 16
        %s336 = scalar_lea.vmem [#allocation2], %s335
        %p337 = scmp.lt.s32.totalorder %s23, 1
        %s338 = scalar_select %p337, %s23, 1
        %s339 = smul.addr %s338, 2
        %s340 = smul.addr %s339, 4
        %s341 = scalar_lea.vmem %s0, %s340
        %p342 = scmp.lt.s32.totalorder %s23, 1
        %s343 = scalar_select %p342, %s23, 1
        %s344 = scalar_lea.vmem %s5, %s343
        %v345 = vld [vmem:[%s341] sm:$0xff]
        %v347 = vcombine.high %v345, %v345
        %348 = vrot.lane.b32.xlu0 %v347, 17
        %v349 = vpop.permute.xlu0 %348
        %351 = vrot.lane.b32.xlu0 %v345, 17
        %v352 = vpop.permute.xlu0 %351
        %vm353 = vcmask 138240
        %v354 = vsel %vm353, %v352, %v349
        %v357 = vsel %vm353, %v349, %v352
        %v358 = vld [vmem:[%s1] sm:$0x3]
        %v360 = vlaneseq
        %v361 = vshrl.u32 %v360, 7
        %v362 = vsub.s32 0, %v361
        %v363 = vrot.slane %v358, %v362
        %v364 = vlaneseq
        %v365 = vshrl.u32 %v364, 7
        %v366 = vsub.s32 1, %v365
        %v367 = vrot.slane %v358, %v366
        %v370 = vmul.f32 %v357, %v363
        %v371 = vmul.f32 %v354, %v367
        %v372 = vld [vmem:[%s2] sm:$0xff]
        %373 = vrot.lane.b32.xlu0 %v347, 16
        %v374 = vpop.permute.xlu0 %373
        %376 = vrot.lane.b32.xlu0 %v345, 16
        %v377 = vpop.permute.xlu0 %376
        %vm378 = vcmask 130048
        %v379 = vsel %vm378, %v377, %v374
        %v382 = vsel %vm378, %v374, %v377
        %s383 = scalar_lea.vmem %s1, 2
        %v384 = vld [vmem:[%s383] sm:$0x3]
        %v386 = vlaneseq
        %v387 = vshrl.u32 %v386, 7
        %v388 = vsub.s32 0, %v387
        %v389 = vrot.slane %v384, %v388
        %v390 = vlaneseq
        %v391 = vshrl.u32 %v390, 7
        %v392 = vsub.s32 1, %v391
        %v393 = vrot.slane %v384, %v392
        %v396 = vmul.f32 %v382, %v389
        %v397 = vmul.f32 %v379, %v393
        %s398 = scalar_lea.vmem %s2, 8
        %v399 = vld [vmem:[%s398] sm:$0xff]
        %vm400 = vcmask 31744
        %v402 = vsel %vm400, %v399, 0
        %vm404 = vcmask 1043456
        %v406 = vsel %vm404, %v396, 0
        %v409 = vsel %vm404, %v397, 0
        %v411 = vand.u32 %v409, 4294901760
        %412 = vmatprep.subr.mxu0 %v411
        %v413 = vand.u32 %v406, 4294901760
        %414 = vmatpush1.msra.mxu0 %v413
        %415 = vmatprep.subr.mxu0 0.0
        %416 = vmatpush1.msra.mxu0 0.0
        %417 = vmatprep.subr.mxu0 0.0
        %418 = vmatpush1.msra.mxu0 0.0
        %419 = vmatprep.subr.mxu0 0.0
        %420 = vmatpush1.msra.mxu0 0.0
        %421 = vmatprep.subr.mxu0 0.0
        %422 = vmatpush1.msra.mxu0 0.0
        %423 = vmatprep.subr.mxu0 0.0
        %424 = vmatpush1.msra.mxu0 0.0
        %425 = vmatprep.subr.mxu0 0.0
        %426 = vmatpush1.msra.mxu0 0.0
        %427 = vmatprep.subr.mxu0 0.0
        %428 = vmatpush1.msra.mxu0 0.0
        %429 = vmatprep.subr.mxu0 0.0
        %430 = vmatpush1.msra.mxu0 0.0
        %431 = vmatprep.subr.mxu0 0.0
        %432 = vmatpush1.msra.mxu0 0.0
        %433 = vmatprep.subr.mxu0 0.0
        %434 = vmatpush1.msra.mxu0 0.0
        %435 = vmatprep.subr.mxu0 0.0
        %436 = vmatpush1.msra.mxu0 0.0
        %437 = vmatprep.subr.mxu0 0.0
        %438 = vmatpush1.msra.mxu0 0.0
        %439 = vmatprep.subr.mxu0 0.0
        %440 = vmatpush1.msra.mxu0 0.0
        %441 = vmatprep.subr.mxu0 0.0
        %442 = vmatpush1.msra.mxu0 0.0
        %443 = vmatprep.subr.mxu0 0.0
        %444 = vmatpush1.msra.mxu0 0.0
        %445 = vmatprep.subr.mxu0 0.0
        %446 = vmatpush1.msra.mxu0 0.0
        %447 = vmatprep.subr.mxu0 0.0
        %448 = vmatpush1.msra.mxu0 0.0
        %449 = vmatprep.subr.mxu0 0.0
        %450 = vmatpush1.msra.mxu0 0.0
        %451 = vmatprep.subr.mxu0 0.0
        %452 = vmatpush1.msra.mxu0 0.0
        %453 = vmatprep.subr.mxu0 0.0
        %454 = vmatpush1.msra.mxu0 0.0
        %455 = vmatprep.subr.mxu0 0.0
        %456 = vmatpush1.msra.mxu0 0.0
        %457 = vmatprep.subr.mxu0 0.0
        %458 = vmatpush1.msra.mxu0 0.0
        %459 = vmatprep.subr.mxu0 0.0
        %460 = vmatpush1.msra.mxu0 0.0
        %461 = vmatprep.subr.mxu0 0.0
        %462 = vmatpush1.msra.mxu0 0.0
        %463 = vmatprep.subr.mxu0 0.0
        %464 = vmatpush1.msra.mxu0 0.0
        %465 = vmatprep.subr.mxu0 0.0
        %466 = vmatpush1.msra.mxu0 0.0
        %467 = vmatprep.subr.mxu0 0.0
        %468 = vmatpush1.msra.mxu0 0.0
        %469 = vmatprep.subr.mxu0 0.0
        %470 = vmatpush1.msra.mxu0 0.0
        %471 = vmatprep.subr.mxu0 0.0
        %472 = vmatpush1.msra.mxu0 0.0
        %473 = vmatprep.subr.mxu0 0.0
        %474 = vmatpush1.msra.mxu0 0.0
        %475 = vmatprep.subr.mxu0 0.0
        %476 = vmatpush1.msra.mxu0 0.0
        %477 = vmatprep.mubr.f32.mxu0 0.0
        %v478 = vand.u32 %v402, 4294901760
        %v479 = vsub.f32 %v402, %v478
        %v480 = vand.u32 %v479, 4294901760
        %v481 = vsub.f32 %v479, %v480
        %v482 = vand.u32 %v481, 4294901760
        %483 = vmatmul.mubr.f32.gmra.mrb[0].mxu0 %v482
        %v484 = vpop.f32.mrb[0].mxu0
        %v485 = vadd.f32 0.0, %v484
        %v486 = vpop.f32.mrb[0].mxu0
        %v487 = vadd.f32 0.0, %v486
        %488 = vdwg.mxu0
        %v489 = vand.u32 %v409, 4294901760
        %v490 = vsub.f32 %v409, %v489
        %v491 = vand.u32 %v490, 4294901760
        %v492 = vsub.f32 %v490, %v491
        %v493 = vand.u32 %v492, 4294901760
        %494 = vmatprep.subr.mxu0 %v493
        %v495 = vand.u32 %v406, 4294901760
        %v496 = vsub.f32 %v406, %v495
        %v497 = vand.u32 %v496, 4294901760
        %v498 = vsub.f32 %v496, %v497
        %v499 = vand.u32 %v498, 4294901760
        %500 = vmatpush1.msra.mxu0 %v499
        %501 = vmatprep.subr.mxu0 0.0
        %502 = vmatpush1.msra.mxu0 0.0
        %503 = vmatprep.subr.mxu0 0.0
        %504 = vmatpush1.msra.mxu0 0.0
        %505 = vmatprep.subr.mxu0 0.0
        %506 = vmatpush1.msra.mxu0 0.0
        %507 = vmatprep.subr.mxu0 0.0
        %508 = vmatpush1.msra.mxu0 0.0
        %509 = vmatprep.subr.mxu0 0.0
        %510 = vmatpush1.msra.mxu0 0.0
        %511 = vmatprep.subr.mxu0 0.0
        %512 = vmatpush1.msra.mxu0 0.0
        %513 = vmatprep.subr.mxu0 0.0
        %514 = vmatpush1.msra.mxu0 0.0
        %515 = vmatprep.subr.mxu0 0.0
        %516 = vmatpush1.msra.mxu0 0.0
        %517 = vmatprep.subr.mxu0 0.0
        %518 = vmatpush1.msra.mxu0 0.0
        %519 = vmatprep.subr.mxu0 0.0
        %520 = vmatpush1.msra.mxu0 0.0
        %521 = vmatprep.subr.mxu0 0.0
        %522 = vmatpush1.msra.mxu0 0.0
        %523 = vmatprep.subr.mxu0 0.0
        %524 = vmatpush1.msra.mxu0 0.0
        %525 = vmatprep.subr.mxu0 0.0
        %526 = vmatpush1.msra.mxu0 0.0
        %527 = vmatprep.subr.mxu0 0.0
        %528 = vmatpush1.msra.mxu0 0.0
        %529 = vmatprep.subr.mxu0 0.0
        %530 = vmatpush1.msra.mxu0 0.0
        %531 = vmatprep.subr.mxu0 0.0
        %532 = vmatpush1.msra.mxu0 0.0
        %533 = vmatprep.subr.mxu0 0.0
        %534 = vmatpush1.msra.mxu0 0.0
        %535 = vmatprep.subr.mxu0 0.0
        %536 = vmatpush1.msra.mxu0 0.0
        %537 = vmatprep.subr.mxu0 0.0
        %538 = vmatpush1.msra.mxu0 0.0
        %539 = vmatprep.subr.mxu0 0.0
        %540 = vmatpush1.msra.mxu0 0.0
        %541 = vmatprep.subr.mxu0 0.0
        %542 = vmatpush1.msra.mxu0 0.0
        %543 = vmatprep.subr.mxu0 0.0
        %544 = vmatpush1.msra.mxu0 0.0
        %545 = vmatprep.subr.mxu0 0.0
        %546 = vmatpush1.msra.mxu0 0.0
        %547 = vmatprep.subr.mxu0 0.0
        %548 = vmatpush1.msra.mxu0 0.0
        %549 = vmatprep.subr.mxu0 0.0
        %550 = vmatpush1.msra.mxu0 0.0
        %551 = vmatprep.subr.mxu0 0.0
        %552 = vmatpush1.msra.mxu0 0.0
        %553 = vmatprep.subr.mxu0 0.0
        %554 = vmatpush1.msra.mxu0 0.0
        %555 = vmatprep.subr.mxu0 0.0
        %556 = vmatpush1.msra.mxu0 0.0
        %557 = vmatprep.subr.mxu0 0.0
        %558 = vmatpush1.msra.mxu0 0.0
        %559 = vmatprep.subr.mxu0 0.0
        %560 = vmatpush1.msra.mxu0 0.0
        %561 = vmatprep.subr.mxu0 0.0
        %562 = vmatpush1.msra.mxu0 0.0
        %563 = vmatprep.mubr.f32.mxu0 0.0
        %v564 = vand.u32 %v402, 4294901760
        %565 = vmatmul.mubr.f32.gmra.mrb[0].mxu0 %v564
        %v566 = vpop.f32.mrb[0].mxu0
        %v567 = vadd.f32 %v485, %v566
        %v568 = vpop.f32.mrb[0].mxu0
        %v569 = vadd.f32 %v487, %v568
        %570 = vdwg.mxu0
        %v571 = vand.u32 %v409, 4294901760
        %v572 = vsub.f32 %v409, %v571
        %573 = vmatprep.subr.mxu0 %v572
        %v574 = vand.u32 %v406, 4294901760
        %v575 = vsub.f32 %v406, %v574
        %576 = vmatpush1.msra.mxu0 %v575
        %577 = vmatprep.subr.mxu0 0.0
        %578 = vmatpush1.msra.mxu0 0.0
        %579 = vmatprep.subr.mxu0 0.0
        %580 = vmatpush1.msra.mxu0 0.0
        %581 = vmatprep.subr.mxu0 0.0
        %582 = vmatpush1.msra.mxu0 0.0
        %583 = vmatprep.subr.mxu0 0.0
        %584 = vmatpush1.msra.mxu0 0.0
        %585 = vmatprep.subr.mxu0 0.0
        %586 = vmatpush1.msra.mxu0 0.0
        %587 = vmatprep.subr.mxu0 0.0
        %588 = vmatpush1.msra.mxu0 0.0
        %589 = vmatprep.subr.mxu0 0.0
        %590 = vmatpush1.msra.mxu0 0.0
        %591 = vmatprep.subr.mxu0 0.0
        %592 = vmatpush1.msra.mxu0 0.0
        %593 = vmatprep.subr.mxu0 0.0
        %594 = vmatpush1.msra.mxu0 0.0
        %595 = vmatprep.subr.mxu0 0.0
        %596 = vmatpush1.msra.mxu0 0.0
        %597 = vmatprep.subr.mxu0 0.0
        %598 = vmatpush1.msra.mxu0 0.0
        %599 = vmatprep.subr.mxu0 0.0
        %600 = vmatpush1.msra.mxu0 0.0
        %601 = vmatprep.subr.mxu0 0.0
        %602 = vmatpush1.msra.mxu0 0.0
        %603 = vmatprep.subr.mxu0 0.0
        %604 = vmatpush1.msra.mxu0 0.0
        %605 = vmatprep.subr.mxu0 0.0
        %606 = vmatpush1.msra.mxu0 0.0
        %607 = vmatprep.subr.mxu0 0.0
        %608 = vmatpush1.msra.mxu0 0.0
        %609 = vmatprep.subr.mxu0 0.0
        %610 = vmatpush1.msra.mxu0 0.0
        %611 = vmatprep.subr.mxu0 0.0
        %612 = vmatpush1.msra.mxu0 0.0
        %613 = vmatprep.subr.mxu0 0.0
        %614 = vmatpush1.msra.mxu0 0.0
        %615 = vmatprep.subr.mxu0 0.0
        %616 = vmatpush1.msra.mxu0 0.0
        %617 = vmatprep.subr.mxu0 0.0
        %618 = vmatpush1.msra.mxu0 0.0
        %619 = vmatprep.subr.mxu0 0.0
        %620 = vmatpush1.msra.mxu0 0.0
        %621 = vmatprep.subr.mxu0 0.0
        %622 = vmatpush1.msra.mxu0 0.0
        %623 = vmatprep.subr.mxu0 0.0
        %624 = vmatpush1.msra.mxu0 0.0
        %625 = vmatprep.subr.mxu0 0.0
        %626 = vmatpush1.msra.mxu0 0.0
        %627 = vmatprep.subr.mxu0 0.0
        %628 = vmatpush1.msra.mxu0 0.0
        %629 = vmatprep.subr.mxu0 0.0
        %630 = vmatpush1.msra.mxu0 0.0
        %631 = vmatprep.subr.mxu0 0.0
        %632 = vmatpush1.msra.mxu0 0.0
        %633 = vmatprep.subr.mxu0 0.0
        %634 = vmatpush1.msra.mxu0 0.0
        %635 = vmatprep.subr.mxu0 0.0
        %636 = vmatpush1.msra.mxu0 0.0
        %637 = vmatprep.subr.mxu0 0.0
        %638 = vmatpush1.msra.mxu0 0.0
        %639 = vmatprep.mubr.f32.mxu0 0.0
        %v640 = vand.u32 %v402, 4294901760
        %v641 = vsub.f32 %v402, %v640
        %642 = vmatmul.mubr.f32.gmra.mrb[0].mxu0 %v641
        %v643 = vpop.f32.mrb[0].mxu0
        %v644 = vadd.f32 %v567, %v643
        %v645 = vpop.f32.mrb[0].mxu0
        %v646 = vadd.f32 %v569, %v645
        %647 = vdwg.mxu0
        %v648 = vand.u32 %v409, 4294901760
        %649 = vmatprep.subr.mxu0 %v648
        %v650 = vand.u32 %v406, 4294901760
        %651 = vmatpush1.msra.mxu0 %v650
        %652 = vmatprep.subr.mxu0 0.0
        %653 = vmatpush1.msra.mxu0 0.0
        %654 = vmatprep.subr.mxu0 0.0
        %655 = vmatpush1.msra.mxu0 0.0
        %656 = vmatprep.subr.mxu0 0.0
        %657 = vmatpush1.msra.mxu0 0.0
        %658 = vmatprep.subr.mxu0 0.0
        %659 = vmatpush1.msra.mxu0 0.0
        %660 = vmatprep.subr.mxu0 0.0
        %661 = vmatpush1.msra.mxu0 0.0
        %662 = vmatprep.subr.mxu0 0.0
        %663 = vmatpush1.msra.mxu0 0.0
        %664 = vmatprep.subr.mxu0 0.0
        %665 = vmatpush1.msra.mxu0 0.0
        %666 = vmatprep.subr.mxu0 0.0
        %667 = vmatpush1.msra.mxu0 0.0
        %668 = vmatprep.subr.mxu0 0.0
        %669 = vmatpush1.msra.mxu0 0.0
        %670 = vmatprep.subr.mxu0 0.0
        %671 = vmatpush1.msra.mxu0 0.0
        %672 = vmatprep.subr.mxu0 0.0
        %673 = vmatpush1.msra.mxu0 0.0
        %674 = vmatprep.subr.mxu0 0.0
        %675 = vmatpush1.msra.mxu0 0.0
        %676 = vmatprep.subr.mxu0 0.0
        %677 = vmatpush1.msra.mxu0 0.0
        %678 = vmatprep.subr.mxu0 0.0
        %679 = vmatpush1.msra.mxu0 0.0
        %680 = vmatprep.subr.mxu0 0.0
        %681 = vmatpush1.msra.mxu0 0.0
        %682 = vmatprep.subr.mxu0 0.0
        %683 = vmatpush1.msra.mxu0 0.0
        %684 = vmatprep.subr.mxu0 0.0
        %685 = vmatpush1.msra.mxu0 0.0
        %686 = vmatprep.subr.mxu0 0.0
        %687 = vmatpush1.msra.mxu0 0.0
        %688 = vmatprep.subr.mxu0 0.0
        %689 = vmatpush1.msra.mxu0 0.0
        %690 = vmatprep.subr.mxu0 0.0
        %691 = vmatpush1.msra.mxu0 0.0
        %692 = vmatprep.subr.mxu0 0.0
        %693 = vmatpush1.msra.mxu0 0.0
        %694 = vmatprep.subr.mxu0 0.0
        %695 = vmatpush1.msra.mxu0 0.0
        %696 = vmatprep.subr.mxu0 0.0
        %697 = vmatpush1.msra.mxu0 0.0
        %698 = vmatprep.subr.mxu0 0.0
        %699 = vmatpush1.msra.mxu0 0.0
        %700 = vmatprep.subr.mxu0 0.0
        %701 = vmatpush1.msra.mxu0 0.0
        %702 = vmatprep.subr.mxu0 0.0
        %703 = vmatpush1.msra.mxu0 0.0
        %704 = vmatprep.subr.mxu0 0.0
        %705 = vmatpush1.msra.mxu0 0.0
        %706 = vmatprep.subr.mxu0 0.0
        %707 = vmatpush1.msra.mxu0 0.0
        %708 = vmatprep.subr.mxu0 0.0
        %709 = vmatpush1.msra.mxu0 0.0
        %710 = vmatprep.subr.mxu0 0.0
        %711 = vmatpush1.msra.mxu0 0.0
        %712 = vmatprep.subr.mxu0 0.0
        %713 = vmatpush1.msra.mxu0 0.0
        %714 = vmatprep.mubr.f32.mxu0 0.0
        %v715 = vand.u32 %v402, 4294901760
        %v716 = vsub.f32 %v402, %v715
        %v717 = vand.u32 %v716, 4294901760
        %718 = vmatmul.mubr.f32.gmra.mrb[0].mxu0 %v717
        %v719 = vpop.f32.mrb[0].mxu0
        %v720 = vadd.f32 %v644, %v719
        %v721 = vpop.f32.mrb[0].mxu0
        %v722 = vadd.f32 %v646, %v721
        %723 = vdwg.mxu0
        %v724 = vand.u32 %v409, 4294901760
        %v725 = vsub.f32 %v409, %v724
        %v726 = vand.u32 %v725, 4294901760
        %727 = vmatprep.subr.mxu0 %v726
        %v728 = vand.u32 %v406, 4294901760
        %v729 = vsub.f32 %v406, %v728
        %v730 = vand.u32 %v729, 4294901760
        %731 = vmatpush1.msra.mxu0 %v730
        %732 = vmatprep.subr.mxu0 0.0
        %733 = vmatpush1.msra.mxu0 0.0
        %734 = vmatprep.subr.mxu0 0.0
        %735 = vmatpush1.msra.mxu0 0.0
        %736 = vmatprep.subr.mxu0 0.0
        %737 = vmatpush1.msra.mxu0 0.0
        %738 = vmatprep.subr.mxu0 0.0
        %739 = vmatpush1.msra.mxu0 0.0
        %740 = vmatprep.subr.mxu0 0.0
        %741 = vmatpush1.msra.mxu0 0.0
        %742 = vmatprep.subr.mxu0 0.0
        %743 = vmatpush1.msra.mxu0 0.0
        %744 = vmatprep.subr.mxu0 0.0
        %745 = vmatpush1.msra.mxu0 0.0
        %746 = vmatprep.subr.mxu0 0.0
        %747 = vmatpush1.msra.mxu0 0.0
        %748 = vmatprep.subr.mxu0 0.0
        %749 = vmatpush1.msra.mxu0 0.0
        %750 = vmatprep.subr.mxu0 0.0
        %751 = vmatpush1.msra.mxu0 0.0
        %752 = vmatprep.subr.mxu0 0.0
        %753 = vmatpush1.msra.mxu0 0.0
        %754 = vmatprep.subr.mxu0 0.0
        %755 = vmatpush1.msra.mxu0 0.0
        %756 = vmatprep.subr.mxu0 0.0
        %757 = vmatpush1.msra.mxu0 0.0
        %758 = vmatprep.subr.mxu0 0.0
        %759 = vmatpush1.msra.mxu0 0.0
        %760 = vmatprep.subr.mxu0 0.0
        %761 = vmatpush1.msra.mxu0 0.0
        %762 = vmatprep.subr.mxu0 0.0
        %763 = vmatpush1.msra.mxu0 0.0
        %764 = vmatprep.subr.mxu0 0.0
        %765 = vmatpush1.msra.mxu0 0.0
        %766 = vmatprep.subr.mxu0 0.0
        %767 = vmatpush1.msra.mxu0 0.0
        %768 = vmatprep.subr.mxu0 0.0
        %769 = vmatpush1.msra.mxu0 0.0
        %770 = vmatprep.subr.mxu0 0.0
        %771 = vmatpush1.msra.mxu0 0.0
        %772 = vmatprep.subr.mxu0 0.0
        %773 = vmatpush1.msra.mxu0 0.0
        %774 = vmatprep.subr.mxu0 0.0
        %775 = vmatpush1.msra.mxu0 0.0
        %776 = vmatprep.subr.mxu0 0.0
        %777 = vmatpush1.msra.mxu0 0.0
        %778 = vmatprep.subr.mxu0 0.0
        %779 = vmatpush1.msra.mxu0 0.0
        %780 = vmatprep.subr.mxu0 0.0
        %781 = vmatpush1.msra.mxu0 0.0
        %782 = vmatprep.subr.mxu0 0.0
        %783 = vmatpush1.msra.mxu0 0.0
        %784 = vmatprep.subr.mxu0 0.0
        %785 = vmatpush1.msra.mxu0 0.0
        %786 = vmatprep.subr.mxu0 0.0
        %787 = vmatpush1.msra.mxu0 0.0
        %788 = vmatprep.subr.mxu0 0.0
        %789 = vmatpush1.msra.mxu0 0.0
        %790 = vmatprep.subr.mxu0 0.0
        %791 = vmatpush1.msra.mxu0 0.0
        %792 = vmatprep.subr.mxu0 0.0
        %793 = vmatpush1.msra.mxu0 0.0
        %794 = vmatprep.mubr.f32.mxu0 0.0
        %v795 = vand.u32 %v402, 4294901760
        %796 = vmatmul.mubr.f32.gmra.mrb[0].mxu0 %v795
        %v797 = vpop.f32.mrb[0].mxu0
        %v798 = vadd.f32 %v720, %v797
        %v799 = vpop.f32.mrb[0].mxu0
        %v800 = vadd.f32 %v722, %v799
        %801 = vdwg.mxu0
        %v802 = vand.u32 %v409, 4294901760
        %803 = vmatprep.subr.mxu0 %v802
        %v804 = vand.u32 %v406, 4294901760
        %805 = vmatpush1.msra.mxu0 %v804
        %806 = vmatprep.subr.mxu0 0.0
        %807 = vmatpush1.msra.mxu0 0.0
        %808 = vmatprep.subr.mxu0 0.0
        %809 = vmatpush1.msra.mxu0 0.0
        %810 = vmatprep.subr.mxu0 0.0
        %811 = vmatpush1.msra.mxu0 0.0
        %812 = vmatprep.subr.mxu0 0.0
        %813 = vmatpush1.msra.mxu0 0.0
        %814 = vmatprep.subr.mxu0 0.0
        %815 = vmatpush1.msra.mxu0 0.0
        %816 = vmatprep.subr.mxu0 0.0
        %817 = vmatpush1.msra.mxu0 0.0
        %818 = vmatprep.subr.mxu0 0.0
        %819 = vmatpush1.msra.mxu0 0.0
        %820 = vmatprep.subr.mxu0 0.0
        %821 = vmatpush1.msra.mxu0 0.0
        %822 = vmatprep.subr.mxu0 0.0
        %823 = vmatpush1.msra.mxu0 0.0
        %824 = vmatprep.subr.mxu0 0.0
        %825 = vmatpush1.msra.mxu0 0.0
        %826 = vmatprep.subr.mxu0 0.0
        %827 = vmatpush1.msra.mxu0 0.0
        %828 = vmatprep.subr.mxu0 0.0
        %829 = vmatpush1.msra.mxu0 0.0
        %830 = vmatprep.subr.mxu0 0.0
        %831 = vmatpush1.msra.mxu0 0.0
        %832 = vmatprep.subr.mxu0 0.0
        %833 = vmatpush1.msra.mxu0 0.0
        %834 = vmatprep.subr.mxu0 0.0
        %835 = vmatpush1.msra.mxu0 0.0
        %836 = vmatprep.subr.mxu0 0.0
        %837 = vmatpush1.msra.mxu0 0.0
        %838 = vmatprep.subr.mxu0 0.0
        %839 = vmatpush1.msra.mxu0 0.0
        %840 = vmatprep.subr.mxu0 0.0
        %841 = vmatpush1.msra.mxu0 0.0
        %842 = vmatprep.subr.mxu0 0.0
        %843 = vmatpush1.msra.mxu0 0.0
        %844 = vmatprep.subr.mxu0 0.0
        %845 = vmatpush1.msra.mxu0 0.0
        %846 = vmatprep.subr.mxu0 0.0
        %847 = vmatpush1.msra.mxu0 0.0
        %848 = vmatprep.subr.mxu0 0.0
        %849 = vmatpush1.msra.mxu0 0.0
        %850 = vmatprep.subr.mxu0 0.0
        %851 = vmatpush1.msra.mxu0 0.0
        %852 = vmatprep.subr.mxu0 0.0
        %853 = vmatpush1.msra.mxu0 0.0
        %854 = vmatprep.subr.mxu0 0.0
        %855 = vmatpush1.msra.mxu0 0.0
        %856 = vmatprep.subr.mxu0 0.0
        %857 = vmatpush1.msra.mxu0 0.0
        %858 = vmatprep.subr.mxu0 0.0
        %859 = vmatpush1.msra.mxu0 0.0
        %860 = vmatprep.subr.mxu0 0.0
        %861 = vmatpush1.msra.mxu0 0.0
        %862 = vmatprep.subr.mxu0 0.0
        %863 = vmatpush1.msra.mxu0 0.0
        %864 = vmatprep.subr.mxu0 0.0
        %865 = vmatpush1.msra.mxu0 0.0
        %866 = vmatprep.subr.mxu0 0.0
        %867 = vmatpush1.msra.mxu0 0.0
        %868 = vmatprep.mubr.f32.mxu0 0.0
        %v869 = vand.u32 %v402, 4294901760
        %870 = vmatmul.mubr.f32.gmra.mrb[0].mxu0 %v869
        %v871 = vpop.f32.mrb[0].mxu0
        %v872 = vadd.f32 %v798, %v871
        %v873 = vpop.f32.mrb[0].mxu0
        %v874 = vadd.f32 %v800, %v873
        %875 = vdwg.mxu0
        %v877 = vsel %vm400, %v372, 0
        %v880 = vsel %vm404, %v370, 0
        %v883 = vsel %vm404, %v371, 0
        %v885 = vand.u32 %v883, 4294901760
        %886 = vmatprep.subr.mxu0 %v885
        %v887 = vand.u32 %v880, 4294901760
        %888 = vmatpush1.msra.mxu0 %v887
        %889 = vmatprep.subr.mxu0 0.0
        %890 = vmatpush1.msra.mxu0 0.0
        %891 = vmatprep.subr.mxu0 0.0
        %892 = vmatpush1.msra.mxu0 0.0
        %893 = vmatprep.subr.mxu0 0.0
        %894 = vmatpush1.msra.mxu0 0.0
        %895 = vmatprep.subr.mxu0 0.0
        %896 = vmatpush1.msra.mxu0 0.0
        %897 = vmatprep.subr.mxu0 0.0
        %898 = vmatpush1.msra.mxu0 0.0
        %899 = vmatprep.subr.mxu0 0.0
        %900 = vmatpush1.msra.mxu0 0.0
        %901 = vmatprep.subr.mxu0 0.0
        %902 = vmatpush1.msra.mxu0 0.0
        %903 = vmatprep.subr.mxu0 0.0
        %904 = vmatpush1.msra.mxu0 0.0
        %905 = vmatprep.subr.mxu0 0.0
        %906 = vmatpush1.msra.mxu0 0.0
        %907 = vmatprep.subr.mxu0 0.0
        %908 = vmatpush1.msra.mxu0 0.0
        %909 = vmatprep.subr.mxu0 0.0
        %910 = vmatpush1.msra.mxu0 0.0
        %911 = vmatprep.subr.mxu0 0.0
        %912 = vmatpush1.msra.mxu0 0.0
        %913 = vmatprep.subr.mxu0 0.0
        %914 = vmatpush1.msra.mxu0 0.0
        %915 = vmatprep.subr.mxu0 0.0
        %916 = vmatpush1.msra.mxu0 0.0
        %917 = vmatprep.subr.mxu0 0.0
        %918 = vmatpush1.msra.mxu0 0.0
        %919 = vmatprep.subr.mxu0 0.0
        %920 = vmatpush1.msra.mxu0 0.0
        %921 = vmatprep.subr.mxu0 0.0
        %922 = vmatpush1.msra.mxu0 0.0
        %923 = vmatprep.subr.mxu0 0.0
        %924 = vmatpush1.msra.mxu0 0.0
        %925 = vmatprep.subr.mxu0 0.0
        %926 = vmatpush1.msra.mxu0 0.0
        %927 = vmatprep.subr.mxu0 0.0
        %928 = vmatpush1.msra.mxu0 0.0
        %929 = vmatprep.subr.mxu0 0.0
        %930 = vmatpush1.msra.mxu0 0.0
        %931 = vmatprep.subr.mxu0 0.0
        %932 = vmatpush1.msra.mxu0 0.0
        %933 = vmatprep.subr.mxu0 0.0
        %934 = vmatpush1.msra.mxu0 0.0
        %935 = vmatprep.subr.mxu0 0.0
        %936 = vmatpush1.msra.mxu0 0.0
        %937 = vmatprep.subr.mxu0 0.0
        %938 = vmatpush1.msra.mxu0 0.0
        %939 = vmatprep.subr.mxu0 0.0
        %940 = vmatpush1.msra.mxu0 0.0
        %941 = vmatprep.subr.mxu0 0.0
        %942 = vmatpush1.msra.mxu0 0.0
        %943 = vmatprep.subr.mxu0 0.0
        %944 = vmatpush1.msra.mxu0 0.0
        %945 = vmatprep.subr.mxu0 0.0
        %946 = vmatpush1.msra.mxu0 0.0
        %947 = vmatprep.subr.mxu0 0.0
        %948 = vmatpush1.msra.mxu0 0.0
        %949 = vmatprep.subr.mxu0 0.0
        %950 = vmatpush1.msra.mxu0 0.0
        %951 = vmatprep.mubr.f32.mxu0 0.0
        %v952 = vand.u32 %v877, 4294901760
        %v953 = vsub.f32 %v877, %v952
        %v954 = vand.u32 %v953, 4294901760
        %v955 = vsub.f32 %v953, %v954
        %v956 = vand.u32 %v955, 4294901760
        %957 = vmatmul.mubr.f32.gmra.mrb[0].mxu0 %v956
        %v958 = vpop.f32.mrb[0].mxu0
        %v959 = vadd.f32 %v872, %v958
        %v960 = vpop.f32.mrb[0].mxu0
        %v961 = vadd.f32 %v874, %v960
        %962 = vdwg.mxu0
        %v963 = vand.u32 %v883, 4294901760
        %v964 = vsub.f32 %v883, %v963
        %v965 = vand.u32 %v964, 4294901760
        %v966 = vsub.f32 %v964, %v965
        %v967 = vand.u32 %v966, 4294901760
        %968 = vmatprep.subr.mxu0 %v967
        %v969 = vand.u32 %v880, 4294901760
        %v970 = vsub.f32 %v880, %v969
        %v971 = vand.u32 %v970, 4294901760
        %v972 = vsub.f32 %v970, %v971
        %v973 = vand.u32 %v972, 4294901760
        %974 = vmatpush1.msra.mxu0 %v973
        %975 = vmatprep.subr.mxu0 0.0
        %976 = vmatpush1.msra.mxu0 0.0
        %977 = vmatprep.subr.mxu0 0.0
        %978 = vmatpush1.msra.mxu0 0.0
        %979 = vmatprep.subr.mxu0 0.0
        %980 = vmatpush1.msra.mxu0 0.0
        %981 = vmatprep.subr.mxu0 0.0
        %982 = vmatpush1.msra.mxu0 0.0
        %983 = vmatprep.subr.mxu0 0.0
        %984 = vmatpush1.msra.mxu0 0.0
        %985 = vmatprep.subr.mxu0 0.0
        %986 = vmatpush1.msra.mxu0 0.0
        %987 = vmatprep.subr.mxu0 0.0
        %988 = vmatpush1.msra.mxu0 0.0
        %989 = vmatprep.subr.mxu0 0.0
        %990 = vmatpush1.msra.mxu0 0.0
        %991 = vmatprep.subr.mxu0 0.0
        %992 = vmatpush1.msra.mxu0 0.0
        %993 = vmatprep.subr.mxu0 0.0
        %994 = vmatpush1.msra.mxu0 0.0
        %995 = vmatprep.subr.mxu0 0.0
        %996 = vmatpush1.msra.mxu0 0.0
        %997 = vmatprep.subr.mxu0 0.0
        %998 = vmatpush1.msra.mxu0 0.0
        %999 = vmatprep.subr.mxu0 0.0
        %1000 = vmatpush1.msra.mxu0 0.0
        %1001 = vmatprep.subr.mxu0 0.0
        %1002 = vmatpush1.msra.mxu0 0.0
        %1003 = vmatprep.subr.mxu0 0.0
        %1004 = vmatpush1.msra.mxu0 0.0
        %1005 = vmatprep.subr.mxu0 0.0
        %1006 = vmatpush1.msra.mxu0 0.0
        %1007 = vmatprep.subr.mxu0 0.0
        %1008 = vmatpush1.msra.mxu0 0.0
        %1009 = vmatprep.subr.mxu0 0.0
        %1010 = vmatpush1.msra.mxu0 0.0
        %1011 = vmatprep.subr.mxu0 0.0
        %1012 = vmatpush1.msra.mxu0 0.0
        %1013 = vmatprep.subr.mxu0 0.0
        %1014 = vmatpush1.msra.mxu0 0.0
        %1015 = vmatprep.subr.mxu0 0.0
        %1016 = vmatpush1.msra.mxu0 0.0
        %1017 = vmatprep.subr.mxu0 0.0
        %1018 = vmatpush1.msra.mxu0 0.0
        %1019 = vmatprep.subr.mxu0 0.0
        %1020 = vmatpush1.msra.mxu0 0.0
        %1021 = vmatprep.subr.mxu0 0.0
        %1022 = vmatpush1.msra.mxu0 0.0
        %1023 = vmatprep.subr.mxu0 0.0
        %1024 = vmatpush1.msra.mxu0 0.0
        %1025 = vmatprep.subr.mxu0 0.0
        %1026 = vmatpush1.msra.mxu0 0.0
        %1027 = vmatprep.subr.mxu0 0.0
        %1028 = vmatpush1.msra.mxu0 0.0
        %1029 = vmatprep.subr.mxu0 0.0
        %1030 = vmatpush1.msra.mxu0 0.0
        %1031 = vmatprep.subr.mxu0 0.0
        %1032 = vmatpush1.msra.mxu0 0.0
        %1033 = vmatprep.subr.mxu0 0.0
        %1034 = vmatpush1.msra.mxu0 0.0
        %1035 = vmatprep.subr.mxu0 0.0
        %1036 = vmatpush1.msra.mxu0 0.0
        %1037 = vmatprep.mubr.f32.mxu0 0.0
        %v1038 = vand.u32 %v877, 4294901760
        %1039 = vmatmul.mubr.f32.gmra.mrb[0].mxu0 %v1038
        %v1040 = vpop.f32.mrb[0].mxu0
        %v1041 = vadd.f32 %v959, %v1040
        %v1042 = vpop.f32.mrb[0].mxu0
        %v1043 = vadd.f32 %v961, %v1042
        %1044 = vdwg.mxu0
        %v1045 = vand.u32 %v883, 4294901760
        %v1046 = vsub.f32 %v883, %v1045
        %1047 = vmatprep.subr.mxu0 %v1046
        %v1048 = vand.u32 %v880, 4294901760
        %v1049 = vsub.f32 %v880, %v1048
        %1050 = vmatpush1.msra.mxu0 %v1049
        %1051 = vmatprep.subr.mxu0 0.0
        %1052 = vmatpush1.msra.mxu0 0.0
        %1053 = vmatprep.subr.mxu0 0.0
        %1054 = vmatpush1.msra.mxu0 0.0
        %1055 = vmatprep.subr.mxu0 0.0
        %1056 = vmatpush1.msra.mxu0 0.0
        %1057 = vmatprep.subr.mxu0 0.0
        %1058 = vmatpush1.msra.mxu0 0.0
        %1059 = vmatprep.subr.mxu0 0.0
        %1060 = vmatpush1.msra.mxu0 0.0
        %1061 = vmatprep.subr.mxu0 0.0
        %1062 = vmatpush1.msra.mxu0 0.0
        %1063 = vmatprep.subr.mxu0 0.0
        %1064 = vmatpush1.msra.mxu0 0.0
        %1065 = vmatprep.subr.mxu0 0.0
        %1066 = vmatpush1.msra.mxu0 0.0
        %1067 = vmatprep.subr.mxu0 0.0
        %1068 = vmatpush1.msra.mxu0 0.0
        %1069 = vmatprep.subr.mxu0 0.0
        %1070 = vmatpush1.msra.mxu0 0.0
        %1071 = vmatprep.subr.mxu0 0.0
        %1072 = vmatpush1.msra.mxu0 0.0
        %1073 = vmatprep.subr.mxu0 0.0
        %1074 = vmatpush1.msra.mxu0 0.0
        %1075 = vmatprep.subr.mxu0 0.0
        %1076 = vmatpush1.msra.mxu0 0.0
        %1077 = vmatprep.subr.mxu0 0.0
        %1078 = vmatpush1.msra.mxu0 0.0
        %1079 = vmatprep.subr.mxu0 0.0
        %1080 = vmatpush1.msra.mxu0 0.0
        %1081 = vmatprep.subr.mxu0 0.0
        %1082 = vmatpush1.msra.mxu0 0.0
        %1083 = vmatprep.subr.mxu0 0.0
        %1084 = vmatpush1.msra.mxu0 0.0
        %1085 = vmatprep.subr.mxu0 0.0
        %1086 = vmatpush1.msra.mxu0 0.0
        %1087 = vmatprep.subr.mxu0 0.0
        %1088 = vmatpush1.msra.mxu0 0.0
        %1089 = vmatprep.subr.mxu0 0.0
        %1090 = vmatpush1.msra.mxu0 0.0
        %1091 = vmatprep.subr.mxu0 0.0
        %1092 = vmatpush1.msra.mxu0 0.0
        %1093 = vmatprep.subr.mxu0 0.0
        %1094 = vmatpush1.msra.mxu0 0.0
        %1095 = vmatprep.subr.mxu0 0.0
        %1096 = vmatpush1.msra.mxu0 0.0
        %1097 = vmatprep.subr.mxu0 0.0
        %1098 = vmatpush1.msra.mxu0 0.0
        %1099 = vmatprep.subr.mxu0 0.0
        %1100 = vmatpush1.msra.mxu0 0.0
        %1101 = vmatprep.subr.mxu0 0.0
        %1102 = vmatpush1.msra.mxu0 0.0
        %1103 = vmatprep.subr.mxu0 0.0
        %1104 = vmatpush1.msra.mxu0 0.0
        %1105 = vmatprep.subr.mxu0 0.0
        %1106 = vmatpush1.msra.mxu0 0.0
        %1107 = vmatprep.subr.mxu0 0.0
        %1108 = vmatpush1.msra.mxu0 0.0
        %1109 = vmatprep.subr.mxu0 0.0
        %1110 = vmatpush1.msra.mxu0 0.0
        %1111 = vmatprep.subr.mxu0 0.0
        %1112 = vmatpush1.msra.mxu0 0.0
        %1113 = vmatprep.mubr.f32.mxu0 0.0
        %v1114 = vand.u32 %v877, 4294901760
        %v1115 = vsub.f32 %v877, %v1114
        %1116 = vmatmul.mubr.f32.gmra.mrb[0].mxu0 %v1115
        %v1117 = vpop.f32.mrb[0].mxu0
        %v1118 = vadd.f32 %v1041, %v1117
        %v1119 = vpop.f32.mrb[0].mxu0
        %v1120 = vadd.f32 %v1043, %v1119
        %1121 = vdwg.mxu0
        %v1122 = vand.u32 %v883, 4294901760
        %1123 = vmatprep.subr.mxu0 %v1122
        %v1124 = vand.u32 %v880, 4294901760
        %1125 = vmatpush1.msra.mxu0 %v1124
        %1126 = vmatprep.subr.mxu0 0.0
        %1127 = vmatpush1.msra.mxu0 0.0
        %1128 = vmatprep.subr.mxu0 0.0
        %1129 = vmatpush1.msra.mxu0 0.0
        %1130 = vmatprep.subr.mxu0 0.0
        %1131 = vmatpush1.msra.mxu0 0.0
        %1132 = vmatprep.subr.mxu0 0.0
        %1133 = vmatpush1.msra.mxu0 0.0
        %1134 = vmatprep.subr.mxu0 0.0
        %1135 = vmatpush1.msra.mxu0 0.0
        %1136 = vmatprep.subr.mxu0 0.0
        %1137 = vmatpush1.msra.mxu0 0.0
        %1138 = vmatprep.subr.mxu0 0.0
        %1139 = vmatpush1.msra.mxu0 0.0
        %1140 = vmatprep.subr.mxu0 0.0
        %1141 = vmatpush1.msra.mxu0 0.0
        %1142 = vmatprep.subr.mxu0 0.0
        %1143 = vmatpush1.msra.mxu0 0.0
        %1144 = vmatprep.subr.mxu0 0.0
        %1145 = vmatpush1.msra.mxu0 0.0
        %1146 = vmatprep.subr.mxu0 0.0
        %1147 = vmatpush1.msra.mxu0 0.0
        %1148 = vmatprep.subr.mxu0 0.0
        %1149 = vmatpush1.msra.mxu0 0.0
        %1150 = vmatprep.subr.mxu0 0.0
        %1151 = vmatpush1.msra.mxu0 0.0
        %1152 = vmatprep.subr.mxu0 0.0
        %1153 = vmatpush1.msra.mxu0 0.0
        %1154 = vmatprep.subr.mxu0 0.0
        %1155 = vmatpush1.msra.mxu0 0.0
        %1156 = vmatprep.subr.mxu0 0.0
        %1157 = vmatpush1.msra.mxu0 0.0
        %1158 = vmatprep.subr.mxu0 0.0
        %1159 = vmatpush1.msra.mxu0 0.0
        %1160 = vmatprep.subr.mxu0 0.0
        %1161 = vmatpush1.msra.mxu0 0.0
        %1162 = vmatprep.subr.mxu0 0.0
        %1163 = vmatpush1.msra.mxu0 0.0
        %1164 = vmatprep.subr.mxu0 0.0
        %1165 = vmatpush1.msra.mxu0 0.0
        %1166 = vmatprep.subr.mxu0 0.0
        %1167 = vmatpush1.msra.mxu0 0.0
        %1168 = vmatprep.subr.mxu0 0.0
        %1169 = vmatpush1.msra.mxu0 0.0
        %1170 = vmatprep.subr.mxu0 0.0
        %1171 = vmatpush1.msra.mxu0 0.0
        %1172 = vmatprep.subr.mxu0 0.0
        %1173 = vmatpush1.msra.mxu0 0.0
        %1174 = vmatprep.subr.mxu0 0.0
        %1175 = vmatpush1.msra.mxu0 0.0
        %1176 = vmatprep.subr.mxu0 0.0
        %1177 = vmatpush1.msra.mxu0 0.0
        %1178 = vmatprep.subr.mxu0 0.0
        %1179 = vmatpush1.msra.mxu0 0.0
        %1180 = vmatprep.subr.mxu0 0.0
        %1181 = vmatpush1.msra.mxu0 0.0
        %1182 = vmatprep.subr.mxu0 0.0
        %1183 = vmatpush1.msra.mxu0 0.0
        %1184 = vmatprep.subr.mxu0 0.0
        %1185 = vmatpush1.msra.mxu0 0.0
        %1186 = vmatprep.subr.mxu0 0.0
        %1187 = vmatpush1.msra.mxu0 0.0
        %1188 = vmatprep.mubr.f32.mxu0 0.0
        %v1189 = vand.u32 %v877, 4294901760
        %v1190 = vsub.f32 %v877, %v1189
        %v1191 = vand.u32 %v1190, 4294901760
        %1192 = vmatmul.mubr.f32.gmra.mrb[0].mxu0 %v1191
        %v1193 = vpop.f32.mrb[0].mxu0
        %v1194 = vadd.f32 %v1118, %v1193
        %v1195 = vpop.f32.mrb[0].mxu0
        %v1196 = vadd.f32 %v1120, %v1195
        %1197 = vdwg.mxu0
        %v1198 = vand.u32 %v883, 4294901760
        %v1199 = vsub.f32 %v883, %v1198
        %v1200 = vand.u32 %v1199, 4294901760
        %1201 = vmatprep.subr.mxu0 %v1200
        %v1202 = vand.u32 %v880, 4294901760
        %v1203 = vsub.f32 %v880, %v1202
        %v1204 = vand.u32 %v1203, 4294901760
        %1205 = vmatpush1.msra.mxu0 %v1204
        %1206 = vmatprep.subr.mxu0 0.0
        %1207 = vmatpush1.msra.mxu0 0.0
        %1208 = vmatprep.subr.mxu0 0.0
        %1209 = vmatpush1.msra.mxu0 0.0
        %1210 = vmatprep.subr.mxu0 0.0
        %1211 = vmatpush1.msra.mxu0 0.0
        %1212 = vmatprep.subr.mxu0 0.0
        %1213 = vmatpush1.msra.mxu0 0.0
        %1214 = vmatprep.subr.mxu0 0.0
        %1215 = vmatpush1.msra.mxu0 0.0
        %1216 = vmatprep.subr.mxu0 0.0
        %1217 = vmatpush1.msra.mxu0 0.0
        %1218 = vmatprep.subr.mxu0 0.0
        %1219 = vmatpush1.msra.mxu0 0.0
        %1220 = vmatprep.subr.mxu0 0.0
        %1221 = vmatpush1.msra.mxu0 0.0
        %1222 = vmatprep.subr.mxu0 0.0
        %1223 = vmatpush1.msra.mxu0 0.0
        %1224 = vmatprep.subr.mxu0 0.0
        %1225 = vmatpush1.msra.mxu0 0.0
        %1226 = vmatprep.subr.mxu0 0.0
        %1227 = vmatpush1.msra.mxu0 0.0
        %1228 = vmatprep.subr.mxu0 0.0
        %1229 = vmatpush1.msra.mxu0 0.0
        %1230 = vmatprep.subr.mxu0 0.0
        %1231 = vmatpush1.msra.mxu0 0.0
        %1232 = vmatprep.subr.mxu0 0.0
        %1233 = vmatpush1.msra.mxu0 0.0
        %1234 = vmatprep.subr.mxu0 0.0
        %1235 = vmatpush1.msra.mxu0 0.0
        %1236 = vmatprep.subr.mxu0 0.0
        %1237 = vmatpush1.msra.mxu0 0.0
        %1238 = vmatprep.subr.mxu0 0.0
        %1239 = vmatpush1.msra.mxu0 0.0
        %1240 = vmatprep.subr.mxu0 0.0
        %1241 = vmatpush1.msra.mxu0 0.0
        %1242 = vmatprep.subr.mxu0 0.0
        %1243 = vmatpush1.msra.mxu0 0.0
        %1244 = vmatprep.subr.mxu0 0.0
        %1245 = vmatpush1.msra.mxu0 0.0
        %1246 = vmatprep.subr.mxu0 0.0
        %1247 = vmatpush1.msra.mxu0 0.0
        %1248 = vmatprep.subr.mxu0 0.0
        %1249 = vmatpush1.msra.mxu0 0.0
        %1250 = vmatprep.subr.mxu0 0.0
        %1251 = vmatpush1.msra.mxu0 0.0
        %1252 = vmatprep.subr.mxu0 0.0
        %1253 = vmatpush1.msra.mxu0 0.0
        %1254 = vmatprep.subr.mxu0 0.0
        %1255 = vmatpush1.msra.mxu0 0.0
        %1256 = vmatprep.subr.mxu0 0.0
        %1257 = vmatpush1.msra.mxu0 0.0
        %1258 = vmatprep.subr.mxu0 0.0
        %1259 = vmatpush1.msra.mxu0 0.0
        %1260 = vmatprep.subr.mxu0 0.0
        %1261 = vmatpush1.msra.mxu0 0.0
        %1262 = vmatprep.subr.mxu0 0.0
        %1263 = vmatpush1.msra.mxu0 0.0
        %1264 = vmatprep.subr.mxu0 0.0
        %1265 = vmatpush1.msra.mxu0 0.0
        %1266 = vmatprep.subr.mxu0 0.0
        %1267 = vmatpush1.msra.mxu0 0.0
        %1268 = vmatprep.mubr.f32.mxu0 0.0
        %v1269 = vand.u32 %v877, 4294901760
        %1270 = vmatmul.mubr.f32.gmra.mrb[0].mxu0 %v1269
        %v1271 = vpop.f32.mrb[0].mxu0
        %v1272 = vadd.f32 %v1194, %v1271
        %v1273 = vpop.f32.mrb[0].mxu0
        %v1274 = vadd.f32 %v1196, %v1273
        %1275 = vdwg.mxu0
        %v1276 = vand.u32 %v883, 4294901760
        %1277 = vmatprep.subr.mxu0 %v1276
        %v1278 = vand.u32 %v880, 4294901760
        %1279 = vmatpush1.msra.mxu0 %v1278
        %1280 = vmatprep.subr.mxu0 0.0
        %1281 = vmatpush1.msra.mxu0 0.0
        %1282 = vmatprep.subr.mxu0 0.0
        %1283 = vmatpush1.msra.mxu0 0.0
        %1284 = vmatprep.subr.mxu0 0.0
        %1285 = vmatpush1.msra.mxu0 0.0
        %1286 = vmatprep.subr.mxu0 0.0
        %1287 = vmatpush1.msra.mxu0 0.0
        %1288 = vmatprep.subr.mxu0 0.0
        %1289 = vmatpush1.msra.mxu0 0.0
        %1290 = vmatprep.subr.mxu0 0.0
        %1291 = vmatpush1.msra.mxu0 0.0
        %1292 = vmatprep.subr.mxu0 0.0
        %1293 = vmatpush1.msra.mxu0 0.0
        %1294 = vmatprep.subr.mxu0 0.0
        %1295 = vmatpush1.msra.mxu0 0.0
        %1296 = vmatprep.subr.mxu0 0.0
        %1297 = vmatpush1.msra.mxu0 0.0
        %1298 = vmatprep.subr.mxu0 0.0
        %1299 = vmatpush1.msra.mxu0 0.0
        %1300 = vmatprep.subr.mxu0 0.0
        %1301 = vmatpush1.msra.mxu0 0.0
        %1302 = vmatprep.subr.mxu0 0.0
        %1303 = vmatpush1.msra.mxu0 0.0
        %1304 = vmatprep.subr.mxu0 0.0
        %1305 = vmatpush1.msra.mxu0 0.0
        %1306 = vmatprep.subr.mxu0 0.0
        %1307 = vmatpush1.msra.mxu0 0.0
        %1308 = vmatprep.subr.mxu0 0.0
        %1309 = vmatpush1.msra.mxu0 0.0
        %1310 = vmatprep.subr.mxu0 0.0
        %1311 = vmatpush1.msra.mxu0 0.0
        %1312 = vmatprep.subr.mxu0 0.0
        %1313 = vmatpush1.msra.mxu0 0.0
        %1314 = vmatprep.subr.mxu0 0.0
        %1315 = vmatpush1.msra.mxu0 0.0
        %1316 = vmatprep.subr.mxu0 0.0
        %1317 = vmatpush1.msra.mxu0 0.0
        %1318 = vmatprep.subr.mxu0 0.0
        %1319 = vmatpush1.msra.mxu0 0.0
        %1320 = vmatprep.subr.mxu0 0.0
        %1321 = vmatpush1.msra.mxu0 0.0
        %1322 = vmatprep.subr.mxu0 0.0
        %1323 = vmatpush1.msra.mxu0 0.0
        %1324 = vmatprep.subr.mxu0 0.0
        %1325 = vmatpush1.msra.mxu0 0.0
        %1326 = vmatprep.subr.mxu0 0.0
        %1327 = vmatpush1.msra.mxu0 0.0
        %1328 = vmatprep.subr.mxu0 0.0
        %1329 = vmatpush1.msra.mxu0 0.0
        %1330 = vmatprep.subr.mxu0 0.0
        %1331 = vmatpush1.msra.mxu0 0.0
        %1332 = vmatprep.subr.mxu0 0.0
        %1333 = vmatpush1.msra.mxu0 0.0
        %1334 = vmatprep.subr.mxu0 0.0
        %1335 = vmatpush1.msra.mxu0 0.0
        %1336 = vmatprep.subr.mxu0 0.0
        %1337 = vmatpush1.msra.mxu0 0.0
        %1338 = vmatprep.subr.mxu0 0.0
        %1339 = vmatpush1.msra.mxu0 0.0
        %1340 = vmatprep.subr.mxu0 0.0
        %1341 = vmatpush1.msra.mxu0 0.0
        %1342 = vmatprep.mubr.f32.mxu0 0.0
        %v1343 = vand.u32 %v877, 4294901760
        %1344 = vmatmul.mubr.f32.gmra.mrb[0].mxu0 %v1343
        %v1345 = vpop.f32.mrb[0].mxu0
        %v1346 = vadd.f32 %v1272, %v1345
        %v1347 = vpop.f32.mrb[0].mxu0
        %v1348 = vadd.f32 %v1274, %v1347
        %1349 = vdwg.mxu0
        %1350 = vrot.lane.b32.xlu0 %v347, 15
        %v1351 = vpop.permute.xlu0 %1350
        %1353 = vrot.lane.b32.xlu0 %v345, 15
        %v1354 = vpop.permute.xlu0 %1353
        %vm1355 = vcmask 121856
        %v1356 = vsel %vm1355, %v1354, %v1351
        %v1359 = vsel %vm1355, %v1351, %v1354
        %s1360 = scalar_lea.vmem %s1, 4
        %v1361 = vld [vmem:[%s1360] sm:$0x3]
        %v1363 = vlaneseq
        %v1364 = vshrl.u32 %v1363, 7
        %v1365 = vsub.s32 0, %v1364
        %v1366 = vrot.slane %v1361, %v1365
        %v1367 = vlaneseq
        %v1368 = vshrl.u32 %v1367, 7
        %v1369 = vsub.s32 1, %v1368
        %v1370 = vrot.slane %v1361, %v1369
        %v1373 = vmul.f32 %v1359, %v1366
        %v1374 = vmul.f32 %v1356, %v1370
        %s1375 = scalar_lea.vmem %s2, 16
        %v1376 = vld [vmem:[%s1375] sm:$0xff]
        %v1378 = vsel %vm400, %v1376, 0
        %v1381 = vsel %vm404, %v1373, 0
        %v1384 = vsel %vm404, %v1374, 0
        %v1386 = vand.u32 %v1384, 4294901760
        %1387 = vmatprep.subr.mxu0 %v1386
        %v1388 = vand.u32 %v1381, 4294901760
        %1389 = vmatpush1.msra.mxu0 %v1388
        %1390 = vmatprep.subr.mxu0 0.0
        %1391 = vmatpush1.msra.mxu0 0.0
        %1392 = vmatprep.subr.mxu0 0.0
        %1393 = vmatpush1.msra.mxu0 0.0
        %1394 = vmatprep.subr.mxu0 0.0
        %1395 = vmatpush1.msra.mxu0 0.0
        %1396 = vmatprep.subr.mxu0 0.0
        %1397 = vmatpush1.msra.mxu0 0.0
        %1398 = vmatprep.subr.mxu0 0.0
        %1399 = vmatpush1.msra.mxu0 0.0
        %1400 = vmatprep.subr.mxu0 0.0
        %1401 = vmatpush1.msra.mxu0 0.0
        %1402 = vmatprep.subr.mxu0 0.0
        %1403 = vmatpush1.msra.mxu0 0.0
        %1404 = vmatprep.subr.mxu0 0.0
        %1405 = vmatpush1.msra.mxu0 0.0
        %1406 = vmatprep.subr.mxu0 0.0
        %1407 = vmatpush1.msra.mxu0 0.0
        %1408 = vmatprep.subr.mxu0 0.0
        %1409 = vmatpush1.msra.mxu0 0.0
        %1410 = vmatprep.subr.mxu0 0.0
        %1411 = vmatpush1.msra.mxu0 0.0
        %1412 = vmatprep.subr.mxu0 0.0
        %1413 = vmatpush1.msra.mxu0 0.0
        %1414 = vmatprep.subr.mxu0 0.0
        %1415 = vmatpush1.msra.mxu0 0.0
        %1416 = vmatprep.subr.mxu0 0.0
        %1417 = vmatpush1.msra.mxu0 0.0
        %1418 = vmatprep.subr.mxu0 0.0
        %1419 = vmatpush1.msra.mxu0 0.0
        %1420 = vmatprep.subr.mxu0 0.0
        %1421 = vmatpush1.msra.mxu0 0.0
        %1422 = vmatprep.subr.mxu0 0.0
        %1423 = vmatpush1.msra.mxu0 0.0
        %1424 = vmatprep.subr.mxu0 0.0
        %1425 = vmatpush1.msra.mxu0 0.0
        %1426 = vmatprep.subr.mxu0 0.0
        %1427 = vmatpush1.msra.mxu0 0.0
        %1428 = vmatprep.subr.mxu0 0.0
        %1429 = vmatpush1.msra.mxu0 0.0
        %1430 = vmatprep.subr.mxu0 0.0
        %1431 = vmatpush1.msra.mxu0 0.0
        %1432 = vmatprep.subr.mxu0 0.0
        %1433 = vmatpush1.msra.mxu0 0.0
        %1434 = vmatprep.subr.mxu0 0.0
        %1435 = vmatpush1.msra.mxu0 0.0
        %1436 = vmatprep.subr.mxu0 0.0
        %1437 = vmatpush1.msra.mxu0 0.0
        %1438 = vmatprep.subr.mxu0 0.0
        %1439 = vmatpush1.msra.mxu0 0.0
        %1440 = vmatprep.subr.mxu0 0.0
        %1441 = vmatpush1.msra.mxu0 0.0
        %1442 = vmatprep.subr.mxu0 0.0
        %1443 = vmatpush1.msra.mxu0 0.0
        %1444 = vmatprep.subr.mxu0 0.0
        %1445 = vmatpush1.msra.mxu0 0.0
        %1446 = vmatprep.subr.mxu0 0.0
        %1447 = vmatpush1.msra.mxu0 0.0
        %1448 = vmatprep.subr.mxu0 0.0
        %1449 = vmatpush1.msra.mxu0 0.0
        %1450 = vmatprep.subr.mxu0 0.0
        %1451 = vmatpush1.msra.mxu0 0.0
        %1452 = vmatprep.mubr.f32.mxu0 0.0
        %v1453 = vand.u32 %v1378, 4294901760
        %v1454 = vsub.f32 %v1378, %v1453
        %v1455 = vand.u32 %v1454, 4294901760
        %v1456 = vsub.f32 %v1454, %v1455
        %v1457 = vand.u32 %v1456, 4294901760
        %1458 = vmatmul.mubr.f32.gmra.mrb[0].mxu0 %v1457
        %v1459 = vpop.f32.mrb[0].mxu0
        %v1460 = vadd.f32 0.0, %v1459
        %v1461 = vpop.f32.mrb[0].mxu0
        %v1462 = vadd.f32 0.0, %v1461
        %1463 = vdwg.mxu0
        %v1464 = vand.u32 %v1384, 4294901760
        %v1465 = vsub.f32 %v1384, %v1464
        %v1466 = vand.u32 %v1465, 4294901760
        %v1467 = vsub.f32 %v1465, %v1466
        %v1468 = vand.u32 %v1467, 4294901760
        %1469 = vmatprep.subr.mxu0 %v1468
        %v1470 = vand.u32 %v1381, 4294901760
        %v1471 = vsub.f32 %v1381, %v1470
        %v1472 = vand.u32 %v1471, 4294901760
        %v1473 = vsub.f32 %v1471, %v1472
        %v1474 = vand.u32 %v1473, 4294901760
        %1475 = vmatpush1.msra.mxu0 %v1474
        %1476 = vmatprep.subr.mxu0 0.0
        %1477 = vmatpush1.msra.mxu0 0.0
        %1478 = vmatprep.subr.mxu0 0.0
        %1479 = vmatpush1.msra.mxu0 0.0
        %1480 = vmatprep.subr.mxu0 0.0
        %1481 = vmatpush1.msra.mxu0 0.0
        %1482 = vmatprep.subr.mxu0 0.0
        %1483 = vmatpush1.msra.mxu0 0.0
        %1484 = vmatprep.subr.mxu0 0.0
        %1485 = vmatpush1.msra.mxu0 0.0
        %1486 = vmatprep.subr.mxu0 0.0
        %1487 = vmatpush1.msra.mxu0 0.0
        %1488 = vmatprep.subr.mxu0 0.0
        %1489 = vmatpush1.msra.mxu0 0.0
        %1490 = vmatprep.subr.mxu0 0.0
        %1491 = vmatpush1.msra.mxu0 0.0
        %1492 = vmatprep.subr.mxu0 0.0
        %1493 = vmatpush1.msra.mxu0 0.0
        %1494 = vmatprep.subr.mxu0 0.0
        %1495 = vmatpush1.msra.mxu0 0.0
        %1496 = vmatprep.subr.mxu0 0.0
        %1497 = vmatpush1.msra.mxu0 0.0
        %1498 = vmatprep.subr.mxu0 0.0
        %1499 = vmatpush1.msra.mxu0 0.0
        %1500 = vmatprep.subr.mxu0 0.0
        %1501 = vmatpush1.msra.mxu0 0.0
        %1502 = vmatprep.subr.mxu0 0.0
        %1503 = vmatpush1.msra.mxu0 0.0
        %1504 = vmatprep.subr.mxu0 0.0
        %1505 = vmatpush1.msra.mxu0 0.0
        %1506 = vmatprep.subr.mxu0 0.0
        %1507 = vmatpush1.msra.mxu0 0.0
        %1508 = vmatprep.subr.mxu0 0.0
        %1509 = vmatpush1.msra.mxu0 0.0
        %1510 = vmatprep.subr.mxu0 0.0
        %1511 = vmatpush1.msra.mxu0 0.0
        %1512 = vmatprep.subr.mxu0 0.0
        %1513 = vmatpush1.msra.mxu0 0.0
        %1514 = vmatprep.subr.mxu0 0.0
        %1515 = vmatpush1.msra.mxu0 0.0
        %1516 = vmatprep.subr.mxu0 0.0
        %1517 = vmatpush1.msra.mxu0 0.0
        %1518 = vmatprep.subr.mxu0 0.0
        %1519 = vmatpush1.msra.mxu0 0.0
        %1520 = vmatprep.subr.mxu0 0.0
        %1521 = vmatpush1.msra.mxu0 0.0
        %1522 = vmatprep.subr.mxu0 0.0
        %1523 = vmatpush1.msra.mxu0 0.0
        %1524 = vmatprep.subr.mxu0 0.0
        %1525 = vmatpush1.msra.mxu0 0.0
        %1526 = vmatprep.subr.mxu0 0.0
        %1527 = vmatpush1.msra.mxu0 0.0
        %1528 = vmatprep.subr.mxu0 0.0
        %1529 = vmatpush1.msra.mxu0 0.0
        %1530 = vmatprep.subr.mxu0 0.0
        %1531 = vmatpush1.msra.mxu0 0.0
        %1532 = vmatprep.subr.mxu0 0.0
        %1533 = vmatpush1.msra.mxu0 0.0
        %1534 = vmatprep.subr.mxu0 0.0
        %1535 = vmatpush1.msra.mxu0 0.0
        %1536 = vmatprep.subr.mxu0 0.0
        %1537 = vmatpush1.msra.mxu0 0.0
        %1538 = vmatprep.mubr.f32.mxu0 0.0
        %v1539 = vand.u32 %v1378, 4294901760
        %1540 = vmatmul.mubr.f32.gmra.mrb[0].mxu0 %v1539
        %v1541 = vpop.f32.mrb[0].mxu0
        %v1542 = vadd.f32 %v1460, %v1541
        %v1543 = vpop.f32.mrb[0].mxu0
        %v1544 = vadd.f32 %v1462, %v1543
        %1545 = vdwg.mxu0
        %v1546 = vand.u32 %v1384, 4294901760
        %v1547 = vsub.f32 %v1384, %v1546
        %1548 = vmatprep.subr.mxu0 %v1547
        %v1549 = vand.u32 %v1381, 4294901760
        %v1550 = vsub.f32 %v1381, %v1549
        %1551 = vmatpush1.msra.mxu0 %v1550
        %1552 = vmatprep.subr.mxu0 0.0
        %1553 = vmatpush1.msra.mxu0 0.0
        %1554 = vmatprep.subr.mxu0 0.0
        %1555 = vmatpush1.msra.mxu0 0.0
        %1556 = vmatprep.subr.mxu0 0.0
        %1557 = vmatpush1.msra.mxu0 0.0
        %1558 = vmatprep.subr.mxu0 0.0
        %1559 = vmatpush1.msra.mxu0 0.0
        %1560 = vmatprep.subr.mxu0 0.0
        %1561 = vmatpush1.msra.mxu0 0.0
        %1562 = vmatprep.subr.mxu0 0.0
        %1563 = vmatpush1.msra.mxu0 0.0
        %1564 = vmatprep.subr.mxu0 0.0
        %1565 = vmatpush1.msra.mxu0 0.0
        %1566 = vmatprep.subr.mxu0 0.0
        %1567 = vmatpush1.msra.mxu0 0.0
        %1568 = vmatprep.subr.mxu0 0.0
        %1569 = vmatpush1.msra.mxu0 0.0
        %1570 = vmatprep.subr.mxu0 0.0
        %1571 = vmatpush1.msra.mxu0 0.0
        %1572 = vmatprep.subr.mxu0 0.0
        %1573 = vmatpush1.msra.mxu0 0.0
        %1574 = vmatprep.subr.mxu0 0.0
        %1575 = vmatpush1.msra.mxu0 0.0
        %1576 = vmatprep.subr.mxu0 0.0
        %1577 = vmatpush1.msra.mxu0 0.0
        %1578 = vmatprep.subr.mxu0 0.0
        %1579 = vmatpush1.msra.mxu0 0.0
        %1580 = vmatprep.subr.mxu0 0.0
        %1581 = vmatpush1.msra.mxu0 0.0
        %1582 = vmatprep.subr.mxu0 0.0
        %1583 = vmatpush1.msra.mxu0 0.0
        %1584 = vmatprep.subr.mxu0 0.0
        %1585 = vmatpush1.msra.mxu0 0.0
        %1586 = vmatprep.subr.mxu0 0.0
        %1587 = vmatpush1.msra.mxu0 0.0
        %1588 = vmatprep.subr.mxu0 0.0
        %1589 = vmatpush1.msra.mxu0 0.0
        %1590 = vmatprep.subr.mxu0 0.0
        %1591 = vmatpush1.msra.mxu0 0.0
        %1592 = vmatprep.subr.mxu0 0.0
        %1593 = vmatpush1.msra.mxu0 0.0
        %1594 = vmatprep.subr.mxu0 0.0
        %1595 = vmatpush1.msra.mxu0 0.0
        %1596 = vmatprep.subr.mxu0 0.0
        %1597 = vmatpush1.msra.mxu0 0.0
        %1598 = vmatprep.subr.mxu0 0.0
        %1599 = vmatpush1.msra.mxu0 0.0
        %1600 = vmatprep.subr.mxu0 0.0
        %1601 = vmatpush1.msra.mxu0 0.0
        %1602 = vmatprep.subr.mxu0 0.0
        %1603 = vmatpush1.msra.mxu0 0.0
        %1604 = vmatprep.subr.mxu0 0.0
        %1605 = vmatpush1.msra.mxu0 0.0
        %1606 = vmatprep.subr.mxu0 0.0
        %1607 = vmatpush1.msra.mxu0 0.0
        %1608 = vmatprep.subr.mxu0 0.0
        %1609 = vmatpush1.msra.mxu0 0.0
        %1610 = vmatprep.subr.mxu0 0.0
        %1611 = vmatpush1.msra.mxu0 0.0
        %1612 = vmatprep.subr.mxu0 0.0
        %1613 = vmatpush1.msra.mxu0 0.0
        %1614 = vmatprep.mubr.f32.mxu0 0.0
        %v1615 = vand.u32 %v1378, 4294901760
        %v1616 = vsub.f32 %v1378, %v1615
        %1617 = vmatmul.mubr.f32.gmra.mrb[0].mxu0 %v1616
        %v1618 = vpop.f32.mrb[0].mxu0
        %v1619 = vadd.f32 %v1542, %v1618
        %v1620 = vpop.f32.mrb[0].mxu0
        %v1621 = vadd.f32 %v1544, %v1620
        %1622 = vdwg.mxu0
        %v1623 = vand.u32 %v1384, 4294901760
        %1624 = vmatprep.subr.mxu0 %v1623
        %v1625 = vand.u32 %v1381, 4294901760
        %1626 = vmatpush1.msra.mxu0 %v1625
        %1627 = vmatprep.subr.mxu0 0.0
        %1628 = vmatpush1.msra.mxu0 0.0
        %1629 = vmatprep.subr.mxu0 0.0
        %1630 = vmatpush1.msra.mxu0 0.0
        %1631 = vmatprep.subr.mxu0 0.0
        %1632 = vmatpush1.msra.mxu0 0.0
        %1633 = vmatprep.subr.mxu0 0.0
        %1634 = vmatpush1.msra.mxu0 0.0
        %1635 = vmatprep.subr.mxu0 0.0
        %1636 = vmatpush1.msra.mxu0 0.0
        %1637 = vmatprep.subr.mxu0 0.0
        %1638 = vmatpush1.msra.mxu0 0.0
        %1639 = vmatprep.subr.mxu0 0.0
        %1640 = vmatpush1.msra.mxu0 0.0
        %1641 = vmatprep.subr.mxu0 0.0
        %1642 = vmatpush1.msra.mxu0 0.0
        %1643 = vmatprep.subr.mxu0 0.0
        %1644 = vmatpush1.msra.mxu0 0.0
        %1645 = vmatprep.subr.mxu0 0.0
        %1646 = vmatpush1.msra.mxu0 0.0
        %1647 = vmatprep.subr.mxu0 0.0
        %1648 = vmatpush1.msra.mxu0 0.0
        %1649 = vmatprep.subr.mxu0 0.0
        %1650 = vmatpush1.msra.mxu0 0.0
        %1651 = vmatprep.subr.mxu0 0.0
        %1652 = vmatpush1.msra.mxu0 0.0
        %1653 = vmatprep.subr.mxu0 0.0
        %1654 = vmatpush1.msra.mxu0 0.0
        %1655 = vmatprep.subr.mxu0 0.0
        %1656 = vmatpush1.msra.mxu0 0.0
        %1657 = vmatprep.subr.mxu0 0.0
        %1658 = vmatpush1.msra.mxu0 0.0
        %1659 = vmatprep.subr.mxu0 0.0
        %1660 = vmatpush1.msra.mxu0 0.0
        %1661 = vmatprep.subr.mxu0 0.0
        %1662 = vmatpush1.msra.mxu0 0.0
        %1663 = vmatprep.subr.mxu0 0.0
        %1664 = vmatpush1.msra.mxu0 0.0
        %1665 = vmatprep.subr.mxu0 0.0
        %1666 = vmatpush1.msra.mxu0 0.0
        %1667 = vmatprep.subr.mxu0 0.0
        %1668 = vmatpush1.msra.mxu0 0.0
        %1669 = vmatprep.subr.mxu0 0.0
        %1670 = vmatpush1.msra.mxu0 0.0
        %1671 = vmatprep.subr.mxu0 0.0
        %1672 = vmatpush1.msra.mxu0 0.0
        %1673 = vmatprep.subr.mxu0 0.0
        %1674 = vmatpush1.msra.mxu0 0.0
        %1675 = vmatprep.subr.mxu0 0.0
        %1676 = vmatpush1.msra.mxu0 0.0
        %1677 = vmatprep.subr.mxu0 0.0
        %1678 = vmatpush1.msra.mxu0 0.0
        %1679 = vmatprep.subr.mxu0 0.0
        %1680 = vmatpush1.msra.mxu0 0.0
        %1681 = vmatprep.subr.mxu0 0.0
        %1682 = vmatpush1.msra.mxu0 0.0
        %1683 = vmatprep.subr.mxu0 0.0
        %1684 = vmatpush1.msra.mxu0 0.0
        %1685 = vmatprep.subr.mxu0 0.0
        %1686 = vmatpush1.msra.mxu0 0.0
        %1687 = vmatprep.subr.mxu0 0.0
        %1688 = vmatpush1.msra.mxu0 0.0
        %1689 = vmatprep.mubr.f32.mxu0 0.0
        %v1690 = vand.u32 %v1378, 4294901760
        %v1691 = vsub.f32 %v1378, %v1690
        %v1692 = vand.u32 %v1691, 4294901760
        %1693 = vmatmul.mubr.f32.gmra.mrb[0].mxu0 %v1692
        %v1694 = vpop.f32.mrb[0].mxu0
        %v1695 = vadd.f32 %v1619, %v1694
        %v1696 = vpop.f32.mrb[0].mxu0
        %v1697 = vadd.f32 %v1621, %v1696
        %1698 = vdwg.mxu0
        %v1699 = vand.u32 %v1384, 4294901760
        %v1700 = vsub.f32 %v1384, %v1699
        %v1701 = vand.u32 %v1700, 4294901760
        %1702 = vmatprep.subr.mxu0 %v1701
        %v1703 = vand.u32 %v1381, 4294901760
        %v1704 = vsub.f32 %v1381, %v1703
        %v1705 = vand.u32 %v1704, 4294901760
        %1706 = vmatpush1.msra.mxu0 %v1705
        %1707 = vmatprep.subr.mxu0 0.0
        %1708 = vmatpush1.msra.mxu0 0.0
        %1709 = vmatprep.subr.mxu0 0.0
        %1710 = vmatpush1.msra.mxu0 0.0
        %1711 = vmatprep.subr.mxu0 0.0
        %1712 = vmatpush1.msra.mxu0 0.0
        %1713 = vmatprep.subr.mxu0 0.0
        %1714 = vmatpush1.msra.mxu0 0.0
        %1715 = vmatprep.subr.mxu0 0.0
        %1716 = vmatpush1.msra.mxu0 0.0
        %1717 = vmatprep.subr.mxu0 0.0
        %1718 = vmatpush1.msra.mxu0 0.0
        %1719 = vmatprep.subr.mxu0 0.0
        %1720 = vmatpush1.msra.mxu0 0.0
        %1721 = vmatprep.subr.mxu0 0.0
        %1722 = vmatpush1.msra.mxu0 0.0
        %1723 = vmatprep.subr.mxu0 0.0
        %1724 = vmatpush1.msra.mxu0 0.0
        %1725 = vmatprep.subr.mxu0 0.0
        %1726 = vmatpush1.msra.mxu0 0.0
        %1727 = vmatprep.subr.mxu0 0.0
        %1728 = vmatpush1.msra.mxu0 0.0
        %1729 = vmatprep.subr.mxu0 0.0
        %1730 = vmatpush1.msra.mxu0 0.0
        %1731 = vmatprep.subr.mxu0 0.0
        %1732 = vmatpush1.msra.mxu0 0.0
        %1733 = vmatprep.subr.mxu0 0.0
        %1734 = vmatpush1.msra.mxu0 0.0
        %1735 = vmatprep.subr.mxu0 0.0
        %1736 = vmatpush1.msra.mxu0 0.0
        %1737 = vmatprep.subr.mxu0 0.0
        %1738 = vmatpush1.msra.mxu0 0.0
        %1739 = vmatprep.subr.mxu0 0.0
        %1740 = vmatpush1.msra.mxu0 0.0
        %1741 = vmatprep.subr.mxu0 0.0
        %1742 = vmatpush1.msra.mxu0 0.0
        %1743 = vmatprep.subr.mxu0 0.0
        %1744 = vmatpush1.msra.mxu0 0.0
        %1745 = vmatprep.subr.mxu0 0.0
        %1746 = vmatpush1.msra.mxu0 0.0
        %1747 = vmatprep.subr.mxu0 0.0
        %1748 = vmatpush1.msra.mxu0 0.0
        %1749 = vmatprep.subr.mxu0 0.0
        %1750 = vmatpush1.msra.mxu0 0.0
        %1751 = vmatprep.subr.mxu0 0.0
        %1752 = vmatpush1.msra.mxu0 0.0
        %1753 = vmatprep.subr.mxu0 0.0
        %1754 = vmatpush1.msra.mxu0 0.0
        %1755 = vmatprep.subr.mxu0 0.0
        %1756 = vmatpush1.msra.mxu0 0.0
        %1757 = vmatprep.subr.mxu0 0.0
        %1758 = vmatpush1.msra.mxu0 0.0
        %1759 = vmatprep.subr.mxu0 0.0
        %1760 = vmatpush1.msra.mxu0 0.0
        %1761 = vmatprep.subr.mxu0 0.0
        %1762 = vmatpush1.msra.mxu0 0.0
        %1763 = vmatprep.subr.mxu0 0.0
        %1764 = vmatpush1.msra.mxu0 0.0
        %1765 = vmatprep.subr.mxu0 0.0
        %1766 = vmatpush1.msra.mxu0 0.0
        %1767 = vmatprep.subr.mxu0 0.0
        %1768 = vmatpush1.msra.mxu0 0.0
        %1769 = vmatprep.mubr.f32.mxu0 0.0
        %v1770 = vand.u32 %v1378, 4294901760
        %1771 = vmatmul.mubr.f32.gmra.mrb[0].mxu0 %v1770
        %v1772 = vpop.f32.mrb[0].mxu0
        %v1773 = vadd.f32 %v1695, %v1772
        %v1774 = vpop.f32.mrb[0].mxu0
        %v1775 = vadd.f32 %v1697, %v1774
        %1776 = vdwg.mxu0
        %v1777 = vand.u32 %v1384, 4294901760
        %1778 = vmatprep.subr.mxu0 %v1777
        %v1779 = vand.u32 %v1381, 4294901760
        %1780 = vmatpush1.msra.mxu0 %v1779
        %1781 = vmatprep.subr.mxu0 0.0
        %1782 = vmatpush1.msra.mxu0 0.0
        %1783 = vmatprep.subr.mxu0 0.0
        %1784 = vmatpush1.msra.mxu0 0.0
        %1785 = vmatprep.subr.mxu0 0.0
        %1786 = vmatpush1.msra.mxu0 0.0
        %1787 = vmatprep.subr.mxu0 0.0
        %1788 = vmatpush1.msra.mxu0 0.0
        %1789 = vmatprep.subr.mxu0 0.0
        %1790 = vmatpush1.msra.mxu0 0.0
        %1791 = vmatprep.subr.mxu0 0.0
        %1792 = vmatpush1.msra.mxu0 0.0
        %1793 = vmatprep.subr.mxu0 0.0
        %1794 = vmatpush1.msra.mxu0 0.0
        %1795 = vmatprep.subr.mxu0 0.0
        %1796 = vmatpush1.msra.mxu0 0.0
        %1797 = vmatprep.subr.mxu0 0.0
        %1798 = vmatpush1.msra.mxu0 0.0
        %1799 = vmatprep.subr.mxu0 0.0
        %1800 = vmatpush1.msra.mxu0 0.0
        %1801 = vmatprep.subr.mxu0 0.0
        %1802 = vmatpush1.msra.mxu0 0.0
        %1803 = vmatprep.subr.mxu0 0.0
        %1804 = vmatpush1.msra.mxu0 0.0
        %1805 = vmatprep.subr.mxu0 0.0
        %1806 = vmatpush1.msra.mxu0 0.0
        %1807 = vmatprep.subr.mxu0 0.0
        %1808 = vmatpush1.msra.mxu0 0.0
        %1809 = vmatprep.subr.mxu0 0.0
        %1810 = vmatpush1.msra.mxu0 0.0
        %1811 = vmatprep.subr.mxu0 0.0
        %1812 = vmatpush1.msra.mxu0 0.0
        %1813 = vmatprep.subr.mxu0 0.0
        %1814 = vmatpush1.msra.mxu0 0.0
        %1815 = vmatprep.subr.mxu0 0.0
        %1816 = vmatpush1.msra.mxu0 0.0
        %1817 = vmatprep.subr.mxu0 0.0
        %1818 = vmatpush1.msra.mxu0 0.0
        %1819 = vmatprep.subr.mxu0 0.0
        %1820 = vmatpush1.msra.mxu0 0.0
        %1821 = vmatprep.subr.mxu0 0.0
        %1822 = vmatpush1.msra.mxu0 0.0
        %1823 = vmatprep.subr.mxu0 0.0
        %1824 = vmatpush1.msra.mxu0 0.0
        %1825 = vmatprep.subr.mxu0 0.0
        %1826 = vmatpush1.msra.mxu0 0.0
        %1827 = vmatprep.subr.mxu0 0.0
        %1828 = vmatpush1.msra.mxu0 0.0
        %1829 = vmatprep.subr.mxu0 0.0
        %1830 = vmatpush1.msra.mxu0 0.0
        %1831 = vmatprep.subr.mxu0 0.0
        %1832 = vmatpush1.msra.mxu0 0.0
        %1833 = vmatprep.subr.mxu0 0.0
        %1834 = vmatpush1.msra.mxu0 0.0
        %1835 = vmatprep.subr.mxu0 0.0
        %1836 = vmatpush1.msra.mxu0 0.0
        %1837 = vmatprep.subr.mxu0 0.0
        %1838 = vmatpush1.msra.mxu0 0.0
        %1839 = vmatprep.subr.mxu0 0.0
        %1840 = vmatpush1.msra.mxu0 0.0
        %1841 = vmatprep.subr.mxu0 0.0
        %1842 = vmatpush1.msra.mxu0 0.0
        %1843 = vmatprep.mubr.f32.mxu0 0.0
        %v1844 = vand.u32 %v1378, 4294901760
        %1845 = vmatmul.mubr.f32.gmra.mrb[0].mxu0 %v1844
        %v1846 = vpop.f32.mrb[0].mxu0
        %v1847 = vadd.f32 %v1773, %v1846
        %v1848 = vpop.f32.mrb[0].mxu0
        %v1849 = vadd.f32 %v1775, %v1848
        %1850 = vdwg.mxu0
        %v1851 = vadd.f32 %v1346, %v1847
        %v1852 = vadd.f32 %v1348, %v1849
        %1853 = vrot.lane.b32.xlu0 %v347, 1
        %v1854 = vpop.permute.xlu0 %1853
        %1856 = vrot.lane.b32.xlu0 %v345, 1
        %v1857 = vpop.permute.xlu0 %1856
        %vm1858 = vcmask 7168
        %v1859 = vsel %vm1858, %v1857, %v1854
        %v1862 = vsel %vm1858, %v1854, %v1857
        %s1863 = scalar_lea.vmem %s1, 6
        %v1864 = vld [vmem:[%s1863] sm:$0x3]
        %v1866 = vlaneseq
        %v1867 = vshrl.u32 %v1866, 7
        %v1868 = vsub.s32 0, %v1867
        %v1869 = vrot.slane %v1864, %v1868
        %v1870 = vlaneseq
        %v1871 = vshrl.u32 %v1870, 7
        %v1872 = vsub.s32 1, %v1871
        %v1873 = vrot.slane %v1864, %v1872
        %v1876 = vmul.f32 %v1862, %v1869
        %v1877 = vmul.f32 %v1859, %v1873
        %s1878 = scalar_lea.vmem %s2, 24
        %v1879 = vld [vmem:[%s1878] sm:$0xff]
        %v1881 = vsel %vm400, %v1879, 0
        %v1884 = vsel %vm404, %v1876, 0
        %v1887 = vsel %vm404, %v1877, 0
        %v1889 = vand.u32 %v1887, 4294901760
        %1890 = vmatprep.subr.mxu0 %v1889
        %v1891 = vand.u32 %v1884, 4294901760
        %1892 = vmatpush1.msra.mxu0 %v1891
        %1893 = vmatprep.subr.mxu0 0.0
        %1894 = vmatpush1.msra.mxu0 0.0
        %1895 = vmatprep.subr.mxu0 0.0
        %1896 = vmatpush1.msra.mxu0 0.0
        %1897 = vmatprep.subr.mxu0 0.0
        %1898 = vmatpush1.msra.mxu0 0.0
        %1899 = vmatprep.subr.mxu0 0.0
        %1900 = vmatpush1.msra.mxu0 0.0
        %1901 = vmatprep.subr.mxu0 0.0
        %1902 = vmatpush1.msra.mxu0 0.0
        %1903 = vmatprep.subr.mxu0 0.0
        %1904 = vmatpush1.msra.mxu0 0.0
        %1905 = vmatprep.subr.mxu0 0.0
        %1906 = vmatpush1.msra.mxu0 0.0
        %1907 = vmatprep.subr.mxu0 0.0
        %1908 = vmatpush1.msra.mxu0 0.0
        %1909 = vmatprep.subr.mxu0 0.0
        %1910 = vmatpush1.msra.mxu0 0.0
        %1911 = vmatprep.subr.mxu0 0.0
        %1912 = vmatpush1.msra.mxu0 0.0
        %1913 = vmatprep.subr.mxu0 0.0
        %1914 = vmatpush1.msra.mxu0 0.0
        %1915 = vmatprep.subr.mxu0 0.0
        %1916 = vmatpush1.msra.mxu0 0.0
        %1917 = vmatprep.subr.mxu0 0.0
        %1918 = vmatpush1.msra.mxu0 0.0
        %1919 = vmatprep.subr.mxu0 0.0
        %1920 = vmatpush1.msra.mxu0 0.0
        %1921 = vmatprep.subr.mxu0 0.0
        %1922 = vmatpush1.msra.mxu0 0.0
        %1923 = vmatprep.subr.mxu0 0.0
        %1924 = vmatpush1.msra.mxu0 0.0
        %1925 = vmatprep.subr.mxu0 0.0
        %1926 = vmatpush1.msra.mxu0 0.0
        %1927 = vmatprep.subr.mxu0 0.0
        %1928 = vmatpush1.msra.mxu0 0.0
        %1929 = vmatprep.subr.mxu0 0.0
        %1930 = vmatpush1.msra.mxu0 0.0
        %1931 = vmatprep.subr.mxu0 0.0
        %1932 = vmatpush1.msra.mxu0 0.0
        %1933 = vmatprep.subr.mxu0 0.0
        %1934 = vmatpush1.msra.mxu0 0.0
        %1935 = vmatprep.subr.mxu0 0.0
        %1936 = vmatpush1.msra.mxu0 0.0
        %1937 = vmatprep.subr.mxu0 0.0
        %1938 = vmatpush1.msra.mxu0 0.0
        %1939 = vmatprep.subr.mxu0 0.0
        %1940 = vmatpush1.msra.mxu0 0.0
        %1941 = vmatprep.subr.mxu0 0.0
        %1942 = vmatpush1.msra.mxu0 0.0
        %1943 = vmatprep.subr.mxu0 0.0
        %1944 = vmatpush1.msra.mxu0 0.0
        %1945 = vmatprep.subr.mxu0 0.0
        %1946 = vmatpush1.msra.mxu0 0.0
        %1947 = vmatprep.subr.mxu0 0.0
        %1948 = vmatpush1.msra.mxu0 0.0
        %1949 = vmatprep.subr.mxu0 0.0
        %1950 = vmatpush1.msra.mxu0 0.0
        %1951 = vmatprep.subr.mxu0 0.0
        %1952 = vmatpush1.msra.mxu0 0.0
        %1953 = vmatprep.subr.mxu0 0.0
        %1954 = vmatpush1.msra.mxu0 0.0
        %1955 = vmatprep.mubr.f32.mxu0 0.0
        %v1956 = vand.u32 %v1881, 4294901760
        %v1957 = vsub.f32 %v1881, %v1956
        %v1958 = vand.u32 %v1957, 4294901760
        %v1959 = vsub.f32 %v1957, %v1958
        %v1960 = vand.u32 %v1959, 4294901760
        %1961 = vmatmul.mubr.f32.gmra.mrb[0].mxu0 %v1960
        %v1962 = vpop.f32.mrb[0].mxu0
        %v1963 = vadd.f32 0.0, %v1962
        %v1964 = vpop.f32.mrb[0].mxu0
        %v1965 = vadd.f32 0.0, %v1964
        %1966 = vdwg.mxu0
        %v1967 = vand.u32 %v1887, 4294901760
        %v1968 = vsub.f32 %v1887, %v1967
        %v1969 = vand.u32 %v1968, 4294901760
        %v1970 = vsub.f32 %v1968, %v1969
        %v1971 = vand.u32 %v1970, 4294901760
        %1972 = vmatprep.subr.mxu0 %v1971
        %v1973 = vand.u32 %v1884, 4294901760
        %v1974 = vsub.f32 %v1884, %v1973
        %v1975 = vand.u32 %v1974, 4294901760
        %v1976 = vsub.f32 %v1974, %v1975
        %v1977 = vand.u32 %v1976, 4294901760
        %1978 = vmatpush1.msra.mxu0 %v1977
        %1979 = vmatprep.subr.mxu0 0.0
        %1980 = vmatpush1.msra.mxu0 0.0
        %1981 = vmatprep.subr.mxu0 0.0
        %1982 = vmatpush1.msra.mxu0 0.0
        %1983 = vmatprep.subr.mxu0 0.0
        %1984 = vmatpush1.msra.mxu0 0.0
        %1985 = vmatprep.subr.mxu0 0.0
        %1986 = vmatpush1.msra.mxu0 0.0
        %1987 = vmatprep.subr.mxu0 0.0
        %1988 = vmatpush1.msra.mxu0 0.0
        %1989 = vmatprep.subr.mxu0 0.0
        %1990 = vmatpush1.msra.mxu0 0.0
        %1991 = vmatprep.subr.mxu0 0.0
        %1992 = vmatpush1.msra.mxu0 0.0
        %1993 = vmatprep.subr.mxu0 0.0
        %1994 = vmatpush1.msra.mxu0 0.0
        %1995 = vmatprep.subr.mxu0 0.0
        %1996 = vmatpush1.msra.mxu0 0.0
        %1997 = vmatprep.subr.mxu0 0.0
        %1998 = vmatpush1.msra.mxu0 0.0
        %1999 = vmatprep.subr.mxu0 0.0
        %2000 = vmatpush1.msra.mxu0 0.0
        %2001 = vmatprep.subr.mxu0 0.0
        %2002 = vmatpush1.msra.mxu0 0.0
        %2003 = vmatprep.subr.mxu0 0.0
        %2004 = vmatpush1.msra.mxu0 0.0
        %2005 = vmatprep.subr.mxu0 0.0
        %2006 = vmatpush1.msra.mxu0 0.0
        %2007 = vmatprep.subr.mxu0 0.0
        %2008 = vmatpush1.msra.mxu0 0.0
        %2009 = vmatprep.subr.mxu0 0.0
        %2010 = vmatpush1.msra.mxu0 0.0
        %2011 = vmatprep.subr.mxu0 0.0
        %2012 = vmatpush1.msra.mxu0 0.0
        %2013 = vmatprep.subr.mxu0 0.0
        %2014 = vmatpush1.msra.mxu0 0.0
        %2015 = vmatprep.subr.mxu0 0.0
        %2016 = vmatpush1.msra.mxu0 0.0
        %2017 = vmatprep.subr.mxu0 0.0
        %2018 = vmatpush1.msra.mxu0 0.0
        %2019 = vmatprep.subr.mxu0 0.0
        %2020 = vmatpush1.msra.mxu0 0.0
        %2021 = vmatprep.subr.mxu0 0.0
        %2022 = vmatpush1.msra.mxu0 0.0
        %2023 = vmatprep.subr.mxu0 0.0
        %2024 = vmatpush1.msra.mxu0 0.0
        %2025 = vmatprep.subr.mxu0 0.0
        %2026 = vmatpush1.msra.mxu0 0.0
        %2027 = vmatprep.subr.mxu0 0.0
        %2028 = vmatpush1.msra.mxu0 0.0
        %2029 = vmatprep.subr.mxu0 0.0
        %2030 = vmatpush1.msra.mxu0 0.0
        %2031 = vmatprep.subr.mxu0 0.0
        %2032 = vmatpush1.msra.mxu0 0.0
        %2033 = vmatprep.subr.mxu0 0.0
        %2034 = vmatpush1.msra.mxu0 0.0
        %2035 = vmatprep.subr.mxu0 0.0
        %2036 = vmatpush1.msra.mxu0 0.0
        %2037 = vmatprep.subr.mxu0 0.0
        %2038 = vmatpush1.msra.mxu0 0.0
        %2039 = vmatprep.subr.mxu0 0.0
        %2040 = vmatpush1.msra.mxu0 0.0
        %2041 = vmatprep.mubr.f32.mxu0 0.0
        %v2042 = vand.u32 %v1881, 4294901760
        %2043 = vmatmul.mubr.f32.gmra.mrb[0].mxu0 %v2042
        %v2044 = vpop.f32.mrb[0].mxu0
        %v2045 = vadd.f32 %v1963, %v2044
        %v2046 = vpop.f32.mrb[0].mxu0
        %v2047 = vadd.f32 %v1965, %v2046
        %2048 = vdwg.mxu0
        %v2049 = vand.u32 %v1887, 4294901760
        %v2050 = vsub.f32 %v1887, %v2049
        %2051 = vmatprep.subr.mxu0 %v2050
        %v2052 = vand.u32 %v1884, 4294901760
        %v2053 = vsub.f32 %v1884, %v2052
        %2054 = vmatpush1.msra.mxu0 %v2053
        %2055 = vmatprep.subr.mxu0 0.0
        %2056 = vmatpush1.msra.mxu0 0.0
        %2057 = vmatprep.subr.mxu0 0.0
        %2058 = vmatpush1.msra.mxu0 0.0
        %2059 = vmatprep.subr.mxu0 0.0
        %2060 = vmatpush1.msra.mxu0 0.0
        %2061 = vmatprep.subr.mxu0 0.0
        %2062 = vmatpush1.msra.mxu0 0.0
        %2063 = vmatprep.subr.mxu0 0.0
        %2064 = vmatpush1.msra.mxu0 0.0
        %2065 = vmatprep.subr.mxu0 0.0
        %2066 = vmatpush1.msra.mxu0 0.0
        %2067 = vmatprep.subr.mxu0 0.0
        %2068 = vmatpush1.msra.mxu0 0.0
        %2069 = vmatprep.subr.mxu0 0.0
        %2070 = vmatpush1.msra.mxu0 0.0
        %2071 = vmatprep.subr.mxu0 0.0
        %2072 = vmatpush1.msra.mxu0 0.0
        %2073 = vmatprep.subr.mxu0 0.0
        %2074 = vmatpush1.msra.mxu0 0.0
        %2075 = vmatprep.subr.mxu0 0.0
        %2076 = vmatpush1.msra.mxu0 0.0
        %2077 = vmatprep.subr.mxu0 0.0
        %2078 = vmatpush1.msra.mxu0 0.0
        %2079 = vmatprep.subr.mxu0 0.0
        %2080 = vmatpush1.msra.mxu0 0.0
        %2081 = vmatprep.subr.mxu0 0.0
        %2082 = vmatpush1.msra.mxu0 0.0
        %2083 = vmatprep.subr.mxu0 0.0
        %2084 = vmatpush1.msra.mxu0 0.0
        %2085 = vmatprep.subr.mxu0 0.0
        %2086 = vmatpush1.msra.mxu0 0.0
        %2087 = vmatprep.subr.mxu0 0.0
        %2088 = vmatpush1.msra.mxu0 0.0
        %2089 = vmatprep.subr.mxu0 0.0
        %2090 = vmatpush1.msra.mxu0 0.0
        %2091 = vmatprep.subr.mxu0 0.0
        %2092 = vmatpush1.msra.mxu0 0.0
        %2093 = vmatprep.subr.mxu0 0.0
        %2094 = vmatpush1.msra.mxu0 0.0
        %2095 = vmatprep.subr.mxu0 0.0
        %2096 = vmatpush1.msra.mxu0 0.0
        %2097 = vmatprep.subr.mxu0 0.0
        %2098 = vmatpush1.msra.mxu0 0.0
        %2099 = vmatprep.subr.mxu0 0.0
        %2100 = vmatpush1.msra.mxu0 0.0
        %2101 = vmatprep.subr.mxu0 0.0
        %2102 = vmatpush1.msra.mxu0 0.0
        %2103 = vmatprep.subr.mxu0 0.0
        %2104 = vmatpush1.msra.mxu0 0.0
        %2105 = vmatprep.subr.mxu0 0.0
        %2106 = vmatpush1.msra.mxu0 0.0
        %2107 = vmatprep.subr.mxu0 0.0
        %2108 = vmatpush1.msra.mxu0 0.0
        %2109 = vmatprep.subr.mxu0 0.0
        %2110 = vmatpush1.msra.mxu0 0.0
        %2111 = vmatprep.subr.mxu0 0.0
        %2112 = vmatpush1.msra.mxu0 0.0
        %2113 = vmatprep.subr.mxu0 0.0
        %2114 = vmatpush1.msra.mxu0 0.0
        %2115 = vmatprep.subr.mxu0 0.0
        %2116 = vmatpush1.msra.mxu0 0.0
        %2117 = vmatprep.mubr.f32.mxu0 0.0
        %v2118 = vand.u32 %v1881, 4294901760
        %v2119 = vsub.f32 %v1881, %v2118
        %2120 = vmatmul.mubr.f32.gmra.mrb[0].mxu0 %v2119
        %v2121 = vpop.f32.mrb[0].mxu0
        %v2122 = vadd.f32 %v2045, %v2121
        %v2123 = vpop.f32.mrb[0].mxu0
        %v2124 = vadd.f32 %v2047, %v2123
        %2125 = vdwg.mxu0
        %v2126 = vand.u32 %v1887, 4294901760
        %2127 = vmatprep.subr.mxu0 %v2126
        %v2128 = vand.u32 %v1884, 4294901760
        %2129 = vmatpush1.msra.mxu0 %v2128
        %2130 = vmatprep.subr.mxu0 0.0
        %2131 = vmatpush1.msra.mxu0 0.0
        %2132 = vmatprep.subr.mxu0 0.0
        %2133 = vmatpush1.msra.mxu0 0.0
        %2134 = vmatprep.subr.mxu0 0.0
        %2135 = vmatpush1.msra.mxu0 0.0
        %2136 = vmatprep.subr.mxu0 0.0
        %2137 = vmatpush1.msra.mxu0 0.0
        %2138 = vmatprep.subr.mxu0 0.0
        %2139 = vmatpush1.msra.mxu0 0.0
        %2140 = vmatprep.subr.mxu0 0.0
        %2141 = vmatpush1.msra.mxu0 0.0
        %2142 = vmatprep.subr.mxu0 0.0
        %2143 = vmatpush1.msra.mxu0 0.0
        %2144 = vmatprep.subr.mxu0 0.0
        %2145 = vmatpush1.msra.mxu0 0.0
        %2146 = vmatprep.subr.mxu0 0.0
        %2147 = vmatpush1.msra.mxu0 0.0
        %2148 = vmatprep.subr.mxu0 0.0
        %2149 = vmatpush1.msra.mxu0 0.0
        %2150 = vmatprep.subr.mxu0 0.0
        %2151 = vmatpush1.msra.mxu0 0.0
        %2152 = vmatprep.subr.mxu0 0.0
        %2153 = vmatpush1.msra.mxu0 0.0
        %2154 = vmatprep.subr.mxu0 0.0
        %2155 = vmatpush1.msra.mxu0 0.0
        %2156 = vmatprep.subr.mxu0 0.0
        %2157 = vmatpush1.msra.mxu0 0.0
        %2158 = vmatprep.subr.mxu0 0.0
        %2159 = vmatpush1.msra.mxu0 0.0
        %2160 = vmatprep.subr.mxu0 0.0
        %2161 = vmatpush1.msra.mxu0 0.0
        %2162 = vmatprep.subr.mxu0 0.0
        %2163 = vmatpush1.msra.mxu0 0.0
        %2164 = vmatprep.subr.mxu0 0.0
        %2165 = vmatpush1.msra.mxu0 0.0
        %2166 = vmatprep.subr.mxu0 0.0
        %2167 = vmatpush1.msra.mxu0 0.0
        %2168 = vmatprep.subr.mxu0 0.0
        %2169 = vmatpush1.msra.mxu0 0.0
        %2170 = vmatprep.subr.mxu0 0.0
        %2171 = vmatpush1.msra.mxu0 0.0
        %2172 = vmatprep.subr.mxu0 0.0
        %2173 = vmatpush1.msra.mxu0 0.0
        %2174 = vmatprep.subr.mxu0 0.0
        %2175 = vmatpush1.msra.mxu0 0.0
        %2176 = vmatprep.subr.mxu0 0.0
        %2177 = vmatpush1.msra.mxu0 0.0
        %2178 = vmatprep.subr.mxu0 0.0
        %2179 = vmatpush1.msra.mxu0 0.0
        %2180 = vmatprep.subr.mxu0 0.0
        %2181 = vmatpush1.msra.mxu0 0.0
        %2182 = vmatprep.subr.mxu0 0.0
        %2183 = vmatpush1.msra.mxu0 0.0
        %2184 = vmatprep.subr.mxu0 0.0
        %2185 = vmatpush1.msra.mxu0 0.0
        %2186 = vmatprep.subr.mxu0 0.0
        %2187 = vmatpush1.msra.mxu0 0.0
        %2188 = vmatprep.subr.mxu0 0.0
        %2189 = vmatpush1.msra.mxu0 0.0
        %2190 = vmatprep.subr.mxu0 0.0
        %2191 = vmatpush1.msra.mxu0 0.0
        %2192 = vmatprep.mubr.f32.mxu0 0.0
        %v2193 = vand.u32 %v1881, 4294901760
        %v2194 = vsub.f32 %v1881, %v2193
        %v2195 = vand.u32 %v2194, 4294901760
        %2196 = vmatmul.mubr.f32.gmra.mrb[0].mxu0 %v2195
        %v2197 = vpop.f32.mrb[0].mxu0
        %v2198 = vadd.f32 %v2122, %v2197
        %v2199 = vpop.f32.mrb[0].mxu0
        %v2200 = vadd.f32 %v2124, %v2199
        %2201 = vdwg.mxu0
        %v2202 = vand.u32 %v1887, 4294901760
        %v2203 = vsub.f32 %v1887, %v2202
        %v2204 = vand.u32 %v2203, 4294901760
        %2205 = vmatprep.subr.mxu0 %v2204
        %v2206 = vand.u32 %v1884, 4294901760
        %v2207 = vsub.f32 %v1884, %v2206
        %v2208 = vand.u32 %v2207, 4294901760
        %2209 = vmatpush1.msra.mxu0 %v2208
        %2210 = vmatprep.subr.mxu0 0.0
        %2211 = vmatpush1.msra.mxu0 0.0
        %2212 = vmatprep.subr.mxu0 0.0
        %2213 = vmatpush1.msra.mxu0 0.0
        %2214 = vmatprep.subr.mxu0 0.0
        %2215 = vmatpush1.msra.mxu0 0.0
        %2216 = vmatprep.subr.mxu0 0.0
        %2217 = vmatpush1.msra.mxu0 0.0
        %2218 = vmatprep.subr.mxu0 0.0
        %2219 = vmatpush1.msra.mxu0 0.0
        %2220 = vmatprep.subr.mxu0 0.0
        %2221 = vmatpush1.msra.mxu0 0.0
        %2222 = vmatprep.subr.mxu0 0.0
        %2223 = vmatpush1.msra.mxu0 0.0
        %2224 = vmatprep.subr.mxu0 0.0
        %2225 = vmatpush1.msra.mxu0 0.0
        %2226 = vmatprep.subr.mxu0 0.0
        %2227 = vmatpush1.msra.mxu0 0.0
        %2228 = vmatprep.subr.mxu0 0.0
        %2229 = vmatpush1.msra.mxu0 0.0
        %2230 = vmatprep.subr.mxu0 0.0
        %2231 = vmatpush1.msra.mxu0 0.0
        %2232 = vmatprep.subr.mxu0 0.0
        %2233 = vmatpush1.msra.mxu0 0.0
        %2234 = vmatprep.subr.mxu0 0.0
        %2235 = vmatpush1.msra.mxu0 0.0
        %2236 = vmatprep.subr.mxu0 0.0
        %2237 = vmatpush1.msra.mxu0 0.0
        %2238 = vmatprep.subr.mxu0 0.0
        %2239 = vmatpush1.msra.mxu0 0.0
        %2240 = vmatprep.subr.mxu0 0.0
        %2241 = vmatpush1.msra.mxu0 0.0
        %2242 = vmatprep.subr.mxu0 0.0
        %2243 = vmatpush1.msra.mxu0 0.0
        %2244 = vmatprep.subr.mxu0 0.0
        %2245 = vmatpush1.msra.mxu0 0.0
        %2246 = vmatprep.subr.mxu0 0.0
        %2247 = vmatpush1.msra.mxu0 0.0
        %2248 = vmatprep.subr.mxu0 0.0
        %2249 = vmatpush1.msra.mxu0 0.0
        %2250 = vmatprep.subr.mxu0 0.0
        %2251 = vmatpush1.msra.mxu0 0.0
        %2252 = vmatprep.subr.mxu0 0.0
        %2253 = vmatpush1.msra.mxu0 0.0
        %2254 = vmatprep.subr.mxu0 0.0
        %2255 = vmatpush1.msra.mxu0 0.0
        %2256 = vmatprep.subr.mxu0 0.0
        %2257 = vmatpush1.msra.mxu0 0.0
        %2258 = vmatprep.subr.mxu0 0.0
        %2259 = vmatpush1.msra.mxu0 0.0
        %2260 = vmatprep.subr.mxu0 0.0
        %2261 = vmatpush1.msra.mxu0 0.0
        %2262 = vmatprep.subr.mxu0 0.0
        %2263 = vmatpush1.msra.mxu0 0.0
        %2264 = vmatprep.subr.mxu0 0.0
        %2265 = vmatpush1.msra.mxu0 0.0
        %2266 = vmatprep.subr.mxu0 0.0
        %2267 = vmatpush1.msra.mxu0 0.0
        %2268 = vmatprep.subr.mxu0 0.0
        %2269 = vmatpush1.msra.mxu0 0.0
        %2270 = vmatprep.subr.mxu0 0.0
        %2271 = vmatpush1.msra.mxu0 0.0
        %2272 = vmatprep.mubr.f32.mxu0 0.0
        %v2273 = vand.u32 %v1881, 4294901760
        %2274 = vmatmul.mubr.f32.gmra.mrb[0].mxu0 %v2273
        %v2275 = vpop.f32.mrb[0].mxu0
        %v2276 = vadd.f32 %v2198, %v2275
        %v2277 = vpop.f32.mrb[0].mxu0
        %v2278 = vadd.f32 %v2200, %v2277
        %2279 = vdwg.mxu0
        %v2280 = vand.u32 %v1887, 4294901760
        %2281 = vmatprep.subr.mxu0 %v2280
        %v2282 = vand.u32 %v1884, 4294901760
        %2283 = vmatpush1.msra.mxu0 %v2282
        %2284 = vmatprep.subr.mxu0 0.0
        %2285 = vmatpush1.msra.mxu0 0.0
        %2286 = vmatprep.subr.mxu0 0.0
        %2287 = vmatpush1.msra.mxu0 0.0
        %2288 = vmatprep.subr.mxu0 0.0
        %2289 = vmatpush1.msra.mxu0 0.0
        %2290 = vmatprep.subr.mxu0 0.0
        %2291 = vmatpush1.msra.mxu0 0.0
        %2292 = vmatprep.subr.mxu0 0.0
        %2293 = vmatpush1.msra.mxu0 0.0
        %2294 = vmatprep.subr.mxu0 0.0
        %2295 = vmatpush1.msra.mxu0 0.0
        %2296 = vmatprep.subr.mxu0 0.0
        %2297 = vmatpush1.msra.mxu0 0.0
        %2298 = vmatprep.subr.mxu0 0.0
        %2299 = vmatpush1.msra.mxu0 0.0
        %2300 = vmatprep.subr.mxu0 0.0
        %2301 = vmatpush1.msra.mxu0 0.0
        %2302 = vmatprep.subr.mxu0 0.0
        %2303 = vmatpush1.msra.mxu0 0.0
        %2304 = vmatprep.subr.mxu0 0.0
        %2305 = vmatpush1.msra.mxu0 0.0
        %2306 = vmatprep.subr.mxu0 0.0
        %2307 = vmatpush1.msra.mxu0 0.0
        %2308 = vmatprep.subr.mxu0 0.0
        %2309 = vmatpush1.msra.mxu0 0.0
        %2310 = vmatprep.subr.mxu0 0.0
        %2311 = vmatpush1.msra.mxu0 0.0
        %2312 = vmatprep.subr.mxu0 0.0
        %2313 = vmatpush1.msra.mxu0 0.0
        %2314 = vmatprep.subr.mxu0 0.0
        %2315 = vmatpush1.msra.mxu0 0.0
        %2316 = vmatprep.subr.mxu0 0.0
        %2317 = vmatpush1.msra.mxu0 0.0
        %2318 = vmatprep.subr.mxu0 0.0
        %2319 = vmatpush1.msra.mxu0 0.0
        %2320 = vmatprep.subr.mxu0 0.0
        %2321 = vmatpush1.msra.mxu0 0.0
        %2322 = vmatprep.subr.mxu0 0.0
        %2323 = vmatpush1.msra.mxu0 0.0
        %2324 = vmatprep.subr.mxu0 0.0
        %2325 = vmatpush1.msra.mxu0 0.0
        %2326 = vmatprep.subr.mxu0 0.0
        %2327 = vmatpush1.msra.mxu0 0.0
        %2328 = vmatprep.subr.mxu0 0.0
        %2329 = vmatpush1.msra.mxu0 0.0
        %2330 = vmatprep.subr.mxu0 0.0
        %2331 = vmatpush1.msra.mxu0 0.0
        %2332 = vmatprep.subr.mxu0 0.0
        %2333 = vmatpush1.msra.mxu0 0.0
        %2334 = vmatprep.subr.mxu0 0.0
        %2335 = vmatpush1.msra.mxu0 0.0
        %2336 = vmatprep.subr.mxu0 0.0
        %2337 = vmatpush1.msra.mxu0 0.0
        %2338 = vmatprep.subr.mxu0 0.0
        %2339 = vmatpush1.msra.mxu0 0.0
        %2340 = vmatprep.subr.mxu0 0.0
        %2341 = vmatpush1.msra.mxu0 0.0
        %2342 = vmatprep.subr.mxu0 0.0
        %2343 = vmatpush1.msra.mxu0 0.0
        %2344 = vmatprep.subr.mxu0 0.0
        %2345 = vmatpush1.msra.mxu0 0.0
        %2346 = vmatprep.mubr.f32.mxu0 0.0
        %v2347 = vand.u32 %v1881, 4294901760
        %2348 = vmatmul.mubr.f32.gmra.mrb[0].mxu0 %v2347
        %v2349 = vpop.f32.mrb[0].mxu0
        %v2350 = vadd.f32 %v2276, %v2349
        %v2351 = vpop.f32.mrb[0].mxu0
        %v2352 = vadd.f32 %v2278, %v2351
        %2353 = vdwg.mxu0
        %v2354 = vadd.f32 %v1851, %v2350
        %v2355 = vadd.f32 %v1852, %v2352
        %s2356 = scalar_lea.vmem %s2, 32
        %v2357 = vld [vmem:[%s2356] sm:$0xff]
        %v2359 = vsel %vm400, %v2357, 0
        %v2361 = vsel %vm404, %v345, 0
        %v2363 = vsel %vm404, %v347, 0
        %v2365 = vand.u32 %v2363, 4294901760
        %2366 = vmatprep.subr.mxu0 %v2365
        %v2367 = vand.u32 %v2361, 4294901760
        %2368 = vmatpush1.msra.mxu0 %v2367
        %2369 = vmatprep.subr.mxu0 0.0
        %2370 = vmatpush1.msra.mxu0 0.0
        %2371 = vmatprep.subr.mxu0 0.0
        %2372 = vmatpush1.msra.mxu0 0.0
        %2373 = vmatprep.subr.mxu0 0.0
        %2374 = vmatpush1.msra.mxu0 0.0
        %2375 = vmatprep.subr.mxu0 0.0
        %2376 = vmatpush1.msra.mxu0 0.0
        %2377 = vmatprep.subr.mxu0 0.0
        %2378 = vmatpush1.msra.mxu0 0.0
        %2379 = vmatprep.subr.mxu0 0.0
        %2380 = vmatpush1.msra.mxu0 0.0
        %2381 = vmatprep.subr.mxu0 0.0
        %2382 = vmatpush1.msra.mxu0 0.0
        %2383 = vmatprep.subr.mxu0 0.0
        %2384 = vmatpush1.msra.mxu0 0.0
        %2385 = vmatprep.subr.mxu0 0.0
        %2386 = vmatpush1.msra.mxu0 0.0
        %2387 = vmatprep.subr.mxu0 0.0
        %2388 = vmatpush1.msra.mxu0 0.0
        %2389 = vmatprep.subr.mxu0 0.0
        %2390 = vmatpush1.msra.mxu0 0.0
        %2391 = vmatprep.subr.mxu0 0.0
        %2392 = vmatpush1.msra.mxu0 0.0
        %2393 = vmatprep.subr.mxu0 0.0
        %2394 = vmatpush1.msra.mxu0 0.0
        %2395 = vmatprep.subr.mxu0 0.0
        %2396 = vmatpush1.msra.mxu0 0.0
        %2397 = vmatprep.subr.mxu0 0.0
        %2398 = vmatpush1.msra.mxu0 0.0
        %2399 = vmatprep.subr.mxu0 0.0
        %2400 = vmatpush1.msra.mxu0 0.0
        %2401 = vmatprep.subr.mxu0 0.0
        %2402 = vmatpush1.msra.mxu0 0.0
        %2403 = vmatprep.subr.mxu0 0.0
        %2404 = vmatpush1.msra.mxu0 0.0
        %2405 = vmatprep.subr.mxu0 0.0
        %2406 = vmatpush1.msra.mxu0 0.0
        %2407 = vmatprep.subr.mxu0 0.0
        %2408 = vmatpush1.msra.mxu0 0.0
        %2409 = vmatprep.subr.mxu0 0.0
        %2410 = vmatpush1.msra.mxu0 0.0
        %2411 = vmatprep.subr.mxu0 0.0
        %2412 = vmatpush1.msra.mxu0 0.0
        %2413 = vmatprep.subr.mxu0 0.0
        %2414 = vmatpush1.msra.mxu0 0.0
        %2415 = vmatprep.subr.mxu0 0.0
        %2416 = vmatpush1.msra.mxu0 0.0
        %2417 = vmatprep.subr.mxu0 0.0
        %2418 = vmatpush1.msra.mxu0 0.0
        %2419 = vmatprep.subr.mxu0 0.0
        %2420 = vmatpush1.msra.mxu0 0.0
        %2421 = vmatprep.subr.mxu0 0.0
        %2422 = vmatpush1.msra.mxu0 0.0
        %2423 = vmatprep.subr.mxu0 0.0
        %2424 = vmatpush1.msra.mxu0 0.0
        %2425 = vmatprep.subr.mxu0 0.0
        %2426 = vmatpush1.msra.mxu0 0.0
        %2427 = vmatprep.subr.mxu0 0.0
        %2428 = vmatpush1.msra.mxu0 0.0
        %2429 = vmatprep.subr.mxu0 0.0
        %2430 = vmatpush1.msra.mxu0 0.0
        %2431 = vmatprep.mubr.f32.mxu0 0.0
        %v2432 = vand.u32 %v2359, 4294901760
        %v2433 = vsub.f32 %v2359, %v2432
        %v2434 = vand.u32 %v2433, 4294901760
        %v2435 = vsub.f32 %v2433, %v2434
        %v2436 = vand.u32 %v2435, 4294901760
        %2437 = vmatmul.mubr.f32.gmra.mrb[0].mxu0 %v2436
        %v2438 = vpop.f32.mrb[0].mxu0
        %v2439 = vadd.f32 0.0, %v2438
        %v2440 = vpop.f32.mrb[0].mxu0
        %v2441 = vadd.f32 0.0, %v2440
        %2442 = vdwg.mxu0
        %v2443 = vand.u32 %v2363, 4294901760
        %v2444 = vsub.f32 %v2363, %v2443
        %v2445 = vand.u32 %v2444, 4294901760
        %v2446 = vsub.f32 %v2444, %v2445
        %v2447 = vand.u32 %v2446, 4294901760
        %2448 = vmatprep.subr.mxu0 %v2447
        %v2449 = vand.u32 %v2361, 4294901760
        %v2450 = vsub.f32 %v2361, %v2449
        %v2451 = vand.u32 %v2450, 4294901760
        %v2452 = vsub.f32 %v2450, %v2451
        %v2453 = vand.u32 %v2452, 4294901760
        %2454 = vmatpush1.msra.mxu0 %v2453
        %2455 = vmatprep.subr.mxu0 0.0
        %2456 = vmatpush1.msra.mxu0 0.0
        %2457 = vmatprep.subr.mxu0 0.0
        %2458 = vmatpush1.msra.mxu0 0.0
        %2459 = vmatprep.subr.mxu0 0.0
        %2460 = vmatpush1.msra.mxu0 0.0
        %2461 = vmatprep.subr.mxu0 0.0
        %2462 = vmatpush1.msra.mxu0 0.0
        %2463 = vmatprep.subr.mxu0 0.0
        %2464 = vmatpush1.msra.mxu0 0.0
        %2465 = vmatprep.subr.mxu0 0.0
        %2466 = vmatpush1.msra.mxu0 0.0
        %2467 = vmatprep.subr.mxu0 0.0
        %2468 = vmatpush1.msra.mxu0 0.0
        %2469 = vmatprep.subr.mxu0 0.0
        %2470 = vmatpush1.msra.mxu0 0.0
        %2471 = vmatprep.subr.mxu0 0.0
        %2472 = vmatpush1.msra.mxu0 0.0
        %2473 = vmatprep.subr.mxu0 0.0
        %2474 = vmatpush1.msra.mxu0 0.0
        %2475 = vmatprep.subr.mxu0 0.0
        %2476 = vmatpush1.msra.mxu0 0.0
        %2477 = vmatprep.subr.mxu0 0.0
        %2478 = vmatpush1.msra.mxu0 0.0
        %2479 = vmatprep.subr.mxu0 0.0
        %2480 = vmatpush1.msra.mxu0 0.0
        %2481 = vmatprep.subr.mxu0 0.0
        %2482 = vmatpush1.msra.mxu0 0.0
        %2483 = vmatprep.subr.mxu0 0.0
        %2484 = vmatpush1.msra.mxu0 0.0
        %2485 = vmatprep.subr.mxu0 0.0
        %2486 = vmatpush1.msra.mxu0 0.0
        %2487 = vmatprep.subr.mxu0 0.0
        %2488 = vmatpush1.msra.mxu0 0.0
        %2489 = vmatprep.subr.mxu0 0.0
        %2490 = vmatpush1.msra.mxu0 0.0
        %2491 = vmatprep.subr.mxu0 0.0
        %2492 = vmatpush1.msra.mxu0 0.0
        %2493 = vmatprep.subr.mxu0 0.0
        %2494 = vmatpush1.msra.mxu0 0.0
        %2495 = vmatprep.subr.mxu0 0.0
        %2496 = vmatpush1.msra.mxu0 0.0
        %2497 = vmatprep.subr.mxu0 0.0
        %2498 = vmatpush1.msra.mxu0 0.0
        %2499 = vmatprep.subr.mxu0 0.0
        %2500 = vmatpush1.msra.mxu0 0.0
        %2501 = vmatprep.subr.mxu0 0.0
        %2502 = vmatpush1.msra.mxu0 0.0
        %2503 = vmatprep.subr.mxu0 0.0
        %2504 = vmatpush1.msra.mxu0 0.0
        %2505 = vmatprep.subr.mxu0 0.0
        %2506 = vmatpush1.msra.mxu0 0.0
        %2507 = vmatprep.subr.mxu0 0.0
        %2508 = vmatpush1.msra.mxu0 0.0
        %2509 = vmatprep.subr.mxu0 0.0
        %2510 = vmatpush1.msra.mxu0 0.0
        %2511 = vmatprep.subr.mxu0 0.0
        %2512 = vmatpush1.msra.mxu0 0.0
        %2513 = vmatprep.subr.mxu0 0.0
        %2514 = vmatpush1.msra.mxu0 0.0
        %2515 = vmatprep.subr.mxu0 0.0
        %2516 = vmatpush1.msra.mxu0 0.0
        %2517 = vmatprep.mubr.f32.mxu0 0.0
        %v2518 = vand.u32 %v2359, 4294901760
        %2519 = vmatmul.mubr.f32.gmra.mrb[0].mxu0 %v2518
        %v2520 = vpop.f32.mrb[0].mxu0
        %v2521 = vadd.f32 %v2439, %v2520
        %v2522 = vpop.f32.mrb[0].mxu0
        %v2523 = vadd.f32 %v2441, %v2522
        %2524 = vdwg.mxu0
        %v2525 = vand.u32 %v2363, 4294901760
        %v2526 = vsub.f32 %v2363, %v2525
        %2527 = vmatprep.subr.mxu0 %v2526
        %v2528 = vand.u32 %v2361, 4294901760
        %v2529 = vsub.f32 %v2361, %v2528
        %2530 = vmatpush1.msra.mxu0 %v2529
        %2531 = vmatprep.subr.mxu0 0.0
        %2532 = vmatpush1.msra.mxu0 0.0
        %2533 = vmatprep.subr.mxu0 0.0
        %2534 = vmatpush1.msra.mxu0 0.0
        %2535 = vmatprep.subr.mxu0 0.0
        %2536 = vmatpush1.msra.mxu0 0.0
        %2537 = vmatprep.subr.mxu0 0.0
        %2538 = vmatpush1.msra.mxu0 0.0
        %2539 = vmatprep.subr.mxu0 0.0
        %2540 = vmatpush1.msra.mxu0 0.0
        %2541 = vmatprep.subr.mxu0 0.0
        %2542 = vmatpush1.msra.mxu0 0.0
        %2543 = vmatprep.subr.mxu0 0.0
        %2544 = vmatpush1.msra.mxu0 0.0
        %2545 = vmatprep.subr.mxu0 0.0
        %2546 = vmatpush1.msra.mxu0 0.0
        %2547 = vmatprep.subr.mxu0 0.0
        %2548 = vmatpush1.msra.mxu0 0.0
        %2549 = vmatprep.subr.mxu0 0.0
        %2550 = vmatpush1.msra.mxu0 0.0
        %2551 = vmatprep.subr.mxu0 0.0
        %2552 = vmatpush1.msra.mxu0 0.0
        %2553 = vmatprep.subr.mxu0 0.0
        %2554 = vmatpush1.msra.mxu0 0.0
        %2555 = vmatprep.subr.mxu0 0.0
        %2556 = vmatpush1.msra.mxu0 0.0
        %2557 = vmatprep.subr.mxu0 0.0
        %2558 = vmatpush1.msra.mxu0 0.0
        %2559 = vmatprep.subr.mxu0 0.0
        %2560 = vmatpush1.msra.mxu0 0.0
        %2561 = vmatprep.subr.mxu0 0.0
        %2562 = vmatpush1.msra.mxu0 0.0
        %2563 = vmatprep.subr.mxu0 0.0
        %2564 = vmatpush1.msra.mxu0 0.0
        %2565 = vmatprep.subr.mxu0 0.0
        %2566 = vmatpush1.msra.mxu0 0.0
        %2567 = vmatprep.subr.mxu0 0.0
        %2568 = vmatpush1.msra.mxu0 0.0
        %2569 = vmatprep.subr.mxu0 0.0
        %2570 = vmatpush1.msra.mxu0 0.0
        %2571 = vmatprep.subr.mxu0 0.0
        %2572 = vmatpush1.msra.mxu0 0.0
        %2573 = vmatprep.subr.mxu0 0.0
        %2574 = vmatpush1.msra.mxu0 0.0
        %2575 = vmatprep.subr.mxu0 0.0
        %2576 = vmatpush1.msra.mxu0 0.0
        %2577 = vmatprep.subr.mxu0 0.0
        %2578 = vmatpush1.msra.mxu0 0.0
        %2579 = vmatprep.subr.mxu0 0.0
        %2580 = vmatpush1.msra.mxu0 0.0
        %2581 = vmatprep.subr.mxu0 0.0
        %2582 = vmatpush1.msra.mxu0 0.0
        %2583 = vmatprep.subr.mxu0 0.0
        %2584 = vmatpush1.msra.mxu0 0.0
        %2585 = vmatprep.subr.mxu0 0.0
        %2586 = vmatpush1.msra.mxu0 0.0
        %2587 = vmatprep.subr.mxu0 0.0
        %2588 = vmatpush1.msra.mxu0 0.0
        %2589 = vmatprep.subr.mxu0 0.0
        %2590 = vmatpush1.msra.mxu0 0.0
        %2591 = vmatprep.subr.mxu0 0.0
        %2592 = vmatpush1.msra.mxu0 0.0
        %2593 = vmatprep.mubr.f32.mxu0 0.0
        %v2594 = vand.u32 %v2359, 4294901760
        %v2595 = vsub.f32 %v2359, %v2594
        %2596 = vmatmul.mubr.f32.gmra.mrb[0].mxu0 %v2595
        %v2597 = vpop.f32.mrb[0].mxu0
        %v2598 = vadd.f32 %v2521, %v2597
        %v2599 = vpop.f32.mrb[0].mxu0
        %v2600 = vadd.f32 %v2523, %v2599
        %2601 = vdwg.mxu0
        %v2602 = vand.u32 %v2363, 4294901760
        %2603 = vmatprep.subr.mxu0 %v2602
        %v2604 = vand.u32 %v2361, 4294901760
        %2605 = vmatpush1.msra.mxu0 %v2604
        %2606 = vmatprep.subr.mxu0 0.0
        %2607 = vmatpush1.msra.mxu0 0.0
        %2608 = vmatprep.subr.mxu0 0.0
        %2609 = vmatpush1.msra.mxu0 0.0
        %2610 = vmatprep.subr.mxu0 0.0
        %2611 = vmatpush1.msra.mxu0 0.0
        %2612 = vmatprep.subr.mxu0 0.0
        %2613 = vmatpush1.msra.mxu0 0.0
        %2614 = vmatprep.subr.mxu0 0.0
        %2615 = vmatpush1.msra.mxu0 0.0
        %2616 = vmatprep.subr.mxu0 0.0
        %2617 = vmatpush1.msra.mxu0 0.0
        %2618 = vmatprep.subr.mxu0 0.0
        %2619 = vmatpush1.msra.mxu0 0.0
        %2620 = vmatprep.subr.mxu0 0.0
        %2621 = vmatpush1.msra.mxu0 0.0
        %2622 = vmatprep.subr.mxu0 0.0
        %2623 = vmatpush1.msra.mxu0 0.0
        %2624 = vmatprep.subr.mxu0 0.0
        %2625 = vmatpush1.msra.mxu0 0.0
        %2626 = vmatprep.subr.mxu0 0.0
        %2627 = vmatpush1.msra.mxu0 0.0
        %2628 = vmatprep.subr.mxu0 0.0
        %2629 = vmatpush1.msra.mxu0 0.0
        %2630 = vmatprep.subr.mxu0 0.0
        %2631 = vmatpush1.msra.mxu0 0.0
        %2632 = vmatprep.subr.mxu0 0.0
        %2633 = vmatpush1.msra.mxu0 0.0
        %2634 = vmatprep.subr.mxu0 0.0
        %2635 = vmatpush1.msra.mxu0 0.0
        %2636 = vmatprep.subr.mxu0 0.0
        %2637 = vmatpush1.msra.mxu0 0.0
        %2638 = vmatprep.subr.mxu0 0.0
        %2639 = vmatpush1.msra.mxu0 0.0
        %2640 = vmatprep.subr.mxu0 0.0
        %2641 = vmatpush1.msra.mxu0 0.0
        %2642 = vmatprep.subr.mxu0 0.0
        %2643 = vmatpush1.msra.mxu0 0.0
        %2644 = vmatprep.subr.mxu0 0.0
        %2645 = vmatpush1.msra.mxu0 0.0
        %2646 = vmatprep.subr.mxu0 0.0
        %2647 = vmatpush1.msra.mxu0 0.0
        %2648 = vmatprep.subr.mxu0 0.0
        %2649 = vmatpush1.msra.mxu0 0.0
        %2650 = vmatprep.subr.mxu0 0.0
        %2651 = vmatpush1.msra.mxu0 0.0
        %2652 = vmatprep.subr.mxu0 0.0
        %2653 = vmatpush1.msra.mxu0 0.0
        %2654 = vmatprep.subr.mxu0 0.0
        %2655 = vmatpush1.msra.mxu0 0.0
        %2656 = vmatprep.subr.mxu0 0.0
        %2657 = vmatpush1.msra.mxu0 0.0
        %2658 = vmatprep.subr.mxu0 0.0
        %2659 = vmatpush1.msra.mxu0 0.0
        %2660 = vmatprep.subr.mxu0 0.0
        %2661 = vmatpush1.msra.mxu0 0.0
        %2662 = vmatprep.subr.mxu0 0.0
        %2663 = vmatpush1.msra.mxu0 0.0
        %2664 = vmatprep.subr.mxu0 0.0
        %2665 = vmatpush1.msra.mxu0 0.0
        %2666 = vmatprep.subr.mxu0 0.0
        %2667 = vmatpush1.msra.mxu0 0.0
        %2668 = vmatprep.mubr.f32.mxu0 0.0
        %v2669 = vand.u32 %v2359, 4294901760
        %v2670 = vsub.f32 %v2359, %v2669
        %v2671 = vand.u32 %v2670, 4294901760
        %2672 = vmatmul.mubr.f32.gmra.mrb[0].mxu0 %v2671
        %v2673 = vpop.f32.mrb[0].mxu0
        %v2674 = vadd.f32 %v2598, %v2673
        %v2675 = vpop.f32.mrb[0].mxu0
        %v2676 = vadd.f32 %v2600, %v2675
        %2677 = vdwg.mxu0
        %v2678 = vand.u32 %v2363, 4294901760
        %v2679 = vsub.f32 %v2363, %v2678
        %v2680 = vand.u32 %v2679, 4294901760
        %2681 = vmatprep.subr.mxu0 %v2680
        %v2682 = vand.u32 %v2361, 4294901760
        %v2683 = vsub.f32 %v2361, %v2682
        %v2684 = vand.u32 %v2683, 4294901760
        %2685 = vmatpush1.msra.mxu0 %v2684
        %2686 = vmatprep.subr.mxu0 0.0
        %2687 = vmatpush1.msra.mxu0 0.0
        %2688 = vmatprep.subr.mxu0 0.0
        %2689 = vmatpush1.msra.mxu0 0.0
        %2690 = vmatprep.subr.mxu0 0.0
        %2691 = vmatpush1.msra.mxu0 0.0
        %2692 = vmatprep.subr.mxu0 0.0
        %2693 = vmatpush1.msra.mxu0 0.0
        %2694 = vmatprep.subr.mxu0 0.0
        %2695 = vmatpush1.msra.mxu0 0.0
        %2696 = vmatprep.subr.mxu0 0.0
        %2697 = vmatpush1.msra.mxu0 0.0
        %2698 = vmatprep.subr.mxu0 0.0
        %2699 = vmatpush1.msra.mxu0 0.0
        %2700 = vmatprep.subr.mxu0 0.0
        %2701 = vmatpush1.msra.mxu0 0.0
        %2702 = vmatprep.subr.mxu0 0.0
        %2703 = vmatpush1.msra.mxu0 0.0
        %2704 = vmatprep.subr.mxu0 0.0
        %2705 = vmatpush1.msra.mxu0 0.0
        %2706 = vmatprep.subr.mxu0 0.0
        %2707 = vmatpush1.msra.mxu0 0.0
        %2708 = vmatprep.subr.mxu0 0.0
        %2709 = vmatpush1.msra.mxu0 0.0
        %2710 = vmatprep.subr.mxu0 0.0
        %2711 = vmatpush1.msra.mxu0 0.0
        %2712 = vmatprep.subr.mxu0 0.0
        %2713 = vmatpush1.msra.mxu0 0.0
        %2714 = vmatprep.subr.mxu0 0.0
        %2715 = vmatpush1.msra.mxu0 0.0
        %2716 = vmatprep.subr.mxu0 0.0
        %2717 = vmatpush1.msra.mxu0 0.0
        %2718 = vmatprep.subr.mxu0 0.0
        %2719 = vmatpush1.msra.mxu0 0.0
        %2720 = vmatprep.subr.mxu0 0.0
        %2721 = vmatpush1.msra.mxu0 0.0
        %2722 = vmatprep.subr.mxu0 0.0
        %2723 = vmatpush1.msra.mxu0 0.0
        %2724 = vmatprep.subr.mxu0 0.0
        %2725 = vmatpush1.msra.mxu0 0.0
        %2726 = vmatprep.subr.mxu0 0.0
        %2727 = vmatpush1.msra.mxu0 0.0
        %2728 = vmatprep.subr.mxu0 0.0
        %2729 = vmatpush1.msra.mxu0 0.0
        %2730 = vmatprep.subr.mxu0 0.0
        %2731 = vmatpush1.msra.mxu0 0.0
        %2732 = vmatprep.subr.mxu0 0.0
        %2733 = vmatpush1.msra.mxu0 0.0
        %2734 = vmatprep.subr.mxu0 0.0
        %2735 = vmatpush1.msra.mxu0 0.0
        %2736 = vmatprep.subr.mxu0 0.0
        %2737 = vmatpush1.msra.mxu0 0.0
        %2738 = vmatprep.subr.mxu0 0.0
        %2739 = vmatpush1.msra.mxu0 0.0
        %2740 = vmatprep.subr.mxu0 0.0
        %2741 = vmatpush1.msra.mxu0 0.0
        %2742 = vmatprep.subr.mxu0 0.0
        %2743 = vmatpush1.msra.mxu0 0.0
        %2744 = vmatprep.subr.mxu0 0.0
        %2745 = vmatpush1.msra.mxu0 0.0
        %2746 = vmatprep.subr.mxu0 0.0
        %2747 = vmatpush1.msra.mxu0 0.0
        %2748 = vmatprep.mubr.f32.mxu0 0.0
        %v2749 = vand.u32 %v2359, 4294901760
        %2750 = vmatmul.mubr.f32.gmra.mrb[0].mxu0 %v2749
        %v2751 = vpop.f32.mrb[0].mxu0
        %v2752 = vadd.f32 %v2674, %v2751
        %v2753 = vpop.f32.mrb[0].mxu0
        %v2754 = vadd.f32 %v2676, %v2753
        %2755 = vdwg.mxu0
        %v2756 = vand.u32 %v2363, 4294901760
        %2757 = vmatprep.subr.mxu0 %v2756
        %v2758 = vand.u32 %v2361, 4294901760
        %2759 = vmatpush1.msra.mxu0 %v2758
        %2760 = vmatprep.subr.mxu0 0.0
        %2761 = vmatpush1.msra.mxu0 0.0
        %2762 = vmatprep.subr.mxu0 0.0
        %2763 = vmatpush1.msra.mxu0 0.0
        %2764 = vmatprep.subr.mxu0 0.0
        %2765 = vmatpush1.msra.mxu0 0.0
        %2766 = vmatprep.subr.mxu0 0.0
        %2767 = vmatpush1.msra.mxu0 0.0
        %2768 = vmatprep.subr.mxu0 0.0
        %2769 = vmatpush1.msra.mxu0 0.0
        %2770 = vmatprep.subr.mxu0 0.0
        %2771 = vmatpush1.msra.mxu0 0.0
        %2772 = vmatprep.subr.mxu0 0.0
        %2773 = vmatpush1.msra.mxu0 0.0
        %2774 = vmatprep.subr.mxu0 0.0
        %2775 = vmatpush1.msra.mxu0 0.0
        %2776 = vmatprep.subr.mxu0 0.0
        %2777 = vmatpush1.msra.mxu0 0.0
        %2778 = vmatprep.subr.mxu0 0.0
        %2779 = vmatpush1.msra.mxu0 0.0
        %2780 = vmatprep.subr.mxu0 0.0
        %2781 = vmatpush1.msra.mxu0 0.0
        %2782 = vmatprep.subr.mxu0 0.0
        %2783 = vmatpush1.msra.mxu0 0.0
        %2784 = vmatprep.subr.mxu0 0.0
        %2785 = vmatpush1.msra.mxu0 0.0
        %2786 = vmatprep.subr.mxu0 0.0
        %2787 = vmatpush1.msra.mxu0 0.0
        %2788 = vmatprep.subr.mxu0 0.0
        %2789 = vmatpush1.msra.mxu0 0.0
        %2790 = vmatprep.subr.mxu0 0.0
        %2791 = vmatpush1.msra.mxu0 0.0
        %2792 = vmatprep.subr.mxu0 0.0
        %2793 = vmatpush1.msra.mxu0 0.0
        %2794 = vmatprep.subr.mxu0 0.0
        %2795 = vmatpush1.msra.mxu0 0.0
        %2796 = vmatprep.subr.mxu0 0.0
        %2797 = vmatpush1.msra.mxu0 0.0
        %2798 = vmatprep.subr.mxu0 0.0
        %2799 = vmatpush1.msra.mxu0 0.0
        %2800 = vmatprep.subr.mxu0 0.0
        %2801 = vmatpush1.msra.mxu0 0.0
        %2802 = vmatprep.subr.mxu0 0.0
        %2803 = vmatpush1.msra.mxu0 0.0
        %2804 = vmatprep.subr.mxu0 0.0
        %2805 = vmatpush1.msra.mxu0 0.0
        %2806 = vmatprep.subr.mxu0 0.0
        %2807 = vmatpush1.msra.mxu0 0.0
        %2808 = vmatprep.subr.mxu0 0.0
        %2809 = vmatpush1.msra.mxu0 0.0
        %2810 = vmatprep.subr.mxu0 0.0
        %2811 = vmatpush1.msra.mxu0 0.0
        %2812 = vmatprep.subr.mxu0 0.0
        %2813 = vmatpush1.msra.mxu0 0.0
        %2814 = vmatprep.subr.mxu0 0.0
        %2815 = vmatpush1.msra.mxu0 0.0
        %2816 = vmatprep.subr.mxu0 0.0
        %2817 = vmatpush1.msra.mxu0 0.0
        %2818 = vmatprep.subr.mxu0 0.0
        %2819 = vmatpush1.msra.mxu0 0.0
        %2820 = vmatprep.subr.mxu0 0.0
        %2821 = vmatpush1.msra.mxu0 0.0
        %2822 = vmatprep.mubr.f32.mxu0 0.0
        %v2823 = vand.u32 %v2359, 4294901760
        %2824 = vmatmul.mubr.f32.gmra.mrb[0].mxu0 %v2823
        %v2825 = vpop.f32.mrb[0].mxu0
        %v2826 = vadd.f32 %v2752, %v2825
        %v2827 = vpop.f32.mrb[0].mxu0
        %v2828 = vadd.f32 %v2754, %v2827
        %2829 = vdwg.mxu0
        %v2830 = vadd.f32 %v2354, %v2826
        %v2831 = vadd.f32 %v2355, %v2828
        %2832 = vrot.lane.b32.xlu0 %v345, 127
        %v2833 = vpop.permute.xlu0 %2832
        %2834 = vrot.lane.b32.xlu0 %v347, 127
        %v2835 = vpop.permute.xlu0 %2834
        %vm2836 = vcmask 1039360
        %v2837 = vsel %vm2836, %v2833, %v2835
        %v2841 = vsel %vm2836, %v2835, %v2833
        %s2842 = scalar_lea.vmem %s1, 10
        %v2843 = vld [vmem:[%s2842] sm:$0x3]
        %v2845 = vlaneseq
        %v2846 = vshrl.u32 %v2845, 7
        %v2847 = vsub.s32 0, %v2846
        %v2848 = vrot.slane %v2843, %v2847
        %v2849 = vlaneseq
        %v2850 = vshrl.u32 %v2849, 7
        %v2851 = vsub.s32 1, %v2850
        %v2852 = vrot.slane %v2843, %v2851
        %v2855 = vmul.f32 %v2837, %v2848
        %v2856 = vmul.f32 %v2841, %v2852
        %s2857 = scalar_lea.vmem %s2, 40
        %v2858 = vld [vmem:[%s2857] sm:$0xff]
        %v2860 = vsel %vm400, %v2858, 0
        %v2863 = vsel %vm404, %v2855, 0
        %v2866 = vsel %vm404, %v2856, 0
        %v2868 = vand.u32 %v2866, 4294901760
        %2869 = vmatprep.subr.mxu0 %v2868
        %v2870 = vand.u32 %v2863, 4294901760
        %2871 = vmatpush1.msra.mxu0 %v2870
        %2872 = vmatprep.subr.mxu0 0.0
        %2873 = vmatpush1.msra.mxu0 0.0
        %2874 = vmatprep.subr.mxu0 0.0
        %2875 = vmatpush1.msra.mxu0 0.0
        %2876 = vmatprep.subr.mxu0 0.0
        %2877 = vmatpush1.msra.mxu0 0.0
        %2878 = vmatprep.subr.mxu0 0.0
        %2879 = vmatpush1.msra.mxu0 0.0
        %2880 = vmatprep.subr.mxu0 0.0
        %2881 = vmatpush1.msra.mxu0 0.0
        %2882 = vmatprep.subr.mxu0 0.0
        %2883 = vmatpush1.msra.mxu0 0.0
        %2884 = vmatprep.subr.mxu0 0.0
        %2885 = vmatpush1.msra.mxu0 0.0
        %2886 = vmatprep.subr.mxu0 0.0
        %2887 = vmatpush1.msra.mxu0 0.0
        %2888 = vmatprep.subr.mxu0 0.0
        %2889 = vmatpush1.msra.mxu0 0.0
        %2890 = vmatprep.subr.mxu0 0.0
        %2891 = vmatpush1.msra.mxu0 0.0
        %2892 = vmatprep.subr.mxu0 0.0
        %2893 = vmatpush1.msra.mxu0 0.0
        %2894 = vmatprep.subr.mxu0 0.0
        %2895 = vmatpush1.msra.mxu0 0.0
        %2896 = vmatprep.subr.mxu0 0.0
        %2897 = vmatpush1.msra.mxu0 0.0
        %2898 = vmatprep.subr.mxu0 0.0
        %2899 = vmatpush1.msra.mxu0 0.0
        %2900 = vmatprep.subr.mxu0 0.0
        %2901 = vmatpush1.msra.mxu0 0.0
        %2902 = vmatprep.subr.mxu0 0.0
        %2903 = vmatpush1.msra.mxu0 0.0
        %2904 = vmatprep.subr.mxu0 0.0
        %2905 = vmatpush1.msra.mxu0 0.0
        %2906 = vmatprep.subr.mxu0 0.0
        %2907 = vmatpush1.msra.mxu0 0.0
        %2908 = vmatprep.subr.mxu0 0.0
        %2909 = vmatpush1.msra.mxu0 0.0
        %2910 = vmatprep.subr.mxu0 0.0
        %2911 = vmatpush1.msra.mxu0 0.0
        %2912 = vmatprep.subr.mxu0 0.0
        %2913 = vmatpush1.msra.mxu0 0.0
        %2914 = vmatprep.subr.mxu0 0.0
        %2915 = vmatpush1.msra.mxu0 0.0
        %2916 = vmatprep.subr.mxu0 0.0
        %2917 = vmatpush1.msra.mxu0 0.0
        %2918 = vmatprep.subr.mxu0 0.0
        %2919 = vmatpush1.msra.mxu0 0.0
        %2920 = vmatprep.subr.mxu0 0.0
        %2921 = vmatpush1.msra.mxu0 0.0
        %2922 = vmatprep.subr.mxu0 0.0
        %2923 = vmatpush1.msra.mxu0 0.0
        %2924 = vmatprep.subr.mxu0 0.0
        %2925 = vmatpush1.msra.mxu0 0.0
        %2926 = vmatprep.subr.mxu0 0.0
        %2927 = vmatpush1.msra.mxu0 0.0
        %2928 = vmatprep.subr.mxu0 0.0
        %2929 = vmatpush1.msra.mxu0 0.0
        %2930 = vmatprep.subr.mxu0 0.0
        %2931 = vmatpush1.msra.mxu0 0.0
        %2932 = vmatprep.subr.mxu0 0.0
        %2933 = vmatpush1.msra.mxu0 0.0
        %2934 = vmatprep.mubr.f32.mxu0 0.0
        %v2935 = vand.u32 %v2860, 4294901760
        %v2936 = vsub.f32 %v2860, %v2935
        %v2937 = vand.u32 %v2936, 4294901760
        %v2938 = vsub.f32 %v2936, %v2937
        %v2939 = vand.u32 %v2938, 4294901760
        %2940 = vmatmul.mubr.f32.gmra.mrb[0].mxu0 %v2939
        %v2941 = vpop.f32.mrb[0].mxu0
        %v2942 = vadd.f32 0.0, %v2941
        %v2943 = vpop.f32.mrb[0].mxu0
        %v2944 = vadd.f32 0.0, %v2943
        %2945 = vdwg.mxu0
        %v2946 = vand.u32 %v2866, 4294901760
        %v2947 = vsub.f32 %v2866, %v2946
        %v2948 = vand.u32 %v2947, 4294901760
        %v2949 = vsub.f32 %v2947, %v2948
        %v2950 = vand.u32 %v2949, 4294901760
        %2951 = vmatprep.subr.mxu0 %v2950
        %v2952 = vand.u32 %v2863, 4294901760
        %v2953 = vsub.f32 %v2863, %v2952
        %v2954 = vand.u32 %v2953, 4294901760
        %v2955 = vsub.f32 %v2953, %v2954
        %v2956 = vand.u32 %v2955, 4294901760
        %2957 = vmatpush1.msra.mxu0 %v2956
        %2958 = vmatprep.subr.mxu0 0.0
        %2959 = vmatpush1.msra.mxu0 0.0
        %2960 = vmatprep.subr.mxu0 0.0
        %2961 = vmatpush1.msra.mxu0 0.0
        %2962 = vmatprep.subr.mxu0 0.0
        %2963 = vmatpush1.msra.mxu0 0.0
        %2964 = vmatprep.subr.mxu0 0.0
        %2965 = vmatpush1.msra.mxu0 0.0
        %2966 = vmatprep.subr.mxu0 0.0
        %2967 = vmatpush1.msra.mxu0 0.0
        %2968 = vmatprep.subr.mxu0 0.0
        %2969 = vmatpush1.msra.mxu0 0.0
        %2970 = vmatprep.subr.mxu0 0.0
        %2971 = vmatpush1.msra.mxu0 0.0
        %2972 = vmatprep.subr.mxu0 0.0
        %2973 = vmatpush1.msra.mxu0 0.0
        %2974 = vmatprep.subr.mxu0 0.0
        %2975 = vmatpush1.msra.mxu0 0.0
        %2976 = vmatprep.subr.mxu0 0.0
        %2977 = vmatpush1.msra.mxu0 0.0
        %2978 = vmatprep.subr.mxu0 0.0
        %2979 = vmatpush1.msra.mxu0 0.0
        %2980 = vmatprep.subr.mxu0 0.0
        %2981 = vmatpush1.msra.mxu0 0.0
        %2982 = vmatprep.subr.mxu0 0.0
        %2983 = vmatpush1.msra.mxu0 0.0
        %2984 = vmatprep.subr.mxu0 0.0
        %2985 = vmatpush1.msra.mxu0 0.0
        %2986 = vmatprep.subr.mxu0 0.0
        %2987 = vmatpush1.msra.mxu0 0.0
        %2988 = vmatprep.subr.mxu0 0.0
        %2989 = vmatpush1.msra.mxu0 0.0
        %2990 = vmatprep.subr.mxu0 0.0
        %2991 = vmatpush1.msra.mxu0 0.0
        %2992 = vmatprep.subr.mxu0 0.0
        %2993 = vmatpush1.msra.mxu0 0.0
        %2994 = vmatprep.subr.mxu0 0.0
        %2995 = vmatpush1.msra.mxu0 0.0
        %2996 = vmatprep.subr.mxu0 0.0
        %2997 = vmatpush1.msra.mxu0 0.0
        %2998 = vmatprep.subr.mxu0 0.0
        %2999 = vmatpush1.msra.mxu0 0.0
        %3000 = vmatprep.subr.mxu0 0.0
        %3001 = vmatpush1.msra.mxu0 0.0
        %3002 = vmatprep.subr.mxu0 0.0
        %3003 = vmatpush1.msra.mxu0 0.0
        %3004 = vmatprep.subr.mxu0 0.0
        %3005 = vmatpush1.msra.mxu0 0.0
        %3006 = vmatprep.subr.mxu0 0.0
        %3007 = vmatpush1.msra.mxu0 0.0
        %3008 = vmatprep.subr.mxu0 0.0
        %3009 = vmatpush1.msra.mxu0 0.0
        %3010 = vmatprep.subr.mxu0 0.0
        %3011 = vmatpush1.msra.mxu0 0.0
        %3012 = vmatprep.subr.mxu0 0.0
        %3013 = vmatpush1.msra.mxu0 0.0
        %3014 = vmatprep.subr.mxu0 0.0
        %3015 = vmatpush1.msra.mxu0 0.0
        %3016 = vmatprep.subr.mxu0 0.0
        %3017 = vmatpush1.msra.mxu0 0.0
        %3018 = vmatprep.subr.mxu0 0.0
        %3019 = vmatpush1.msra.mxu0 0.0
        %3020 = vmatprep.mubr.f32.mxu0 0.0
        %v3021 = vand.u32 %v2860, 4294901760
        %3022 = vmatmul.mubr.f32.gmra.mrb[0].mxu0 %v3021
        %v3023 = vpop.f32.mrb[0].mxu0
        %v3024 = vadd.f32 %v2942, %v3023
        %v3025 = vpop.f32.mrb[0].mxu0
        %v3026 = vadd.f32 %v2944, %v3025
        %3027 = vdwg.mxu0
        %v3028 = vand.u32 %v2866, 4294901760
        %v3029 = vsub.f32 %v2866, %v3028
        %3030 = vmatprep.subr.mxu0 %v3029
        %v3031 = vand.u32 %v2863, 4294901760
        %v3032 = vsub.f32 %v2863, %v3031
        %3033 = vmatpush1.msra.mxu0 %v3032
        %3034 = vmatprep.subr.mxu0 0.0
        %3035 = vmatpush1.msra.mxu0 0.0
        %3036 = vmatprep.subr.mxu0 0.0
        %3037 = vmatpush1.msra.mxu0 0.0
        %3038 = vmatprep.subr.mxu0 0.0
        %3039 = vmatpush1.msra.mxu0 0.0
        %3040 = vmatprep.subr.mxu0 0.0
        %3041 = vmatpush1.msra.mxu0 0.0
        %3042 = vmatprep.subr.mxu0 0.0
        %3043 = vmatpush1.msra.mxu0 0.0
        %3044 = vmatprep.subr.mxu0 0.0
        %3045 = vmatpush1.msra.mxu0 0.0
        %3046 = vmatprep.subr.mxu0 0.0
        %3047 = vmatpush1.msra.mxu0 0.0
        %3048 = vmatprep.subr.mxu0 0.0
        %3049 = vmatpush1.msra.mxu0 0.0
        %3050 = vmatprep.subr.mxu0 0.0
        %3051 = vmatpush1.msra.mxu0 0.0
        %3052 = vmatprep.subr.mxu0 0.0
        %3053 = vmatpush1.msra.mxu0 0.0
        %3054 = vmatprep.subr.mxu0 0.0
        %3055 = vmatpush1.msra.mxu0 0.0
        %3056 = vmatprep.subr.mxu0 0.0
        %3057 = vmatpush1.msra.mxu0 0.0
        %3058 = vmatprep.subr.mxu0 0.0
        %3059 = vmatpush1.msra.mxu0 0.0
        %3060 = vmatprep.subr.mxu0 0.0
        %3061 = vmatpush1.msra.mxu0 0.0
        %3062 = vmatprep.subr.mxu0 0.0
        %3063 = vmatpush1.msra.mxu0 0.0
        %3064 = vmatprep.subr.mxu0 0.0
        %3065 = vmatpush1.msra.mxu0 0.0
        %3066 = vmatprep.subr.mxu0 0.0
        %3067 = vmatpush1.msra.mxu0 0.0
        %3068 = vmatprep.subr.mxu0 0.0
        %3069 = vmatpush1.msra.mxu0 0.0
        %3070 = vmatprep.subr.mxu0 0.0
        %3071 = vmatpush1.msra.mxu0 0.0
        %3072 = vmatprep.subr.mxu0 0.0
        %3073 = vmatpush1.msra.mxu0 0.0
        %3074 = vmatprep.subr.mxu0 0.0
        %3075 = vmatpush1.msra.mxu0 0.0
        %3076 = vmatprep.subr.mxu0 0.0
        %3077 = vmatpush1.msra.mxu0 0.0
        %3078 = vmatprep.subr.mxu0 0.0
        %3079 = vmatpush1.msra.mxu0 0.0
        %3080 = vmatprep.subr.mxu0 0.0
        %3081 = vmatpush1.msra.mxu0 0.0
        %3082 = vmatprep.subr.mxu0 0.0
        %3083 = vmatpush1.msra.mxu0 0.0
        %3084 = vmatprep.subr.mxu0 0.0
        %3085 = vmatpush1.msra.mxu0 0.0
        %3086 = vmatprep.subr.mxu0 0.0
        %3087 = vmatpush1.msra.mxu0 0.0
        %3088 = vmatprep.subr.mxu0 0.0
        %3089 = vmatpush1.msra.mxu0 0.0
        %3090 = vmatprep.subr.mxu0 0.0
        %3091 = vmatpush1.msra.mxu0 0.0
        %3092 = vmatprep.subr.mxu0 0.0
        %3093 = vmatpush1.msra.mxu0 0.0
        %3094 = vmatprep.subr.mxu0 0.0
        %3095 = vmatpush1.msra.mxu0 0.0
        %3096 = vmatprep.mubr.f32.mxu0 0.0
        %v3097 = vand.u32 %v2860, 4294901760
        %v3098 = vsub.f32 %v2860, %v3097
        %3099 = vmatmul.mubr.f32.gmra.mrb[0].mxu0 %v3098
        %v3100 = vpop.f32.mrb[0].mxu0
        %v3101 = vadd.f32 %v3024, %v3100
        %v3102 = vpop.f32.mrb[0].mxu0
        %v3103 = vadd.f32 %v3026, %v3102
        %3104 = vdwg.mxu0
        %v3105 = vand.u32 %v2866, 4294901760
        %3106 = vmatprep.subr.mxu0 %v3105
        %v3107 = vand.u32 %v2863, 4294901760
        %3108 = vmatpush1.msra.mxu0 %v3107
        %3109 = vmatprep.subr.mxu0 0.0
        %3110 = vmatpush1.msra.mxu0 0.0
        %3111 = vmatprep.subr.mxu0 0.0
        %3112 = vmatpush1.msra.mxu0 0.0
        %3113 = vmatprep.subr.mxu0 0.0
        %3114 = vmatpush1.msra.mxu0 0.0
        %3115 = vmatprep.subr.mxu0 0.0
        %3116 = vmatpush1.msra.mxu0 0.0
        %3117 = vmatprep.subr.mxu0 0.0
        %3118 = vmatpush1.msra.mxu0 0.0
        %3119 = vmatprep.subr.mxu0 0.0
        %3120 = vmatpush1.msra.mxu0 0.0
        %3121 = vmatprep.subr.mxu0 0.0
        %3122 = vmatpush1.msra.mxu0 0.0
        %3123 = vmatprep.subr.mxu0 0.0
        %3124 = vmatpush1.msra.mxu0 0.0
        %3125 = vmatprep.subr.mxu0 0.0
        %3126 = vmatpush1.msra.mxu0 0.0
        %3127 = vmatprep.subr.mxu0 0.0
        %3128 = vmatpush1.msra.mxu0 0.0
        %3129 = vmatprep.subr.mxu0 0.0
        %3130 = vmatpush1.msra.mxu0 0.0
        %3131 = vmatprep.subr.mxu0 0.0
        %3132 = vmatpush1.msra.mxu0 0.0
        %3133 = vmatprep.subr.mxu0 0.0
        %3134 = vmatpush1.msra.mxu0 0.0
        %3135 = vmatprep.subr.mxu0 0.0
        %3136 = vmatpush1.msra.mxu0 0.0
        %3137 = vmatprep.subr.mxu0 0.0
        %3138 = vmatpush1.msra.mxu0 0.0
        %3139 = vmatprep.subr.mxu0 0.0
        %3140 = vmatpush1.msra.mxu0 0.0
        %3141 = vmatprep.subr.mxu0 0.0
        %3142 = vmatpush1.msra.mxu0 0.0
        %3143 = vmatprep.subr.mxu0 0.0
        %3144 = vmatpush1.msra.mxu0 0.0
        %3145 = vmatprep.subr.mxu0 0.0
        %3146 = vmatpush1.msra.mxu0 0.0
        %3147 = vmatprep.subr.mxu0 0.0
        %3148 = vmatpush1.msra.mxu0 0.0
        %3149 = vmatprep.subr.mxu0 0.0
        %3150 = vmatpush1.msra.mxu0 0.0
        %3151 = vmatprep.subr.mxu0 0.0
        %3152 = vmatpush1.msra.mxu0 0.0
        %3153 = vmatprep.subr.mxu0 0.0
        %3154 = vmatpush1.msra.mxu0 0.0
        %3155 = vmatprep.subr.mxu0 0.0
        %3156 = vmatpush1.msra.mxu0 0.0
        %3157 = vmatprep.subr.mxu0 0.0
        %3158 = vmatpush1.msra.mxu0 0.0
        %3159 = vmatprep.subr.mxu0 0.0
        %3160 = vmatpush1.msra.mxu0 0.0
        %3161 = vmatprep.subr.mxu0 0.0
        %3162 = vmatpush1.msra.mxu0 0.0
        %3163 = vmatprep.subr.mxu0 0.0
        %3164 = vmatpush1.msra.mxu0 0.0
        %3165 = vmatprep.subr.mxu0 0.0
        %3166 = vmatpush1.msra.mxu0 0.0
        %3167 = vmatprep.subr.mxu0 0.0
        %3168 = vmatpush1.msra.mxu0 0.0
        %3169 = vmatprep.subr.mxu0 0.0
        %3170 = vmatpush1.msra.mxu0 0.0
        %3171 = vmatprep.mubr.f32.mxu0 0.0
        %v3172 = vand.u32 %v2860, 4294901760
        %v3173 = vsub.f32 %v2860, %v3172
        %v3174 = vand.u32 %v3173, 4294901760
        %3175 = vmatmul.mubr.f32.gmra.mrb[0].mxu0 %v3174
        %v3176 = vpop.f32.mrb[0].mxu0
        %v3177 = vadd.f32 %v3101, %v3176
        %v3178 = vpop.f32.mrb[0].mxu0
        %v3179 = vadd.f32 %v3103, %v3178
        %3180 = vdwg.mxu0
        %v3181 = vand.u32 %v2866, 4294901760
        %v3182 = vsub.f32 %v2866, %v3181
        %v3183 = vand.u32 %v3182, 4294901760
        %3184 = vmatprep.subr.mxu0 %v3183
        %v3185 = vand.u32 %v2863, 4294901760
        %v3186 = vsub.f32 %v2863, %v3185
        %v3187 = vand.u32 %v3186, 4294901760
        %3188 = vmatpush1.msra.mxu0 %v3187
        %3189 = vmatprep.subr.mxu0 0.0
        %3190 = vmatpush1.msra.mxu0 0.0
        %3191 = vmatprep.subr.mxu0 0.0
        %3192 = vmatpush1.msra.mxu0 0.0
        %3193 = vmatprep.subr.mxu0 0.0
        %3194 = vmatpush1.msra.mxu0 0.0
        %3195 = vmatprep.subr.mxu0 0.0
        %3196 = vmatpush1.msra.mxu0 0.0
        %3197 = vmatprep.subr.mxu0 0.0
        %3198 = vmatpush1.msra.mxu0 0.0
        %3199 = vmatprep.subr.mxu0 0.0
        %3200 = vmatpush1.msra.mxu0 0.0
        %3201 = vmatprep.subr.mxu0 0.0
        %3202 = vmatpush1.msra.mxu0 0.0
        %3203 = vmatprep.subr.mxu0 0.0
        %3204 = vmatpush1.msra.mxu0 0.0
        %3205 = vmatprep.subr.mxu0 0.0
        %3206 = vmatpush1.msra.mxu0 0.0
        %3207 = vmatprep.subr.mxu0 0.0
        %3208 = vmatpush1.msra.mxu0 0.0
        %3209 = vmatprep.subr.mxu0 0.0
        %3210 = vmatpush1.msra.mxu0 0.0
        %3211 = vmatprep.subr.mxu0 0.0
        %3212 = vmatpush1.msra.mxu0 0.0
        %3213 = vmatprep.subr.mxu0 0.0
        %3214 = vmatpush1.msra.mxu0 0.0
        %3215 = vmatprep.subr.mxu0 0.0
        %3216 = vmatpush1.msra.mxu0 0.0
        %3217 = vmatprep.subr.mxu0 0.0
        %3218 = vmatpush1.msra.mxu0 0.0
        %3219 = vmatprep.subr.mxu0 0.0
        %3220 = vmatpush1.msra.mxu0 0.0
        %3221 = vmatprep.subr.mxu0 0.0
        %3222 = vmatpush1.msra.mxu0 0.0
        %3223 = vmatprep.subr.mxu0 0.0
        %3224 = vmatpush1.msra.mxu0 0.0
        %3225 = vmatprep.subr.mxu0 0.0
        %3226 = vmatpush1.msra.mxu0 0.0
        %3227 = vmatprep.subr.mxu0 0.0
        %3228 = vmatpush1.msra.mxu0 0.0
        %3229 = vmatprep.subr.mxu0 0.0
        %3230 = vmatpush1.msra.mxu0 0.0
        %3231 = vmatprep.subr.mxu0 0.0
        %3232 = vmatpush1.msra.mxu0 0.0
        %3233 = vmatprep.subr.mxu0 0.0
        %3234 = vmatpush1.msra.mxu0 0.0
        %3235 = vmatprep.subr.mxu0 0.0
        %3236 = vmatpush1.msra.mxu0 0.0
        %3237 = vmatprep.subr.mxu0 0.0
        %3238 = vmatpush1.msra.mxu0 0.0
        %3239 = vmatprep.subr.mxu0 0.0
        %3240 = vmatpush1.msra.mxu0 0.0
        %3241 = vmatprep.subr.mxu0 0.0
        %3242 = vmatpush1.msra.mxu0 0.0
        %3243 = vmatprep.subr.mxu0 0.0
        %3244 = vmatpush1.msra.mxu0 0.0
        %3245 = vmatprep.subr.mxu0 0.0
        %3246 = vmatpush1.msra.mxu0 0.0
        %3247 = vmatprep.subr.mxu0 0.0
        %3248 = vmatpush1.msra.mxu0 0.0
        %3249 = vmatprep.subr.mxu0 0.0
        %3250 = vmatpush1.msra.mxu0 0.0
        %3251 = vmatprep.mubr.f32.mxu0 0.0
        %v3252 = vand.u32 %v2860, 4294901760
        %3253 = vmatmul.mubr.f32.gmra.mrb[0].mxu0 %v3252
        %v3254 = vpop.f32.mrb[0].mxu0
        %v3255 = vadd.f32 %v3177, %v3254
        %v3256 = vpop.f32.mrb[0].mxu0
        %v3257 = vadd.f32 %v3179, %v3256
        %3258 = vdwg.mxu0
        %v3259 = vand.u32 %v2866, 4294901760
        %3260 = vmatprep.subr.mxu0 %v3259
        %v3261 = vand.u32 %v2863, 4294901760
        %3262 = vmatpush1.msra.mxu0 %v3261
        %3263 = vmatprep.subr.mxu0 0.0
        %3264 = vmatpush1.msra.mxu0 0.0
        %3265 = vmatprep.subr.mxu0 0.0
        %3266 = vmatpush1.msra.mxu0 0.0
        %3267 = vmatprep.subr.mxu0 0.0
        %3268 = vmatpush1.msra.mxu0 0.0
        %3269 = vmatprep.subr.mxu0 0.0
        %3270 = vmatpush1.msra.mxu0 0.0
        %3271 = vmatprep.subr.mxu0 0.0
        %3272 = vmatpush1.msra.mxu0 0.0
        %3273 = vmatprep.subr.mxu0 0.0
        %3274 = vmatpush1.msra.mxu0 0.0
        %3275 = vmatprep.subr.mxu0 0.0
        %3276 = vmatpush1.msra.mxu0 0.0
        %3277 = vmatprep.subr.mxu0 0.0
        %3278 = vmatpush1.msra.mxu0 0.0
        %3279 = vmatprep.subr.mxu0 0.0
        %3280 = vmatpush1.msra.mxu0 0.0
        %3281 = vmatprep.subr.mxu0 0.0
        %3282 = vmatpush1.msra.mxu0 0.0
        %3283 = vmatprep.subr.mxu0 0.0
        %3284 = vmatpush1.msra.mxu0 0.0
        %3285 = vmatprep.subr.mxu0 0.0
        %3286 = vmatpush1.msra.mxu0 0.0
        %3287 = vmatprep.subr.mxu0 0.0
        %3288 = vmatpush1.msra.mxu0 0.0
        %3289 = vmatprep.subr.mxu0 0.0
        %3290 = vmatpush1.msra.mxu0 0.0
        %3291 = vmatprep.subr.mxu0 0.0
        %3292 = vmatpush1.msra.mxu0 0.0
        %3293 = vmatprep.subr.mxu0 0.0
        %3294 = vmatpush1.msra.mxu0 0.0
        %3295 = vmatprep.subr.mxu0 0.0
        %3296 = vmatpush1.msra.mxu0 0.0
        %3297 = vmatprep.subr.mxu0 0.0
        %3298 = vmatpush1.msra.mxu0 0.0
        %3299 = vmatprep.subr.mxu0 0.0
        %3300 = vmatpush1.msra.mxu0 0.0
        %3301 = vmatprep.subr.mxu0 0.0
        %3302 = vmatpush1.msra.mxu0 0.0
        %3303 = vmatprep.subr.mxu0 0.0
        %3304 = vmatpush1.msra.mxu0 0.0
        %3305 = vmatprep.subr.mxu0 0.0
        %3306 = vmatpush1.msra.mxu0 0.0
        %3307 = vmatprep.subr.mxu0 0.0
        %3308 = vmatpush1.msra.mxu0 0.0
        %3309 = vmatprep.subr.mxu0 0.0
        %3310 = vmatpush1.msra.mxu0 0.0
        %3311 = vmatprep.subr.mxu0 0.0
        %3312 = vmatpush1.msra.mxu0 0.0
        %3313 = vmatprep.subr.mxu0 0.0
        %3314 = vmatpush1.msra.mxu0 0.0
        %3315 = vmatprep.subr.mxu0 0.0
        %3316 = vmatpush1.msra.mxu0 0.0
        %3317 = vmatprep.subr.mxu0 0.0
        %3318 = vmatpush1.msra.mxu0 0.0
        %3319 = vmatprep.subr.mxu0 0.0
        %3320 = vmatpush1.msra.mxu0 0.0
        %3321 = vmatprep.subr.mxu0 0.0
        %3322 = vmatpush1.msra.mxu0 0.0
        %3323 = vmatprep.subr.mxu0 0.0
        %3324 = vmatpush1.msra.mxu0 0.0
        %3325 = vmatprep.mubr.f32.mxu0 0.0
        %v3326 = vand.u32 %v2860, 4294901760
        %3327 = vmatmul.mubr.f32.gmra.mrb[0].mxu0 %v3326
        %v3328 = vpop.f32.mrb[0].mxu0
        %v3329 = vadd.f32 %v3255, %v3328
        %v3330 = vpop.f32.mrb[0].mxu0
        %v3331 = vadd.f32 %v3257, %v3330
        %3332 = vdwg.mxu0
        %v3333 = vadd.f32 %v2830, %v3329
        %v3334 = vadd.f32 %v2831, %v3331
        %3335 = vrot.lane.b32.xlu0 %v345, 113
        %v3336 = vpop.permute.xlu0 %3335
        %3337 = vrot.lane.b32.xlu0 %v347, 113
        %v3338 = vpop.permute.xlu0 %3337
        %vm3339 = vcmask 924672
        %v3340 = vsel %vm3339, %v3336, %v3338
        %v3344 = vsel %vm3339, %v3338, %v3336
        %s3345 = scalar_lea.vmem %s1, 12
        %v3346 = vld [vmem:[%s3345] sm:$0x3]
        %v3348 = vlaneseq
        %v3349 = vshrl.u32 %v3348, 7
        %v3350 = vsub.s32 0, %v3349
        %v3351 = vrot.slane %v3346, %v3350
        %v3352 = vlaneseq
        %v3353 = vshrl.u32 %v3352, 7
        %v3354 = vsub.s32 1, %v3353
        %v3355 = vrot.slane %v3346, %v3354
        %v3358 = vmul.f32 %v3340, %v3351
        %v3359 = vmul.f32 %v3344, %v3355
        %s3360 = scalar_lea.vmem %s2, 48
        %v3361 = vld [vmem:[%s3360] sm:$0xff]
        %v3363 = vsel %vm400, %v3361, 0
        %v3366 = vsel %vm404, %v3358, 0
        %v3369 = vsel %vm404, %v3359, 0
        %v3371 = vand.u32 %v3369, 4294901760
        %3372 = vmatprep.subr.mxu0 %v3371
        %v3373 = vand.u32 %v3366, 4294901760
        %3374 = vmatpush1.msra.mxu0 %v3373
        %3375 = vmatprep.subr.mxu0 0.0
        %3376 = vmatpush1.msra.mxu0 0.0
        %3377 = vmatprep.subr.mxu0 0.0
        %3378 = vmatpush1.msra.mxu0 0.0
        %3379 = vmatprep.subr.mxu0 0.0
        %3380 = vmatpush1.msra.mxu0 0.0
        %3381 = vmatprep.subr.mxu0 0.0
        %3382 = vmatpush1.msra.mxu0 0.0
        %3383 = vmatprep.subr.mxu0 0.0
        %3384 = vmatpush1.msra.mxu0 0.0
        %3385 = vmatprep.subr.mxu0 0.0
        %3386 = vmatpush1.msra.mxu0 0.0
        %3387 = vmatprep.subr.mxu0 0.0
        %3388 = vmatpush1.msra.mxu0 0.0
        %3389 = vmatprep.subr.mxu0 0.0
        %3390 = vmatpush1.msra.mxu0 0.0
        %3391 = vmatprep.subr.mxu0 0.0
        %3392 = vmatpush1.msra.mxu0 0.0
        %3393 = vmatprep.subr.mxu0 0.0
        %3394 = vmatpush1.msra.mxu0 0.0
        %3395 = vmatprep.subr.mxu0 0.0
        %3396 = vmatpush1.msra.mxu0 0.0
        %3397 = vmatprep.subr.mxu0 0.0
        %3398 = vmatpush1.msra.mxu0 0.0
        %3399 = vmatprep.subr.mxu0 0.0
        %3400 = vmatpush1.msra.mxu0 0.0
        %3401 = vmatprep.subr.mxu0 0.0
        %3402 = vmatpush1.msra.mxu0 0.0
        %3403 = vmatprep.subr.mxu0 0.0
        %3404 = vmatpush1.msra.mxu0 0.0
        %3405 = vmatprep.subr.mxu0 0.0
        %3406 = vmatpush1.msra.mxu0 0.0
        %3407 = vmatprep.subr.mxu0 0.0
        %3408 = vmatpush1.msra.mxu0 0.0
        %3409 = vmatprep.subr.mxu0 0.0
        %3410 = vmatpush1.msra.mxu0 0.0
        %3411 = vmatprep.subr.mxu0 0.0
        %3412 = vmatpush1.msra.mxu0 0.0
        %3413 = vmatprep.subr.mxu0 0.0
        %3414 = vmatpush1.msra.mxu0 0.0
        %3415 = vmatprep.subr.mxu0 0.0
        %3416 = vmatpush1.msra.mxu0 0.0
        %3417 = vmatprep.subr.mxu0 0.0
        %3418 = vmatpush1.msra.mxu0 0.0
        %3419 = vmatprep.subr.mxu0 0.0
        %3420 = vmatpush1.msra.mxu0 0.0
        %3421 = vmatprep.subr.mxu0 0.0
        %3422 = vmatpush1.msra.mxu0 0.0
        %3423 = vmatprep.subr.mxu0 0.0
        %3424 = vmatpush1.msra.mxu0 0.0
        %3425 = vmatprep.subr.mxu0 0.0
        %3426 = vmatpush1.msra.mxu0 0.0
        %3427 = vmatprep.subr.mxu0 0.0
        %3428 = vmatpush1.msra.mxu0 0.0
        %3429 = vmatprep.subr.mxu0 0.0
        %3430 = vmatpush1.msra.mxu0 0.0
        %3431 = vmatprep.subr.mxu0 0.0
        %3432 = vmatpush1.msra.mxu0 0.0
        %3433 = vmatprep.subr.mxu0 0.0
        %3434 = vmatpush1.msra.mxu0 0.0
        %3435 = vmatprep.subr.mxu0 0.0
        %3436 = vmatpush1.msra.mxu0 0.0
        %3437 = vmatprep.mubr.f32.mxu0 0.0
        %v3438 = vand.u32 %v3363, 4294901760
        %v3439 = vsub.f32 %v3363, %v3438
        %v3440 = vand.u32 %v3439, 4294901760
        %v3441 = vsub.f32 %v3439, %v3440
        %v3442 = vand.u32 %v3441, 4294901760
        %3443 = vmatmul.mubr.f32.gmra.mrb[0].mxu0 %v3442
        %v3444 = vpop.f32.mrb[0].mxu0
        %v3445 = vadd.f32 0.0, %v3444
        %v3446 = vpop.f32.mrb[0].mxu0
        %v3447 = vadd.f32 0.0, %v3446
        %3448 = vdwg.mxu0
        %v3449 = vand.u32 %v3369, 4294901760
        %v3450 = vsub.f32 %v3369, %v3449
        %v3451 = vand.u32 %v3450, 4294901760
        %v3452 = vsub.f32 %v3450, %v3451
        %v3453 = vand.u32 %v3452, 4294901760
        %3454 = vmatprep.subr.mxu0 %v3453
        %v3455 = vand.u32 %v3366, 4294901760
        %v3456 = vsub.f32 %v3366, %v3455
        %v3457 = vand.u32 %v3456, 4294901760
        %v3458 = vsub.f32 %v3456, %v3457
        %v3459 = vand.u32 %v3458, 4294901760
        %3460 = vmatpush1.msra.mxu0 %v3459
        %3461 = vmatprep.subr.mxu0 0.0
        %3462 = vmatpush1.msra.mxu0 0.0
        %3463 = vmatprep.subr.mxu0 0.0
        %3464 = vmatpush1.msra.mxu0 0.0
        %3465 = vmatprep.subr.mxu0 0.0
        %3466 = vmatpush1.msra.mxu0 0.0
        %3467 = vmatprep.subr.mxu0 0.0
        %3468 = vmatpush1.msra.mxu0 0.0
        %3469 = vmatprep.subr.mxu0 0.0
        %3470 = vmatpush1.msra.mxu0 0.0
        %3471 = vmatprep.subr.mxu0 0.0
        %3472 = vmatpush1.msra.mxu0 0.0
        %3473 = vmatprep.subr.mxu0 0.0
        %3474 = vmatpush1.msra.mxu0 0.0
        %3475 = vmatprep.subr.mxu0 0.0
        %3476 = vmatpush1.msra.mxu0 0.0
        %3477 = vmatprep.subr.mxu0 0.0
        %3478 = vmatpush1.msra.mxu0 0.0
        %3479 = vmatprep.subr.mxu0 0.0
        %3480 = vmatpush1.msra.mxu0 0.0
        %3481 = vmatprep.subr.mxu0 0.0
        %3482 = vmatpush1.msra.mxu0 0.0
        %3483 = vmatprep.subr.mxu0 0.0
        %3484 = vmatpush1.msra.mxu0 0.0
        %3485 = vmatprep.subr.mxu0 0.0
        %3486 = vmatpush1.msra.mxu0 0.0
        %3487 = vmatprep.subr.mxu0 0.0
        %3488 = vmatpush1.msra.mxu0 0.0
        %3489 = vmatprep.subr.mxu0 0.0
        %3490 = vmatpush1.msra.mxu0 0.0
        %3491 = vmatprep.subr.mxu0 0.0
        %3492 = vmatpush1.msra.mxu0 0.0
        %3493 = vmatprep.subr.mxu0 0.0
        %3494 = vmatpush1.msra.mxu0 0.0
        %3495 = vmatprep.subr.mxu0 0.0
        %3496 = vmatpush1.msra.mxu0 0.0
        %3497 = vmatprep.subr.mxu0 0.0
        %3498 = vmatpush1.msra.mxu0 0.0
        %3499 = vmatprep.subr.mxu0 0.0
        %3500 = vmatpush1.msra.mxu0 0.0
        %3501 = vmatprep.subr.mxu0 0.0
        %3502 = vmatpush1.msra.mxu0 0.0
        %3503 = vmatprep.subr.mxu0 0.0
        %3504 = vmatpush1.msra.mxu0 0.0
        %3505 = vmatprep.subr.mxu0 0.0
        %3506 = vmatpush1.msra.mxu0 0.0
        %3507 = vmatprep.subr.mxu0 0.0
        %3508 = vmatpush1.msra.mxu0 0.0
        %3509 = vmatprep.subr.mxu0 0.0
        %3510 = vmatpush1.msra.mxu0 0.0
        %3511 = vmatprep.subr.mxu0 0.0
        %3512 = vmatpush1.msra.mxu0 0.0
        %3513 = vmatprep.subr.mxu0 0.0
        %3514 = vmatpush1.msra.mxu0 0.0
        %3515 = vmatprep.subr.mxu0 0.0
        %3516 = vmatpush1.msra.mxu0 0.0
        %3517 = vmatprep.subr.mxu0 0.0
        %3518 = vmatpush1.msra.mxu0 0.0
        %3519 = vmatprep.subr.mxu0 0.0
        %3520 = vmatpush1.msra.mxu0 0.0
        %3521 = vmatprep.subr.mxu0 0.0
        %3522 = vmatpush1.msra.mxu0 0.0
        %3523 = vmatprep.mubr.f32.mxu0 0.0
        %v3524 = vand.u32 %v3363, 4294901760
        %3525 = vmatmul.mubr.f32.gmra.mrb[0].mxu0 %v3524
        %v3526 = vpop.f32.mrb[0].mxu0
        %v3527 = vadd.f32 %v3445, %v3526
        %v3528 = vpop.f32.mrb[0].mxu0
        %v3529 = vadd.f32 %v3447, %v3528
        %3530 = vdwg.mxu0
        %v3531 = vand.u32 %v3369, 4294901760
        %v3532 = vsub.f32 %v3369, %v3531
        %3533 = vmatprep.subr.mxu0 %v3532
        %v3534 = vand.u32 %v3366, 4294901760
        %v3535 = vsub.f32 %v3366, %v3534
        %3536 = vmatpush1.msra.mxu0 %v3535
        %3537 = vmatprep.subr.mxu0 0.0
        %3538 = vmatpush1.msra.mxu0 0.0
        %3539 = vmatprep.subr.mxu0 0.0
        %3540 = vmatpush1.msra.mxu0 0.0
        %3541 = vmatprep.subr.mxu0 0.0
        %3542 = vmatpush1.msra.mxu0 0.0
        %3543 = vmatprep.subr.mxu0 0.0
        %3544 = vmatpush1.msra.mxu0 0.0
        %3545 = vmatprep.subr.mxu0 0.0
        %3546 = vmatpush1.msra.mxu0 0.0
        %3547 = vmatprep.subr.mxu0 0.0
        %3548 = vmatpush1.msra.mxu0 0.0
        %3549 = vmatprep.subr.mxu0 0.0
        %3550 = vmatpush1.msra.mxu0 0.0
        %3551 = vmatprep.subr.mxu0 0.0
        %3552 = vmatpush1.msra.mxu0 0.0
        %3553 = vmatprep.subr.mxu0 0.0
        %3554 = vmatpush1.msra.mxu0 0.0
        %3555 = vmatprep.subr.mxu0 0.0
        %3556 = vmatpush1.msra.mxu0 0.0
        %3557 = vmatprep.subr.mxu0 0.0
        %3558 = vmatpush1.msra.mxu0 0.0
        %3559 = vmatprep.subr.mxu0 0.0
        %3560 = vmatpush1.msra.mxu0 0.0
        %3561 = vmatprep.subr.mxu0 0.0
        %3562 = vmatpush1.msra.mxu0 0.0
        %3563 = vmatprep.subr.mxu0 0.0
        %3564 = vmatpush1.msra.mxu0 0.0
        %3565 = vmatprep.subr.mxu0 0.0
        %3566 = vmatpush1.msra.mxu0 0.0
        %3567 = vmatprep.subr.mxu0 0.0
        %3568 = vmatpush1.msra.mxu0 0.0
        %3569 = vmatprep.subr.mxu0 0.0
        %3570 = vmatpush1.msra.mxu0 0.0
        %3571 = vmatprep.subr.mxu0 0.0
        %3572 = vmatpush1.msra.mxu0 0.0
        %3573 = vmatprep.subr.mxu0 0.0
        %3574 = vmatpush1.msra.mxu0 0.0
        %3575 = vmatprep.subr.mxu0 0.0
        %3576 = vmatpush1.msra.mxu0 0.0
        %3577 = vmatprep.subr.mxu0 0.0
        %3578 = vmatpush1.msra.mxu0 0.0
        %3579 = vmatprep.subr.mxu0 0.0
        %3580 = vmatpush1.msra.mxu0 0.0
        %3581 = vmatprep.subr.mxu0 0.0
        %3582 = vmatpush1.msra.mxu0 0.0
        %3583 = vmatprep.subr.mxu0 0.0
        %3584 = vmatpush1.msra.mxu0 0.0
        %3585 = vmatprep.subr.mxu0 0.0
        %3586 = vmatpush1.msra.mxu0 0.0
        %3587 = vmatprep.subr.mxu0 0.0
        %3588 = vmatpush1.msra.mxu0 0.0
        %3589 = vmatprep.subr.mxu0 0.0
        %3590 = vmatpush1.msra.mxu0 0.0
        %3591 = vmatprep.subr.mxu0 0.0
        %3592 = vmatpush1.msra.mxu0 0.0
        %3593 = vmatprep.subr.mxu0 0.0
        %3594 = vmatpush1.msra.mxu0 0.0
        %3595 = vmatprep.subr.mxu0 0.0
        %3596 = vmatpush1.msra.mxu0 0.0
        %3597 = vmatprep.subr.mxu0 0.0
        %3598 = vmatpush1.msra.mxu0 0.0
        %3599 = vmatprep.mubr.f32.mxu0 0.0
        %v3600 = vand.u32 %v3363, 4294901760
        %v3601 = vsub.f32 %v3363, %v3600
        %3602 = vmatmul.mubr.f32.gmra.mrb[0].mxu0 %v3601
        %v3603 = vpop.f32.mrb[0].mxu0
        %v3604 = vadd.f32 %v3527, %v3603
        %v3605 = vpop.f32.mrb[0].mxu0
        %v3606 = vadd.f32 %v3529, %v3605
        %3607 = vdwg.mxu0
        %v3608 = vand.u32 %v3369, 4294901760
        %3609 = vmatprep.subr.mxu0 %v3608
        %v3610 = vand.u32 %v3366, 4294901760
        %3611 = vmatpush1.msra.mxu0 %v3610
        %3612 = vmatprep.subr.mxu0 0.0
        %3613 = vmatpush1.msra.mxu0 0.0
        %3614 = vmatprep.subr.mxu0 0.0
        %3615 = vmatpush1.msra.mxu0 0.0
        %3616 = vmatprep.subr.mxu0 0.0
        %3617 = vmatpush1.msra.mxu0 0.0
        %3618 = vmatprep.subr.mxu0 0.0
        %3619 = vmatpush1.msra.mxu0 0.0
        %3620 = vmatprep.subr.mxu0 0.0
        %3621 = vmatpush1.msra.mxu0 0.0
        %3622 = vmatprep.subr.mxu0 0.0
        %3623 = vmatpush1.msra.mxu0 0.0
        %3624 = vmatprep.subr.mxu0 0.0
        %3625 = vmatpush1.msra.mxu0 0.0
        %3626 = vmatprep.subr.mxu0 0.0
        %3627 = vmatpush1.msra.mxu0 0.0
        %3628 = vmatprep.subr.mxu0 0.0
        %3629 = vmatpush1.msra.mxu0 0.0
        %3630 = vmatprep.subr.mxu0 0.0
        %3631 = vmatpush1.msra.mxu0 0.0
        %3632 = vmatprep.subr.mxu0 0.0
        %3633 = vmatpush1.msra.mxu0 0.0
        %3634 = vmatprep.subr.mxu0 0.0
        %3635 = vmatpush1.msra.mxu0 0.0
        %3636 = vmatprep.subr.mxu0 0.0
        %3637 = vmatpush1.msra.mxu0 0.0
        %3638 = vmatprep.subr.mxu0 0.0
        %3639 = vmatpush1.msra.mxu0 0.0
        %3640 = vmatprep.subr.mxu0 0.0
        %3641 = vmatpush1.msra.mxu0 0.0
        %3642 = vmatprep.subr.mxu0 0.0
        %3643 = vmatpush1.msra.mxu0 0.0
        %3644 = vmatprep.subr.mxu0 0.0
        %3645 = vmatpush1.msra.mxu0 0.0
        %3646 = vmatprep.subr.mxu0 0.0
        %3647 = vmatpush1.msra.mxu0 0.0
        %3648 = vmatprep.subr.mxu0 0.0
        %3649 = vmatpush1.msra.mxu0 0.0
        %3650 = vmatprep.subr.mxu0 0.0
        %3651 = vmatpush1.msra.mxu0 0.0
        %3652 = vmatprep.subr.mxu0 0.0
        %3653 = vmatpush1.msra.mxu0 0.0
        %3654 = vmatprep.subr.mxu0 0.0
        %3655 = vmatpush1.msra.mxu0 0.0
        %3656 = vmatprep.subr.mxu0 0.0
        %3657 = vmatpush1.msra.mxu0 0.0
        %3658 = vmatprep.subr.mxu0 0.0
        %3659 = vmatpush1.msra.mxu0 0.0
        %3660 = vmatprep.subr.mxu0 0.0
        %3661 = vmatpush1.msra.mxu0 0.0
        %3662 = vmatprep.subr.mxu0 0.0
        %3663 = vmatpush1.msra.mxu0 0.0
        %3664 = vmatprep.subr.mxu0 0.0
        %3665 = vmatpush1.msra.mxu0 0.0
        %3666 = vmatprep.subr.mxu0 0.0
        %3667 = vmatpush1.msra.mxu0 0.0
        %3668 = vmatprep.subr.mxu0 0.0
        %3669 = vmatpush1.msra.mxu0 0.0
        %3670 = vmatprep.subr.mxu0 0.0
        %3671 = vmatpush1.msra.mxu0 0.0
        %3672 = vmatprep.subr.mxu0 0.0
        %3673 = vmatpush1.msra.mxu0 0.0
        %3674 = vmatprep.mubr.f32.mxu0 0.0
        %v3675 = vand.u32 %v3363, 4294901760
        %v3676 = vsub.f32 %v3363, %v3675
        %v3677 = vand.u32 %v3676, 4294901760
        %3678 = vmatmul.mubr.f32.gmra.mrb[0].mxu0 %v3677
        %v3679 = vpop.f32.mrb[0].mxu0
        %v3680 = vadd.f32 %v3604, %v3679
        %v3681 = vpop.f32.mrb[0].mxu0
        %v3682 = vadd.f32 %v3606, %v3681
        %3683 = vdwg.mxu0
        %v3684 = vand.u32 %v3369, 4294901760
        %v3685 = vsub.f32 %v3369, %v3684
        %v3686 = vand.u32 %v3685, 4294901760
        %3687 = vmatprep.subr.mxu0 %v3686
        %v3688 = vand.u32 %v3366, 4294901760
        %v3689 = vsub.f32 %v3366, %v3688
        %v3690 = vand.u32 %v3689, 4294901760
        %3691 = vmatpush1.msra.mxu0 %v3690
        %3692 = vmatprep.subr.mxu0 0.0
        %3693 = vmatpush1.msra.mxu0 0.0
        %3694 = vmatprep.subr.mxu0 0.0
        %3695 = vmatpush1.msra.mxu0 0.0
        %3696 = vmatprep.subr.mxu0 0.0
        %3697 = vmatpush1.msra.mxu0 0.0
        %3698 = vmatprep.subr.mxu0 0.0
        %3699 = vmatpush1.msra.mxu0 0.0
        %3700 = vmatprep.subr.mxu0 0.0
        %3701 = vmatpush1.msra.mxu0 0.0
        %3702 = vmatprep.subr.mxu0 0.0
        %3703 = vmatpush1.msra.mxu0 0.0
        %3704 = vmatprep.subr.mxu0 0.0
        %3705 = vmatpush1.msra.mxu0 0.0
        %3706 = vmatprep.subr.mxu0 0.0
        %3707 = vmatpush1.msra.mxu0 0.0
        %3708 = vmatprep.subr.mxu0 0.0
        %3709 = vmatpush1.msra.mxu0 0.0
        %3710 = vmatprep.subr.mxu0 0.0
        %3711 = vmatpush1.msra.mxu0 0.0
        %3712 = vmatprep.subr.mxu0 0.0
        %3713 = vmatpush1.msra.mxu0 0.0
        %3714 = vmatprep.subr.mxu0 0.0
        %3715 = vmatpush1.msra.mxu0 0.0
        %3716 = vmatprep.subr.mxu0 0.0
        %3717 = vmatpush1.msra.mxu0 0.0
        %3718 = vmatprep.subr.mxu0 0.0
        %3719 = vmatpush1.msra.mxu0 0.0
        %3720 = vmatprep.subr.mxu0 0.0
        %3721 = vmatpush1.msra.mxu0 0.0
        %3722 = vmatprep.subr.mxu0 0.0
        %3723 = vmatpush1.msra.mxu0 0.0
        %3724 = vmatprep.subr.mxu0 0.0
        %3725 = vmatpush1.msra.mxu0 0.0
        %3726 = vmatprep.subr.mxu0 0.0
        %3727 = vmatpush1.msra.mxu0 0.0
        %3728 = vmatprep.subr.mxu0 0.0
        %3729 = vmatpush1.msra.mxu0 0.0
        %3730 = vmatprep.subr.mxu0 0.0
        %3731 = vmatpush1.msra.mxu0 0.0
        %3732 = vmatprep.subr.mxu0 0.0
        %3733 = vmatpush1.msra.mxu0 0.0
        %3734 = vmatprep.subr.mxu0 0.0
        %3735 = vmatpush1.msra.mxu0 0.0
        %3736 = vmatprep.subr.mxu0 0.0
        %3737 = vmatpush1.msra.mxu0 0.0
        %3738 = vmatprep.subr.mxu0 0.0
        %3739 = vmatpush1.msra.mxu0 0.0
        %3740 = vmatprep.subr.mxu0 0.0
        %3741 = vmatpush1.msra.mxu0 0.0
        %3742 = vmatprep.subr.mxu0 0.0
        %3743 = vmatpush1.msra.mxu0 0.0
        %3744 = vmatprep.subr.mxu0 0.0
        %3745 = vmatpush1.msra.mxu0 0.0
        %3746 = vmatprep.subr.mxu0 0.0
        %3747 = vmatpush1.msra.mxu0 0.0
        %3748 = vmatprep.subr.mxu0 0.0
        %3749 = vmatpush1.msra.mxu0 0.0
        %3750 = vmatprep.subr.mxu0 0.0
        %3751 = vmatpush1.msra.mxu0 0.0
        %3752 = vmatprep.subr.mxu0 0.0
        %3753 = vmatpush1.msra.mxu0 0.0
        %3754 = vmatprep.mubr.f32.mxu0 0.0
        %v3755 = vand.u32 %v3363, 4294901760
        %3756 = vmatmul.mubr.f32.gmra.mrb[0].mxu0 %v3755
        %v3757 = vpop.f32.mrb[0].mxu0
        %v3758 = vadd.f32 %v3680, %v3757
        %v3759 = vpop.f32.mrb[0].mxu0
        %v3760 = vadd.f32 %v3682, %v3759
        %3761 = vdwg.mxu0
        %v3762 = vand.u32 %v3369, 4294901760
        %3763 = vmatprep.subr.mxu0 %v3762
        %v3764 = vand.u32 %v3366, 4294901760
        %3765 = vmatpush1.msra.mxu0 %v3764
        %3766 = vmatprep.subr.mxu0 0.0
        %3767 = vmatpush1.msra.mxu0 0.0
        %3768 = vmatprep.subr.mxu0 0.0
        %3769 = vmatpush1.msra.mxu0 0.0
        %3770 = vmatprep.subr.mxu0 0.0
        %3771 = vmatpush1.msra.mxu0 0.0
        %3772 = vmatprep.subr.mxu0 0.0
        %3773 = vmatpush1.msra.mxu0 0.0
        %3774 = vmatprep.subr.mxu0 0.0
        %3775 = vmatpush1.msra.mxu0 0.0
        %3776 = vmatprep.subr.mxu0 0.0
        %3777 = vmatpush1.msra.mxu0 0.0
        %3778 = vmatprep.subr.mxu0 0.0
        %3779 = vmatpush1.msra.mxu0 0.0
        %3780 = vmatprep.subr.mxu0 0.0
        %3781 = vmatpush1.msra.mxu0 0.0
        %3782 = vmatprep.subr.mxu0 0.0
        %3783 = vmatpush1.msra.mxu0 0.0
        %3784 = vmatprep.subr.mxu0 0.0
        %3785 = vmatpush1.msra.mxu0 0.0
        %3786 = vmatprep.subr.mxu0 0.0
        %3787 = vmatpush1.msra.mxu0 0.0
        %3788 = vmatprep.subr.mxu0 0.0
        %3789 = vmatpush1.msra.mxu0 0.0
        %3790 = vmatprep.subr.mxu0 0.0
        %3791 = vmatpush1.msra.mxu0 0.0
        %3792 = vmatprep.subr.mxu0 0.0
        %3793 = vmatpush1.msra.mxu0 0.0
        %3794 = vmatprep.subr.mxu0 0.0
        %3795 = vmatpush1.msra.mxu0 0.0
        %3796 = vmatprep.subr.mxu0 0.0
        %3797 = vmatpush1.msra.mxu0 0.0
        %3798 = vmatprep.subr.mxu0 0.0
        %3799 = vmatpush1.msra.mxu0 0.0
        %3800 = vmatprep.subr.mxu0 0.0
        %3801 = vmatpush1.msra.mxu0 0.0
        %3802 = vmatprep.subr.mxu0 0.0
        %3803 = vmatpush1.msra.mxu0 0.0
        %3804 = vmatprep.subr.mxu0 0.0
        %3805 = vmatpush1.msra.mxu0 0.0
        %3806 = vmatprep.subr.mxu0 0.0
        %3807 = vmatpush1.msra.mxu0 0.0
        %3808 = vmatprep.subr.mxu0 0.0
        %3809 = vmatpush1.msra.mxu0 0.0
        %3810 = vmatprep.subr.mxu0 0.0
        %3811 = vmatpush1.msra.mxu0 0.0
        %3812 = vmatprep.subr.mxu0 0.0
        %3813 = vmatpush1.msra.mxu0 0.0
        %3814 = vmatprep.subr.mxu0 0.0
        %3815 = vmatpush1.msra.mxu0 0.0
        %3816 = vmatprep.subr.mxu0 0.0
        %3817 = vmatpush1.msra.mxu0 0.0
        %3818 = vmatprep.subr.mxu0 0.0
        %3819 = vmatpush1.msra.mxu0 0.0
        %3820 = vmatprep.subr.mxu0 0.0
        %3821 = vmatpush1.msra.mxu0 0.0
        %3822 = vmatprep.subr.mxu0 0.0
        %3823 = vmatpush1.msra.mxu0 0.0
        %3824 = vmatprep.subr.mxu0 0.0
        %3825 = vmatpush1.msra.mxu0 0.0
        %3826 = vmatprep.subr.mxu0 0.0
        %3827 = vmatpush1.msra.mxu0 0.0
        %3828 = vmatprep.mubr.f32.mxu0 0.0
        %v3829 = vand.u32 %v3363, 4294901760
        %3830 = vmatmul.mubr.f32.gmra.mrb[0].mxu0 %v3829
        %v3831 = vpop.f32.mrb[0].mxu0
        %v3832 = vadd.f32 %v3758, %v3831
        %v3833 = vpop.f32.mrb[0].mxu0
        %v3834 = vadd.f32 %v3760, %v3833
        %3835 = vdwg.mxu0
        %v3836 = vadd.f32 %v3333, %v3832
        %v3837 = vadd.f32 %v3334, %v3834
        %3838 = vrot.lane.b32.xlu0 %v345, 112
        %v3839 = vpop.permute.xlu0 %3838
        %3840 = vrot.lane.b32.xlu0 %v347, 112
        %v3841 = vpop.permute.xlu0 %3840
        %vm3842 = vcmask 916480
        %v3843 = vsel %vm3842, %v3839, %v3841
        %v3847 = vsel %vm3842, %v3841, %v3839
        %s3848 = scalar_lea.vmem %s1, 14
        %v3849 = vld [vmem:[%s3848] sm:$0x3]
        %v3851 = vlaneseq
        %v3852 = vshrl.u32 %v3851, 7
        %v3853 = vsub.s32 0, %v3852
        %v3854 = vrot.slane %v3849, %v3853
        %v3855 = vlaneseq
        %v3856 = vshrl.u32 %v3855, 7
        %v3857 = vsub.s32 1, %v3856
        %v3858 = vrot.slane %v3849, %v3857
        %v3861 = vmul.f32 %v3843, %v3854
        %v3862 = vmul.f32 %v3847, %v3858
        %s3863 = scalar_lea.vmem %s2, 56
        %v3864 = vld [vmem:[%s3863] sm:$0xff]
        %v3866 = vsel %vm400, %v3864, 0
        %v3869 = vsel %vm404, %v3861, 0
        %v3872 = vsel %vm404, %v3862, 0
        %v3874 = vand.u32 %v3872, 4294901760
        %3875 = vmatprep.subr.mxu0 %v3874
        %v3876 = vand.u32 %v3869, 4294901760
        %3877 = vmatpush1.msra.mxu0 %v3876
        %3878 = vmatprep.subr.mxu0 0.0
        %3879 = vmatpush1.msra.mxu0 0.0
        %3880 = vmatprep.subr.mxu0 0.0
        %3881 = vmatpush1.msra.mxu0 0.0
        %3882 = vmatprep.subr.mxu0 0.0
        %3883 = vmatpush1.msra.mxu0 0.0
        %3884 = vmatprep.subr.mxu0 0.0
        %3885 = vmatpush1.msra.mxu0 0.0
        %3886 = vmatprep.subr.mxu0 0.0
        %3887 = vmatpush1.msra.mxu0 0.0
        %3888 = vmatprep.subr.mxu0 0.0
        %3889 = vmatpush1.msra.mxu0 0.0
        %3890 = vmatprep.subr.mxu0 0.0
        %3891 = vmatpush1.msra.mxu0 0.0
        %3892 = vmatprep.subr.mxu0 0.0
        %3893 = vmatpush1.msra.mxu0 0.0
        %3894 = vmatprep.subr.mxu0 0.0
        %3895 = vmatpush1.msra.mxu0 0.0
        %3896 = vmatprep.subr.mxu0 0.0
        %3897 = vmatpush1.msra.mxu0 0.0
        %3898 = vmatprep.subr.mxu0 0.0
        %3899 = vmatpush1.msra.mxu0 0.0
        %3900 = vmatprep.subr.mxu0 0.0
        %3901 = vmatpush1.msra.mxu0 0.0
        %3902 = vmatprep.subr.mxu0 0.0
        %3903 = vmatpush1.msra.mxu0 0.0
        %3904 = vmatprep.subr.mxu0 0.0
        %3905 = vmatpush1.msra.mxu0 0.0
        %3906 = vmatprep.subr.mxu0 0.0
        %3907 = vmatpush1.msra.mxu0 0.0
        %3908 = vmatprep.subr.mxu0 0.0
        %3909 = vmatpush1.msra.mxu0 0.0
        %3910 = vmatprep.subr.mxu0 0.0
        %3911 = vmatpush1.msra.mxu0 0.0
        %3912 = vmatprep.subr.mxu0 0.0
        %3913 = vmatpush1.msra.mxu0 0.0
        %3914 = vmatprep.subr.mxu0 0.0
        %3915 = vmatpush1.msra.mxu0 0.0
        %3916 = vmatprep.subr.mxu0 0.0
        %3917 = vmatpush1.msra.mxu0 0.0
        %3918 = vmatprep.subr.mxu0 0.0
        %3919 = vmatpush1.msra.mxu0 0.0
        %3920 = vmatprep.subr.mxu0 0.0
        %3921 = vmatpush1.msra.mxu0 0.0
        %3922 = vmatprep.subr.mxu0 0.0
        %3923 = vmatpush1.msra.mxu0 0.0
        %3924 = vmatprep.subr.mxu0 0.0
        %3925 = vmatpush1.msra.mxu0 0.0
        %3926 = vmatprep.subr.mxu0 0.0
        %3927 = vmatpush1.msra.mxu0 0.0
        %3928 = vmatprep.subr.mxu0 0.0
        %3929 = vmatpush1.msra.mxu0 0.0
        %3930 = vmatprep.subr.mxu0 0.0
        %3931 = vmatpush1.msra.mxu0 0.0
        %3932 = vmatprep.subr.mxu0 0.0
        %3933 = vmatpush1.msra.mxu0 0.0
        %3934 = vmatprep.subr.mxu0 0.0
        %3935 = vmatpush1.msra.mxu0 0.0
        %3936 = vmatprep.subr.mxu0 0.0
        %3937 = vmatpush1.msra.mxu0 0.0
        %3938 = vmatprep.subr.mxu0 0.0
        %3939 = vmatpush1.msra.mxu0 0.0
        %3940 = vmatprep.mubr.f32.mxu0 0.0
        %v3941 = vand.u32 %v3866, 4294901760
        %v3942 = vsub.f32 %v3866, %v3941
        %v3943 = vand.u32 %v3942, 4294901760
        %v3944 = vsub.f32 %v3942, %v3943
        %v3945 = vand.u32 %v3944, 4294901760
        %3946 = vmatmul.mubr.f32.gmra.mrb[0].mxu0 %v3945
        %v3947 = vpop.f32.mrb[0].mxu0
        %v3948 = vadd.f32 0.0, %v3947
        %v3949 = vpop.f32.mrb[0].mxu0
        %v3950 = vadd.f32 0.0, %v3949
        %3951 = vdwg.mxu0
        %v3952 = vand.u32 %v3872, 4294901760
        %v3953 = vsub.f32 %v3872, %v3952
        %v3954 = vand.u32 %v3953, 4294901760
        %v3955 = vsub.f32 %v3953, %v3954
        %v3956 = vand.u32 %v3955, 4294901760
        %3957 = vmatprep.subr.mxu0 %v3956
        %v3958 = vand.u32 %v3869, 4294901760
        %v3959 = vsub.f32 %v3869, %v3958
        %v3960 = vand.u32 %v3959, 4294901760
        %v3961 = vsub.f32 %v3959, %v3960
        %v3962 = vand.u32 %v3961, 4294901760
        %3963 = vmatpush1.msra.mxu0 %v3962
        %3964 = vmatprep.subr.mxu0 0.0
        %3965 = vmatpush1.msra.mxu0 0.0
        %3966 = vmatprep.subr.mxu0 0.0
        %3967 = vmatpush1.msra.mxu0 0.0
        %3968 = vmatprep.subr.mxu0 0.0
        %3969 = vmatpush1.msra.mxu0 0.0
        %3970 = vmatprep.subr.mxu0 0.0
        %3971 = vmatpush1.msra.mxu0 0.0
        %3972 = vmatprep.subr.mxu0 0.0
        %3973 = vmatpush1.msra.mxu0 0.0
        %3974 = vmatprep.subr.mxu0 0.0
        %3975 = vmatpush1.msra.mxu0 0.0
        %3976 = vmatprep.subr.mxu0 0.0
        %3977 = vmatpush1.msra.mxu0 0.0
        %3978 = vmatprep.subr.mxu0 0.0
        %3979 = vmatpush1.msra.mxu0 0.0
        %3980 = vmatprep.subr.mxu0 0.0
        %3981 = vmatpush1.msra.mxu0 0.0
        %3982 = vmatprep.subr.mxu0 0.0
        %3983 = vmatpush1.msra.mxu0 0.0
        %3984 = vmatprep.subr.mxu0 0.0
        %3985 = vmatpush1.msra.mxu0 0.0
        %3986 = vmatprep.subr.mxu0 0.0
        %3987 = vmatpush1.msra.mxu0 0.0
        %3988 = vmatprep.subr.mxu0 0.0
        %3989 = vmatpush1.msra.mxu0 0.0
        %3990 = vmatprep.subr.mxu0 0.0
        %3991 = vmatpush1.msra.mxu0 0.0
        %3992 = vmatprep.subr.mxu0 0.0
        %3993 = vmatpush1.msra.mxu0 0.0
        %3994 = vmatprep.subr.mxu0 0.0
        %3995 = vmatpush1.msra.mxu0 0.0
        %3996 = vmatprep.subr.mxu0 0.0
        %3997 = vmatpush1.msra.mxu0 0.0
        %3998 = vmatprep.subr.mxu0 0.0
        %3999 = vmatpush1.msra.mxu0 0.0
        %4000 = vmatprep.subr.mxu0 0.0
        %4001 = vmatpush1.msra.mxu0 0.0
        %4002 = vmatprep.subr.mxu0 0.0
        %4003 = vmatpush1.msra.mxu0 0.0
        %4004 = vmatprep.subr.mxu0 0.0
        %4005 = vmatpush1.msra.mxu0 0.0
        %4006 = vmatprep.subr.mxu0 0.0
        %4007 = vmatpush1.msra.mxu0 0.0
        %4008 = vmatprep.subr.mxu0 0.0
        %4009 = vmatpush1.msra.mxu0 0.0
        %4010 = vmatprep.subr.mxu0 0.0
        %4011 = vmatpush1.msra.mxu0 0.0
        %4012 = vmatprep.subr.mxu0 0.0
        %4013 = vmatpush1.msra.mxu0 0.0
        %4014 = vmatprep.subr.mxu0 0.0
        %4015 = vmatpush1.msra.mxu0 0.0
        %4016 = vmatprep.subr.mxu0 0.0
        %4017 = vmatpush1.msra.mxu0 0.0
        %4018 = vmatprep.subr.mxu0 0.0
        %4019 = vmatpush1.msra.mxu0 0.0
        %4020 = vmatprep.subr.mxu0 0.0
        %4021 = vmatpush1.msra.mxu0 0.0
        %4022 = vmatprep.subr.mxu0 0.0
        %4023 = vmatpush1.msra.mxu0 0.0
        %4024 = vmatprep.subr.mxu0 0.0
        %4025 = vmatpush1.msra.mxu0 0.0
        %4026 = vmatprep.mubr.f32.mxu0 0.0
        %v4027 = vand.u32 %v3866, 4294901760
        %4028 = vmatmul.mubr.f32.gmra.mrb[0].mxu0 %v4027
        %v4029 = vpop.f32.mrb[0].mxu0
        %v4030 = vadd.f32 %v3948, %v4029
        %v4031 = vpop.f32.mrb[0].mxu0
        %v4032 = vadd.f32 %v3950, %v4031
        %4033 = vdwg.mxu0
        %v4034 = vand.u32 %v3872, 4294901760
        %v4035 = vsub.f32 %v3872, %v4034
        %4036 = vmatprep.subr.mxu0 %v4035
        %v4037 = vand.u32 %v3869, 4294901760
        %v4038 = vsub.f32 %v3869, %v4037
        %4039 = vmatpush1.msra.mxu0 %v4038
        %4040 = vmatprep.subr.mxu0 0.0
        %4041 = vmatpush1.msra.mxu0 0.0
        %4042 = vmatprep.subr.mxu0 0.0
        %4043 = vmatpush1.msra.mxu0 0.0
        %4044 = vmatprep.subr.mxu0 0.0
        %4045 = vmatpush1.msra.mxu0 0.0
        %4046 = vmatprep.subr.mxu0 0.0
        %4047 = vmatpush1.msra.mxu0 0.0
        %4048 = vmatprep.subr.mxu0 0.0
        %4049 = vmatpush1.msra.mxu0 0.0
        %4050 = vmatprep.subr.mxu0 0.0
        %4051 = vmatpush1.msra.mxu0 0.0
        %4052 = vmatprep.subr.mxu0 0.0
        %4053 = vmatpush1.msra.mxu0 0.0
        %4054 = vmatprep.subr.mxu0 0.0
        %4055 = vmatpush1.msra.mxu0 0.0
        %4056 = vmatprep.subr.mxu0 0.0
        %4057 = vmatpush1.msra.mxu0 0.0
        %4058 = vmatprep.subr.mxu0 0.0
        %4059 = vmatpush1.msra.mxu0 0.0
        %4060 = vmatprep.subr.mxu0 0.0
        %4061 = vmatpush1.msra.mxu0 0.0
        %4062 = vmatprep.subr.mxu0 0.0
        %4063 = vmatpush1.msra.mxu0 0.0
        %4064 = vmatprep.subr.mxu0 0.0
        %4065 = vmatpush1.msra.mxu0 0.0
        %4066 = vmatprep.subr.mxu0 0.0
        %4067 = vmatpush1.msra.mxu0 0.0
        %4068 = vmatprep.subr.mxu0 0.0
        %4069 = vmatpush1.msra.mxu0 0.0
        %4070 = vmatprep.subr.mxu0 0.0
        %4071 = vmatpush1.msra.mxu0 0.0
        %4072 = vmatprep.subr.mxu0 0.0
        %4073 = vmatpush1.msra.mxu0 0.0
        %4074 = vmatprep.subr.mxu0 0.0
        %4075 = vmatpush1.msra.mxu0 0.0
        %4076 = vmatprep.subr.mxu0 0.0
        %4077 = vmatpush1.msra.mxu0 0.0
        %4078 = vmatprep.subr.mxu0 0.0
        %4079 = vmatpush1.msra.mxu0 0.0
        %4080 = vmatprep.subr.mxu0 0.0
        %4081 = vmatpush1.msra.mxu0 0.0
        %4082 = vmatprep.subr.mxu0 0.0
        %4083 = vmatpush1.msra.mxu0 0.0
        %4084 = vmatprep.subr.mxu0 0.0
        %4085 = vmatpush1.msra.mxu0 0.0
        %4086 = vmatprep.subr.mxu0 0.0
        %4087 = vmatpush1.msra.mxu0 0.0
        %4088 = vmatprep.subr.mxu0 0.0
        %4089 = vmatpush1.msra.mxu0 0.0
        %4090 = vmatprep.subr.mxu0 0.0
        %4091 = vmatpush1.msra.mxu0 0.0
        %4092 = vmatprep.subr.mxu0 0.0
        %4093 = vmatpush1.msra.mxu0 0.0
        %4094 = vmatprep.subr.mxu0 0.0
        %4095 = vmatpush1.msra.mxu0 0.0
        %4096 = vmatprep.subr.mxu0 0.0
        %4097 = vmatpush1.msra.mxu0 0.0
        %4098 = vmatprep.subr.mxu0 0.0
        %4099 = vmatpush1.msra.mxu0 0.0
        %4100 = vmatprep.subr.mxu0 0.0
        %4101 = vmatpush1.msra.mxu0 0.0
        %4102 = vmatprep.mubr.f32.mxu0 0.0
        %v4103 = vand.u32 %v3866, 4294901760
        %v4104 = vsub.f32 %v3866, %v4103
        %4105 = vmatmul.mubr.f32.gmra.mrb[0].mxu0 %v4104
        %v4106 = vpop.f32.mrb[0].mxu0
        %v4107 = vadd.f32 %v4030, %v4106
        %v4108 = vpop.f32.mrb[0].mxu0
        %v4109 = vadd.f32 %v4032, %v4108
        %4110 = vdwg.mxu0
        %v4111 = vand.u32 %v3872, 4294901760
        %4112 = vmatprep.subr.mxu0 %v4111
        %v4113 = vand.u32 %v3869, 4294901760
        %4114 = vmatpush1.msra.mxu0 %v4113
        %4115 = vmatprep.subr.mxu0 0.0
        %4116 = vmatpush1.msra.mxu0 0.0
        %4117 = vmatprep.subr.mxu0 0.0
        %4118 = vmatpush1.msra.mxu0 0.0
        %4119 = vmatprep.subr.mxu0 0.0
        %4120 = vmatpush1.msra.mxu0 0.0
        %4121 = vmatprep.subr.mxu0 0.0
        %4122 = vmatpush1.msra.mxu0 0.0
        %4123 = vmatprep.subr.mxu0 0.0
        %4124 = vmatpush1.msra.mxu0 0.0
        %4125 = vmatprep.subr.mxu0 0.0
        %4126 = vmatpush1.msra.mxu0 0.0
        %4127 = vmatprep.subr.mxu0 0.0
        %4128 = vmatpush1.msra.mxu0 0.0
        %4129 = vmatprep.subr.mxu0 0.0
        %4130 = vmatpush1.msra.mxu0 0.0
        %4131 = vmatprep.subr.mxu0 0.0
        %4132 = vmatpush1.msra.mxu0 0.0
        %4133 = vmatprep.subr.mxu0 0.0
        %4134 = vmatpush1.msra.mxu0 0.0
        %4135 = vmatprep.subr.mxu0 0.0
        %4136 = vmatpush1.msra.mxu0 0.0
        %4137 = vmatprep.subr.mxu0 0.0
        %4138 = vmatpush1.msra.mxu0 0.0
        %4139 = vmatprep.subr.mxu0 0.0
        %4140 = vmatpush1.msra.mxu0 0.0
        %4141 = vmatprep.subr.mxu0 0.0
        %4142 = vmatpush1.msra.mxu0 0.0
        %4143 = vmatprep.subr.mxu0 0.0
        %4144 = vmatpush1.msra.mxu0 0.0
        %4145 = vmatprep.subr.mxu0 0.0
        %4146 = vmatpush1.msra.mxu0 0.0
        %4147 = vmatprep.subr.mxu0 0.0
        %4148 = vmatpush1.msra.mxu0 0.0
        %4149 = vmatprep.subr.mxu0 0.0
        %4150 = vmatpush1.msra.mxu0 0.0
        %4151 = vmatprep.subr.mxu0 0.0
        %4152 = vmatpush1.msra.mxu0 0.0
        %4153 = vmatprep.subr.mxu0 0.0
        %4154 = vmatpush1.msra.mxu0 0.0
        %4155 = vmatprep.subr.mxu0 0.0
        %4156 = vmatpush1.msra.mxu0 0.0
        %4157 = vmatprep.subr.mxu0 0.0
        %4158 = vmatpush1.msra.mxu0 0.0
        %4159 = vmatprep.subr.mxu0 0.0
        %4160 = vmatpush1.msra.mxu0 0.0
        %4161 = vmatprep.subr.mxu0 0.0
        %4162 = vmatpush1.msra.mxu0 0.0
        %4163 = vmatprep.subr.mxu0 0.0
        %4164 = vmatpush1.msra.mxu0 0.0
        %4165 = vmatprep.subr.mxu0 0.0
        %4166 = vmatpush1.msra.mxu0 0.0
        %4167 = vmatprep.subr.mxu0 0.0
        %4168 = vmatpush1.msra.mxu0 0.0
        %4169 = vmatprep.subr.mxu0 0.0
        %4170 = vmatpush1.msra.mxu0 0.0
        %4171 = vmatprep.subr.mxu0 0.0
        %4172 = vmatpush1.msra.mxu0 0.0
        %4173 = vmatprep.subr.mxu0 0.0
        %4174 = vmatpush1.msra.mxu0 0.0
        %4175 = vmatprep.subr.mxu0 0.0
        %4176 = vmatpush1.msra.mxu0 0.0
        %4177 = vmatprep.mubr.f32.mxu0 0.0
        %v4178 = vand.u32 %v3866, 4294901760
        %v4179 = vsub.f32 %v3866, %v4178
        %v4180 = vand.u32 %v4179, 4294901760
        %4181 = vmatmul.mubr.f32.gmra.mrb[0].mxu0 %v4180
        %v4182 = vpop.f32.mrb[0].mxu0
        %v4183 = vadd.f32 %v4107, %v4182
        %v4184 = vpop.f32.mrb[0].mxu0
        %v4185 = vadd.f32 %v4109, %v4184
        %4186 = vdwg.mxu0
        %v4187 = vand.u32 %v3872, 4294901760
        %v4188 = vsub.f32 %v3872, %v4187
        %v4189 = vand.u32 %v4188, 4294901760
        %4190 = vmatprep.subr.mxu0 %v4189
        %v4191 = vand.u32 %v3869, 4294901760
        %v4192 = vsub.f32 %v3869, %v4191
        %v4193 = vand.u32 %v4192, 4294901760
        %4194 = vmatpush1.msra.mxu0 %v4193
        %4195 = vmatprep.subr.mxu0 0.0
        %4196 = vmatpush1.msra.mxu0 0.0
        %4197 = vmatprep.subr.mxu0 0.0
        %4198 = vmatpush1.msra.mxu0 0.0
        %4199 = vmatprep.subr.mxu0 0.0
        %4200 = vmatpush1.msra.mxu0 0.0
        %4201 = vmatprep.subr.mxu0 0.0
        %4202 = vmatpush1.msra.mxu0 0.0
        %4203 = vmatprep.subr.mxu0 0.0
        %4204 = vmatpush1.msra.mxu0 0.0
        %4205 = vmatprep.subr.mxu0 0.0
        %4206 = vmatpush1.msra.mxu0 0.0
        %4207 = vmatprep.subr.mxu0 0.0
        %4208 = vmatpush1.msra.mxu0 0.0
        %4209 = vmatprep.subr.mxu0 0.0
        %4210 = vmatpush1.msra.mxu0 0.0
        %4211 = vmatprep.subr.mxu0 0.0
        %4212 = vmatpush1.msra.mxu0 0.0
        %4213 = vmatprep.subr.mxu0 0.0
        %4214 = vmatpush1.msra.mxu0 0.0
        %4215 = vmatprep.subr.mxu0 0.0
        %4216 = vmatpush1.msra.mxu0 0.0
        %4217 = vmatprep.subr.mxu0 0.0
        %4218 = vmatpush1.msra.mxu0 0.0
        %4219 = vmatprep.subr.mxu0 0.0
        %4220 = vmatpush1.msra.mxu0 0.0
        %4221 = vmatprep.subr.mxu0 0.0
        %4222 = vmatpush1.msra.mxu0 0.0
        %4223 = vmatprep.subr.mxu0 0.0
        %4224 = vmatpush1.msra.mxu0 0.0
        %4225 = vmatprep.subr.mxu0 0.0
        %4226 = vmatpush1.msra.mxu0 0.0
        %4227 = vmatprep.subr.mxu0 0.0
        %4228 = vmatpush1.msra.mxu0 0.0
        %4229 = vmatprep.subr.mxu0 0.0
        %4230 = vmatpush1.msra.mxu0 0.0
        %4231 = vmatprep.subr.mxu0 0.0
        %4232 = vmatpush1.msra.mxu0 0.0
        %4233 = vmatprep.subr.mxu0 0.0
        %4234 = vmatpush1.msra.mxu0 0.0
        %4235 = vmatprep.subr.mxu0 0.0
        %4236 = vmatpush1.msra.mxu0 0.0
        %4237 = vmatprep.subr.mxu0 0.0
        %4238 = vmatpush1.msra.mxu0 0.0
        %4239 = vmatprep.subr.mxu0 0.0
        %4240 = vmatpush1.msra.mxu0 0.0
        %4241 = vmatprep.subr.mxu0 0.0
        %4242 = vmatpush1.msra.mxu0 0.0
        %4243 = vmatprep.subr.mxu0 0.0
        %4244 = vmatpush1.msra.mxu0 0.0
        %4245 = vmatprep.subr.mxu0 0.0
        %4246 = vmatpush1.msra.mxu0 0.0
        %4247 = vmatprep.subr.mxu0 0.0
        %4248 = vmatpush1.msra.mxu0 0.0
        %4249 = vmatprep.subr.mxu0 0.0
        %4250 = vmatpush1.msra.mxu0 0.0
        %4251 = vmatprep.subr.mxu0 0.0
        %4252 = vmatpush1.msra.mxu0 0.0
        %4253 = vmatprep.subr.mxu0 0.0
        %4254 = vmatpush1.msra.mxu0 0.0
        %4255 = vmatprep.subr.mxu0 0.0
        %4256 = vmatpush1.msra.mxu0 0.0
        %4257 = vmatprep.mubr.f32.mxu0 0.0
        %v4258 = vand.u32 %v3866, 4294901760
        %4259 = vmatmul.mubr.f32.gmra.mrb[0].mxu0 %v4258
        %v4260 = vpop.f32.mrb[0].mxu0
        %v4261 = vadd.f32 %v4183, %v4260
        %v4262 = vpop.f32.mrb[0].mxu0
        %v4263 = vadd.f32 %v4185, %v4262
        %4264 = vdwg.mxu0
        %v4265 = vand.u32 %v3872, 4294901760
        %4266 = vmatprep.subr.mxu0 %v4265
        %v4267 = vand.u32 %v3869, 4294901760
        %4268 = vmatpush1.msra.mxu0 %v4267
        %4269 = vmatprep.subr.mxu0 0.0
        %4270 = vmatpush1.msra.mxu0 0.0
        %4271 = vmatprep.subr.mxu0 0.0
        %4272 = vmatpush1.msra.mxu0 0.0
        %4273 = vmatprep.subr.mxu0 0.0
        %4274 = vmatpush1.msra.mxu0 0.0
        %4275 = vmatprep.subr.mxu0 0.0
        %4276 = vmatpush1.msra.mxu0 0.0
        %4277 = vmatprep.subr.mxu0 0.0
        %4278 = vmatpush1.msra.mxu0 0.0
        %4279 = vmatprep.subr.mxu0 0.0
        %4280 = vmatpush1.msra.mxu0 0.0
        %4281 = vmatprep.subr.mxu0 0.0
        %4282 = vmatpush1.msra.mxu0 0.0
        %4283 = vmatprep.subr.mxu0 0.0
        %4284 = vmatpush1.msra.mxu0 0.0
        %4285 = vmatprep.subr.mxu0 0.0
        %4286 = vmatpush1.msra.mxu0 0.0
        %4287 = vmatprep.subr.mxu0 0.0
        %4288 = vmatpush1.msra.mxu0 0.0
        %4289 = vmatprep.subr.mxu0 0.0
        %4290 = vmatpush1.msra.mxu0 0.0
        %4291 = vmatprep.subr.mxu0 0.0
        %4292 = vmatpush1.msra.mxu0 0.0
        %4293 = vmatprep.subr.mxu0 0.0
        %4294 = vmatpush1.msra.mxu0 0.0
        %4295 = vmatprep.subr.mxu0 0.0
        %4296 = vmatpush1.msra.mxu0 0.0
        %4297 = vmatprep.subr.mxu0 0.0
        %4298 = vmatpush1.msra.mxu0 0.0
        %4299 = vmatprep.subr.mxu0 0.0
        %4300 = vmatpush1.msra.mxu0 0.0
        %4301 = vmatprep.subr.mxu0 0.0
        %4302 = vmatpush1.msra.mxu0 0.0
        %4303 = vmatprep.subr.mxu0 0.0
        %4304 = vmatpush1.msra.mxu0 0.0
        %4305 = vmatprep.subr.mxu0 0.0
        %4306 = vmatpush1.msra.mxu0 0.0
        %4307 = vmatprep.subr.mxu0 0.0
        %4308 = vmatpush1.msra.mxu0 0.0
        %4309 = vmatprep.subr.mxu0 0.0
        %4310 = vmatpush1.msra.mxu0 0.0
        %4311 = vmatprep.subr.mxu0 0.0
        %4312 = vmatpush1.msra.mxu0 0.0
        %4313 = vmatprep.subr.mxu0 0.0
        %4314 = vmatpush1.msra.mxu0 0.0
        %4315 = vmatprep.subr.mxu0 0.0
        %4316 = vmatpush1.msra.mxu0 0.0
        %4317 = vmatprep.subr.mxu0 0.0
        %4318 = vmatpush1.msra.mxu0 0.0
        %4319 = vmatprep.subr.mxu0 0.0
        %4320 = vmatpush1.msra.mxu0 0.0
        %4321 = vmatprep.subr.mxu0 0.0
        %4322 = vmatpush1.msra.mxu0 0.0
        %4323 = vmatprep.subr.mxu0 0.0
        %4324 = vmatpush1.msra.mxu0 0.0
        %4325 = vmatprep.subr.mxu0 0.0
        %4326 = vmatpush1.msra.mxu0 0.0
        %4327 = vmatprep.subr.mxu0 0.0
        %4328 = vmatpush1.msra.mxu0 0.0
        %4329 = vmatprep.subr.mxu0 0.0
        %4330 = vmatpush1.msra.mxu0 0.0
        %4331 = vmatprep.mubr.f32.mxu0 0.0
        %v4332 = vand.u32 %v3866, 4294901760
        %4333 = vmatmul.mubr.f32.gmra.mrb[0].mxu0 %v4332
        %v4334 = vpop.f32.mrb[0].mxu0
        %v4335 = vadd.f32 %v4261, %v4334
        %v4336 = vpop.f32.mrb[0].mxu0
        %v4337 = vadd.f32 %v4263, %v4336
        %4338 = vdwg.mxu0
        %v4339 = vadd.f32 %v3836, %v4335
        %v4340 = vadd.f32 %v3837, %v4337
        %4341 = vrot.lane.b32.xlu0 %v345, 111
        %v4342 = vpop.permute.xlu0 %4341
        %4343 = vrot.lane.b32.xlu0 %v347, 111
        %v4344 = vpop.permute.xlu0 %4343
        %vm4345 = vcmask 908288
        %v4346 = vsel %vm4345, %v4342, %v4344
        %v4350 = vsel %vm4345, %v4344, %v4342
        %s4351 = scalar_lea.vmem %s1, 16
        %v4352 = vld [vmem:[%s4351] sm:$0x3]
        %v4354 = vlaneseq
        %v4355 = vshrl.u32 %v4354, 7
        %v4356 = vsub.s32 0, %v4355
        %v4357 = vrot.slane %v4352, %v4356
        %v4358 = vlaneseq
        %v4359 = vshrl.u32 %v4358, 7
        %v4360 = vsub.s32 1, %v4359
        %v4361 = vrot.slane %v4352, %v4360
        %v4364 = vmul.f32 %v4346, %v4357
        %v4365 = vmul.f32 %v4350, %v4361
        %s4366 = scalar_lea.vmem %s2, 64
        %v4367 = vld [vmem:[%s4366] sm:$0xff]
        %v4369 = vsel %vm400, %v4367, 0
        %v4372 = vsel %vm404, %v4364, 0
        %v4375 = vsel %vm404, %v4365, 0
        %v4377 = vand.u32 %v4375, 4294901760
        %4378 = vmatprep.subr.mxu0 %v4377
        %v4379 = vand.u32 %v4372, 4294901760
        %4380 = vmatpush1.msra.mxu0 %v4379
        %4381 = vmatprep.subr.mxu0 0.0
        %4382 = vmatpush1.msra.mxu0 0.0
        %4383 = vmatprep.subr.mxu0 0.0
        %4384 = vmatpush1.msra.mxu0 0.0
        %4385 = vmatprep.subr.mxu0 0.0
        %4386 = vmatpush1.msra.mxu0 0.0
        %4387 = vmatprep.subr.mxu0 0.0
        %4388 = vmatpush1.msra.mxu0 0.0
        %4389 = vmatprep.subr.mxu0 0.0
        %4390 = vmatpush1.msra.mxu0 0.0
        %4391 = vmatprep.subr.mxu0 0.0
        %4392 = vmatpush1.msra.mxu0 0.0
        %4393 = vmatprep.subr.mxu0 0.0
        %4394 = vmatpush1.msra.mxu0 0.0
        %4395 = vmatprep.subr.mxu0 0.0
        %4396 = vmatpush1.msra.mxu0 0.0
        %4397 = vmatprep.subr.mxu0 0.0
        %4398 = vmatpush1.msra.mxu0 0.0
        %4399 = vmatprep.subr.mxu0 0.0
        %4400 = vmatpush1.msra.mxu0 0.0
        %4401 = vmatprep.subr.mxu0 0.0
        %4402 = vmatpush1.msra.mxu0 0.0
        %4403 = vmatprep.subr.mxu0 0.0
        %4404 = vmatpush1.msra.mxu0 0.0
        %4405 = vmatprep.subr.mxu0 0.0
        %4406 = vmatpush1.msra.mxu0 0.0
        %4407 = vmatprep.subr.mxu0 0.0
        %4408 = vmatpush1.msra.mxu0 0.0
        %4409 = vmatprep.subr.mxu0 0.0
        %4410 = vmatpush1.msra.mxu0 0.0
        %4411 = vmatprep.subr.mxu0 0.0
        %4412 = vmatpush1.msra.mxu0 0.0
        %4413 = vmatprep.subr.mxu0 0.0
        %4414 = vmatpush1.msra.mxu0 0.0
        %4415 = vmatprep.subr.mxu0 0.0
        %4416 = vmatpush1.msra.mxu0 0.0
        %4417 = vmatprep.subr.mxu0 0.0
        %4418 = vmatpush1.msra.mxu0 0.0
        %4419 = vmatprep.subr.mxu0 0.0
        %4420 = vmatpush1.msra.mxu0 0.0
        %4421 = vmatprep.subr.mxu0 0.0
        %4422 = vmatpush1.msra.mxu0 0.0
        %4423 = vmatprep.subr.mxu0 0.0
        %4424 = vmatpush1.msra.mxu0 0.0
        %4425 = vmatprep.subr.mxu0 0.0
        %4426 = vmatpush1.msra.mxu0 0.0
        %4427 = vmatprep.subr.mxu0 0.0
        %4428 = vmatpush1.msra.mxu0 0.0
        %4429 = vmatprep.subr.mxu0 0.0
        %4430 = vmatpush1.msra.mxu0 0.0
        %4431 = vmatprep.subr.mxu0 0.0
        %4432 = vmatpush1.msra.mxu0 0.0
        %4433 = vmatprep.subr.mxu0 0.0
        %4434 = vmatpush1.msra.mxu0 0.0
        %4435 = vmatprep.subr.mxu0 0.0
        %4436 = vmatpush1.msra.mxu0 0.0
        %4437 = vmatprep.subr.mxu0 0.0
        %4438 = vmatpush1.msra.mxu0 0.0
        %4439 = vmatprep.subr.mxu0 0.0
        %4440 = vmatpush1.msra.mxu0 0.0
        %4441 = vmatprep.subr.mxu0 0.0
        %4442 = vmatpush1.msra.mxu0 0.0
        %4443 = vmatprep.mubr.f32.mxu0 0.0
        %v4444 = vand.u32 %v4369, 4294901760
        %v4445 = vsub.f32 %v4369, %v4444
        %v4446 = vand.u32 %v4445, 4294901760
        %v4447 = vsub.f32 %v4445, %v4446
        %v4448 = vand.u32 %v4447, 4294901760
        %4449 = vmatmul.mubr.f32.gmra.mrb[0].mxu0 %v4448
        %v4450 = vpop.f32.mrb[0].mxu0
        %v4451 = vadd.f32 0.0, %v4450
        %v4452 = vpop.f32.mrb[0].mxu0
        %v4453 = vadd.f32 0.0, %v4452
        %4454 = vdwg.mxu0
        %v4455 = vand.u32 %v4375, 4294901760
        %v4456 = vsub.f32 %v4375, %v4455
        %v4457 = vand.u32 %v4456, 4294901760
        %v4458 = vsub.f32 %v4456, %v4457
        %v4459 = vand.u32 %v4458, 4294901760
        %4460 = vmatprep.subr.mxu0 %v4459
        %v4461 = vand.u32 %v4372, 4294901760
        %v4462 = vsub.f32 %v4372, %v4461
        %v4463 = vand.u32 %v4462, 4294901760
        %v4464 = vsub.f32 %v4462, %v4463
        %v4465 = vand.u32 %v4464, 4294901760
        %4466 = vmatpush1.msra.mxu0 %v4465
        %4467 = vmatprep.subr.mxu0 0.0
        %4468 = vmatpush1.msra.mxu0 0.0
        %4469 = vmatprep.subr.mxu0 0.0
        %4470 = vmatpush1.msra.mxu0 0.0
        %4471 = vmatprep.subr.mxu0 0.0
        %4472 = vmatpush1.msra.mxu0 0.0
        %4473 = vmatprep.subr.mxu0 0.0
        %4474 = vmatpush1.msra.mxu0 0.0
        %4475 = vmatprep.subr.mxu0 0.0
        %4476 = vmatpush1.msra.mxu0 0.0
        %4477 = vmatprep.subr.mxu0 0.0
        %4478 = vmatpush1.msra.mxu0 0.0
        %4479 = vmatprep.subr.mxu0 0.0
        %4480 = vmatpush1.msra.mxu0 0.0
        %4481 = vmatprep.subr.mxu0 0.0
        %4482 = vmatpush1.msra.mxu0 0.0
        %4483 = vmatprep.subr.mxu0 0.0
        %4484 = vmatpush1.msra.mxu0 0.0
        %4485 = vmatprep.subr.mxu0 0.0
        %4486 = vmatpush1.msra.mxu0 0.0
        %4487 = vmatprep.subr.mxu0 0.0
        %4488 = vmatpush1.msra.mxu0 0.0
        %4489 = vmatprep.subr.mxu0 0.0
        %4490 = vmatpush1.msra.mxu0 0.0
        %4491 = vmatprep.subr.mxu0 0.0
        %4492 = vmatpush1.msra.mxu0 0.0
        %4493 = vmatprep.subr.mxu0 0.0
        %4494 = vmatpush1.msra.mxu0 0.0
        %4495 = vmatprep.subr.mxu0 0.0
        %4496 = vmatpush1.msra.mxu0 0.0
        %4497 = vmatprep.subr.mxu0 0.0
        %4498 = vmatpush1.msra.mxu0 0.0
        %4499 = vmatprep.subr.mxu0 0.0
        %4500 = vmatpush1.msra.mxu0 0.0
        %4501 = vmatprep.subr.mxu0 0.0
        %4502 = vmatpush1.msra.mxu0 0.0
        %4503 = vmatprep.subr.mxu0 0.0
        %4504 = vmatpush1.msra.mxu0 0.0
        %4505 = vmatprep.subr.mxu0 0.0
        %4506 = vmatpush1.msra.mxu0 0.0
        %4507 = vmatprep.subr.mxu0 0.0
        %4508 = vmatpush1.msra.mxu0 0.0
        %4509 = vmatprep.subr.mxu0 0.0
        %4510 = vmatpush1.msra.mxu0 0.0
        %4511 = vmatprep.subr.mxu0 0.0
        %4512 = vmatpush1.msra.mxu0 0.0
        %4513 = vmatprep.subr.mxu0 0.0
        %4514 = vmatpush1.msra.mxu0 0.0
        %4515 = vmatprep.subr.mxu0 0.0
        %4516 = vmatpush1.msra.mxu0 0.0
        %4517 = vmatprep.subr.mxu0 0.0
        %4518 = vmatpush1.msra.mxu0 0.0
        %4519 = vmatprep.subr.mxu0 0.0
        %4520 = vmatpush1.msra.mxu0 0.0
        %4521 = vmatprep.subr.mxu0 0.0
        %4522 = vmatpush1.msra.mxu0 0.0
        %4523 = vmatprep.subr.mxu0 0.0
        %4524 = vmatpush1.msra.mxu0 0.0
        %4525 = vmatprep.subr.mxu0 0.0
        %4526 = vmatpush1.msra.mxu0 0.0
        %4527 = vmatprep.subr.mxu0 0.0
        %4528 = vmatpush1.msra.mxu0 0.0
        %4529 = vmatprep.mubr.f32.mxu0 0.0
        %v4530 = vand.u32 %v4369, 4294901760
        %4531 = vmatmul.mubr.f32.gmra.mrb[0].mxu0 %v4530
        %v4532 = vpop.f32.mrb[0].mxu0
        %v4533 = vadd.f32 %v4451, %v4532
        %v4534 = vpop.f32.mrb[0].mxu0
        %v4535 = vadd.f32 %v4453, %v4534
        %4536 = vdwg.mxu0
        %v4537 = vand.u32 %v4375, 4294901760
        %v4538 = vsub.f32 %v4375, %v4537
        %4539 = vmatprep.subr.mxu0 %v4538
        %v4540 = vand.u32 %v4372, 4294901760
        %v4541 = vsub.f32 %v4372, %v4540
        %4542 = vmatpush1.msra.mxu0 %v4541
        %4543 = vmatprep.subr.mxu0 0.0
        %4544 = vmatpush1.msra.mxu0 0.0
        %4545 = vmatprep.subr.mxu0 0.0
        %4546 = vmatpush1.msra.mxu0 0.0
        %4547 = vmatprep.subr.mxu0 0.0
        %4548 = vmatpush1.msra.mxu0 0.0
        %4549 = vmatprep.subr.mxu0 0.0
        %4550 = vmatpush1.msra.mxu0 0.0
        %4551 = vmatprep.subr.mxu0 0.0
        %4552 = vmatpush1.msra.mxu0 0.0
        %4553 = vmatprep.subr.mxu0 0.0
        %4554 = vmatpush1.msra.mxu0 0.0
        %4555 = vmatprep.subr.mxu0 0.0
        %4556 = vmatpush1.msra.mxu0 0.0
        %4557 = vmatprep.subr.mxu0 0.0
        %4558 = vmatpush1.msra.mxu0 0.0
        %4559 = vmatprep.subr.mxu0 0.0
        %4560 = vmatpush1.msra.mxu0 0.0
        %4561 = vmatprep.subr.mxu0 0.0
        %4562 = vmatpush1.msra.mxu0 0.0
        %4563 = vmatprep.subr.mxu0 0.0
        %4564 = vmatpush1.msra.mxu0 0.0
        %4565 = vmatprep.subr.mxu0 0.0
        %4566 = vmatpush1.msra.mxu0 0.0
        %4567 = vmatprep.subr.mxu0 0.0
        %4568 = vmatpush1.msra.mxu0 0.0
        %4569 = vmatprep.subr.mxu0 0.0
        %4570 = vmatpush1.msra.mxu0 0.0
        %4571 = vmatprep.subr.mxu0 0.0
        %4572 = vmatpush1.msra.mxu0 0.0
        %4573 = vmatprep.subr.mxu0 0.0
        %4574 = vmatpush1.msra.mxu0 0.0
        %4575 = vmatprep.subr.mxu0 0.0
        %4576 = vmatpush1.msra.mxu0 0.0
        %4577 = vmatprep.subr.mxu0 0.0
        %4578 = vmatpush1.msra.mxu0 0.0
        %4579 = vmatprep.subr.mxu0 0.0
        %4580 = vmatpush1.msra.mxu0 0.0
        %4581 = vmatprep.subr.mxu0 0.0
        %4582 = vmatpush1.msra.mxu0 0.0
        %4583 = vmatprep.subr.mxu0 0.0
        %4584 = vmatpush1.msra.mxu0 0.0
        %4585 = vmatprep.subr.mxu0 0.0
        %4586 = vmatpush1.msra.mxu0 0.0
        %4587 = vmatprep.subr.mxu0 0.0
        %4588 = vmatpush1.msra.mxu0 0.0
        %4589 = vmatprep.subr.mxu0 0.0
        %4590 = vmatpush1.msra.mxu0 0.0
        %4591 = vmatprep.subr.mxu0 0.0
        %4592 = vmatpush1.msra.mxu0 0.0
        %4593 = vmatprep.subr.mxu0 0.0
        %4594 = vmatpush1.msra.mxu0 0.0
        %4595 = vmatprep.subr.mxu0 0.0
        %4596 = vmatpush1.msra.mxu0 0.0
        %4597 = vmatprep.subr.mxu0 0.0
        %4598 = vmatpush1.msra.mxu0 0.0
        %4599 = vmatprep.subr.mxu0 0.0
        %4600 = vmatpush1.msra.mxu0 0.0
        %4601 = vmatprep.subr.mxu0 0.0
        %4602 = vmatpush1.msra.mxu0 0.0
        %4603 = vmatprep.subr.mxu0 0.0
        %4604 = vmatpush1.msra.mxu0 0.0
        %4605 = vmatprep.mubr.f32.mxu0 0.0
        %v4606 = vand.u32 %v4369, 4294901760
        %v4607 = vsub.f32 %v4369, %v4606
        %4608 = vmatmul.mubr.f32.gmra.mrb[0].mxu0 %v4607
        %v4609 = vpop.f32.mrb[0].mxu0
        %v4610 = vadd.f32 %v4533, %v4609
        %v4611 = vpop.f32.mrb[0].mxu0
        %v4612 = vadd.f32 %v4535, %v4611
        %4613 = vdwg.mxu0
        %v4614 = vand.u32 %v4375, 4294901760
        %4615 = vmatprep.subr.mxu0 %v4614
        %v4616 = vand.u32 %v4372, 4294901760
        %4617 = vmatpush1.msra.mxu0 %v4616
        %4618 = vmatprep.subr.mxu0 0.0
        %4619 = vmatpush1.msra.mxu0 0.0
        %4620 = vmatprep.subr.mxu0 0.0
        %4621 = vmatpush1.msra.mxu0 0.0
        %4622 = vmatprep.subr.mxu0 0.0
        %4623 = vmatpush1.msra.mxu0 0.0
        %4624 = vmatprep.subr.mxu0 0.0
        %4625 = vmatpush1.msra.mxu0 0.0
        %4626 = vmatprep.subr.mxu0 0.0
        %4627 = vmatpush1.msra.mxu0 0.0
        %4628 = vmatprep.subr.mxu0 0.0
        %4629 = vmatpush1.msra.mxu0 0.0
        %4630 = vmatprep.subr.mxu0 0.0
        %4631 = vmatpush1.msra.mxu0 0.0
        %4632 = vmatprep.subr.mxu0 0.0
        %4633 = vmatpush1.msra.mxu0 0.0
        %4634 = vmatprep.subr.mxu0 0.0
        %4635 = vmatpush1.msra.mxu0 0.0
        %4636 = vmatprep.subr.mxu0 0.0
        %4637 = vmatpush1.msra.mxu0 0.0
        %4638 = vmatprep.subr.mxu0 0.0
        %4639 = vmatpush1.msra.mxu0 0.0
        %4640 = vmatprep.subr.mxu0 0.0
        %4641 = vmatpush1.msra.mxu0 0.0
        %4642 = vmatprep.subr.mxu0 0.0
        %4643 = vmatpush1.msra.mxu0 0.0
        %4644 = vmatprep.subr.mxu0 0.0
        %4645 = vmatpush1.msra.mxu0 0.0
        %4646 = vmatprep.subr.mxu0 0.0
        %4647 = vmatpush1.msra.mxu0 0.0
        %4648 = vmatprep.subr.mxu0 0.0
        %4649 = vmatpush1.msra.mxu0 0.0
        %4650 = vmatprep.subr.mxu0 0.0
        %4651 = vmatpush1.msra.mxu0 0.0
        %4652 = vmatprep.subr.mxu0 0.0
        %4653 = vmatpush1.msra.mxu0 0.0
        %4654 = vmatprep.subr.mxu0 0.0
        %4655 = vmatpush1.msra.mxu0 0.0
        %4656 = vmatprep.subr.mxu0 0.0
        %4657 = vmatpush1.msra.mxu0 0.0
        %4658 = vmatprep.subr.mxu0 0.0
        %4659 = vmatpush1.msra.mxu0 0.0
        %4660 = vmatprep.subr.mxu0 0.0
        %4661 = vmatpush1.msra.mxu0 0.0
        %4662 = vmatprep.subr.mxu0 0.0
        %4663 = vmatpush1.msra.mxu0 0.0
        %4664 = vmatprep.subr.mxu0 0.0
        %4665 = vmatpush1.msra.mxu0 0.0
        %4666 = vmatprep.subr.mxu0 0.0
        %4667 = vmatpush1.msra.mxu0 0.0
        %4668 = vmatprep.subr.mxu0 0.0
        %4669 = vmatpush1.msra.mxu0 0.0
        %4670 = vmatprep.subr.mxu0 0.0
        %4671 = vmatpush1.msra.mxu0 0.0
        %4672 = vmatprep.subr.mxu0 0.0
        %4673 = vmatpush1.msra.mxu0 0.0
        %4674 = vmatprep.subr.mxu0 0.0
        %4675 = vmatpush1.msra.mxu0 0.0
        %4676 = vmatprep.subr.mxu0 0.0
        %4677 = vmatpush1.msra.mxu0 0.0
        %4678 = vmatprep.subr.mxu0 0.0
        %4679 = vmatpush1.msra.mxu0 0.0
        %4680 = vmatprep.mubr.f32.mxu0 0.0
        %v4681 = vand.u32 %v4369, 4294901760
        %v4682 = vsub.f32 %v4369, %v4681
        %v4683 = vand.u32 %v4682, 4294901760
        %4684 = vmatmul.mubr.f32.gmra.mrb[0].mxu0 %v4683
        %v4685 = vpop.f32.mrb[0].mxu0
        %v4686 = vadd.f32 %v4610, %v4685
        %v4687 = vpop.f32.mrb[0].mxu0
        %v4688 = vadd.f32 %v4612, %v4687
        %4689 = vdwg.mxu0
        %v4690 = vand.u32 %v4375, 4294901760
        %v4691 = vsub.f32 %v4375, %v4690
        %v4692 = vand.u32 %v4691, 4294901760
        %4693 = vmatprep.subr.mxu0 %v4692
        %v4694 = vand.u32 %v4372, 4294901760
        %v4695 = vsub.f32 %v4372, %v4694
        %v4696 = vand.u32 %v4695, 4294901760
        %4697 = vmatpush1.msra.mxu0 %v4696
        %4698 = vmatprep.subr.mxu0 0.0
        %4699 = vmatpush1.msra.mxu0 0.0
        %4700 = vmatprep.subr.mxu0 0.0
        %4701 = vmatpush1.msra.mxu0 0.0
        %4702 = vmatprep.subr.mxu0 0.0
        %4703 = vmatpush1.msra.mxu0 0.0
        %4704 = vmatprep.subr.mxu0 0.0
        %4705 = vmatpush1.msra.mxu0 0.0
        %4706 = vmatprep.subr.mxu0 0.0
        %4707 = vmatpush1.msra.mxu0 0.0
        %4708 = vmatprep.subr.mxu0 0.0
        %4709 = vmatpush1.msra.mxu0 0.0
        %4710 = vmatprep.subr.mxu0 0.0
        %4711 = vmatpush1.msra.mxu0 0.0
        %4712 = vmatprep.subr.mxu0 0.0
        %4713 = vmatpush1.msra.mxu0 0.0
        %4714 = vmatprep.subr.mxu0 0.0
        %4715 = vmatpush1.msra.mxu0 0.0
        %4716 = vmatprep.subr.mxu0 0.0
        %4717 = vmatpush1.msra.mxu0 0.0
        %4718 = vmatprep.subr.mxu0 0.0
        %4719 = vmatpush1.msra.mxu0 0.0
        %4720 = vmatprep.subr.mxu0 0.0
        %4721 = vmatpush1.msra.mxu0 0.0
        %4722 = vmatprep.subr.mxu0 0.0
        %4723 = vmatpush1.msra.mxu0 0.0
        %4724 = vmatprep.subr.mxu0 0.0
        %4725 = vmatpush1.msra.mxu0 0.0
        %4726 = vmatprep.subr.mxu0 0.0
        %4727 = vmatpush1.msra.mxu0 0.0
        %4728 = vmatprep.subr.mxu0 0.0
        %4729 = vmatpush1.msra.mxu0 0.0
        %4730 = vmatprep.subr.mxu0 0.0
        %4731 = vmatpush1.msra.mxu0 0.0
        %4732 = vmatprep.subr.mxu0 0.0
        %4733 = vmatpush1.msra.mxu0 0.0
        %4734 = vmatprep.subr.mxu0 0.0
        %4735 = vmatpush1.msra.mxu0 0.0
        %4736 = vmatprep.subr.mxu0 0.0
        %4737 = vmatpush1.msra.mxu0 0.0
        %4738 = vmatprep.subr.mxu0 0.0
        %4739 = vmatpush1.msra.mxu0 0.0
        %4740 = vmatprep.subr.mxu0 0.0
        %4741 = vmatpush1.msra.mxu0 0.0
        %4742 = vmatprep.subr.mxu0 0.0
        %4743 = vmatpush1.msra.mxu0 0.0
        %4744 = vmatprep.subr.mxu0 0.0
        %4745 = vmatpush1.msra.mxu0 0.0
        %4746 = vmatprep.subr.mxu0 0.0
        %4747 = vmatpush1.msra.mxu0 0.0
        %4748 = vmatprep.subr.mxu0 0.0
        %4749 = vmatpush1.msra.mxu0 0.0
        %4750 = vmatprep.subr.mxu0 0.0
        %4751 = vmatpush1.msra.mxu0 0.0
        %4752 = vmatprep.subr.mxu0 0.0
        %4753 = vmatpush1.msra.mxu0 0.0
        %4754 = vmatprep.subr.mxu0 0.0
        %4755 = vmatpush1.msra.mxu0 0.0
        %4756 = vmatprep.subr.mxu0 0.0
        %4757 = vmatpush1.msra.mxu0 0.0
        %4758 = vmatprep.subr.mxu0 0.0
        %4759 = vmatpush1.msra.mxu0 0.0
        %4760 = vmatprep.mubr.f32.mxu0 0.0
        %v4761 = vand.u32 %v4369, 4294901760
        %4762 = vmatmul.mubr.f32.gmra.mrb[0].mxu0 %v4761
        %v4763 = vpop.f32.mrb[0].mxu0
        %v4764 = vadd.f32 %v4686, %v4763
        %v4765 = vpop.f32.mrb[0].mxu0
        %v4766 = vadd.f32 %v4688, %v4765
        %4767 = vdwg.mxu0
        %v4768 = vand.u32 %v4375, 4294901760
        %4769 = vmatprep.subr.mxu0 %v4768
        %v4770 = vand.u32 %v4372, 4294901760
        %4771 = vmatpush1.msra.mxu0 %v4770
        %4772 = vmatprep.subr.mxu0 0.0
        %4773 = vmatpush1.msra.mxu0 0.0
        %4774 = vmatprep.subr.mxu0 0.0
        %4775 = vmatpush1.msra.mxu0 0.0
        %4776 = vmatprep.subr.mxu0 0.0
        %4777 = vmatpush1.msra.mxu0 0.0
        %4778 = vmatprep.subr.mxu0 0.0
        %4779 = vmatpush1.msra.mxu0 0.0
        %4780 = vmatprep.subr.mxu0 0.0
        %4781 = vmatpush1.msra.mxu0 0.0
        %4782 = vmatprep.subr.mxu0 0.0
        %4783 = vmatpush1.msra.mxu0 0.0
        %4784 = vmatprep.subr.mxu0 0.0
        %4785 = vmatpush1.msra.mxu0 0.0
        %4786 = vmatprep.subr.mxu0 0.0
        %4787 = vmatpush1.msra.mxu0 0.0
        %4788 = vmatprep.subr.mxu0 0.0
        %4789 = vmatpush1.msra.mxu0 0.0
        %4790 = vmatprep.subr.mxu0 0.0
        %4791 = vmatpush1.msra.mxu0 0.0
        %4792 = vmatprep.subr.mxu0 0.0
        %4793 = vmatpush1.msra.mxu0 0.0
        %4794 = vmatprep.subr.mxu0 0.0
        %4795 = vmatpush1.msra.mxu0 0.0
        %4796 = vmatprep.subr.mxu0 0.0
        %4797 = vmatpush1.msra.mxu0 0.0
        %4798 = vmatprep.subr.mxu0 0.0
        %4799 = vmatpush1.msra.mxu0 0.0
        %4800 = vmatprep.subr.mxu0 0.0
        %4801 = vmatpush1.msra.mxu0 0.0
        %4802 = vmatprep.subr.mxu0 0.0
        %4803 = vmatpush1.msra.mxu0 0.0
        %4804 = vmatprep.subr.mxu0 0.0
        %4805 = vmatpush1.msra.mxu0 0.0
        %4806 = vmatprep.subr.mxu0 0.0
        %4807 = vmatpush1.msra.mxu0 0.0
        %4808 = vmatprep.subr.mxu0 0.0
        %4809 = vmatpush1.msra.mxu0 0.0
        %4810 = vmatprep.subr.mxu0 0.0
        %4811 = vmatpush1.msra.mxu0 0.0
        %4812 = vmatprep.subr.mxu0 0.0
        %4813 = vmatpush1.msra.mxu0 0.0
        %4814 = vmatprep.subr.mxu0 0.0
        %4815 = vmatpush1.msra.mxu0 0.0
        %4816 = vmatprep.subr.mxu0 0.0
        %4817 = vmatpush1.msra.mxu0 0.0
        %4818 = vmatprep.subr.mxu0 0.0
        %4819 = vmatpush1.msra.mxu0 0.0
        %4820 = vmatprep.subr.mxu0 0.0
        %4821 = vmatpush1.msra.mxu0 0.0
        %4822 = vmatprep.subr.mxu0 0.0
        %4823 = vmatpush1.msra.mxu0 0.0
        %4824 = vmatprep.subr.mxu0 0.0
        %4825 = vmatpush1.msra.mxu0 0.0
        %4826 = vmatprep.subr.mxu0 0.0
        %4827 = vmatpush1.msra.mxu0 0.0
        %4828 = vmatprep.subr.mxu0 0.0
        %4829 = vmatpush1.msra.mxu0 0.0
        %4830 = vmatprep.subr.mxu0 0.0
        %4831 = vmatpush1.msra.mxu0 0.0
        %4832 = vmatprep.subr.mxu0 0.0
        %4833 = vmatpush1.msra.mxu0 0.0
        %4834 = vmatprep.mubr.f32.mxu0 0.0
        %v4835 = vand.u32 %v4369, 4294901760
        %4836 = vmatmul.mubr.f32.gmra.mrb[0].mxu0 %v4835
        %v4837 = vpop.f32.mrb[0].mxu0
        %v4838 = vadd.f32 %v4764, %v4837
        %v4839 = vpop.f32.mrb[0].mxu0
        %v4840 = vadd.f32 %v4766, %v4839
        %4841 = vdwg.mxu0
        %v4842 = vadd.f32 %v4339, %v4838
        %v4843 = vadd.f32 %v4340, %v4840
        %v4844 = vld [vmem:[%s3] sm:$0xff]
        %4846 = vset.pattern.permute.xlu0 0
        %4847 = vperm.xlu0 %4846, %v4844
        %v4848 = vpop.permute.xlu0 %4847
        %v4850 = vmul.f32 %v4842, %v4848
        %v4851 = vmul.f32 %v4843, %v4848
        %v4852 = vld [vmem:[%s4] sm:$0xff]
        %4854 = vset.pattern.permute.xlu0 0
        %4855 = vperm.xlu0 %4854, %v4852
        %v4856 = vpop.permute.xlu0 %4855
        %v4858 = vadd.f32 %v4850, %v4856
        %v4859 = vadd.f32 %v4851, %v4856
        %v4860 = vmax.f32 %v4858, 0.0
        %v4861 = vmax.f32 %v4859, 0.0
        %v4862 = vld [vmem:[%s6] sm:$0xff]
        %v4863 = vld [vmem:[%s344] sm:$0x1]
        %v4865 = vlaneseq
        %v4866 = vshrl.u32 %v4865, 7
        %v4867 = vsub.s32 0, %v4866
        %v4868 = vrot.slane %v4863, %v4867
        %v4870 = vmul.f32 %v4862, %v4868
        %vm4871 = vcmask 261120
        %v4872 = vsel %vm4871, %v4870, 0.0
        %4873 = vadd.xlane.f32.xlu0 %v4872
        %v4874 = vpop.xlane.xlu0 %4873
        %v4875 = vld [vmem:[%s7] sm:$0xff]
        %v4876 = vadd.f32 %v4874, %v4875
        %v4877 = vmax.f32 %v4876, 0.0
        %4879 = vset.pattern.permute.xlu0 0
        %4880 = vperm.xlu0 %4879, %v4877
        %v4881 = vpop.permute.xlu0 %4880
        %v4883 = vadd.f32 %v4860, %v4881
        %v4884 = vadd.f32 %v4861, %v4881
        %4886 = vrot.lane.b32.xlu0 %v4884, 17
        %v4887 = vpop.permute.xlu0 %4886
        %4890 = vrot.lane.b32.xlu0 %v4883, 17
        %v4891 = vpop.permute.xlu0 %4890
        %v4892 = vsel %vm353, %v4891, %v4887
        %v4895 = vsel %vm353, %v4887, %v4891
        %v4896 = vmul.f32 %v4895, %v363
        %v4897 = vmul.f32 %v4892, %v367
        %v4898 = vld [vmem:[%s8] sm:$0xff]
        %4899 = vrot.lane.b32.xlu0 %v4884, 16
        %v4900 = vpop.permute.xlu0 %4899
        %4902 = vrot.lane.b32.xlu0 %v4883, 16
        %v4903 = vpop.permute.xlu0 %4902
        %v4904 = vsel %vm378, %v4903, %v4900
        %v4907 = vsel %vm378, %v4900, %v4903
        %v4908 = vmul.f32 %v4907, %v389
        %v4909 = vmul.f32 %v4904, %v393
        %s4910 = scalar_lea.vmem %s8, 8
        %v4911 = vld [vmem:[%s4910] sm:$0xff]
        %vm4912 = vcmask 64512
        %v4914 = vsel %vm4912, %v4911, 0
        %v4916 = vand.u32 %v4909, 4294901760
        %4917 = vmatprep.subr.mxu0 %v4916
        %v4918 = vand.u32 %v4908, 4294901760
        %4919 = vmatpush1.msra.mxu0 %v4918
        %4920 = vmatprep.subr.mxu0 0.0
        %4921 = vmatpush1.msra.mxu0 0.0
        %4922 = vmatprep.subr.mxu0 0.0
        %4923 = vmatpush1.msra.mxu0 0.0
        %4924 = vmatprep.subr.mxu0 0.0
        %4925 = vmatpush1.msra.mxu0 0.0
        %4926 = vmatprep.subr.mxu0 0.0
        %4927 = vmatpush1.msra.mxu0 0.0
        %4928 = vmatprep.subr.mxu0 0.0
        %4929 = vmatpush1.msra.mxu0 0.0
        %4930 = vmatprep.subr.mxu0 0.0
        %4931 = vmatpush1.msra.mxu0 0.0
        %4932 = vmatprep.subr.mxu0 0.0
        %4933 = vmatpush1.msra.mxu0 0.0
        %4934 = vmatprep.subr.mxu0 0.0
        %4935 = vmatpush1.msra.mxu0 0.0
        %4936 = vmatprep.subr.mxu0 0.0
        %4937 = vmatpush1.msra.mxu0 0.0
        %4938 = vmatprep.subr.mxu0 0.0
        %4939 = vmatpush1.msra.mxu0 0.0
        %4940 = vmatprep.subr.mxu0 0.0
        %4941 = vmatpush1.msra.mxu0 0.0
        %4942 = vmatprep.subr.mxu0 0.0
        %4943 = vmatpush1.msra.mxu0 0.0
        %4944 = vmatprep.subr.mxu0 0.0
        %4945 = vmatpush1.msra.mxu0 0.0
        %4946 = vmatprep.subr.mxu0 0.0
        %4947 = vmatpush1.msra.mxu0 0.0
        %4948 = vmatprep.subr.mxu0 0.0
        %4949 = vmatpush1.msra.mxu0 0.0
        %4950 = vmatprep.subr.mxu0 0.0
        %4951 = vmatpush1.msra.mxu0 0.0
        %4952 = vmatprep.subr.mxu0 0.0
        %4953 = vmatpush1.msra.mxu0 0.0
        %4954 = vmatprep.subr.mxu0 0.0
        %4955 = vmatpush1.msra.mxu0 0.0
        %4956 = vmatprep.subr.mxu0 0.0
        %4957 = vmatpush1.msra.mxu0 0.0
        %4958 = vmatprep.subr.mxu0 0.0
        %4959 = vmatpush1.msra.mxu0 0.0
        %4960 = vmatprep.subr.mxu0 0.0
        %4961 = vmatpush1.msra.mxu0 0.0
        %4962 = vmatprep.subr.mxu0 0.0
        %4963 = vmatpush1.msra.mxu0 0.0
        %4964 = vmatprep.subr.mxu0 0.0
        %4965 = vmatpush1.msra.mxu0 0.0
        %4966 = vmatprep.subr.mxu0 0.0
        %4967 = vmatpush1.msra.mxu0 0.0
        %4968 = vmatprep.subr.mxu0 0.0
        %4969 = vmatpush1.msra.mxu0 0.0
        %4970 = vmatprep.subr.mxu0 0.0
        %4971 = vmatpush1.msra.mxu0 0.0
        %4972 = vmatprep.subr.mxu0 0.0
        %4973 = vmatpush1.msra.mxu0 0.0
        %4974 = vmatprep.subr.mxu0 0.0
        %4975 = vmatpush1.msra.mxu0 0.0
        %4976 = vmatprep.subr.mxu0 0.0
        %4977 = vmatpush1.msra.mxu0 0.0
        %4978 = vmatprep.subr.mxu0 0.0
        %4979 = vmatpush1.msra.mxu0 0.0
        %4980 = vmatprep.subr.mxu0 0.0
        %4981 = vmatpush1.msra.mxu0 0.0
        %4982 = vmatprep.mubr.f32.mxu0 0.0
        %v4983 = vand.u32 %v4914, 4294901760
        %v4984 = vsub.f32 %v4914, %v4983
        %v4985 = vand.u32 %v4984, 4294901760
        %v4986 = vsub.f32 %v4984, %v4985
        %v4987 = vand.u32 %v4986, 4294901760
        %4988 = vmatmul.mubr.f32.gmra.mrb[0].mxu0 %v4987
        %v4989 = vpop.f32.mrb[0].mxu0
        %v4990 = vadd.f32 0.0, %v4989
        %v4991 = vpop.f32.mrb[0].mxu0
        %v4992 = vadd.f32 0.0, %v4991
        %4993 = vdwg.mxu0
        %v4994 = vand.u32 %v4909, 4294901760
        %v4995 = vsub.f32 %v4909, %v4994
        %v4996 = vand.u32 %v4995, 4294901760
        %v4997 = vsub.f32 %v4995, %v4996
        %v4998 = vand.u32 %v4997, 4294901760
        %4999 = vmatprep.subr.mxu0 %v4998
        %v5000 = vand.u32 %v4908, 4294901760
        %v5001 = vsub.f32 %v4908, %v5000
        %v5002 = vand.u32 %v5001, 4294901760
        %v5003 = vsub.f32 %v5001, %v5002
        %v5004 = vand.u32 %v5003, 4294901760
        %5005 = vmatpush1.msra.mxu0 %v5004
        %5006 = vmatprep.subr.mxu0 0.0
        %5007 = vmatpush1.msra.mxu0 0.0
        %5008 = vmatprep.subr.mxu0 0.0
        %5009 = vmatpush1.msra.mxu0 0.0
        %5010 = vmatprep.subr.mxu0 0.0
        %5011 = vmatpush1.msra.mxu0 0.0
        %5012 = vmatprep.subr.mxu0 0.0
        %5013 = vmatpush1.msra.mxu0 0.0
        %5014 = vmatprep.subr.mxu0 0.0
        %5015 = vmatpush1.msra.mxu0 0.0
        %5016 = vmatprep.subr.mxu0 0.0
        %5017 = vmatpush1.msra.mxu0 0.0
        %5018 = vmatprep.subr.mxu0 0.0
        %5019 = vmatpush1.msra.mxu0 0.0
        %5020 = vmatprep.subr.mxu0 0.0
        %5021 = vmatpush1.msra.mxu0 0.0
        %5022 = vmatprep.subr.mxu0 0.0
        %5023 = vmatpush1.msra.mxu0 0.0
        %5024 = vmatprep.subr.mxu0 0.0
        %5025 = vmatpush1.msra.mxu0 0.0
        %5026 = vmatprep.subr.mxu0 0.0
        %5027 = vmatpush1.msra.mxu0 0.0
        %5028 = vmatprep.subr.mxu0 0.0
        %5029 = vmatpush1.msra.mxu0 0.0
        %5030 = vmatprep.subr.mxu0 0.0
        %5031 = vmatpush1.msra.mxu0 0.0
        %5032 = vmatprep.subr.mxu0 0.0
        %5033 = vmatpush1.msra.mxu0 0.0
        %5034 = vmatprep.subr.mxu0 0.0
        %5035 = vmatpush1.msra.mxu0 0.0
        %5036 = vmatprep.subr.mxu0 0.0
        %5037 = vmatpush1.msra.mxu0 0.0
        %5038 = vmatprep.subr.mxu0 0.0
        %5039 = vmatpush1.msra.mxu0 0.0
        %5040 = vmatprep.subr.mxu0 0.0
        %5041 = vmatpush1.msra.mxu0 0.0
        %5042 = vmatprep.subr.mxu0 0.0
        %5043 = vmatpush1.msra.mxu0 0.0
        %5044 = vmatprep.subr.mxu0 0.0
        %5045 = vmatpush1.msra.mxu0 0.0
        %5046 = vmatprep.subr.mxu0 0.0
        %5047 = vmatpush1.msra.mxu0 0.0
        %5048 = vmatprep.subr.mxu0 0.0
        %5049 = vmatpush1.msra.mxu0 0.0
        %5050 = vmatprep.subr.mxu0 0.0
        %5051 = vmatpush1.msra.mxu0 0.0
        %5052 = vmatprep.subr.mxu0 0.0
        %5053 = vmatpush1.msra.mxu0 0.0
        %5054 = vmatprep.subr.mxu0 0.0
        %5055 = vmatpush1.msra.mxu0 0.0
        %5056 = vmatprep.subr.mxu0 0.0
        %5057 = vmatpush1.msra.mxu0 0.0
        %5058 = vmatprep.subr.mxu0 0.0
        %5059 = vmatpush1.msra.mxu0 0.0
        %5060 = vmatprep.subr.mxu0 0.0
        %5061 = vmatpush1.msra.mxu0 0.0
        %5062 = vmatprep.subr.mxu0 0.0
        %5063 = vmatpush1.msra.mxu0 0.0
        %5064 = vmatprep.subr.mxu0 0.0
        %5065 = vmatpush1.msra.mxu0 0.0
        %5066 = vmatprep.subr.mxu0 0.0
        %5067 = vmatpush1.msra.mxu0 0.0
        %5068 = vmatprep.mubr.f32.mxu0 0.0
        %v5069 = vand.u32 %v4914, 4294901760
        %5070 = vmatmul.mubr.f32.gmra.mrb[0].mxu0 %v5069
        %v5071 = vpop.f32.mrb[0].mxu0
        %v5072 = vadd.f32 %v4990, %v5071
        %v5073 = vpop.f32.mrb[0].mxu0
        %v5074 = vadd.f32 %v4992, %v5073
        %5075 = vdwg.mxu0
        %v5076 = vand.u32 %v4909, 4294901760
        %v5077 = vsub.f32 %v4909, %v5076
        %5078 = vmatprep.subr.mxu0 %v5077
        %v5079 = vand.u32 %v4908, 4294901760
        %v5080 = vsub.f32 %v4908, %v5079
        %5081 = vmatpush1.msra.mxu0 %v5080
        %5082 = vmatprep.subr.mxu0 0.0
        %5083 = vmatpush1.msra.mxu0 0.0
        %5084 = vmatprep.subr.mxu0 0.0
        %5085 = vmatpush1.msra.mxu0 0.0
        %5086 = vmatprep.subr.mxu0 0.0
        %5087 = vmatpush1.msra.mxu0 0.0
        %5088 = vmatprep.subr.mxu0 0.0
        %5089 = vmatpush1.msra.mxu0 0.0
        %5090 = vmatprep.subr.mxu0 0.0
        %5091 = vmatpush1.msra.mxu0 0.0
        %5092 = vmatprep.subr.mxu0 0.0
        %5093 = vmatpush1.msra.mxu0 0.0
        %5094 = vmatprep.subr.mxu0 0.0
        %5095 = vmatpush1.msra.mxu0 0.0
        %5096 = vmatprep.subr.mxu0 0.0
        %5097 = vmatpush1.msra.mxu0 0.0
        %5098 = vmatprep.subr.mxu0 0.0
        %5099 = vmatpush1.msra.mxu0 0.0
        %5100 = vmatprep.subr.mxu0 0.0
        %5101 = vmatpush1.msra.mxu0 0.0
        %5102 = vmatprep.subr.mxu0 0.0
        %5103 = vmatpush1.msra.mxu0 0.0
        %5104 = vmatprep.subr.mxu0 0.0
        %5105 = vmatpush1.msra.mxu0 0.0
        %5106 = vmatprep.subr.mxu0 0.0
        %5107 = vmatpush1.msra.mxu0 0.0
        %5108 = vmatprep.subr.mxu0 0.0
        %5109 = vmatpush1.msra.mxu0 0.0
        %5110 = vmatprep.subr.mxu0 0.0
        %5111 = vmatpush1.msra.mxu0 0.0
        %5112 = vmatprep.subr.mxu0 0.0
        %5113 = vmatpush1.msra.mxu0 0.0
        %5114 = vmatprep.subr.mxu0 0.0
        %5115 = vmatpush1.msra.mxu0 0.0
        %5116 = vmatprep.subr.mxu0 0.0
        %5117 = vmatpush1.msra.mxu0 0.0
        %5118 = vmatprep.subr.mxu0 0.0
        %5119 = vmatpush1.msra.mxu0 0.0
        %5120 = vmatprep.subr.mxu0 0.0
        %5121 = vmatpush1.msra.mxu0 0.0
        %5122 = vmatprep.subr.mxu0 0.0
        %5123 = vmatpush1.msra.mxu0 0.0
        %5124 = vmatprep.subr.mxu0 0.0
        %5125 = vmatpush1.msra.mxu0 0.0
        %5126 = vmatprep.subr.mxu0 0.0
        %5127 = vmatpush1.msra.mxu0 0.0
        %5128 = vmatprep.subr.mxu0 0.0
        %5129 = vmatpush1.msra.mxu0 0.0
        %5130 = vmatprep.subr.mxu0 0.0
        %5131 = vmatpush1.msra.mxu0 0.0
        %5132 = vmatprep.subr.mxu0 0.0
        %5133 = vmatpush1.msra.mxu0 0.0
        %5134 = vmatprep.subr.mxu0 0.0
        %5135 = vmatpush1.msra.mxu0 0.0
        %5136 = vmatprep.subr.mxu0 0.0
        %5137 = vmatpush1.msra.mxu0 0.0
        %5138 = vmatprep.subr.mxu0 0.0
        %5139 = vmatpush1.msra.mxu0 0.0
        %5140 = vmatprep.subr.mxu0 0.0
        %5141 = vmatpush1.msra.mxu0 0.0
        %5142 = vmatprep.subr.mxu0 0.0
        %5143 = vmatpush1.msra.mxu0 0.0
        %5144 = vmatprep.mubr.f32.mxu0 0.0
        %v5145 = vand.u32 %v4914, 4294901760
        %v5146 = vsub.f32 %v4914, %v5145
        %5147 = vmatmul.mubr.f32.gmra.mrb[0].mxu0 %v5146
        %v5148 = vpop.f32.mrb[0].mxu0
        %v5149 = vadd.f32 %v5072, %v5148
        %v5150 = vpop.f32.mrb[0].mxu0
        %v5151 = vadd.f32 %v5074, %v5150
        %5152 = vdwg.mxu0
        %v5153 = vand.u32 %v4909, 4294901760
        %5154 = vmatprep.subr.mxu0 %v5153
        %v5155 = vand.u32 %v4908, 4294901760
        %5156 = vmatpush1.msra.mxu0 %v5155
        %5157 = vmatprep.subr.mxu0 0.0
        %5158 = vmatpush1.msra.mxu0 0.0
        %5159 = vmatprep.subr.mxu0 0.0
        %5160 = vmatpush1.msra.mxu0 0.0
        %5161 = vmatprep.subr.mxu0 0.0
        %5162 = vmatpush1.msra.mxu0 0.0
        %5163 = vmatprep.subr.mxu0 0.0
        %5164 = vmatpush1.msra.mxu0 0.0
        %5165 = vmatprep.subr.mxu0 0.0
        %5166 = vmatpush1.msra.mxu0 0.0
        %5167 = vmatprep.subr.mxu0 0.0
        %5168 = vmatpush1.msra.mxu0 0.0
        %5169 = vmatprep.subr.mxu0 0.0
        %5170 = vmatpush1.msra.mxu0 0.0
        %5171 = vmatprep.subr.mxu0 0.0
        %5172 = vmatpush1.msra.mxu0 0.0
        %5173 = vmatprep.subr.mxu0 0.0
        %5174 = vmatpush1.msra.mxu0 0.0
        %5175 = vmatprep.subr.mxu0 0.0
        %5176 = vmatpush1.msra.mxu0 0.0
        %5177 = vmatprep.subr.mxu0 0.0
        %5178 = vmatpush1.msra.mxu0 0.0
        %5179 = vmatprep.subr.mxu0 0.0
        %5180 = vmatpush1.msra.mxu0 0.0
        %5181 = vmatprep.subr.mxu0 0.0
        %5182 = vmatpush1.msra.mxu0 0.0
        %5183 = vmatprep.subr.mxu0 0.0
        %5184 = vmatpush1.msra.mxu0 0.0
        %5185 = vmatprep.subr.mxu0 0.0
        %5186 = vmatpush1.msra.mxu0 0.0
        %5187 = vmatprep.subr.mxu0 0.0
        %5188 = vmatpush1.msra.mxu0 0.0
        %5189 = vmatprep.subr.mxu0 0.0
        %5190 = vmatpush1.msra.mxu0 0.0
        %5191 = vmatprep.subr.mxu0 0.0
        %5192 = vmatpush1.msra.mxu0 0.0
        %5193 = vmatprep.subr.mxu0 0.0
        %5194 = vmatpush1.msra.mxu0 0.0
        %5195 = vmatprep.subr.mxu0 0.0
        %5196 = vmatpush1.msra.mxu0 0.0
        %5197 = vmatprep.subr.mxu0 0.0
        %5198 = vmatpush1.msra.mxu0 0.0
        %5199 = vmatprep.subr.mxu0 0.0
        %5200 = vmatpush1.msra.mxu0 0.0
        %5201 = vmatprep.subr.mxu0 0.0
        %5202 = vmatpush1.msra.mxu0 0.0
        %5203 = vmatprep.subr.mxu0 0.0
        %5204 = vmatpush1.msra.mxu0 0.0
        %5205 = vmatprep.subr.mxu0 0.0
        %5206 = vmatpush1.msra.mxu0 0.0
        %5207 = vmatprep.subr.mxu0 0.0
        %5208 = vmatpush1.msra.mxu0 0.0
        %5209 = vmatprep.subr.mxu0 0.0
        %5210 = vmatpush1.msra.mxu0 0.0
        %5211 = vmatprep.subr.mxu0 0.0
        %5212 = vmatpush1.msra.mxu0 0.0
        %5213 = vmatprep.subr.mxu0 0.0
        %5214 = vmatpush1.msra.mxu0 0.0
        %5215 = vmatprep.subr.mxu0 0.0
        %5216 = vmatpush1.msra.mxu0 0.0
        %5217 = vmatprep.subr.mxu0 0.0
        %5218 = vmatpush1.msra.mxu0 0.0
        %5219 = vmatprep.mubr.f32.mxu0 0.0
        %v5220 = vand.u32 %v4914, 4294901760
        %v5221 = vsub.f32 %v4914, %v5220
        %v5222 = vand.u32 %v5221, 4294901760
        %5223 = vmatmul.mubr.f32.gmra.mrb[0].mxu0 %v5222
        %v5224 = vpop.f32.mrb[0].mxu0
        %v5225 = vadd.f32 %v5149, %v5224
        %v5226 = vpop.f32.mrb[0].mxu0
        %v5227 = vadd.f32 %v5151, %v5226
        %5228 = vdwg.mxu0
        %v5229 = vand.u32 %v4909, 4294901760
        %v5230 = vsub.f32 %v4909, %v5229
        %v5231 = vand.u32 %v5230, 4294901760
        %5232 = vmatprep.subr.mxu0 %v5231
        %v5233 = vand.u32 %v4908, 4294901760
        %v5234 = vsub.f32 %v4908, %v5233
        %v5235 = vand.u32 %v5234, 4294901760
        %5236 = vmatpush1.msra.mxu0 %v5235
        %5237 = vmatprep.subr.mxu0 0.0
        %5238 = vmatpush1.msra.mxu0 0.0
        %5239 = vmatprep.subr.mxu0 0.0
        %5240 = vmatpush1.msra.mxu0 0.0
        %5241 = vmatprep.subr.mxu0 0.0
        %5242 = vmatpush1.msra.mxu0 0.0
        %5243 = vmatprep.subr.mxu0 0.0
        %5244 = vmatpush1.msra.mxu0 0.0
        %5245 = vmatprep.subr.mxu0 0.0
        %5246 = vmatpush1.msra.mxu0 0.0
        %5247 = vmatprep.subr.mxu0 0.0
        %5248 = vmatpush1.msra.mxu0 0.0
        %5249 = vmatprep.subr.mxu0 0.0
        %5250 = vmatpush1.msra.mxu0 0.0
        %5251 = vmatprep.subr.mxu0 0.0
        %5252 = vmatpush1.msra.mxu0 0.0
        %5253 = vmatprep.subr.mxu0 0.0
        %5254 = vmatpush1.msra.mxu0 0.0
        %5255 = vmatprep.subr.mxu0 0.0
        %5256 = vmatpush1.msra.mxu0 0.0
        %5257 = vmatprep.subr.mxu0 0.0
        %5258 = vmatpush1.msra.mxu0 0.0
        %5259 = vmatprep.subr.mxu0 0.0
        %5260 = vmatpush1.msra.mxu0 0.0
        %5261 = vmatprep.subr.mxu0 0.0
        %5262 = vmatpush1.msra.mxu0 0.0
        %5263 = vmatprep.subr.mxu0 0.0
        %5264 = vmatpush1.msra.mxu0 0.0
        %5265 = vmatprep.subr.mxu0 0.0
        %5266 = vmatpush1.msra.mxu0 0.0
        %5267 = vmatprep.subr.mxu0 0.0
        %5268 = vmatpush1.msra.mxu0 0.0
        %5269 = vmatprep.subr.mxu0 0.0
        %5270 = vmatpush1.msra.mxu0 0.0
        %5271 = vmatprep.subr.mxu0 0.0
        %5272 = vmatpush1.msra.mxu0 0.0
        %5273 = vmatprep.subr.mxu0 0.0
        %5274 = vmatpush1.msra.mxu0 0.0
        %5275 = vmatprep.subr.mxu0 0.0
        %5276 = vmatpush1.msra.mxu0 0.0
        %5277 = vmatprep.subr.mxu0 0.0
        %5278 = vmatpush1.msra.mxu0 0.0
        %5279 = vmatprep.subr.mxu0 0.0
        %5280 = vmatpush1.msra.mxu0 0.0
        %5281 = vmatprep.subr.mxu0 0.0
        %5282 = vmatpush1.msra.mxu0 0.0
        %5283 = vmatprep.subr.mxu0 0.0
        %5284 = vmatpush1.msra.mxu0 0.0
        %5285 = vmatprep.subr.mxu0 0.0
        %5286 = vmatpush1.msra.mxu0 0.0
        %5287 = vmatprep.subr.mxu0 0.0
        %5288 = vmatpush1.msra.mxu0 0.0
        %5289 = vmatprep.subr.mxu0 0.0
        %5290 = vmatpush1.msra.mxu0 0.0
        %5291 = vmatprep.subr.mxu0 0.0
        %5292 = vmatpush1.msra.mxu0 0.0
        %5293 = vmatprep.subr.mxu0 0.0
        %5294 = vmatpush1.msra.mxu0 0.0
        %5295 = vmatprep.subr.mxu0 0.0
        %5296 = vmatpush1.msra.mxu0 0.0
        %5297 = vmatprep.subr.mxu0 0.0
        %5298 = vmatpush1.msra.mxu0 0.0
        %5299 = vmatprep.mubr.f32.mxu0 0.0
        %v5300 = vand.u32 %v4914, 4294901760
        %5301 = vmatmul.mubr.f32.gmra.mrb[0].mxu0 %v5300
        %v5302 = vpop.f32.mrb[0].mxu0
        %v5303 = vadd.f32 %v5225, %v5302
        %v5304 = vpop.f32.mrb[0].mxu0
        %v5305 = vadd.f32 %v5227, %v5304
        %5306 = vdwg.mxu0
        %v5307 = vand.u32 %v4909, 4294901760
        %5308 = vmatprep.subr.mxu0 %v5307
        %v5309 = vand.u32 %v4908, 4294901760
        %5310 = vmatpush1.msra.mxu0 %v5309
        %5311 = vmatprep.subr.mxu0 0.0
        %5312 = vmatpush1.msra.mxu0 0.0
        %5313 = vmatprep.subr.mxu0 0.0
        %5314 = vmatpush1.msra.mxu0 0.0
        %5315 = vmatprep.subr.mxu0 0.0
        %5316 = vmatpush1.msra.mxu0 0.0
        %5317 = vmatprep.subr.mxu0 0.0
        %5318 = vmatpush1.msra.mxu0 0.0
        %5319 = vmatprep.subr.mxu0 0.0
        %5320 = vmatpush1.msra.mxu0 0.0
        %5321 = vmatprep.subr.mxu0 0.0
        %5322 = vmatpush1.msra.mxu0 0.0
        %5323 = vmatprep.subr.mxu0 0.0
        %5324 = vmatpush1.msra.mxu0 0.0
        %5325 = vmatprep.subr.mxu0 0.0
        %5326 = vmatpush1.msra.mxu0 0.0
        %5327 = vmatprep.subr.mxu0 0.0
        %5328 = vmatpush1.msra.mxu0 0.0
        %5329 = vmatprep.subr.mxu0 0.0
        %5330 = vmatpush1.msra.mxu0 0.0
        %5331 = vmatprep.subr.mxu0 0.0
        %5332 = vmatpush1.msra.mxu0 0.0
        %5333 = vmatprep.subr.mxu0 0.0
        %5334 = vmatpush1.msra.mxu0 0.0
        %5335 = vmatprep.subr.mxu0 0.0
        %5336 = vmatpush1.msra.mxu0 0.0
        %5337 = vmatprep.subr.mxu0 0.0
        %5338 = vmatpush1.msra.mxu0 0.0
        %5339 = vmatprep.subr.mxu0 0.0
        %5340 = vmatpush1.msra.mxu0 0.0
        %5341 = vmatprep.subr.mxu0 0.0
        %5342 = vmatpush1.msra.mxu0 0.0
        %5343 = vmatprep.subr.mxu0 0.0
        %5344 = vmatpush1.msra.mxu0 0.0
        %5345 = vmatprep.subr.mxu0 0.0
        %5346 = vmatpush1.msra.mxu0 0.0
        %5347 = vmatprep.subr.mxu0 0.0
        %5348 = vmatpush1.msra.mxu0 0.0
        %5349 = vmatprep.subr.mxu0 0.0
        %5350 = vmatpush1.msra.mxu0 0.0
        %5351 = vmatprep.subr.mxu0 0.0
        %5352 = vmatpush1.msra.mxu0 0.0
        %5353 = vmatprep.subr.mxu0 0.0
        %5354 = vmatpush1.msra.mxu0 0.0
        %5355 = vmatprep.subr.mxu0 0.0
        %5356 = vmatpush1.msra.mxu0 0.0
        %5357 = vmatprep.subr.mxu0 0.0
        %5358 = vmatpush1.msra.mxu0 0.0
        %5359 = vmatprep.subr.mxu0 0.0
        %5360 = vmatpush1.msra.mxu0 0.0
        %5361 = vmatprep.subr.mxu0 0.0
        %5362 = vmatpush1.msra.mxu0 0.0
        %5363 = vmatprep.subr.mxu0 0.0
        %5364 = vmatpush1.msra.mxu0 0.0
        %5365 = vmatprep.subr.mxu0 0.0
        %5366 = vmatpush1.msra.mxu0 0.0
        %5367 = vmatprep.subr.mxu0 0.0
        %5368 = vmatpush1.msra.mxu0 0.0
        %5369 = vmatprep.subr.mxu0 0.0
        %5370 = vmatpush1.msra.mxu0 0.0
        %5371 = vmatprep.subr.mxu0 0.0
        %5372 = vmatpush1.msra.mxu0 0.0
        %5373 = vmatprep.mubr.f32.mxu0 0.0
        %v5374 = vand.u32 %v4914, 4294901760
        %5375 = vmatmul.mubr.f32.gmra.mrb[0].mxu0 %v5374
        %v5376 = vpop.f32.mrb[0].mxu0
        %v5377 = vadd.f32 %v5303, %v5376
        %v5378 = vpop.f32.mrb[0].mxu0
        %v5379 = vadd.f32 %v5305, %v5378
        %5380 = vdwg.mxu0
        %v5382 = vsel %vm4912, %v4898, 0
        %v5384 = vand.u32 %v4897, 4294901760
        %5385 = vmatprep.subr.mxu0 %v5384
        %v5386 = vand.u32 %v4896, 4294901760
        %5387 = vmatpush1.msra.mxu0 %v5386
        %5388 = vmatprep.subr.mxu0 0.0
        %5389 = vmatpush1.msra.mxu0 0.0
        %5390 = vmatprep.subr.mxu0 0.0
        %5391 = vmatpush1.msra.mxu0 0.0
        %5392 = vmatprep.subr.mxu0 0.0
        %5393 = vmatpush1.msra.mxu0 0.0
        %5394 = vmatprep.subr.mxu0 0.0
        %5395 = vmatpush1.msra.mxu0 0.0
        %5396 = vmatprep.subr.mxu0 0.0
        %5397 = vmatpush1.msra.mxu0 0.0
        %5398 = vmatprep.subr.mxu0 0.0
        %5399 = vmatpush1.msra.mxu0 0.0
        %5400 = vmatprep.subr.mxu0 0.0
        %5401 = vmatpush1.msra.mxu0 0.0
        %5402 = vmatprep.subr.mxu0 0.0
        %5403 = vmatpush1.msra.mxu0 0.0
        %5404 = vmatprep.subr.mxu0 0.0
        %5405 = vmatpush1.msra.mxu0 0.0
        %5406 = vmatprep.subr.mxu0 0.0
        %5407 = vmatpush1.msra.mxu0 0.0
        %5408 = vmatprep.subr.mxu0 0.0
        %5409 = vmatpush1.msra.mxu0 0.0
        %5410 = vmatprep.subr.mxu0 0.0
        %5411 = vmatpush1.msra.mxu0 0.0
        %5412 = vmatprep.subr.mxu0 0.0
        %5413 = vmatpush1.msra.mxu0 0.0
        %5414 = vmatprep.subr.mxu0 0.0
        %5415 = vmatpush1.msra.mxu0 0.0
        %5416 = vmatprep.subr.mxu0 0.0
        %5417 = vmatpush1.msra.mxu0 0.0
        %5418 = vmatprep.subr.mxu0 0.0
        %5419 = vmatpush1.msra.mxu0 0.0
        %5420 = vmatprep.subr.mxu0 0.0
        %5421 = vmatpush1.msra.mxu0 0.0
        %5422 = vmatprep.subr.mxu0 0.0
        %5423 = vmatpush1.msra.mxu0 0.0
        %5424 = vmatprep.subr.mxu0 0.0
        %5425 = vmatpush1.msra.mxu0 0.0
        %5426 = vmatprep.subr.mxu0 0.0
        %5427 = vmatpush1.msra.mxu0 0.0
        %5428 = vmatprep.subr.mxu0 0.0
        %5429 = vmatpush1.msra.mxu0 0.0
        %5430 = vmatprep.subr.mxu0 0.0
        %5431 = vmatpush1.msra.mxu0 0.0
        %5432 = vmatprep.subr.mxu0 0.0
        %5433 = vmatpush1.msra.mxu0 0.0
        %5434 = vmatprep.subr.mxu0 0.0
        %5435 = vmatpush1.msra.mxu0 0.0
        %5436 = vmatprep.subr.mxu0 0.0
        %5437 = vmatpush1.msra.mxu0 0.0
        %5438 = vmatprep.subr.mxu0 0.0
        %5439 = vmatpush1.msra.mxu0 0.0
        %5440 = vmatprep.subr.mxu0 0.0
        %5441 = vmatpush1.msra.mxu0 0.0
        %5442 = vmatprep.subr.mxu0 0.0
        %5443 = vmatpush1.msra.mxu0 0.0
        %5444 = vmatprep.subr.mxu0 0.0
        %5445 = vmatpush1.msra.mxu0 0.0
        %5446 = vmatprep.subr.mxu0 0.0
        %5447 = vmatpush1.msra.mxu0 0.0
        %5448 = vmatprep.subr.mxu0 0.0
        %5449 = vmatpush1.msra.mxu0 0.0
        %5450 = vmatprep.mubr.f32.mxu0 0.0
        %v5451 = vand.u32 %v5382, 4294901760
        %v5452 = vsub.f32 %v5382, %v5451
        %v5453 = vand.u32 %v5452, 4294901760
        %v5454 = vsub.f32 %v5452, %v5453
        %v5455 = vand.u32 %v5454, 4294901760
        %5456 = vmatmul.mubr.f32.gmra.mrb[0].mxu0 %v5455
        %v5457 = vpop.f32.mrb[0].mxu0
        %v5458 = vadd.f32 %v5377, %v5457
        %v5459 = vpop.f32.mrb[0].mxu0
        %v5460 = vadd.f32 %v5379, %v5459
        %5461 = vdwg.mxu0
        %v5462 = vand.u32 %v4897, 4294901760
        %v5463 = vsub.f32 %v4897, %v5462
        %v5464 = vand.u32 %v5463, 4294901760
        %v5465 = vsub.f32 %v5463, %v5464
        %v5466 = vand.u32 %v5465, 4294901760
        %5467 = vmatprep.subr.mxu0 %v5466
        %v5468 = vand.u32 %v4896, 4294901760
        %v5469 = vsub.f32 %v4896, %v5468
        %v5470 = vand.u32 %v5469, 4294901760
        %v5471 = vsub.f32 %v5469, %v5470
        %v5472 = vand.u32 %v5471, 4294901760
        %5473 = vmatpush1.msra.mxu0 %v5472
        %5474 = vmatprep.subr.mxu0 0.0
        %5475 = vmatpush1.msra.mxu0 0.0
        %5476 = vmatprep.subr.mxu0 0.0
        %5477 = vmatpush1.msra.mxu0 0.0
        %5478 = vmatprep.subr.mxu0 0.0
        %5479 = vmatpush1.msra.mxu0 0.0
        %5480 = vmatprep.subr.mxu0 0.0
        %5481 = vmatpush1.msra.mxu0 0.0
        %5482 = vmatprep.subr.mxu0 0.0
        %5483 = vmatpush1.msra.mxu0 0.0
        %5484 = vmatprep.subr.mxu0 0.0
        %5485 = vmatpush1.msra.mxu0 0.0
        %5486 = vmatprep.subr.mxu0 0.0
        %5487 = vmatpush1.msra.mxu0 0.0
        %5488 = vmatprep.subr.mxu0 0.0
        %5489 = vmatpush1.msra.mxu0 0.0
        %5490 = vmatprep.subr.mxu0 0.0
        %5491 = vmatpush1.msra.mxu0 0.0
        %5492 = vmatprep.subr.mxu0 0.0
        %5493 = vmatpush1.msra.mxu0 0.0
        %5494 = vmatprep.subr.mxu0 0.0
        %5495 = vmatpush1.msra.mxu0 0.0
        %5496 = vmatprep.subr.mxu0 0.0
        %5497 = vmatpush1.msra.mxu0 0.0
        %5498 = vmatprep.subr.mxu0 0.0
        %5499 = vmatpush1.msra.mxu0 0.0
        %5500 = vmatprep.subr.mxu0 0.0
        %5501 = vmatpush1.msra.mxu0 0.0
        %5502 = vmatprep.subr.mxu0 0.0
        %5503 = vmatpush1.msra.mxu0 0.0
        %5504 = vmatprep.subr.mxu0 0.0
        %5505 = vmatpush1.msra.mxu0 0.0
        %5506 = vmatprep.subr.mxu0 0.0
        %5507 = vmatpush1.msra.mxu0 0.0
        %5508 = vmatprep.subr.mxu0 0.0
        %5509 = vmatpush1.msra.mxu0 0.0
        %5510 = vmatprep.subr.mxu0 0.0
        %5511 = vmatpush1.msra.mxu0 0.0
        %5512 = vmatprep.subr.mxu0 0.0
        %5513 = vmatpush1.msra.mxu0 0.0
        %5514 = vmatprep.subr.mxu0 0.0
        %5515 = vmatpush1.msra.mxu0 0.0
        %5516 = vmatprep.subr.mxu0 0.0
        %5517 = vmatpush1.msra.mxu0 0.0
        %5518 = vmatprep.subr.mxu0 0.0
        %5519 = vmatpush1.msra.mxu0 0.0
        %5520 = vmatprep.subr.mxu0 0.0
        %5521 = vmatpush1.msra.mxu0 0.0
        %5522 = vmatprep.subr.mxu0 0.0
        %5523 = vmatpush1.msra.mxu0 0.0
        %5524 = vmatprep.subr.mxu0 0.0
        %5525 = vmatpush1.msra.mxu0 0.0
        %5526 = vmatprep.subr.mxu0 0.0
        %5527 = vmatpush1.msra.mxu0 0.0
        %5528 = vmatprep.subr.mxu0 0.0
        %5529 = vmatpush1.msra.mxu0 0.0
        %5530 = vmatprep.subr.mxu0 0.0
        %5531 = vmatpush1.msra.mxu0 0.0
        %5532 = vmatprep.subr.mxu0 0.0
        %5533 = vmatpush1.msra.mxu0 0.0
        %5534 = vmatprep.subr.mxu0 0.0
        %5535 = vmatpush1.msra.mxu0 0.0
        %5536 = vmatprep.mubr.f32.mxu0 0.0
        %v5537 = vand.u32 %v5382, 4294901760
        %5538 = vmatmul.mubr.f32.gmra.mrb[0].mxu0 %v5537
        %v5539 = vpop.f32.mrb[0].mxu0
        %v5540 = vadd.f32 %v5458, %v5539
        %v5541 = vpop.f32.mrb[0].mxu0
        %v5542 = vadd.f32 %v5460, %v5541
        %5543 = vdwg.mxu0
        %v5544 = vand.u32 %v4897, 4294901760
        %v5545 = vsub.f32 %v4897, %v5544
        %5546 = vmatprep.subr.mxu0 %v5545
        %v5547 = vand.u32 %v4896, 4294901760
        %v5548 = vsub.f32 %v4896, %v5547
        %5549 = vmatpush1.msra.mxu0 %v5548
        %5550 = vmatprep.subr.mxu0 0.0
        %5551 = vmatpush1.msra.mxu0 0.0
        %5552 = vmatprep.subr.mxu0 0.0
        %5553 = vmatpush1.msra.mxu0 0.0
        %5554 = vmatprep.subr.mxu0 0.0
        %5555 = vmatpush1.msra.mxu0 0.0
        %5556 = vmatprep.subr.mxu0 0.0
        %5557 = vmatpush1.msra.mxu0 0.0
        %5558 = vmatprep.subr.mxu0 0.0
        %5559 = vmatpush1.msra.mxu0 0.0
        %5560 = vmatprep.subr.mxu0 0.0
        %5561 = vmatpush1.msra.mxu0 0.0
        %5562 = vmatprep.subr.mxu0 0.0
        %5563 = vmatpush1.msra.mxu0 0.0
        %5564 = vmatprep.subr.mxu0 0.0
        %5565 = vmatpush1.msra.mxu0 0.0
        %5566 = vmatprep.subr.mxu0 0.0
        %5567 = vmatpush1.msra.mxu0 0.0
        %5568 = vmatprep.subr.mxu0 0.0
        %5569 = vmatpush1.msra.mxu0 0.0
        %5570 = vmatprep.subr.mxu0 0.0
        %5571 = vmatpush1.msra.mxu0 0.0
        %5572 = vmatprep.subr.mxu0 0.0
        %5573 = vmatpush1.msra.mxu0 0.0
        %5574 = vmatprep.subr.mxu0 0.0
        %5575 = vmatpush1.msra.mxu0 0.0
        %5576 = vmatprep.subr.mxu0 0.0
        %5577 = vmatpush1.msra.mxu0 0.0
        %5578 = vmatprep.subr.mxu0 0.0
        %5579 = vmatpush1.msra.mxu0 0.0
        %5580 = vmatprep.subr.mxu0 0.0
        %5581 = vmatpush1.msra.mxu0 0.0
        %5582 = vmatprep.subr.mxu0 0.0
        %5583 = vmatpush1.msra.mxu0 0.0
        %5584 = vmatprep.subr.mxu0 0.0
        %5585 = vmatpush1.msra.mxu0 0.0
        %5586 = vmatprep.subr.mxu0 0.0
        %5587 = vmatpush1.msra.mxu0 0.0
        %5588 = vmatprep.subr.mxu0 0.0
        %5589 = vmatpush1.msra.mxu0 0.0
        %5590 = vmatprep.subr.mxu0 0.0
        %5591 = vmatpush1.msra.mxu0 0.0
        %5592 = vmatprep.subr.mxu0 0.0
        %5593 = vmatpush1.msra.mxu0 0.0
        %5594 = vmatprep.subr.mxu0 0.0
        %5595 = vmatpush1.msra.mxu0 0.0
        %5596 = vmatprep.subr.mxu0 0.0
        %5597 = vmatpush1.msra.mxu0 0.0
        %5598 = vmatprep.subr.mxu0 0.0
        %5599 = vmatpush1.msra.mxu0 0.0
        %5600 = vmatprep.subr.mxu0 0.0
        %5601 = vmatpush1.msra.mxu0 0.0
        %5602 = vmatprep.subr.mxu0 0.0
        %5603 = vmatpush1.msra.mxu0 0.0
        %5604 = vmatprep.subr.mxu0 0.0
        %5605 = vmatpush1.msra.mxu0 0.0
        %5606 = vmatprep.subr.mxu0 0.0
        %5607 = vmatpush1.msra.mxu0 0.0
        %5608 = vmatprep.subr.mxu0 0.0
        %5609 = vmatpush1.msra.mxu0 0.0
        %5610 = vmatprep.subr.mxu0 0.0
        %5611 = vmatpush1.msra.mxu0 0.0
        %5612 = vmatprep.mubr.f32.mxu0 0.0
        %v5613 = vand.u32 %v5382, 4294901760
        %v5614 = vsub.f32 %v5382, %v5613
        %5615 = vmatmul.mubr.f32.gmra.mrb[0].mxu0 %v5614
        %v5616 = vpop.f32.mrb[0].mxu0
        %v5617 = vadd.f32 %v5540, %v5616
        %v5618 = vpop.f32.mrb[0].mxu0
        %v5619 = vadd.f32 %v5542, %v5618
        %5620 = vdwg.mxu0
        %v5621 = vand.u32 %v4897, 4294901760
        %5622 = vmatprep.subr.mxu0 %v5621
        %v5623 = vand.u32 %v4896, 4294901760
        %5624 = vmatpush1.msra.mxu0 %v5623
        %5625 = vmatprep.subr.mxu0 0.0
        %5626 = vmatpush1.msra.mxu0 0.0
        %5627 = vmatprep.subr.mxu0 0.0
        %5628 = vmatpush1.msra.mxu0 0.0
        %5629 = vmatprep.subr.mxu0 0.0
        %5630 = vmatpush1.msra.mxu0 0.0
        %5631 = vmatprep.subr.mxu0 0.0
        %5632 = vmatpush1.msra.mxu0 0.0
        %5633 = vmatprep.subr.mxu0 0.0
        %5634 = vmatpush1.msra.mxu0 0.0
        %5635 = vmatprep.subr.mxu0 0.0
        %5636 = vmatpush1.msra.mxu0 0.0
        %5637 = vmatprep.subr.mxu0 0.0
        %5638 = vmatpush1.msra.mxu0 0.0
        %5639 = vmatprep.subr.mxu0 0.0
        %5640 = vmatpush1.msra.mxu0 0.0
        %5641 = vmatprep.subr.mxu0 0.0
        %5642 = vmatpush1.msra.mxu0 0.0
        %5643 = vmatprep.subr.mxu0 0.0
        %5644 = vmatpush1.msra.mxu0 0.0
        %5645 = vmatprep.subr.mxu0 0.0
        %5646 = vmatpush1.msra.mxu0 0.0
        %5647 = vmatprep.subr.mxu0 0.0
        %5648 = vmatpush1.msra.mxu0 0.0
        %5649 = vmatprep.subr.mxu0 0.0
        %5650 = vmatpush1.msra.mxu0 0.0
        %5651 = vmatprep.subr.mxu0 0.0
        %5652 = vmatpush1.msra.mxu0 0.0
        %5653 = vmatprep.subr.mxu0 0.0
        %5654 = vmatpush1.msra.mxu0 0.0
        %5655 = vmatprep.subr.mxu0 0.0
        %5656 = vmatpush1.msra.mxu0 0.0
        %5657 = vmatprep.subr.mxu0 0.0
        %5658 = vmatpush1.msra.mxu0 0.0
        %5659 = vmatprep.subr.mxu0 0.0
        %5660 = vmatpush1.msra.mxu0 0.0
        %5661 = vmatprep.subr.mxu0 0.0
        %5662 = vmatpush1.msra.mxu0 0.0
        %5663 = vmatprep.subr.mxu0 0.0
        %5664 = vmatpush1.msra.mxu0 0.0
        %5665 = vmatprep.subr.mxu0 0.0
        %5666 = vmatpush1.msra.mxu0 0.0
        %5667 = vmatprep.subr.mxu0 0.0
        %5668 = vmatpush1.msra.mxu0 0.0
        %5669 = vmatprep.subr.mxu0 0.0
        %5670 = vmatpush1.msra.mxu0 0.0
        %5671 = vmatprep.subr.mxu0 0.0
        %5672 = vmatpush1.msra.mxu0 0.0
        %5673 = vmatprep.subr.mxu0 0.0
        %5674 = vmatpush1.msra.mxu0 0.0
        %5675 = vmatprep.subr.mxu0 0.0
        %5676 = vmatpush1.msra.mxu0 0.0
        %5677 = vmatprep.subr.mxu0 0.0
        %5678 = vmatpush1.msra.mxu0 0.0
        %5679 = vmatprep.subr.mxu0 0.0
        %5680 = vmatpush1.msra.mxu0 0.0
        %5681 = vmatprep.subr.mxu0 0.0
        %5682 = vmatpush1.msra.mxu0 0.0
        %5683 = vmatprep.subr.mxu0 0.0
        %5684 = vmatpush1.msra.mxu0 0.0
        %5685 = vmatprep.subr.mxu0 0.0
        %5686 = vmatpush1.msra.mxu0 0.0
        %5687 = vmatprep.mubr.f32.mxu0 0.0
        %v5688 = vand.u32 %v5382, 4294901760
        %v5689 = vsub.f32 %v5382, %v5688
        %v5690 = vand.u32 %v5689, 4294901760
        %5691 = vmatmul.mubr.f32.gmra.mrb[0].mxu0 %v5690
        %v5692 = vpop.f32.mrb[0].mxu0
        %v5693 = vadd.f32 %v5617, %v5692
        %v5694 = vpop.f32.mrb[0].mxu0
        %v5695 = vadd.f32 %v5619, %v5694
        %5696 = vdwg.mxu0
        %v5697 = vand.u32 %v4897, 4294901760
        %v5698 = vsub.f32 %v4897, %v5697
        %v5699 = vand.u32 %v5698, 4294901760
        %5700 = vmatprep.subr.mxu0 %v5699
        %v5701 = vand.u32 %v4896, 4294901760
        %v5702 = vsub.f32 %v4896, %v5701
        %v5703 = vand.u32 %v5702, 4294901760
        %5704 = vmatpush1.msra.mxu0 %v5703
        %5705 = vmatprep.subr.mxu0 0.0
        %5706 = vmatpush1.msra.mxu0 0.0
        %5707 = vmatprep.subr.mxu0 0.0
        %5708 = vmatpush1.msra.mxu0 0.0
        %5709 = vmatprep.subr.mxu0 0.0
        %5710 = vmatpush1.msra.mxu0 0.0
        %5711 = vmatprep.subr.mxu0 0.0
        %5712 = vmatpush1.msra.mxu0 0.0
        %5713 = vmatprep.subr.mxu0 0.0
        %5714 = vmatpush1.msra.mxu0 0.0
        %5715 = vmatprep.subr.mxu0 0.0
        %5716 = vmatpush1.msra.mxu0 0.0
        %5717 = vmatprep.subr.mxu0 0.0
        %5718 = vmatpush1.msra.mxu0 0.0
        %5719 = vmatprep.subr.mxu0 0.0
        %5720 = vmatpush1.msra.mxu0 0.0
        %5721 = vmatprep.subr.mxu0 0.0
        %5722 = vmatpush1.msra.mxu0 0.0
        %5723 = vmatprep.subr.mxu0 0.0
        %5724 = vmatpush1.msra.mxu0 0.0
        %5725 = vmatprep.subr.mxu0 0.0
        %5726 = vmatpush1.msra.mxu0 0.0
        %5727 = vmatprep.subr.mxu0 0.0
        %5728 = vmatpush1.msra.mxu0 0.0
        %5729 = vmatprep.subr.mxu0 0.0
        %5730 = vmatpush1.msra.mxu0 0.0
        %5731 = vmatprep.subr.mxu0 0.0
        %5732 = vmatpush1.msra.mxu0 0.0
        %5733 = vmatprep.subr.mxu0 0.0
        %5734 = vmatpush1.msra.mxu0 0.0
        %5735 = vmatprep.subr.mxu0 0.0
        %5736 = vmatpush1.msra.mxu0 0.0
        %5737 = vmatprep.subr.mxu0 0.0
        %5738 = vmatpush1.msra.mxu0 0.0
        %5739 = vmatprep.subr.mxu0 0.0
        %5740 = vmatpush1.msra.mxu0 0.0
        %5741 = vmatprep.subr.mxu0 0.0
        %5742 = vmatpush1.msra.mxu0 0.0
        %5743 = vmatprep.subr.mxu0 0.0
        %5744 = vmatpush1.msra.mxu0 0.0
        %5745 = vmatprep.subr.mxu0 0.0
        %5746 = vmatpush1.msra.mxu0 0.0
        %5747 = vmatprep.subr.mxu0 0.0
        %5748 = vmatpush1.msra.mxu0 0.0
        %5749 = vmatprep.subr.mxu0 0.0
        %5750 = vmatpush1.msra.mxu0 0.0
        %5751 = vmatprep.subr.mxu0 0.0
        %5752 = vmatpush1.msra.mxu0 0.0
        %5753 = vmatprep.subr.mxu0 0.0
        %5754 = vmatpush1.msra.mxu0 0.0
        %5755 = vmatprep.subr.mxu0 0.0
        %5756 = vmatpush1.msra.mxu0 0.0
        %5757 = vmatprep.subr.mxu0 0.0
        %5758 = vmatpush1.msra.mxu0 0.0
        %5759 = vmatprep.subr.mxu0 0.0
        %5760 = vmatpush1.msra.mxu0 0.0
        %5761 = vmatprep.subr.mxu0 0.0
        %5762 = vmatpush1.msra.mxu0 0.0
        %5763 = vmatprep.subr.mxu0 0.0
        %5764 = vmatpush1.msra.mxu0 0.0
        %5765 = vmatprep.subr.mxu0 0.0
        %5766 = vmatpush1.msra.mxu0 0.0
        %5767 = vmatprep.mubr.f32.mxu0 0.0
        %v5768 = vand.u32 %v5382, 4294901760
        %5769 = vmatmul.mubr.f32.gmra.mrb[0].mxu0 %v5768
        %v5770 = vpop.f32.mrb[0].mxu0
        %v5771 = vadd.f32 %v5693, %v5770
        %v5772 = vpop.f32.mrb[0].mxu0
        %v5773 = vadd.f32 %v5695, %v5772
        %5774 = vdwg.mxu0
        %v5775 = vand.u32 %v4897, 4294901760
        %5776 = vmatprep.subr.mxu0 %v5775
        %v5777 = vand.u32 %v4896, 4294901760
        %5778 = vmatpush1.msra.mxu0 %v5777
        %5779 = vmatprep.subr.mxu0 0.0
        %5780 = vmatpush1.msra.mxu0 0.0
        %5781 = vmatprep.subr.mxu0 0.0
        %5782 = vmatpush1.msra.mxu0 0.0
        %5783 = vmatprep.subr.mxu0 0.0
        %5784 = vmatpush1.msra.mxu0 0.0
        %5785 = vmatprep.subr.mxu0 0.0
        %5786 = vmatpush1.msra.mxu0 0.0
        %5787 = vmatprep.subr.mxu0 0.0
        %5788 = vmatpush1.msra.mxu0 0.0
        %5789 = vmatprep.subr.mxu0 0.0
        %5790 = vmatpush1.msra.mxu0 0.0
        %5791 = vmatprep.subr.mxu0 0.0
        %5792 = vmatpush1.msra.mxu0 0.0
        %5793 = vmatprep.subr.mxu0 0.0
        %5794 = vmatpush1.msra.mxu0 0.0
        %5795 = vmatprep.subr.mxu0 0.0
        %5796 = vmatpush1.msra.mxu0 0.0
        %5797 = vmatprep.subr.mxu0 0.0
        %5798 = vmatpush1.msra.mxu0 0.0
        %5799 = vmatprep.subr.mxu0 0.0
        %5800 = vmatpush1.msra.mxu0 0.0
        %5801 = vmatprep.subr.mxu0 0.0
        %5802 = vmatpush1.msra.mxu0 0.0
        %5803 = vmatprep.subr.mxu0 0.0
        %5804 = vmatpush1.msra.mxu0 0.0
        %5805 = vmatprep.subr.mxu0 0.0
        %5806 = vmatpush1.msra.mxu0 0.0
        %5807 = vmatprep.subr.mxu0 0.0
        %5808 = vmatpush1.msra.mxu0 0.0
        %5809 = vmatprep.subr.mxu0 0.0
        %5810 = vmatpush1.msra.mxu0 0.0
        %5811 = vmatprep.subr.mxu0 0.0
        %5812 = vmatpush1.msra.mxu0 0.0
        %5813 = vmatprep.subr.mxu0 0.0
        %5814 = vmatpush1.msra.mxu0 0.0
        %5815 = vmatprep.subr.mxu0 0.0
        %5816 = vmatpush1.msra.mxu0 0.0
        %5817 = vmatprep.subr.mxu0 0.0
        %5818 = vmatpush1.msra.mxu0 0.0
        %5819 = vmatprep.subr.mxu0 0.0
        %5820 = vmatpush1.msra.mxu0 0.0
        %5821 = vmatprep.subr.mxu0 0.0
        %5822 = vmatpush1.msra.mxu0 0.0
        %5823 = vmatprep.subr.mxu0 0.0
        %5824 = vmatpush1.msra.mxu0 0.0
        %5825 = vmatprep.subr.mxu0 0.0
        %5826 = vmatpush1.msra.mxu0 0.0
        %5827 = vmatprep.subr.mxu0 0.0
        %5828 = vmatpush1.msra.mxu0 0.0
        %5829 = vmatprep.subr.mxu0 0.0
        %5830 = vmatpush1.msra.mxu0 0.0
        %5831 = vmatprep.subr.mxu0 0.0
        %5832 = vmatpush1.msra.mxu0 0.0
        %5833 = vmatprep.subr.mxu0 0.0
        %5834 = vmatpush1.msra.mxu0 0.0
        %5835 = vmatprep.subr.mxu0 0.0
        %5836 = vmatpush1.msra.mxu0 0.0
        %5837 = vmatprep.subr.mxu0 0.0
        %5838 = vmatpush1.msra.mxu0 0.0
        %5839 = vmatprep.subr.mxu0 0.0
        %5840 = vmatpush1.msra.mxu0 0.0
        %5841 = vmatprep.mubr.f32.mxu0 0.0
        %v5842 = vand.u32 %v5382, 4294901760
        %5843 = vmatmul.mubr.f32.gmra.mrb[0].mxu0 %v5842
        %v5844 = vpop.f32.mrb[0].mxu0
        %v5845 = vadd.f32 %v5771, %v5844
        %v5846 = vpop.f32.mrb[0].mxu0
        %v5847 = vadd.f32 %v5773, %v5846
        %5848 = vdwg.mxu0
        %5849 = vrot.lane.b32.xlu0 %v4884, 15
        %v5850 = vpop.permute.xlu0 %5849
        %5852 = vrot.lane.b32.xlu0 %v4883, 15
        %v5853 = vpop.permute.xlu0 %5852
        %v5854 = vsel %vm1355, %v5853, %v5850
        %v5857 = vsel %vm1355, %v5850, %v5853
        %v5858 = vmul.f32 %v5857, %v1366
        %v5859 = vmul.f32 %v5854, %v1370
        %s5860 = scalar_lea.vmem %s8, 16
        %v5861 = vld [vmem:[%s5860] sm:$0xff]
        %v5863 = vsel %vm4912, %v5861, 0
        %v5865 = vand.u32 %v5859, 4294901760
        %5866 = vmatprep.subr.mxu0 %v5865
        %v5867 = vand.u32 %v5858, 4294901760
        %5868 = vmatpush1.msra.mxu0 %v5867
        %5869 = vmatprep.subr.mxu0 0.0
        %5870 = vmatpush1.msra.mxu0 0.0
        %5871 = vmatprep.subr.mxu0 0.0
        %5872 = vmatpush1.msra.mxu0 0.0
        %5873 = vmatprep.subr.mxu0 0.0
        %5874 = vmatpush1.msra.mxu0 0.0
        %5875 = vmatprep.subr.mxu0 0.0
        %5876 = vmatpush1.msra.mxu0 0.0
        %5877 = vmatprep.subr.mxu0 0.0
        %5878 = vmatpush1.msra.mxu0 0.0
        %5879 = vmatprep.subr.mxu0 0.0
        %5880 = vmatpush1.msra.mxu0 0.0
        %5881 = vmatprep.subr.mxu0 0.0
        %5882 = vmatpush1.msra.mxu0 0.0
        %5883 = vmatprep.subr.mxu0 0.0
        %5884 = vmatpush1.msra.mxu0 0.0
        %5885 = vmatprep.subr.mxu0 0.0
        %5886 = vmatpush1.msra.mxu0 0.0
        %5887 = vmatprep.subr.mxu0 0.0
        %5888 = vmatpush1.msra.mxu0 0.0
        %5889 = vmatprep.subr.mxu0 0.0
        %5890 = vmatpush1.msra.mxu0 0.0
        %5891 = vmatprep.subr.mxu0 0.0
        %5892 = vmatpush1.msra.mxu0 0.0
        %5893 = vmatprep.subr.mxu0 0.0
        %5894 = vmatpush1.msra.mxu0 0.0
        %5895 = vmatprep.subr.mxu0 0.0
        %5896 = vmatpush1.msra.mxu0 0.0
        %5897 = vmatprep.subr.mxu0 0.0
        %5898 = vmatpush1.msra.mxu0 0.0
        %5899 = vmatprep.subr.mxu0 0.0
        %5900 = vmatpush1.msra.mxu0 0.0
        %5901 = vmatprep.subr.mxu0 0.0
        %5902 = vmatpush1.msra.mxu0 0.0
        %5903 = vmatprep.subr.mxu0 0.0
        %5904 = vmatpush1.msra.mxu0 0.0
        %5905 = vmatprep.subr.mxu0 0.0
        %5906 = vmatpush1.msra.mxu0 0.0
        %5907 = vmatprep.subr.mxu0 0.0
        %5908 = vmatpush1.msra.mxu0 0.0
        %5909 = vmatprep.subr.mxu0 0.0
        %5910 = vmatpush1.msra.mxu0 0.0
        %5911 = vmatprep.subr.mxu0 0.0
        %5912 = vmatpush1.msra.mxu0 0.0
        %5913 = vmatprep.subr.mxu0 0.0
        %5914 = vmatpush1.msra.mxu0 0.0
        %5915 = vmatprep.subr.mxu0 0.0
        %5916 = vmatpush1.msra.mxu0 0.0
        %5917 = vmatprep.subr.mxu0 0.0
        %5918 = vmatpush1.msra.mxu0 0.0
        %5919 = vmatprep.subr.mxu0 0.0
        %5920 = vmatpush1.msra.mxu0 0.0
        %5921 = vmatprep.subr.mxu0 0.0
        %5922 = vmatpush1.msra.mxu0 0.0
        %5923 = vmatprep.subr.mxu0 0.0
        %5924 = vmatpush1.msra.mxu0 0.0
        %5925 = vmatprep.subr.mxu0 0.0
        %5926 = vmatpush1.msra.mxu0 0.0
        %5927 = vmatprep.subr.mxu0 0.0
        %5928 = vmatpush1.msra.mxu0 0.0
        %5929 = vmatprep.subr.mxu0 0.0
        %5930 = vmatpush1.msra.mxu0 0.0
        %5931 = vmatprep.mubr.f32.mxu0 0.0
        %v5932 = vand.u32 %v5863, 4294901760
        %v5933 = vsub.f32 %v5863, %v5932
        %v5934 = vand.u32 %v5933, 4294901760
        %v5935 = vsub.f32 %v5933, %v5934
        %v5936 = vand.u32 %v5935, 4294901760
        %5937 = vmatmul.mubr.f32.gmra.mrb[0].mxu0 %v5936
        %v5938 = vpop.f32.mrb[0].mxu0
        %v5939 = vadd.f32 0.0, %v5938
        %v5940 = vpop.f32.mrb[0].mxu0
        %v5941 = vadd.f32 0.0, %v5940
        %5942 = vdwg.mxu0
        %v5943 = vand.u32 %v5859, 4294901760
        %v5944 = vsub.f32 %v5859, %v5943
        %v5945 = vand.u32 %v5944, 4294901760
        %v5946 = vsub.f32 %v5944, %v5945
        %v5947 = vand.u32 %v5946, 4294901760
        %5948 = vmatprep.subr.mxu0 %v5947
        %v5949 = vand.u32 %v5858, 4294901760
        %v5950 = vsub.f32 %v5858, %v5949
        %v5951 = vand.u32 %v5950, 4294901760
        %v5952 = vsub.f32 %v5950, %v5951
        %v5953 = vand.u32 %v5952, 4294901760
        %5954 = vmatpush1.msra.mxu0 %v5953
        %5955 = vmatprep.subr.mxu0 0.0
        %5956 = vmatpush1.msra.mxu0 0.0
        %5957 = vmatprep.subr.mxu0 0.0
        %5958 = vmatpush1.msra.mxu0 0.0
        %5959 = vmatprep.subr.mxu0 0.0
        %5960 = vmatpush1.msra.mxu0 0.0
        %5961 = vmatprep.subr.mxu0 0.0
        %5962 = vmatpush1.msra.mxu0 0.0
        %5963 = vmatprep.subr.mxu0 0.0
        %5964 = vmatpush1.msra.mxu0 0.0
        %5965 = vmatprep.subr.mxu0 0.0
        %5966 = vmatpush1.msra.mxu0 0.0
        %5967 = vmatprep.subr.mxu0 0.0
        %5968 = vmatpush1.msra.mxu0 0.0
        %5969 = vmatprep.subr.mxu0 0.0
        %5970 = vmatpush1.msra.mxu0 0.0
        %5971 = vmatprep.subr.mxu0 0.0
        %5972 = vmatpush1.msra.mxu0 0.0
        %5973 = vmatprep.subr.mxu0 0.0
        %5974 = vmatpush1.msra.mxu0 0.0
        %5975 = vmatprep.subr.mxu0 0.0
        %5976 = vmatpush1.msra.mxu0 0.0
        %5977 = vmatprep.subr.mxu0 0.0
        %5978 = vmatpush1.msra.mxu0 0.0
        %5979 = vmatprep.subr.mxu0 0.0
        %5980 = vmatpush1.msra.mxu0 0.0
        %5981 = vmatprep.subr.mxu0 0.0
        %5982 = vmatpush1.msra.mxu0 0.0
        %5983 = vmatprep.subr.mxu0 0.0
        %5984 = vmatpush1.msra.mxu0 0.0
        %5985 = vmatprep.subr.mxu0 0.0
        %5986 = vmatpush1.msra.mxu0 0.0
        %5987 = vmatprep.subr.mxu0 0.0
        %5988 = vmatpush1.msra.mxu0 0.0
        %5989 = vmatprep.subr.mxu0 0.0
        %5990 = vmatpush1.msra.mxu0 0.0
        %5991 = vmatprep.subr.mxu0 0.0
        %5992 = vmatpush1.msra.mxu0 0.0
        %5993 = vmatprep.subr.mxu0 0.0
        %5994 = vmatpush1.msra.mxu0 0.0
        %5995 = vmatprep.subr.mxu0 0.0
        %5996 = vmatpush1.msra.mxu0 0.0
        %5997 = vmatprep.subr.mxu0 0.0
        %5998 = vmatpush1.msra.mxu0 0.0
        %5999 = vmatprep.subr.mxu0 0.0
        %6000 = vmatpush1.msra.mxu0 0.0
        %6001 = vmatprep.subr.mxu0 0.0
        %6002 = vmatpush1.msra.mxu0 0.0
        %6003 = vmatprep.subr.mxu0 0.0
        %6004 = vmatpush1.msra.mxu0 0.0
        %6005 = vmatprep.subr.mxu0 0.0
        %6006 = vmatpush1.msra.mxu0 0.0
        %6007 = vmatprep.subr.mxu0 0.0
        %6008 = vmatpush1.msra.mxu0 0.0
        %6009 = vmatprep.subr.mxu0 0.0
        %6010 = vmatpush1.msra.mxu0 0.0
        %6011 = vmatprep.subr.mxu0 0.0
        %6012 = vmatpush1.msra.mxu0 0.0
        %6013 = vmatprep.subr.mxu0 0.0
        %6014 = vmatpush1.msra.mxu0 0.0
        %6015 = vmatprep.subr.mxu0 0.0
        %6016 = vmatpush1.msra.mxu0 0.0
        %6017 = vmatprep.mubr.f32.mxu0 0.0
        %v6018 = vand.u32 %v5863, 4294901760
        %6019 = vmatmul.mubr.f32.gmra.mrb[0].mxu0 %v6018
        %v6020 = vpop.f32.mrb[0].mxu0
        %v6021 = vadd.f32 %v5939, %v6020
        %v6022 = vpop.f32.mrb[0].mxu0
        %v6023 = vadd.f32 %v5941, %v6022
        %6024 = vdwg.mxu0
        %v6025 = vand.u32 %v5859, 4294901760
        %v6026 = vsub.f32 %v5859, %v6025
        %6027 = vmatprep.subr.mxu0 %v6026
        %v6028 = vand.u32 %v5858, 4294901760
        %v6029 = vsub.f32 %v5858, %v6028
        %6030 = vmatpush1.msra.mxu0 %v6029
        %6031 = vmatprep.subr.mxu0 0.0
        %6032 = vmatpush1.msra.mxu0 0.0
        %6033 = vmatprep.subr.mxu0 0.0
        %6034 = vmatpush1.msra.mxu0 0.0
        %6035 = vmatprep.subr.mxu0 0.0
        %6036 = vmatpush1.msra.mxu0 0.0
        %6037 = vmatprep.subr.mxu0 0.0
        %6038 = vmatpush1.msra.mxu0 0.0
        %6039 = vmatprep.subr.mxu0 0.0
        %6040 = vmatpush1.msra.mxu0 0.0
        %6041 = vmatprep.subr.mxu0 0.0
        %6042 = vmatpush1.msra.mxu0 0.0
        %6043 = vmatprep.subr.mxu0 0.0
        %6044 = vmatpush1.msra.mxu0 0.0
        %6045 = vmatprep.subr.mxu0 0.0
        %6046 = vmatpush1.msra.mxu0 0.0
        %6047 = vmatprep.subr.mxu0 0.0
        %6048 = vmatpush1.msra.mxu0 0.0
        %6049 = vmatprep.subr.mxu0 0.0
        %6050 = vmatpush1.msra.mxu0 0.0
        %6051 = vmatprep.subr.mxu0 0.0
        %6052 = vmatpush1.msra.mxu0 0.0
        %6053 = vmatprep.subr.mxu0 0.0
        %6054 = vmatpush1.msra.mxu0 0.0
        %6055 = vmatprep.subr.mxu0 0.0
        %6056 = vmatpush1.msra.mxu0 0.0
        %6057 = vmatprep.subr.mxu0 0.0
        %6058 = vmatpush1.msra.mxu0 0.0
        %6059 = vmatprep.subr.mxu0 0.0
        %6060 = vmatpush1.msra.mxu0 0.0
        %6061 = vmatprep.subr.mxu0 0.0
        %6062 = vmatpush1.msra.mxu0 0.0
        %6063 = vmatprep.subr.mxu0 0.0
        %6064 = vmatpush1.msra.mxu0 0.0
        %6065 = vmatprep.subr.mxu0 0.0
        %6066 = vmatpush1.msra.mxu0 0.0
        %6067 = vmatprep.subr.mxu0 0.0
        %6068 = vmatpush1.msra.mxu0 0.0
        %6069 = vmatprep.subr.mxu0 0.0
        %6070 = vmatpush1.msra.mxu0 0.0
        %6071 = vmatprep.subr.mxu0 0.0
        %6072 = vmatpush1.msra.mxu0 0.0
        %6073 = vmatprep.subr.mxu0 0.0
        %6074 = vmatpush1.msra.mxu0 0.0
        %6075 = vmatprep.subr.mxu0 0.0
        %6076 = vmatpush1.msra.mxu0 0.0
        %6077 = vmatprep.subr.mxu0 0.0
        %6078 = vmatpush1.msra.mxu0 0.0
        %6079 = vmatprep.subr.mxu0 0.0
        %6080 = vmatpush1.msra.mxu0 0.0
        %6081 = vmatprep.subr.mxu0 0.0
        %6082 = vmatpush1.msra.mxu0 0.0
        %6083 = vmatprep.subr.mxu0 0.0
        %6084 = vmatpush1.msra.mxu0 0.0
        %6085 = vmatprep.subr.mxu0 0.0
        %6086 = vmatpush1.msra.mxu0 0.0
        %6087 = vmatprep.subr.mxu0 0.0
        %6088 = vmatpush1.msra.mxu0 0.0
        %6089 = vmatprep.subr.mxu0 0.0
        %6090 = vmatpush1.msra.mxu0 0.0
        %6091 = vmatprep.subr.mxu0 0.0
        %6092 = vmatpush1.msra.mxu0 0.0
        %6093 = vmatprep.mubr.f32.mxu0 0.0
        %v6094 = vand.u32 %v5863, 4294901760
        %v6095 = vsub.f32 %v5863, %v6094
        %6096 = vmatmul.mubr.f32.gmra.mrb[0].mxu0 %v6095
        %v6097 = vpop.f32.mrb[0].mxu0
        %v6098 = vadd.f32 %v6021, %v6097
        %v6099 = vpop.f32.mrb[0].mxu0
        %v6100 = vadd.f32 %v6023, %v6099
        %6101 = vdwg.mxu0
        %v6102 = vand.u32 %v5859, 4294901760
        %6103 = vmatprep.subr.mxu0 %v6102
        %v6104 = vand.u32 %v5858, 4294901760
        %6105 = vmatpush1.msra.mxu0 %v6104
        %6106 = vmatprep.subr.mxu0 0.0
        %6107 = vmatpush1.msra.mxu0 0.0
        %6108 = vmatprep.subr.mxu0 0.0
        %6109 = vmatpush1.msra.mxu0 0.0
        %6110 = vmatprep.subr.mxu0 0.0
        %6111 = vmatpush1.msra.mxu0 0.0
        %6112 = vmatprep.subr.mxu0 0.0
        %6113 = vmatpush1.msra.mxu0 0.0
        %6114 = vmatprep.subr.mxu0 0.0
        %6115 = vmatpush1.msra.mxu0 0.0
        %6116 = vmatprep.subr.mxu0 0.0
        %6117 = vmatpush1.msra.mxu0 0.0
        %6118 = vmatprep.subr.mxu0 0.0
        %6119 = vmatpush1.msra.mxu0 0.0
        %6120 = vmatprep.subr.mxu0 0.0
        %6121 = vmatpush1.msra.mxu0 0.0
        %6122 = vmatprep.subr.mxu0 0.0
        %6123 = vmatpush1.msra.mxu0 0.0
        %6124 = vmatprep.subr.mxu0 0.0
        %6125 = vmatpush1.msra.mxu0 0.0
        %6126 = vmatprep.subr.mxu0 0.0
        %6127 = vmatpush1.msra.mxu0 0.0
        %6128 = vmatprep.subr.mxu0 0.0
        %6129 = vmatpush1.msra.mxu0 0.0
        %6130 = vmatprep.subr.mxu0 0.0
        %6131 = vmatpush1.msra.mxu0 0.0
        %6132 = vmatprep.subr.mxu0 0.0
        %6133 = vmatpush1.msra.mxu0 0.0
        %6134 = vmatprep.subr.mxu0 0.0
        %6135 = vmatpush1.msra.mxu0 0.0
        %6136 = vmatprep.subr.mxu0 0.0
        %6137 = vmatpush1.msra.mxu0 0.0
        %6138 = vmatprep.subr.mxu0 0.0
        %6139 = vmatpush1.msra.mxu0 0.0
        %6140 = vmatprep.subr.mxu0 0.0
        %6141 = vmatpush1.msra.mxu0 0.0
        %6142 = vmatprep.subr.mxu0 0.0
        %6143 = vmatpush1.msra.mxu0 0.0
        %6144 = vmatprep.subr.mxu0 0.0
        %6145 = vmatpush1.msra.mxu0 0.0
        %6146 = vmatprep.subr.mxu0 0.0
        %6147 = vmatpush1.msra.mxu0 0.0
        %6148 = vmatprep.subr.mxu0 0.0
        %6149 = vmatpush1.msra.mxu0 0.0
        %6150 = vmatprep.subr.mxu0 0.0
        %6151 = vmatpush1.msra.mxu0 0.0
        %6152 = vmatprep.subr.mxu0 0.0
        %6153 = vmatpush1.msra.mxu0 0.0
        %6154 = vmatprep.subr.mxu0 0.0
        %6155 = vmatpush1.msra.mxu0 0.0
        %6156 = vmatprep.subr.mxu0 0.0
        %6157 = vmatpush1.msra.mxu0 0.0
        %6158 = vmatprep.subr.mxu0 0.0
        %6159 = vmatpush1.msra.mxu0 0.0
        %6160 = vmatprep.subr.mxu0 0.0
        %6161 = vmatpush1.msra.mxu0 0.0
        %6162 = vmatprep.subr.mxu0 0.0
        %6163 = vmatpush1.msra.mxu0 0.0
        %6164 = vmatprep.subr.mxu0 0.0
        %6165 = vmatpush1.msra.mxu0 0.0
        %6166 = vmatprep.subr.mxu0 0.0
        %6167 = vmatpush1.msra.mxu0 0.0
        %6168 = vmatprep.mubr.f32.mxu0 0.0
        %v6169 = vand.u32 %v5863, 4294901760
        %v6170 = vsub.f32 %v5863, %v6169
        %v6171 = vand.u32 %v6170, 4294901760
        %6172 = vmatmul.mubr.f32.gmra.mrb[0].mxu0 %v6171
        %v6173 = vpop.f32.mrb[0].mxu0
        %v6174 = vadd.f32 %v6098, %v6173
        %v6175 = vpop.f32.mrb[0].mxu0
        %v6176 = vadd.f32 %v6100, %v6175
        %6177 = vdwg.mxu0
        %v6178 = vand.u32 %v5859, 4294901760
        %v6179 = vsub.f32 %v5859, %v6178
        %v6180 = vand.u32 %v6179, 4294901760
        %6181 = vmatprep.subr.mxu0 %v6180
        %v6182 = vand.u32 %v5858, 4294901760
        %v6183 = vsub.f32 %v5858, %v6182
        %v6184 = vand.u32 %v6183, 4294901760
        %6185 = vmatpush1.msra.mxu0 %v6184
        %6186 = vmatprep.subr.mxu0 0.0
        %6187 = vmatpush1.msra.mxu0 0.0
        %6188 = vmatprep.subr.mxu0 0.0
        %6189 = vmatpush1.msra.mxu0 0.0
        %6190 = vmatprep.subr.mxu0 0.0
        %6191 = vmatpush1.msra.mxu0 0.0
        %6192 = vmatprep.subr.mxu0 0.0
        %6193 = vmatpush1.msra.mxu0 0.0
        %6194 = vmatprep.subr.mxu0 0.0
        %6195 = vmatpush1.msra.mxu0 0.0
        %6196 = vmatprep.subr.mxu0 0.0
        %6197 = vmatpush1.msra.mxu0 0.0
        %6198 = vmatprep.subr.mxu0 0.0
        %6199 = vmatpush1.msra.mxu0 0.0
        %6200 = vmatprep.subr.mxu0 0.0
        %6201 = vmatpush1.msra.mxu0 0.0
        %6202 = vmatprep.subr.mxu0 0.0
        %6203 = vmatpush1.msra.mxu0 0.0
        %6204 = vmatprep.subr.mxu0 0.0
        %6205 = vmatpush1.msra.mxu0 0.0
        %6206 = vmatprep.subr.mxu0 0.0
        %6207 = vmatpush1.msra.mxu0 0.0
        %6208 = vmatprep.subr.mxu0 0.0
        %6209 = vmatpush1.msra.mxu0 0.0
        %6210 = vmatprep.subr.mxu0 0.0
        %6211 = vmatpush1.msra.mxu0 0.0
        %6212 = vmatprep.subr.mxu0 0.0
        %6213 = vmatpush1.msra.mxu0 0.0
        %6214 = vmatprep.subr.mxu0 0.0
        %6215 = vmatpush1.msra.mxu0 0.0
        %6216 = vmatprep.subr.mxu0 0.0
        %6217 = vmatpush1.msra.mxu0 0.0
        %6218 = vmatprep.subr.mxu0 0.0
        %6219 = vmatpush1.msra.mxu0 0.0
        %6220 = vmatprep.subr.mxu0 0.0
        %6221 = vmatpush1.msra.mxu0 0.0
        %6222 = vmatprep.subr.mxu0 0.0
        %6223 = vmatpush1.msra.mxu0 0.0
        %6224 = vmatprep.subr.mxu0 0.0
        %6225 = vmatpush1.msra.mxu0 0.0
        %6226 = vmatprep.subr.mxu0 0.0
        %6227 = vmatpush1.msra.mxu0 0.0
        %6228 = vmatprep.subr.mxu0 0.0
        %6229 = vmatpush1.msra.mxu0 0.0
        %6230 = vmatprep.subr.mxu0 0.0
        %6231 = vmatpush1.msra.mxu0 0.0
        %6232 = vmatprep.subr.mxu0 0.0
        %6233 = vmatpush1.msra.mxu0 0.0
        %6234 = vmatprep.subr.mxu0 0.0
        %6235 = vmatpush1.msra.mxu0 0.0
        %6236 = vmatprep.subr.mxu0 0.0
        %6237 = vmatpush1.msra.mxu0 0.0
        %6238 = vmatprep.subr.mxu0 0.0
        %6239 = vmatpush1.msra.mxu0 0.0
        %6240 = vmatprep.subr.mxu0 0.0
        %6241 = vmatpush1.msra.mxu0 0.0
        %6242 = vmatprep.subr.mxu0 0.0
        %6243 = vmatpush1.msra.mxu0 0.0
        %6244 = vmatprep.subr.mxu0 0.0
        %6245 = vmatpush1.msra.mxu0 0.0
        %6246 = vmatprep.subr.mxu0 0.0
        %6247 = vmatpush1.msra.mxu0 0.0
        %6248 = vmatprep.mubr.f32.mxu0 0.0
        %v6249 = vand.u32 %v5863, 4294901760
        %6250 = vmatmul.mubr.f32.gmra.mrb[0].mxu0 %v6249
        %v6251 = vpop.f32.mrb[0].mxu0
        %v6252 = vadd.f32 %v6174, %v6251
        %v6253 = vpop.f32.mrb[0].mxu0
        %v6254 = vadd.f32 %v6176, %v6253
        %6255 = vdwg.mxu0
        %v6256 = vand.u32 %v5859, 4294901760
        %6257 = vmatprep.subr.mxu0 %v6256
        %v6258 = vand.u32 %v5858, 4294901760
        %6259 = vmatpush1.msra.mxu0 %v6258
        %6260 = vmatprep.subr.mxu0 0.0
        %6261 = vmatpush1.msra.mxu0 0.0
        %6262 = vmatprep.subr.mxu0 0.0
        %6263 = vmatpush1.msra.mxu0 0.0
        %6264 = vmatprep.subr.mxu0 0.0
        %6265 = vmatpush1.msra.mxu0 0.0
        %6266 = vmatprep.subr.mxu0 0.0
        %6267 = vmatpush1.msra.mxu0 0.0
        %6268 = vmatprep.subr.mxu0 0.0
        %6269 = vmatpush1.msra.mxu0 0.0
        %6270 = vmatprep.subr.mxu0 0.0
        %6271 = vmatpush1.msra.mxu0 0.0
        %6272 = vmatprep.subr.mxu0 0.0
        %6273 = vmatpush1.msra.mxu0 0.0
        %6274 = vmatprep.subr.mxu0 0.0
        %6275 = vmatpush1.msra.mxu0 0.0
        %6276 = vmatprep.subr.mxu0 0.0
        %6277 = vmatpush1.msra.mxu0 0.0
        %6278 = vmatprep.subr.mxu0 0.0
        %6279 = vmatpush1.msra.mxu0 0.0
        %6280 = vmatprep.subr.mxu0 0.0
        %6281 = vmatpush1.msra.mxu0 0.0
        %6282 = vmatprep.subr.mxu0 0.0
        %6283 = vmatpush1.msra.mxu0 0.0
        %6284 = vmatprep.subr.mxu0 0.0
        %6285 = vmatpush1.msra.mxu0 0.0
        %6286 = vmatprep.subr.mxu0 0.0
        %6287 = vmatpush1.msra.mxu0 0.0
        %6288 = vmatprep.subr.mxu0 0.0
        %6289 = vmatpush1.msra.mxu0 0.0
        %6290 = vmatprep.subr.mxu0 0.0
        %6291 = vmatpush1.msra.mxu0 0.0
        %6292 = vmatprep.subr.mxu0 0.0
        %6293 = vmatpush1.msra.mxu0 0.0
        %6294 = vmatprep.subr.mxu0 0.0
        %6295 = vmatpush1.msra.mxu0 0.0
        %6296 = vmatprep.subr.mxu0 0.0
        %6297 = vmatpush1.msra.mxu0 0.0
        %6298 = vmatprep.subr.mxu0 0.0
        %6299 = vmatpush1.msra.mxu0 0.0
        %6300 = vmatprep.subr.mxu0 0.0
        %6301 = vmatpush1.msra.mxu0 0.0
        %6302 = vmatprep.subr.mxu0 0.0
        %6303 = vmatpush1.msra.mxu0 0.0
        %6304 = vmatprep.subr.mxu0 0.0
        %6305 = vmatpush1.msra.mxu0 0.0
        %6306 = vmatprep.subr.mxu0 0.0
        %6307 = vmatpush1.msra.mxu0 0.0
        %6308 = vmatprep.subr.mxu0 0.0
        %6309 = vmatpush1.msra.mxu0 0.0
        %6310 = vmatprep.subr.mxu0 0.0
        %6311 = vmatpush1.msra.mxu0 0.0
        %6312 = vmatprep.subr.mxu0 0.0
        %6313 = vmatpush1.msra.mxu0 0.0
        %6314 = vmatprep.subr.mxu0 0.0
        %6315 = vmatpush1.msra.mxu0 0.0
        %6316 = vmatprep.subr.mxu0 0.0
        %6317 = vmatpush1.msra.mxu0 0.0
        %6318 = vmatprep.subr.mxu0 0.0
        %6319 = vmatpush1.msra.mxu0 0.0
        %6320 = vmatprep.subr.mxu0 0.0
        %6321 = vmatpush1.msra.mxu0 0.0
        %6322 = vmatprep.mubr.f32.mxu0 0.0
        %v6323 = vand.u32 %v5863, 4294901760
        %6324 = vmatmul.mubr.f32.gmra.mrb[0].mxu0 %v6323
        %v6325 = vpop.f32.mrb[0].mxu0
        %v6326 = vadd.f32 %v6252, %v6325
        %v6327 = vpop.f32.mrb[0].mxu0
        %v6328 = vadd.f32 %v6254, %v6327
        %6329 = vdwg.mxu0
        %v6330 = vadd.f32 %v5845, %v6326
        %v6331 = vadd.f32 %v5847, %v6328
        %6332 = vrot.lane.b32.xlu0 %v4884, 1
        %v6333 = vpop.permute.xlu0 %6332
        %6335 = vrot.lane.b32.xlu0 %v4883, 1
        %v6336 = vpop.permute.xlu0 %6335
        %v6337 = vsel %vm1858, %v6336, %v6333
        %v6340 = vsel %vm1858, %v6333, %v6336
        %v6341 = vmul.f32 %v6340, %v1869
        %v6342 = vmul.f32 %v6337, %v1873
        %s6343 = scalar_lea.vmem %s8, 24
        %v6344 = vld [vmem:[%s6343] sm:$0xff]
        %v6346 = vsel %vm4912, %v6344, 0
        %v6348 = vand.u32 %v6342, 4294901760
        %6349 = vmatprep.subr.mxu0 %v6348
        %v6350 = vand.u32 %v6341, 4294901760
        %6351 = vmatpush1.msra.mxu0 %v6350
        %6352 = vmatprep.subr.mxu0 0.0
        %6353 = vmatpush1.msra.mxu0 0.0
        %6354 = vmatprep.subr.mxu0 0.0
        %6355 = vmatpush1.msra.mxu0 0.0
        %6356 = vmatprep.subr.mxu0 0.0
        %6357 = vmatpush1.msra.mxu0 0.0
        %6358 = vmatprep.subr.mxu0 0.0
        %6359 = vmatpush1.msra.mxu0 0.0
        %6360 = vmatprep.subr.mxu0 0.0
        %6361 = vmatpush1.msra.mxu0 0.0
        %6362 = vmatprep.subr.mxu0 0.0
        %6363 = vmatpush1.msra.mxu0 0.0
        %6364 = vmatprep.subr.mxu0 0.0
        %6365 = vmatpush1.msra.mxu0 0.0
        %6366 = vmatprep.subr.mxu0 0.0
        %6367 = vmatpush1.msra.mxu0 0.0
        %6368 = vmatprep.subr.mxu0 0.0
        %6369 = vmatpush1.msra.mxu0 0.0
        %6370 = vmatprep.subr.mxu0 0.0
        %6371 = vmatpush1.msra.mxu0 0.0
        %6372 = vmatprep.subr.mxu0 0.0
        %6373 = vmatpush1.msra.mxu0 0.0
        %6374 = vmatprep.subr.mxu0 0.0
        %6375 = vmatpush1.msra.mxu0 0.0
        %6376 = vmatprep.subr.mxu0 0.0
        %6377 = vmatpush1.msra.mxu0 0.0
        %6378 = vmatprep.subr.mxu0 0.0
        %6379 = vmatpush1.msra.mxu0 0.0
        %6380 = vmatprep.subr.mxu0 0.0
        %6381 = vmatpush1.msra.mxu0 0.0
        %6382 = vmatprep.subr.mxu0 0.0
        %6383 = vmatpush1.msra.mxu0 0.0
        %6384 = vmatprep.subr.mxu0 0.0
        %6385 = vmatpush1.msra.mxu0 0.0
        %6386 = vmatprep.subr.mxu0 0.0
        %6387 = vmatpush1.msra.mxu0 0.0
        %6388 = vmatprep.subr.mxu0 0.0
        %6389 = vmatpush1.msra.mxu0 0.0
        %6390 = vmatprep.subr.mxu0 0.0
        %6391 = vmatpush1.msra.mxu0 0.0
        %6392 = vmatprep.subr.mxu0 0.0
        %6393 = vmatpush1.msra.mxu0 0.0
        %6394 = vmatprep.subr.mxu0 0.0
        %6395 = vmatpush1.msra.mxu0 0.0
        %6396 = vmatprep.subr.mxu0 0.0
        %6397 = vmatpush1.msra.mxu0 0.0
        %6398 = vmatprep.subr.mxu0 0.0
        %6399 = vmatpush1.msra.mxu0 0.0
        %6400 = vmatprep.subr.mxu0 0.0
        %6401 = vmatpush1.msra.mxu0 0.0
        %6402 = vmatprep.subr.mxu0 0.0
        %6403 = vmatpush1.msra.mxu0 0.0
        %6404 = vmatprep.subr.mxu0 0.0
        %6405 = vmatpush1.msra.mxu0 0.0
        %6406 = vmatprep.subr.mxu0 0.0
        %6407 = vmatpush1.msra.mxu0 0.0
        %6408 = vmatprep.subr.mxu0 0.0
        %6409 = vmatpush1.msra.mxu0 0.0
        %6410 = vmatprep.subr.mxu0 0.0
        %6411 = vmatpush1.msra.mxu0 0.0
        %6412 = vmatprep.subr.mxu0 0.0
        %6413 = vmatpush1.msra.mxu0 0.0
        %6414 = vmatprep.mubr.f32.mxu0 0.0
        %v6415 = vand.u32 %v6346, 4294901760
        %v6416 = vsub.f32 %v6346, %v6415
        %v6417 = vand.u32 %v6416, 4294901760
        %v6418 = vsub.f32 %v6416, %v6417
        %v6419 = vand.u32 %v6418, 4294901760
        %6420 = vmatmul.mubr.f32.gmra.mrb[0].mxu0 %v6419
        %v6421 = vpop.f32.mrb[0].mxu0
        %v6422 = vadd.f32 0.0, %v6421
        %v6423 = vpop.f32.mrb[0].mxu0
        %v6424 = vadd.f32 0.0, %v6423
        %6425 = vdwg.mxu0
        %v6426 = vand.u32 %v6342, 4294901760
        %v6427 = vsub.f32 %v6342, %v6426
        %v6428 = vand.u32 %v6427, 4294901760
        %v6429 = vsub.f32 %v6427, %v6428
        %v6430 = vand.u32 %v6429, 4294901760
        %6431 = vmatprep.subr.mxu0 %v6430
        %v6432 = vand.u32 %v6341, 4294901760
        %v6433 = vsub.f32 %v6341, %v6432
        %v6434 = vand.u32 %v6433, 4294901760
        %v6435 = vsub.f32 %v6433, %v6434
        %v6436 = vand.u32 %v6435, 4294901760
        %6437 = vmatpush1.msra.mxu0 %v6436
        %6438 = vmatprep.subr.mxu0 0.0
        %6439 = vmatpush1.msra.mxu0 0.0
        %6440 = vmatprep.subr.mxu0 0.0
        %6441 = vmatpush1.msra.mxu0 0.0
        %6442 = vmatprep.subr.mxu0 0.0
        %6443 = vmatpush1.msra.mxu0 0.0
        %6444 = vmatprep.subr.mxu0 0.0
        %6445 = vmatpush1.msra.mxu0 0.0
        %6446 = vmatprep.subr.mxu0 0.0
        %6447 = vmatpush1.msra.mxu0 0.0
        %6448 = vmatprep.subr.mxu0 0.0
        %6449 = vmatpush1.msra.mxu0 0.0
        %6450 = vmatprep.subr.mxu0 0.0
        %6451 = vmatpush1.msra.mxu0 0.0
        %6452 = vmatprep.subr.mxu0 0.0
        %6453 = vmatpush1.msra.mxu0 0.0
        %6454 = vmatprep.subr.mxu0 0.0
        %6455 = vmatpush1.msra.mxu0 0.0
        %6456 = vmatprep.subr.mxu0 0.0
        %6457 = vmatpush1.msra.mxu0 0.0
        %6458 = vmatprep.subr.mxu0 0.0
        %6459 = vmatpush1.msra.mxu0 0.0
        %6460 = vmatprep.subr.mxu0 0.0
        %6461 = vmatpush1.msra.mxu0 0.0
        %6462 = vmatprep.subr.mxu0 0.0
        %6463 = vmatpush1.msra.mxu0 0.0
        %6464 = vmatprep.subr.mxu0 0.0
        %6465 = vmatpush1.msra.mxu0 0.0
        %6466 = vmatprep.subr.mxu0 0.0
        %6467 = vmatpush1.msra.mxu0 0.0
        %6468 = vmatprep.subr.mxu0 0.0
        %6469 = vmatpush1.msra.mxu0 0.0
        %6470 = vmatprep.subr.mxu0 0.0
        %6471 = vmatpush1.msra.mxu0 0.0
        %6472 = vmatprep.subr.mxu0 0.0
        %6473 = vmatpush1.msra.mxu0 0.0
        %6474 = vmatprep.subr.mxu0 0.0
        %6475 = vmatpush1.msra.mxu0 0.0
        %6476 = vmatprep.subr.mxu0 0.0
        %6477 = vmatpush1.msra.mxu0 0.0
        %6478 = vmatprep.subr.mxu0 0.0
        %6479 = vmatpush1.msra.mxu0 0.0
        %6480 = vmatprep.subr.mxu0 0.0
        %6481 = vmatpush1.msra.mxu0 0.0
        %6482 = vmatprep.subr.mxu0 0.0
        %6483 = vmatpush1.msra.mxu0 0.0
        %6484 = vmatprep.subr.mxu0 0.0
        %6485 = vmatpush1.msra.mxu0 0.0
        %6486 = vmatprep.subr.mxu0 0.0
        %6487 = vmatpush1.msra.mxu0 0.0
        %6488 = vmatprep.subr.mxu0 0.0
        %6489 = vmatpush1.msra.mxu0 0.0
        %6490 = vmatprep.subr.mxu0 0.0
        %6491 = vmatpush1.msra.mxu0 0.0
        %6492 = vmatprep.subr.mxu0 0.0
        %6493 = vmatpush1.msra.mxu0 0.0
        %6494 = vmatprep.subr.mxu0 0.0
        %6495 = vmatpush1.msra.mxu0 0.0
        %6496 = vmatprep.subr.mxu0 0.0
        %6497 = vmatpush1.msra.mxu0 0.0
        %6498 = vmatprep.subr.mxu0 0.0
        %6499 = vmatpush1.msra.mxu0 0.0
        %6500 = vmatprep.mubr.f32.mxu0 0.0
        %v6501 = vand.u32 %v6346, 4294901760
        %6502 = vmatmul.mubr.f32.gmra.mrb[0].mxu0 %v6501
        %v6503 = vpop.f32.mrb[0].mxu0
        %v6504 = vadd.f32 %v6422, %v6503
        %v6505 = vpop.f32.mrb[0].mxu0
        %v6506 = vadd.f32 %v6424, %v6505
        %6507 = vdwg.mxu0
        %v6508 = vand.u32 %v6342, 4294901760
        %v6509 = vsub.f32 %v6342, %v6508
        %6510 = vmatprep.subr.mxu0 %v6509
        %v6511 = vand.u32 %v6341, 4294901760
        %v6512 = vsub.f32 %v6341, %v6511
        %6513 = vmatpush1.msra.mxu0 %v6512
        %6514 = vmatprep.subr.mxu0 0.0
        %6515 = vmatpush1.msra.mxu0 0.0
        %6516 = vmatprep.subr.mxu0 0.0
        %6517 = vmatpush1.msra.mxu0 0.0
        %6518 = vmatprep.subr.mxu0 0.0
        %6519 = vmatpush1.msra.mxu0 0.0
        %6520 = vmatprep.subr.mxu0 0.0
        %6521 = vmatpush1.msra.mxu0 0.0
        %6522 = vmatprep.subr.mxu0 0.0
        %6523 = vmatpush1.msra.mxu0 0.0
        %6524 = vmatprep.subr.mxu0 0.0
        %6525 = vmatpush1.msra.mxu0 0.0
        %6526 = vmatprep.subr.mxu0 0.0
        %6527 = vmatpush1.msra.mxu0 0.0
        %6528 = vmatprep.subr.mxu0 0.0
        %6529 = vmatpush1.msra.mxu0 0.0
        %6530 = vmatprep.subr.mxu0 0.0
        %6531 = vmatpush1.msra.mxu0 0.0
        %6532 = vmatprep.subr.mxu0 0.0
        %6533 = vmatpush1.msra.mxu0 0.0
        %6534 = vmatprep.subr.mxu0 0.0
        %6535 = vmatpush1.msra.mxu0 0.0
        %6536 = vmatprep.subr.mxu0 0.0
        %6537 = vmatpush1.msra.mxu0 0.0
        %6538 = vmatprep.subr.mxu0 0.0
        %6539 = vmatpush1.msra.mxu0 0.0
        %6540 = vmatprep.subr.mxu0 0.0
        %6541 = vmatpush1.msra.mxu0 0.0
        %6542 = vmatprep.subr.mxu0 0.0
        %6543 = vmatpush1.msra.mxu0 0.0
        %6544 = vmatprep.subr.mxu0 0.0
        %6545 = vmatpush1.msra.mxu0 0.0
        %6546 = vmatprep.subr.mxu0 0.0
        %6547 = vmatpush1.msra.mxu0 0.0
        %6548 = vmatprep.subr.mxu0 0.0
        %6549 = vmatpush1.msra.mxu0 0.0
        %6550 = vmatprep.subr.mxu0 0.0
        %6551 = vmatpush1.msra.mxu0 0.0
        %6552 = vmatprep.subr.mxu0 0.0
        %6553 = vmatpush1.msra.mxu0 0.0
        %6554 = vmatprep.subr.mxu0 0.0
        %6555 = vmatpush1.msra.mxu0 0.0
        %6556 = vmatprep.subr.mxu0 0.0
        %6557 = vmatpush1.msra.mxu0 0.0
        %6558 = vmatprep.subr.mxu0 0.0
        %6559 = vmatpush1.msra.mxu0 0.0
        %6560 = vmatprep.subr.mxu0 0.0
        %6561 = vmatpush1.msra.mxu0 0.0
        %6562 = vmatprep.subr.mxu0 0.0
        %6563 = vmatpush1.msra.mxu0 0.0
        %6564 = vmatprep.subr.mxu0 0.0
        %6565 = vmatpush1.msra.mxu0 0.0
        %6566 = vmatprep.subr.mxu0 0.0
        %6567 = vmatpush1.msra.mxu0 0.0
        %6568 = vmatprep.subr.mxu0 0.0
        %6569 = vmatpush1.msra.mxu0 0.0
        %6570 = vmatprep.subr.mxu0 0.0
        %6571 = vmatpush1.msra.mxu0 0.0
        %6572 = vmatprep.subr.mxu0 0.0
        %6573 = vmatpush1.msra.mxu0 0.0
        %6574 = vmatprep.subr.mxu0 0.0
        %6575 = vmatpush1.msra.mxu0 0.0
        %6576 = vmatprep.mubr.f32.mxu0 0.0
        %v6577 = vand.u32 %v6346, 4294901760
        %v6578 = vsub.f32 %v6346, %v6577
        %6579 = vmatmul.mubr.f32.gmra.mrb[0].mxu0 %v6578
        %v6580 = vpop.f32.mrb[0].mxu0
        %v6581 = vadd.f32 %v6504, %v6580
        %v6582 = vpop.f32.mrb[0].mxu0
        %v6583 = vadd.f32 %v6506, %v6582
        %6584 = vdwg.mxu0
        %v6585 = vand.u32 %v6342, 4294901760
        %6586 = vmatprep.subr.mxu0 %v6585
        %v6587 = vand.u32 %v6341, 4294901760
        %6588 = vmatpush1.msra.mxu0 %v6587
        %6589 = vmatprep.subr.mxu0 0.0
        %6590 = vmatpush1.msra.mxu0 0.0
        %6591 = vmatprep.subr.mxu0 0.0
        %6592 = vmatpush1.msra.mxu0 0.0
        %6593 = vmatprep.subr.mxu0 0.0
        %6594 = vmatpush1.msra.mxu0 0.0
        %6595 = vmatprep.subr.mxu0 0.0
        %6596 = vmatpush1.msra.mxu0 0.0
        %6597 = vmatprep.subr.mxu0 0.0
        %6598 = vmatpush1.msra.mxu0 0.0
        %6599 = vmatprep.subr.mxu0 0.0
        %6600 = vmatpush1.msra.mxu0 0.0
        %6601 = vmatprep.subr.mxu0 0.0
        %6602 = vmatpush1.msra.mxu0 0.0
        %6603 = vmatprep.subr.mxu0 0.0
        %6604 = vmatpush1.msra.mxu0 0.0
        %6605 = vmatprep.subr.mxu0 0.0
        %6606 = vmatpush1.msra.mxu0 0.0
        %6607 = vmatprep.subr.mxu0 0.0
        %6608 = vmatpush1.msra.mxu0 0.0
        %6609 = vmatprep.subr.mxu0 0.0
        %6610 = vmatpush1.msra.mxu0 0.0
        %6611 = vmatprep.subr.mxu0 0.0
        %6612 = vmatpush1.msra.mxu0 0.0
        %6613 = vmatprep.subr.mxu0 0.0
        %6614 = vmatpush1.msra.mxu0 0.0
        %6615 = vmatprep.subr.mxu0 0.0
        %6616 = vmatpush1.msra.mxu0 0.0
        %6617 = vmatprep.subr.mxu0 0.0
        %6618 = vmatpush1.msra.mxu0 0.0
        %6619 = vmatprep.subr.mxu0 0.0
        %6620 = vmatpush1.msra.mxu0 0.0
        %6621 = vmatprep.subr.mxu0 0.0
        %6622 = vmatpush1.msra.mxu0 0.0
        %6623 = vmatprep.subr.mxu0 0.0
        %6624 = vmatpush1.msra.mxu0 0.0
        %6625 = vmatprep.subr.mxu0 0.0
        %6626 = vmatpush1.msra.mxu0 0.0
        %6627 = vmatprep.subr.mxu0 0.0
        %6628 = vmatpush1.msra.mxu0 0.0
        %6629 = vmatprep.subr.mxu0 0.0
        %6630 = vmatpush1.msra.mxu0 0.0
        %6631 = vmatprep.subr.mxu0 0.0
        %6632 = vmatpush1.msra.mxu0 0.0
        %6633 = vmatprep.subr.mxu0 0.0
        %6634 = vmatpush1.msra.mxu0 0.0
        %6635 = vmatprep.subr.mxu0 0.0
        %6636 = vmatpush1.msra.mxu0 0.0
        %6637 = vmatprep.subr.mxu0 0.0
        %6638 = vmatpush1.msra.mxu0 0.0
        %6639 = vmatprep.subr.mxu0 0.0
        %6640 = vmatpush1.msra.mxu0 0.0
        %6641 = vmatprep.subr.mxu0 0.0
        %6642 = vmatpush1.msra.mxu0 0.0
        %6643 = vmatprep.subr.mxu0 0.0
        %6644 = vmatpush1.msra.mxu0 0.0
        %6645 = vmatprep.subr.mxu0 0.0
        %6646 = vmatpush1.msra.mxu0 0.0
        %6647 = vmatprep.subr.mxu0 0.0
        %6648 = vmatpush1.msra.mxu0 0.0
        %6649 = vmatprep.subr.mxu0 0.0
        %6650 = vmatpush1.msra.mxu0 0.0
        %6651 = vmatprep.mubr.f32.mxu0 0.0
        %v6652 = vand.u32 %v6346, 4294901760
        %v6653 = vsub.f32 %v6346, %v6652
        %v6654 = vand.u32 %v6653, 4294901760
        %6655 = vmatmul.mubr.f32.gmra.mrb[0].mxu0 %v6654
        %v6656 = vpop.f32.mrb[0].mxu0
        %v6657 = vadd.f32 %v6581, %v6656
        %v6658 = vpop.f32.mrb[0].mxu0
        %v6659 = vadd.f32 %v6583, %v6658
        %6660 = vdwg.mxu0
        %v6661 = vand.u32 %v6342, 4294901760
        %v6662 = vsub.f32 %v6342, %v6661
        %v6663 = vand.u32 %v6662, 4294901760
        %6664 = vmatprep.subr.mxu0 %v6663
        %v6665 = vand.u32 %v6341, 4294901760
        %v6666 = vsub.f32 %v6341, %v6665
        %v6667 = vand.u32 %v6666, 4294901760
        %6668 = vmatpush1.msra.mxu0 %v6667
        %6669 = vmatprep.subr.mxu0 0.0
        %6670 = vmatpush1.msra.mxu0 0.0
        %6671 = vmatprep.subr.mxu0 0.0
        %6672 = vmatpush1.msra.mxu0 0.0
        %6673 = vmatprep.subr.mxu0 0.0
        %6674 = vmatpush1.msra.mxu0 0.0
        %6675 = vmatprep.subr.mxu0 0.0
        %6676 = vmatpush1.msra.mxu0 0.0
        %6677 = vmatprep.subr.mxu0 0.0
        %6678 = vmatpush1.msra.mxu0 0.0
        %6679 = vmatprep.subr.mxu0 0.0
        %6680 = vmatpush1.msra.mxu0 0.0
        %6681 = vmatprep.subr.mxu0 0.0
        %6682 = vmatpush1.msra.mxu0 0.0
        %6683 = vmatprep.subr.mxu0 0.0
        %6684 = vmatpush1.msra.mxu0 0.0
        %6685 = vmatprep.subr.mxu0 0.0
        %6686 = vmatpush1.msra.mxu0 0.0
        %6687 = vmatprep.subr.mxu0 0.0
        %6688 = vmatpush1.msra.mxu0 0.0
        %6689 = vmatprep.subr.mxu0 0.0
        %6690 = vmatpush1.msra.mxu0 0.0
        %6691 = vmatprep.subr.mxu0 0.0
        %6692 = vmatpush1.msra.mxu0 0.0
        %6693 = vmatprep.subr.mxu0 0.0
        %6694 = vmatpush1.msra.mxu0 0.0
        %6695 = vmatprep.subr.mxu0 0.0
        %6696 = vmatpush1.msra.mxu0 0.0
        %6697 = vmatprep.subr.mxu0 0.0
        %6698 = vmatpush1.msra.mxu0 0.0
        %6699 = vmatprep.subr.mxu0 0.0
        %6700 = vmatpush1.msra.mxu0 0.0
        %6701 = vmatprep.subr.mxu0 0.0
        %6702 = vmatpush1.msra.mxu0 0.0
        %6703 = vmatprep.subr.mxu0 0.0
        %6704 = vmatpush1.msra.mxu0 0.0
        %6705 = vmatprep.subr.mxu0 0.0
        %6706 = vmatpush1.msra.mxu0 0.0
        %6707 = vmatprep.subr.mxu0 0.0
        %6708 = vmatpush1.msra.mxu0 0.0
        %6709 = vmatprep.subr.mxu0 0.0
        %6710 = vmatpush1.msra.mxu0 0.0
        %6711 = vmatprep.subr.mxu0 0.0
        %6712 = vmatpush1.msra.mxu0 0.0
        %6713 = vmatprep.subr.mxu0 0.0
        %6714 = vmatpush1.msra.mxu0 0.0
        %6715 = vmatprep.subr.mxu0 0.0
        %6716 = vmatpush1.msra.mxu0 0.0
        %6717 = vmatprep.subr.mxu0 0.0
        %6718 = vmatpush1.msra.mxu0 0.0
        %6719 = vmatprep.subr.mxu0 0.0
        %6720 = vmatpush1.msra.mxu0 0.0
        %6721 = vmatprep.subr.mxu0 0.0
        %6722 = vmatpush1.msra.mxu0 0.0
        %6723 = vmatprep.subr.mxu0 0.0
        %6724 = vmatpush1.msra.mxu0 0.0
        %6725 = vmatprep.subr.mxu0 0.0
        %6726 = vmatpush1.msra.mxu0 0.0
        %6727 = vmatprep.subr.mxu0 0.0
        %6728 = vmatpush1.msra.mxu0 0.0
        %6729 = vmatprep.subr.mxu0 0.0
        %6730 = vmatpush1.msra.mxu0 0.0
        %6731 = vmatprep.mubr.f32.mxu0 0.0
        %v6732 = vand.u32 %v6346, 4294901760
        %6733 = vmatmul.mubr.f32.gmra.mrb[0].mxu0 %v6732
        %v6734 = vpop.f32.mrb[0].mxu0
        %v6735 = vadd.f32 %v6657, %v6734
        %v6736 = vpop.f32.mrb[0].mxu0
        %v6737 = vadd.f32 %v6659, %v6736
        %6738 = vdwg.mxu0
        %v6739 = vand.u32 %v6342, 4294901760
        %6740 = vmatprep.subr.mxu0 %v6739
        %v6741 = vand.u32 %v6341, 4294901760
        %6742 = vmatpush1.msra.mxu0 %v6741
        %6743 = vmatprep.subr.mxu0 0.0
        %6744 = vmatpush1.msra.mxu0 0.0
        %6745 = vmatprep.subr.mxu0 0.0
        %6746 = vmatpush1.msra.mxu0 0.0
        %6747 = vmatprep.subr.mxu0 0.0
        %6748 = vmatpush1.msra.mxu0 0.0
        %6749 = vmatprep.subr.mxu0 0.0
        %6750 = vmatpush1.msra.mxu0 0.0
        %6751 = vmatprep.subr.mxu0 0.0
        %6752 = vmatpush1.msra.mxu0 0.0
        %6753 = vmatprep.subr.mxu0 0.0
        %6754 = vmatpush1.msra.mxu0 0.0
        %6755 = vmatprep.subr.mxu0 0.0
        %6756 = vmatpush1.msra.mxu0 0.0
        %6757 = vmatprep.subr.mxu0 0.0
        %6758 = vmatpush1.msra.mxu0 0.0
        %6759 = vmatprep.subr.mxu0 0.0
        %6760 = vmatpush1.msra.mxu0 0.0
        %6761 = vmatprep.subr.mxu0 0.0
        %6762 = vmatpush1.msra.mxu0 0.0
        %6763 = vmatprep.subr.mxu0 0.0
        %6764 = vmatpush1.msra.mxu0 0.0
        %6765 = vmatprep.subr.mxu0 0.0
        %6766 = vmatpush1.msra.mxu0 0.0
        %6767 = vmatprep.subr.mxu0 0.0
        %6768 = vmatpush1.msra.mxu0 0.0
        %6769 = vmatprep.subr.mxu0 0.0
        %6770 = vmatpush1.msra.mxu0 0.0
        %6771 = vmatprep.subr.mxu0 0.0
        %6772 = vmatpush1.msra.mxu0 0.0
        %6773 = vmatprep.subr.mxu0 0.0
        %6774 = vmatpush1.msra.mxu0 0.0
        %6775 = vmatprep.subr.mxu0 0.0
        %6776 = vmatpush1.msra.mxu0 0.0
        %6777 = vmatprep.subr.mxu0 0.0
        %6778 = vmatpush1.msra.mxu0 0.0
        %6779 = vmatprep.subr.mxu0 0.0
        %6780 = vmatpush1.msra.mxu0 0.0
        %6781 = vmatprep.subr.mxu0 0.0
        %6782 = vmatpush1.msra.mxu0 0.0
        %6783 = vmatprep.subr.mxu0 0.0
        %6784 = vmatpush1.msra.mxu0 0.0
        %6785 = vmatprep.subr.mxu0 0.0
        %6786 = vmatpush1.msra.mxu0 0.0
        %6787 = vmatprep.subr.mxu0 0.0
        %6788 = vmatpush1.msra.mxu0 0.0
        %6789 = vmatprep.subr.mxu0 0.0
        %6790 = vmatpush1.msra.mxu0 0.0
        %6791 = vmatprep.subr.mxu0 0.0
        %6792 = vmatpush1.msra.mxu0 0.0
        %6793 = vmatprep.subr.mxu0 0.0
        %6794 = vmatpush1.msra.mxu0 0.0
        %6795 = vmatprep.subr.mxu0 0.0
        %6796 = vmatpush1.msra.mxu0 0.0
        %6797 = vmatprep.subr.mxu0 0.0
        %6798 = vmatpush1.msra.mxu0 0.0
        %6799 = vmatprep.subr.mxu0 0.0
        %6800 = vmatpush1.msra.mxu0 0.0
        %6801 = vmatprep.subr.mxu0 0.0
        %6802 = vmatpush1.msra.mxu0 0.0
        %6803 = vmatprep.subr.mxu0 0.0
        %6804 = vmatpush1.msra.mxu0 0.0
        %6805 = vmatprep.mubr.f32.mxu0 0.0
        %v6806 = vand.u32 %v6346, 4294901760
        %6807 = vmatmul.mubr.f32.gmra.mrb[0].mxu0 %v6806
        %v6808 = vpop.f32.mrb[0].mxu0
        %v6809 = vadd.f32 %v6735, %v6808
        %v6810 = vpop.f32.mrb[0].mxu0
        %v6811 = vadd.f32 %v6737, %v6810
        %6812 = vdwg.mxu0
        %v6813 = vadd.f32 %v6330, %v6809
        %v6814 = vadd.f32 %v6331, %v6811
        %s6815 = scalar_lea.vmem %s8, 32
        %v6816 = vld [vmem:[%s6815] sm:$0xff]
        %v6818 = vsel %vm4912, %v6816, 0
        %v6820 = vand.u32 %v4884, 4294901760
        %6821 = vmatprep.subr.mxu0 %v6820
        %v6822 = vand.u32 %v4883, 4294901760
        %6823 = vmatpush1.msra.mxu0 %v6822
        %6824 = vmatprep.subr.mxu0 0.0
        %6825 = vmatpush1.msra.mxu0 0.0
        %6826 = vmatprep.subr.mxu0 0.0
        %6827 = vmatpush1.msra.mxu0 0.0
        %6828 = vmatprep.subr.mxu0 0.0
        %6829 = vmatpush1.msra.mxu0 0.0
        %6830 = vmatprep.subr.mxu0 0.0
        %6831 = vmatpush1.msra.mxu0 0.0
        %6832 = vmatprep.subr.mxu0 0.0
        %6833 = vmatpush1.msra.mxu0 0.0
        %6834 = vmatprep.subr.mxu0 0.0
        %6835 = vmatpush1.msra.mxu0 0.0
        %6836 = vmatprep.subr.mxu0 0.0
        %6837 = vmatpush1.msra.mxu0 0.0
        %6838 = vmatprep.subr.mxu0 0.0
        %6839 = vmatpush1.msra.mxu0 0.0
        %6840 = vmatprep.subr.mxu0 0.0
        %6841 = vmatpush1.msra.mxu0 0.0
        %6842 = vmatprep.subr.mxu0 0.0
        %6843 = vmatpush1.msra.mxu0 0.0
        %6844 = vmatprep.subr.mxu0 0.0
        %6845 = vmatpush1.msra.mxu0 0.0
        %6846 = vmatprep.subr.mxu0 0.0
        %6847 = vmatpush1.msra.mxu0 0.0
        %6848 = vmatprep.subr.mxu0 0.0
        %6849 = vmatpush1.msra.mxu0 0.0
        %6850 = vmatprep.subr.mxu0 0.0
        %6851 = vmatpush1.msra.mxu0 0.0
        %6852 = vmatprep.subr.mxu0 0.0
        %6853 = vmatpush1.msra.mxu0 0.0
        %6854 = vmatprep.subr.mxu0 0.0
        %6855 = vmatpush1.msra.mxu0 0.0
        %6856 = vmatprep.subr.mxu0 0.0
        %6857 = vmatpush1.msra.mxu0 0.0
        %6858 = vmatprep.subr.mxu0 0.0
        %6859 = vmatpush1.msra.mxu0 0.0
        %6860 = vmatprep.subr.mxu0 0.0
        %6861 = vmatpush1.msra.mxu0 0.0
        %6862 = vmatprep.subr.mxu0 0.0
        %6863 = vmatpush1.msra.mxu0 0.0
        %6864 = vmatprep.subr.mxu0 0.0
        %6865 = vmatpush1.msra.mxu0 0.0
        %6866 = vmatprep.subr.mxu0 0.0
        %6867 = vmatpush1.msra.mxu0 0.0
        %6868 = vmatprep.subr.mxu0 0.0
        %6869 = vmatpush1.msra.mxu0 0.0
        %6870 = vmatprep.subr.mxu0 0.0
        %6871 = vmatpush1.msra.mxu0 0.0
        %6872 = vmatprep.subr.mxu0 0.0
        %6873 = vmatpush1.msra.mxu0 0.0
        %6874 = vmatprep.subr.mxu0 0.0
        %6875 = vmatpush1.msra.mxu0 0.0
        %6876 = vmatprep.subr.mxu0 0.0
        %6877 = vmatpush1.msra.mxu0 0.0
        %6878 = vmatprep.subr.mxu0 0.0
        %6879 = vmatpush1.msra.mxu0 0.0
        %6880 = vmatprep.subr.mxu0 0.0
        %6881 = vmatpush1.msra.mxu0 0.0
        %6882 = vmatprep.subr.mxu0 0.0
        %6883 = vmatpush1.msra.mxu0 0.0
        %6884 = vmatprep.subr.mxu0 0.0
        %6885 = vmatpush1.msra.mxu0 0.0
        %6886 = vmatprep.mubr.f32.mxu0 0.0
        %v6887 = vand.u32 %v6818, 4294901760
        %v6888 = vsub.f32 %v6818, %v6887
        %v6889 = vand.u32 %v6888, 4294901760
        %v6890 = vsub.f32 %v6888, %v6889
        %v6891 = vand.u32 %v6890, 4294901760
        %6892 = vmatmul.mubr.f32.gmra.mrb[0].mxu0 %v6891
        %v6893 = vpop.f32.mrb[0].mxu0
        %v6894 = vadd.f32 0.0, %v6893
        %v6895 = vpop.f32.mrb[0].mxu0
        %v6896 = vadd.f32 0.0, %v6895
        %6897 = vdwg.mxu0
        %v6898 = vand.u32 %v4884, 4294901760
        %v6899 = vsub.f32 %v4884, %v6898
        %v6900 = vand.u32 %v6899, 4294901760
        %v6901 = vsub.f32 %v6899, %v6900
        %v6902 = vand.u32 %v6901, 4294901760
        %6903 = vmatprep.subr.mxu0 %v6902
        %v6904 = vand.u32 %v4883, 4294901760
        %v6905 = vsub.f32 %v4883, %v6904
        %v6906 = vand.u32 %v6905, 4294901760
        %v6907 = vsub.f32 %v6905, %v6906
        %v6908 = vand.u32 %v6907, 4294901760
        %6909 = vmatpush1.msra.mxu0 %v6908
        %6910 = vmatprep.subr.mxu0 0.0
        %6911 = vmatpush1.msra.mxu0 0.0
        %6912 = vmatprep.subr.mxu0 0.0
        %6913 = vmatpush1.msra.mxu0 0.0
        %6914 = vmatprep.subr.mxu0 0.0
        %6915 = vmatpush1.msra.mxu0 0.0
        %6916 = vmatprep.subr.mxu0 0.0
        %6917 = vmatpush1.msra.mxu0 0.0
        %6918 = vmatprep.subr.mxu0 0.0
        %6919 = vmatpush1.msra.mxu0 0.0
        %6920 = vmatprep.subr.mxu0 0.0
        %6921 = vmatpush1.msra.mxu0 0.0
        %6922 = vmatprep.subr.mxu0 0.0
        %6923 = vmatpush1.msra.mxu0 0.0
        %6924 = vmatprep.subr.mxu0 0.0
        %6925 = vmatpush1.msra.mxu0 0.0
        %6926 = vmatprep.subr.mxu0 0.0
        %6927 = vmatpush1.msra.mxu0 0.0
        %6928 = vmatprep.subr.mxu0 0.0
        %6929 = vmatpush1.msra.mxu0 0.0
        %6930 = vmatprep.subr.mxu0 0.0
        %6931 = vmatpush1.msra.mxu0 0.0
        %6932 = vmatprep.subr.mxu0 0.0
        %6933 = vmatpush1.msra.mxu0 0.0
        %6934 = vmatprep.subr.mxu0 0.0
        %6935 = vmatpush1.msra.mxu0 0.0
        %6936 = vmatprep.subr.mxu0 0.0
        %6937 = vmatpush1.msra.mxu0 0.0
        %6938 = vmatprep.subr.mxu0 0.0
        %6939 = vmatpush1.msra.mxu0 0.0
        %6940 = vmatprep.subr.mxu0 0.0
        %6941 = vmatpush1.msra.mxu0 0.0
        %6942 = vmatprep.subr.mxu0 0.0
        %6943 = vmatpush1.msra.mxu0 0.0
        %6944 = vmatprep.subr.mxu0 0.0
        %6945 = vmatpush1.msra.mxu0 0.0
        %6946 = vmatprep.subr.mxu0 0.0
        %6947 = vmatpush1.msra.mxu0 0.0
        %6948 = vmatprep.subr.mxu0 0.0
        %6949 = vmatpush1.msra.mxu0 0.0
        %6950 = vmatprep.subr.mxu0 0.0
        %6951 = vmatpush1.msra.mxu0 0.0
        %6952 = vmatprep.subr.mxu0 0.0
        %6953 = vmatpush1.msra.mxu0 0.0
        %6954 = vmatprep.subr.mxu0 0.0
        %6955 = vmatpush1.msra.mxu0 0.0
        %6956 = vmatprep.subr.mxu0 0.0
        %6957 = vmatpush1.msra.mxu0 0.0
        %6958 = vmatprep.subr.mxu0 0.0
        %6959 = vmatpush1.msra.mxu0 0.0
        %6960 = vmatprep.subr.mxu0 0.0
        %6961 = vmatpush1.msra.mxu0 0.0
        %6962 = vmatprep.subr.mxu0 0.0
        %6963 = vmatpush1.msra.mxu0 0.0
        %6964 = vmatprep.subr.mxu0 0.0
        %6965 = vmatpush1.msra.mxu0 0.0
        %6966 = vmatprep.subr.mxu0 0.0
        %6967 = vmatpush1.msra.mxu0 0.0
        %6968 = vmatprep.subr.mxu0 0.0
        %6969 = vmatpush1.msra.mxu0 0.0
        %6970 = vmatprep.subr.mxu0 0.0
        %6971 = vmatpush1.msra.mxu0 0.0
        %6972 = vmatprep.mubr.f32.mxu0 0.0
        %v6973 = vand.u32 %v6818, 4294901760
        %6974 = vmatmul.mubr.f32.gmra.mrb[0].mxu0 %v6973
        %v6975 = vpop.f32.mrb[0].mxu0
        %v6976 = vadd.f32 %v6894, %v6975
        %v6977 = vpop.f32.mrb[0].mxu0
        %v6978 = vadd.f32 %v6896, %v6977
        %6979 = vdwg.mxu0
        %v6980 = vand.u32 %v4884, 4294901760
        %v6981 = vsub.f32 %v4884, %v6980
        %6982 = vmatprep.subr.mxu0 %v6981
        %v6983 = vand.u32 %v4883, 4294901760
        %v6984 = vsub.f32 %v4883, %v6983
        %6985 = vmatpush1.msra.mxu0 %v6984
        %6986 = vmatprep.subr.mxu0 0.0
        %6987 = vmatpush1.msra.mxu0 0.0
        %6988 = vmatprep.subr.mxu0 0.0
        %6989 = vmatpush1.msra.mxu0 0.0
        %6990 = vmatprep.subr.mxu0 0.0
        %6991 = vmatpush1.msra.mxu0 0.0
        %6992 = vmatprep.subr.mxu0 0.0
        %6993 = vmatpush1.msra.mxu0 0.0
        %6994 = vmatprep.subr.mxu0 0.0
        %6995 = vmatpush1.msra.mxu0 0.0
        %6996 = vmatprep.subr.mxu0 0.0
        %6997 = vmatpush1.msra.mxu0 0.0
        %6998 = vmatprep.subr.mxu0 0.0
        %6999 = vmatpush1.msra.mxu0 0.0
        %7000 = vmatprep.subr.mxu0 0.0
        %7001 = vmatpush1.msra.mxu0 0.0
        %7002 = vmatprep.subr.mxu0 0.0
        %7003 = vmatpush1.msra.mxu0 0.0
        %7004 = vmatprep.subr.mxu0 0.0
        %7005 = vmatpush1.msra.mxu0 0.0
        %7006 = vmatprep.subr.mxu0 0.0
        %7007 = vmatpush1.msra.mxu0 0.0
        %7008 = vmatprep.subr.mxu0 0.0
        %7009 = vmatpush1.msra.mxu0 0.0
        %7010 = vmatprep.subr.mxu0 0.0
        %7011 = vmatpush1.msra.mxu0 0.0
        %7012 = vmatprep.subr.mxu0 0.0
        %7013 = vmatpush1.msra.mxu0 0.0
        %7014 = vmatprep.subr.mxu0 0.0
        %7015 = vmatpush1.msra.mxu0 0.0
        %7016 = vmatprep.subr.mxu0 0.0
        %7017 = vmatpush1.msra.mxu0 0.0
        %7018 = vmatprep.subr.mxu0 0.0
        %7019 = vmatpush1.msra.mxu0 0.0
        %7020 = vmatprep.subr.mxu0 0.0
        %7021 = vmatpush1.msra.mxu0 0.0
        %7022 = vmatprep.subr.mxu0 0.0
        %7023 = vmatpush1.msra.mxu0 0.0
        %7024 = vmatprep.subr.mxu0 0.0
        %7025 = vmatpush1.msra.mxu0 0.0
        %7026 = vmatprep.subr.mxu0 0.0
        %7027 = vmatpush1.msra.mxu0 0.0
        %7028 = vmatprep.subr.mxu0 0.0
        %7029 = vmatpush1.msra.mxu0 0.0
        %7030 = vmatprep.subr.mxu0 0.0
        %7031 = vmatpush1.msra.mxu0 0.0
        %7032 = vmatprep.subr.mxu0 0.0
        %7033 = vmatpush1.msra.mxu0 0.0
        %7034 = vmatprep.subr.mxu0 0.0
        %7035 = vmatpush1.msra.mxu0 0.0
        %7036 = vmatprep.subr.mxu0 0.0
        %7037 = vmatpush1.msra.mxu0 0.0
        %7038 = vmatprep.subr.mxu0 0.0
        %7039 = vmatpush1.msra.mxu0 0.0
        %7040 = vmatprep.subr.mxu0 0.0
        %7041 = vmatpush1.msra.mxu0 0.0
        %7042 = vmatprep.subr.mxu0 0.0
        %7043 = vmatpush1.msra.mxu0 0.0
        %7044 = vmatprep.subr.mxu0 0.0
        %7045 = vmatpush1.msra.mxu0 0.0
        %7046 = vmatprep.subr.mxu0 0.0
        %7047 = vmatpush1.msra.mxu0 0.0
        %7048 = vmatprep.mubr.f32.mxu0 0.0
        %v7049 = vand.u32 %v6818, 4294901760
        %v7050 = vsub.f32 %v6818, %v7049
        %7051 = vmatmul.mubr.f32.gmra.mrb[0].mxu0 %v7050
        %v7052 = vpop.f32.mrb[0].mxu0
        %v7053 = vadd.f32 %v6976, %v7052
        %v7054 = vpop.f32.mrb[0].mxu0
        %v7055 = vadd.f32 %v6978, %v7054
        %7056 = vdwg.mxu0
        %v7057 = vand.u32 %v4884, 4294901760
        %7058 = vmatprep.subr.mxu0 %v7057
        %v7059 = vand.u32 %v4883, 4294901760
        %7060 = vmatpush1.msra.mxu0 %v7059
        %7061 = vmatprep.subr.mxu0 0.0
        %7062 = vmatpush1.msra.mxu0 0.0
        %7063 = vmatprep.subr.mxu0 0.0
        %7064 = vmatpush1.msra.mxu0 0.0
        %7065 = vmatprep.subr.mxu0 0.0
        %7066 = vmatpush1.msra.mxu0 0.0
        %7067 = vmatprep.subr.mxu0 0.0
        %7068 = vmatpush1.msra.mxu0 0.0
        %7069 = vmatprep.subr.mxu0 0.0
        %7070 = vmatpush1.msra.mxu0 0.0
        %7071 = vmatprep.subr.mxu0 0.0
        %7072 = vmatpush1.msra.mxu0 0.0
        %7073 = vmatprep.subr.mxu0 0.0
        %7074 = vmatpush1.msra.mxu0 0.0
        %7075 = vmatprep.subr.mxu0 0.0
        %7076 = vmatpush1.msra.mxu0 0.0
        %7077 = vmatprep.subr.mxu0 0.0
        %7078 = vmatpush1.msra.mxu0 0.0
        %7079 = vmatprep.subr.mxu0 0.0
        %7080 = vmatpush1.msra.mxu0 0.0
        %7081 = vmatprep.subr.mxu0 0.0
        %7082 = vmatpush1.msra.mxu0 0.0
        %7083 = vmatprep.subr.mxu0 0.0
        %7084 = vmatpush1.msra.mxu0 0.0
        %7085 = vmatprep.subr.mxu0 0.0
        %7086 = vmatpush1.msra.mxu0 0.0
        %7087 = vmatprep.subr.mxu0 0.0
        %7088 = vmatpush1.msra.mxu0 0.0
        %7089 = vmatprep.subr.mxu0 0.0
        %7090 = vmatpush1.msra.mxu0 0.0
        %7091 = vmatprep.subr.mxu0 0.0
        %7092 = vmatpush1.msra.mxu0 0.0
        %7093 = vmatprep.subr.mxu0 0.0
        %7094 = vmatpush1.msra.mxu0 0.0
        %7095 = vmatprep.subr.mxu0 0.0
        %7096 = vmatpush1.msra.mxu0 0.0
        %7097 = vmatprep.subr.mxu0 0.0
        %7098 = vmatpush1.msra.mxu0 0.0
        %7099 = vmatprep.subr.mxu0 0.0
        %7100 = vmatpush1.msra.mxu0 0.0
        %7101 = vmatprep.subr.mxu0 0.0
        %7102 = vmatpush1.msra.mxu0 0.0
        %7103 = vmatprep.subr.mxu0 0.0
        %7104 = vmatpush1.msra.mxu0 0.0
        %7105 = vmatprep.subr.mxu0 0.0
        %7106 = vmatpush1.msra.mxu0 0.0
        %7107 = vmatprep.subr.mxu0 0.0
        %7108 = vmatpush1.msra.mxu0 0.0
        %7109 = vmatprep.subr.mxu0 0.0
        %7110 = vmatpush1.msra.mxu0 0.0
        %7111 = vmatprep.subr.mxu0 0.0
        %7112 = vmatpush1.msra.mxu0 0.0
        %7113 = vmatprep.subr.mxu0 0.0
        %7114 = vmatpush1.msra.mxu0 0.0
        %7115 = vmatprep.subr.mxu0 0.0
        %7116 = vmatpush1.msra.mxu0 0.0
        %7117 = vmatprep.subr.mxu0 0.0
        %7118 = vmatpush1.msra.mxu0 0.0
        %7119 = vmatprep.subr.mxu0 0.0
        %7120 = vmatpush1.msra.mxu0 0.0
        %7121 = vmatprep.subr.mxu0 0.0
        %7122 = vmatpush1.msra.mxu0 0.0
        %7123 = vmatprep.mubr.f32.mxu0 0.0
        %v7124 = vand.u32 %v6818, 4294901760
        %v7125 = vsub.f32 %v6818, %v7124
        %v7126 = vand.u32 %v7125, 4294901760
        %7127 = vmatmul.mubr.f32.gmra.mrb[0].mxu0 %v7126
        %v7128 = vpop.f32.mrb[0].mxu0
        %v7129 = vadd.f32 %v7053, %v7128
        %v7130 = vpop.f32.mrb[0].mxu0
        %v7131 = vadd.f32 %v7055, %v7130
        %7132 = vdwg.mxu0
        %v7133 = vand.u32 %v4884, 4294901760
        %v7134 = vsub.f32 %v4884, %v7133
        %v7135 = vand.u32 %v7134, 4294901760
        %7136 = vmatprep.subr.mxu0 %v7135
        %v7137 = vand.u32 %v4883, 4294901760
        %v7138 = vsub.f32 %v4883, %v7137
        %v7139 = vand.u32 %v7138, 4294901760
        %7140 = vmatpush1.msra.mxu0 %v7139
        %7141 = vmatprep.subr.mxu0 0.0
        %7142 = vmatpush1.msra.mxu0 0.0
        %7143 = vmatprep.subr.mxu0 0.0
        %7144 = vmatpush1.msra.mxu0 0.0
        %7145 = vmatprep.subr.mxu0 0.0
        %7146 = vmatpush1.msra.mxu0 0.0
        %7147 = vmatprep.subr.mxu0 0.0
        %7148 = vmatpush1.msra.mxu0 0.0
        %7149 = vmatprep.subr.mxu0 0.0
        %7150 = vmatpush1.msra.mxu0 0.0
        %7151 = vmatprep.subr.mxu0 0.0
        %7152 = vmatpush1.msra.mxu0 0.0
        %7153 = vmatprep.subr.mxu0 0.0
        %7154 = vmatpush1.msra.mxu0 0.0
        %7155 = vmatprep.subr.mxu0 0.0
        %7156 = vmatpush1.msra.mxu0 0.0
        %7157 = vmatprep.subr.mxu0 0.0
        %7158 = vmatpush1.msra.mxu0 0.0
        %7159 = vmatprep.subr.mxu0 0.0
        %7160 = vmatpush1.msra.mxu0 0.0
        %7161 = vmatprep.subr.mxu0 0.0
        %7162 = vmatpush1.msra.mxu0 0.0
        %7163 = vmatprep.subr.mxu0 0.0
        %7164 = vmatpush1.msra.mxu0 0.0
        %7165 = vmatprep.subr.mxu0 0.0
        %7166 = vmatpush1.msra.mxu0 0.0
        %7167 = vmatprep.subr.mxu0 0.0
        %7168 = vmatpush1.msra.mxu0 0.0
        %7169 = vmatprep.subr.mxu0 0.0
        %7170 = vmatpush1.msra.mxu0 0.0
        %7171 = vmatprep.subr.mxu0 0.0
        %7172 = vmatpush1.msra.mxu0 0.0
        %7173 = vmatprep.subr.mxu0 0.0
        %7174 = vmatpush1.msra.mxu0 0.0
        %7175 = vmatprep.subr.mxu0 0.0
        %7176 = vmatpush1.msra.mxu0 0.0
        %7177 = vmatprep.subr.mxu0 0.0
        %7178 = vmatpush1.msra.mxu0 0.0
        %7179 = vmatprep.subr.mxu0 0.0
        %7180 = vmatpush1.msra.mxu0 0.0
        %7181 = vmatprep.subr.mxu0 0.0
        %7182 = vmatpush1.msra.mxu0 0.0
        %7183 = vmatprep.subr.mxu0 0.0
        %7184 = vmatpush1.msra.mxu0 0.0
        %7185 = vmatprep.subr.mxu0 0.0
        %7186 = vmatpush1.msra.mxu0 0.0
        %7187 = vmatprep.subr.mxu0 0.0
        %7188 = vmatpush1.msra.mxu0 0.0
        %7189 = vmatprep.subr.mxu0 0.0
        %7190 = vmatpush1.msra.mxu0 0.0
        %7191 = vmatprep.subr.mxu0 0.0
        %7192 = vmatpush1.msra.mxu0 0.0
        %7193 = vmatprep.subr.mxu0 0.0
        %7194 = vmatpush1.msra.mxu0 0.0
        %7195 = vmatprep.subr.mxu0 0.0
        %7196 = vmatpush1.msra.mxu0 0.0
        %7197 = vmatprep.subr.mxu0 0.0
        %7198 = vmatpush1.msra.mxu0 0.0
        %7199 = vmatprep.subr.mxu0 0.0
        %7200 = vmatpush1.msra.mxu0 0.0
        %7201 = vmatprep.subr.mxu0 0.0
        %7202 = vmatpush1.msra.mxu0 0.0
        %7203 = vmatprep.mubr.f32.mxu0 0.0
        %v7204 = vand.u32 %v6818, 4294901760
        %7205 = vmatmul.mubr.f32.gmra.mrb[0].mxu0 %v7204
        %v7206 = vpop.f32.mrb[0].mxu0
        %v7207 = vadd.f32 %v7129, %v7206
        %v7208 = vpop.f32.mrb[0].mxu0
        %v7209 = vadd.f32 %v7131, %v7208
        %7210 = vdwg.mxu0
        %v7211 = vand.u32 %v4884, 4294901760
        %7212 = vmatprep.subr.mxu0 %v7211
        %v7213 = vand.u32 %v4883, 4294901760
        %7214 = vmatpush1.msra.mxu0 %v7213
        %7215 = vmatprep.subr.mxu0 0.0
        %7216 = vmatpush1.msra.mxu0 0.0
        %7217 = vmatprep.subr.mxu0 0.0
        %7218 = vmatpush1.msra.mxu0 0.0
        %7219 = vmatprep.subr.mxu0 0.0
        %7220 = vmatpush1.msra.mxu0 0.0
        %7221 = vmatprep.subr.mxu0 0.0
        %7222 = vmatpush1.msra.mxu0 0.0
        %7223 = vmatprep.subr.mxu0 0.0
        %7224 = vmatpush1.msra.mxu0 0.0
        %7225 = vmatprep.subr.mxu0 0.0
        %7226 = vmatpush1.msra.mxu0 0.0
        %7227 = vmatprep.subr.mxu0 0.0
        %7228 = vmatpush1.msra.mxu0 0.0
        %7229 = vmatprep.subr.mxu0 0.0
        %7230 = vmatpush1.msra.mxu0 0.0
        %7231 = vmatprep.subr.mxu0 0.0
        %7232 = vmatpush1.msra.mxu0 0.0
        %7233 = vmatprep.subr.mxu0 0.0
        %7234 = vmatpush1.msra.mxu0 0.0
        %7235 = vmatprep.subr.mxu0 0.0
        %7236 = vmatpush1.msra.mxu0 0.0
        %7237 = vmatprep.subr.mxu0 0.0
        %7238 = vmatpush1.msra.mxu0 0.0
        %7239 = vmatprep.subr.mxu0 0.0
        %7240 = vmatpush1.msra.mxu0 0.0
        %7241 = vmatprep.subr.mxu0 0.0
        %7242 = vmatpush1.msra.mxu0 0.0
        %7243 = vmatprep.subr.mxu0 0.0
        %7244 = vmatpush1.msra.mxu0 0.0
        %7245 = vmatprep.subr.mxu0 0.0
        %7246 = vmatpush1.msra.mxu0 0.0
        %7247 = vmatprep.subr.mxu0 0.0
        %7248 = vmatpush1.msra.mxu0 0.0
        %7249 = vmatprep.subr.mxu0 0.0
        %7250 = vmatpush1.msra.mxu0 0.0
        %7251 = vmatprep.subr.mxu0 0.0
        %7252 = vmatpush1.msra.mxu0 0.0
        %7253 = vmatprep.subr.mxu0 0.0
        %7254 = vmatpush1.msra.mxu0 0.0
        %7255 = vmatprep.subr.mxu0 0.0
        %7256 = vmatpush1.msra.mxu0 0.0
        %7257 = vmatprep.subr.mxu0 0.0
        %7258 = vmatpush1.msra.mxu0 0.0
        %7259 = vmatprep.subr.mxu0 0.0
        %7260 = vmatpush1.msra.mxu0 0.0
        %7261 = vmatprep.subr.mxu0 0.0
        %7262 = vmatpush1.msra.mxu0 0.0
        %7263 = vmatprep.subr.mxu0 0.0
        %7264 = vmatpush1.msra.mxu0 0.0
        %7265 = vmatprep.subr.mxu0 0.0
        %7266 = vmatpush1.msra.mxu0 0.0
        %7267 = vmatprep.subr.mxu0 0.0
        %7268 = vmatpush1.msra.mxu0 0.0
        %7269 = vmatprep.subr.mxu0 0.0
        %7270 = vmatpush1.msra.mxu0 0.0
        %7271 = vmatprep.subr.mxu0 0.0
        %7272 = vmatpush1.msra.mxu0 0.0
        %7273 = vmatprep.subr.mxu0 0.0
        %7274 = vmatpush1.msra.mxu0 0.0
        %7275 = vmatprep.subr.mxu0 0.0
        %7276 = vmatpush1.msra.mxu0 0.0
        %7277 = vmatprep.mubr.f32.mxu0 0.0
        %v7278 = vand.u32 %v6818, 4294901760
        %7279 = vmatmul.mubr.f32.gmra.mrb[0].mxu0 %v7278
        %v7280 = vpop.f32.mrb[0].mxu0
        %v7281 = vadd.f32 %v7207, %v7280
        %v7282 = vpop.f32.mrb[0].mxu0
        %v7283 = vadd.f32 %v7209, %v7282
        %7284 = vdwg.mxu0
        %v7285 = vadd.f32 %v6813, %v7281
        %v7286 = vadd.f32 %v6814, %v7283
        %7287 = vrot.lane.b32.xlu0 %v4883, 127
        %v7288 = vpop.permute.xlu0 %7287
        %7289 = vrot.lane.b32.xlu0 %v4884, 127
        %v7290 = vpop.permute.xlu0 %7289
        %v7291 = vsel %vm2836, %v7288, %v7290
        %v7295 = vsel %vm2836, %v7290, %v7288
        %v7296 = vmul.f32 %v7291, %v2848
        %v7297 = vmul.f32 %v7295, %v2852
        %s7298 = scalar_lea.vmem %s8, 40
        %v7299 = vld [vmem:[%s7298] sm:$0xff]
        %v7301 = vsel %vm4912, %v7299, 0
        %v7303 = vand.u32 %v7297, 4294901760
        %7304 = vmatprep.subr.mxu0 %v7303
        %v7305 = vand.u32 %v7296, 4294901760
        %7306 = vmatpush1.msra.mxu0 %v7305
        %7307 = vmatprep.subr.mxu0 0.0
        %7308 = vmatpush1.msra.mxu0 0.0
        %7309 = vmatprep.subr.mxu0 0.0
        %7310 = vmatpush1.msra.mxu0 0.0
        %7311 = vmatprep.subr.mxu0 0.0
        %7312 = vmatpush1.msra.mxu0 0.0
        %7313 = vmatprep.subr.mxu0 0.0
        %7314 = vmatpush1.msra.mxu0 0.0
        %7315 = vmatprep.subr.mxu0 0.0
        %7316 = vmatpush1.msra.mxu0 0.0
        %7317 = vmatprep.subr.mxu0 0.0
        %7318 = vmatpush1.msra.mxu0 0.0
        %7319 = vmatprep.subr.mxu0 0.0
        %7320 = vmatpush1.msra.mxu0 0.0
        %7321 = vmatprep.subr.mxu0 0.0
        %7322 = vmatpush1.msra.mxu0 0.0
        %7323 = vmatprep.subr.mxu0 0.0
        %7324 = vmatpush1.msra.mxu0 0.0
        %7325 = vmatprep.subr.mxu0 0.0
        %7326 = vmatpush1.msra.mxu0 0.0
        %7327 = vmatprep.subr.mxu0 0.0
        %7328 = vmatpush1.msra.mxu0 0.0
        %7329 = vmatprep.subr.mxu0 0.0
        %7330 = vmatpush1.msra.mxu0 0.0
        %7331 = vmatprep.subr.mxu0 0.0
        %7332 = vmatpush1.msra.mxu0 0.0
        %7333 = vmatprep.subr.mxu0 0.0
        %7334 = vmatpush1.msra.mxu0 0.0
        %7335 = vmatprep.subr.mxu0 0.0
        %7336 = vmatpush1.msra.mxu0 0.0
        %7337 = vmatprep.subr.mxu0 0.0
        %7338 = vmatpush1.msra.mxu0 0.0
        %7339 = vmatprep.subr.mxu0 0.0
        %7340 = vmatpush1.msra.mxu0 0.0
        %7341 = vmatprep.subr.mxu0 0.0
        %7342 = vmatpush1.msra.mxu0 0.0
        %7343 = vmatprep.subr.mxu0 0.0
        %7344 = vmatpush1.msra.mxu0 0.0
        %7345 = vmatprep.subr.mxu0 0.0
        %7346 = vmatpush1.msra.mxu0 0.0
        %7347 = vmatprep.subr.mxu0 0.0
        %7348 = vmatpush1.msra.mxu0 0.0
        %7349 = vmatprep.subr.mxu0 0.0
        %7350 = vmatpush1.msra.mxu0 0.0
        %7351 = vmatprep.subr.mxu0 0.0
        %7352 = vmatpush1.msra.mxu0 0.0
        %7353 = vmatprep.subr.mxu0 0.0
        %7354 = vmatpush1.msra.mxu0 0.0
        %7355 = vmatprep.subr.mxu0 0.0
        %7356 = vmatpush1.msra.mxu0 0.0
        %7357 = vmatprep.subr.mxu0 0.0
        %7358 = vmatpush1.msra.mxu0 0.0
        %7359 = vmatprep.subr.mxu0 0.0
        %7360 = vmatpush1.msra.mxu0 0.0
        %7361 = vmatprep.subr.mxu0 0.0
        %7362 = vmatpush1.msra.mxu0 0.0
        %7363 = vmatprep.subr.mxu0 0.0
        %7364 = vmatpush1.msra.mxu0 0.0
        %7365 = vmatprep.subr.mxu0 0.0
        %7366 = vmatpush1.msra.mxu0 0.0
        %7367 = vmatprep.subr.mxu0 0.0
        %7368 = vmatpush1.msra.mxu0 0.0
        %7369 = vmatprep.mubr.f32.mxu0 0.0
        %v7370 = vand.u32 %v7301, 4294901760
        %v7371 = vsub.f32 %v7301, %v7370
        %v7372 = vand.u32 %v7371, 4294901760
        %v7373 = vsub.f32 %v7371, %v7372
        %v7374 = vand.u32 %v7373, 4294901760
        %7375 = vmatmul.mubr.f32.gmra.mrb[0].mxu0 %v7374
        %v7376 = vpop.f32.mrb[0].mxu0
        %v7377 = vadd.f32 0.0, %v7376
        %v7378 = vpop.f32.mrb[0].mxu0
        %v7379 = vadd.f32 0.0, %v7378
        %7380 = vdwg.mxu0
        %v7381 = vand.u32 %v7297, 4294901760
        %v7382 = vsub.f32 %v7297, %v7381
        %v7383 = vand.u32 %v7382, 4294901760
        %v7384 = vsub.f32 %v7382, %v7383
        %v7385 = vand.u32 %v7384, 4294901760
        %7386 = vmatprep.subr.mxu0 %v7385
        %v7387 = vand.u32 %v7296, 4294901760
        %v7388 = vsub.f32 %v7296, %v7387
        %v7389 = vand.u32 %v7388, 4294901760
        %v7390 = vsub.f32 %v7388, %v7389
        %v7391 = vand.u32 %v7390, 4294901760
        %7392 = vmatpush1.msra.mxu0 %v7391
        %7393 = vmatprep.subr.mxu0 0.0
        %7394 = vmatpush1.msra.mxu0 0.0
        %7395 = vmatprep.subr.mxu0 0.0
        %7396 = vmatpush1.msra.mxu0 0.0
        %7397 = vmatprep.subr.mxu0 0.0
        %7398 = vmatpush1.msra.mxu0 0.0
        %7399 = vmatprep.subr.mxu0 0.0
        %7400 = vmatpush1.msra.mxu0 0.0
        %7401 = vmatprep.subr.mxu0 0.0
        %7402 = vmatpush1.msra.mxu0 0.0
        %7403 = vmatprep.subr.mxu0 0.0
        %7404 = vmatpush1.msra.mxu0 0.0
        %7405 = vmatprep.subr.mxu0 0.0
        %7406 = vmatpush1.msra.mxu0 0.0
        %7407 = vmatprep.subr.mxu0 0.0
        %7408 = vmatpush1.msra.mxu0 0.0
        %7409 = vmatprep.subr.mxu0 0.0
        %7410 = vmatpush1.msra.mxu0 0.0
        %7411 = vmatprep.subr.mxu0 0.0
        %7412 = vmatpush1.msra.mxu0 0.0
        %7413 = vmatprep.subr.mxu0 0.0
        %7414 = vmatpush1.msra.mxu0 0.0
        %7415 = vmatprep.subr.mxu0 0.0
        %7416 = vmatpush1.msra.mxu0 0.0
        %7417 = vmatprep.subr.mxu0 0.0
        %7418 = vmatpush1.msra.mxu0 0.0
        %7419 = vmatprep.subr.mxu0 0.0
        %7420 = vmatpush1.msra.mxu0 0.0
        %7421 = vmatprep.subr.mxu0 0.0
        %7422 = vmatpush1.msra.mxu0 0.0
        %7423 = vmatprep.subr.mxu0 0.0
        %7424 = vmatpush1.msra.mxu0 0.0
        %7425 = vmatprep.subr.mxu0 0.0
        %7426 = vmatpush1.msra.mxu0 0.0
        %7427 = vmatprep.subr.mxu0 0.0
        %7428 = vmatpush1.msra.mxu0 0.0
        %7429 = vmatprep.subr.mxu0 0.0
        %7430 = vmatpush1.msra.mxu0 0.0
        %7431 = vmatprep.subr.mxu0 0.0
        %7432 = vmatpush1.msra.mxu0 0.0
        %7433 = vmatprep.subr.mxu0 0.0
        %7434 = vmatpush1.msra.mxu0 0.0
        %7435 = vmatprep.subr.mxu0 0.0
        %7436 = vmatpush1.msra.mxu0 0.0
        %7437 = vmatprep.subr.mxu0 0.0
        %7438 = vmatpush1.msra.mxu0 0.0
        %7439 = vmatprep.subr.mxu0 0.0
        %7440 = vmatpush1.msra.mxu0 0.0
        %7441 = vmatprep.subr.mxu0 0.0
        %7442 = vmatpush1.msra.mxu0 0.0
        %7443 = vmatprep.subr.mxu0 0.0
        %7444 = vmatpush1.msra.mxu0 0.0
        %7445 = vmatprep.subr.mxu0 0.0
        %7446 = vmatpush1.msra.mxu0 0.0
        %7447 = vmatprep.subr.mxu0 0.0
        %7448 = vmatpush1.msra.mxu0 0.0
        %7449 = vmatprep.subr.mxu0 0.0
        %7450 = vmatpush1.msra.mxu0 0.0
        %7451 = vmatprep.subr.mxu0 0.0
        %7452 = vmatpush1.msra.mxu0 0.0
        %7453 = vmatprep.subr.mxu0 0.0
        %7454 = vmatpush1.msra.mxu0 0.0
        %7455 = vmatprep.mubr.f32.mxu0 0.0
        %v7456 = vand.u32 %v7301, 4294901760
        %7457 = vmatmul.mubr.f32.gmra.mrb[0].mxu0 %v7456
        %v7458 = vpop.f32.mrb[0].mxu0
        %v7459 = vadd.f32 %v7377, %v7458
        %v7460 = vpop.f32.mrb[0].mxu0
        %v7461 = vadd.f32 %v7379, %v7460
        %7462 = vdwg.mxu0
        %v7463 = vand.u32 %v7297, 4294901760
        %v7464 = vsub.f32 %v7297, %v7463
        %7465 = vmatprep.subr.mxu0 %v7464
        %v7466 = vand.u32 %v7296, 4294901760
        %v7467 = vsub.f32 %v7296, %v7466
        %7468 = vmatpush1.msra.mxu0 %v7467
        %7469 = vmatprep.subr.mxu0 0.0
        %7470 = vmatpush1.msra.mxu0 0.0
        %7471 = vmatprep.subr.mxu0 0.0
        %7472 = vmatpush1.msra.mxu0 0.0
        %7473 = vmatprep.subr.mxu0 0.0
        %7474 = vmatpush1.msra.mxu0 0.0
        %7475 = vmatprep.subr.mxu0 0.0
        %7476 = vmatpush1.msra.mxu0 0.0
        %7477 = vmatprep.subr.mxu0 0.0
        %7478 = vmatpush1.msra.mxu0 0.0
        %7479 = vmatprep.subr.mxu0 0.0
        %7480 = vmatpush1.msra.mxu0 0.0
        %7481 = vmatprep.subr.mxu0 0.0
        %7482 = vmatpush1.msra.mxu0 0.0
        %7483 = vmatprep.subr.mxu0 0.0
        %7484 = vmatpush1.msra.mxu0 0.0
        %7485 = vmatprep.subr.mxu0 0.0
        %7486 = vmatpush1.msra.mxu0 0.0
        %7487 = vmatprep.subr.mxu0 0.0
        %7488 = vmatpush1.msra.mxu0 0.0
        %7489 = vmatprep.subr.mxu0 0.0
        %7490 = vmatpush1.msra.mxu0 0.0
        %7491 = vmatprep.subr.mxu0 0.0
        %7492 = vmatpush1.msra.mxu0 0.0
        %7493 = vmatprep.subr.mxu0 0.0
        %7494 = vmatpush1.msra.mxu0 0.0
        %7495 = vmatprep.subr.mxu0 0.0
        %7496 = vmatpush1.msra.mxu0 0.0
        %7497 = vmatprep.subr.mxu0 0.0
        %7498 = vmatpush1.msra.mxu0 0.0
        %7499 = vmatprep.subr.mxu0 0.0
        %7500 = vmatpush1.msra.mxu0 0.0
        %7501 = vmatprep.subr.mxu0 0.0
        %7502 = vmatpush1.msra.mxu0 0.0
        %7503 = vmatprep.subr.mxu0 0.0
        %7504 = vmatpush1.msra.mxu0 0.0
        %7505 = vmatprep.subr.mxu0 0.0
        %7506 = vmatpush1.msra.mxu0 0.0
        %7507 = vmatprep.subr.mxu0 0.0
        %7508 = vmatpush1.msra.mxu0 0.0
        %7509 = vmatprep.subr.mxu0 0.0
        %7510 = vmatpush1.msra.mxu0 0.0
        %7511 = vmatprep.subr.mxu0 0.0
        %7512 = vmatpush1.msra.mxu0 0.0
        %7513 = vmatprep.subr.mxu0 0.0
        %7514 = vmatpush1.msra.mxu0 0.0
        %7515 = vmatprep.subr.mxu0 0.0
        %7516 = vmatpush1.msra.mxu0 0.0
        %7517 = vmatprep.subr.mxu0 0.0
        %7518 = vmatpush1.msra.mxu0 0.0
        %7519 = vmatprep.subr.mxu0 0.0
        %7520 = vmatpush1.msra.mxu0 0.0
        %7521 = vmatprep.subr.mxu0 0.0
        %7522 = vmatpush1.msra.mxu0 0.0
        %7523 = vmatprep.subr.mxu0 0.0
        %7524 = vmatpush1.msra.mxu0 0.0
        %7525 = vmatprep.subr.mxu0 0.0
        %7526 = vmatpush1.msra.mxu0 0.0
        %7527 = vmatprep.subr.mxu0 0.0
        %7528 = vmatpush1.msra.mxu0 0.0
        %7529 = vmatprep.subr.mxu0 0.0
        %7530 = vmatpush1.msra.mxu0 0.0
        %7531 = vmatprep.mubr.f32.mxu0 0.0
        %v7532 = vand.u32 %v7301, 4294901760
        %v7533 = vsub.f32 %v7301, %v7532
        %7534 = vmatmul.mubr.f32.gmra.mrb[0].mxu0 %v7533
        %v7535 = vpop.f32.mrb[0].mxu0
        %v7536 = vadd.f32 %v7459, %v7535
        %v7537 = vpop.f32.mrb[0].mxu0
        %v7538 = vadd.f32 %v7461, %v7537
        %7539 = vdwg.mxu0
        %v7540 = vand.u32 %v7297, 4294901760
        %7541 = vmatprep.subr.mxu0 %v7540
        %v7542 = vand.u32 %v7296, 4294901760
        %7543 = vmatpush1.msra.mxu0 %v7542
        %7544 = vmatprep.subr.mxu0 0.0
        %7545 = vmatpush1.msra.mxu0 0.0
        %7546 = vmatprep.subr.mxu0 0.0
        %7547 = vmatpush1.msra.mxu0 0.0
        %7548 = vmatprep.subr.mxu0 0.0
        %7549 = vmatpush1.msra.mxu0 0.0
        %7550 = vmatprep.subr.mxu0 0.0
        %7551 = vmatpush1.msra.mxu0 0.0
        %7552 = vmatprep.subr.mxu0 0.0
        %7553 = vmatpush1.msra.mxu0 0.0
        %7554 = vmatprep.subr.mxu0 0.0
        %7555 = vmatpush1.msra.mxu0 0.0
        %7556 = vmatprep.subr.mxu0 0.0
        %7557 = vmatpush1.msra.mxu0 0.0
        %7558 = vmatprep.subr.mxu0 0.0
        %7559 = vmatpush1.msra.mxu0 0.0
        %7560 = vmatprep.subr.mxu0 0.0
        %7561 = vmatpush1.msra.mxu0 0.0
        %7562 = vmatprep.subr.mxu0 0.0
        %7563 = vmatpush1.msra.mxu0 0.0
        %7564 = vmatprep.subr.mxu0 0.0
        %7565 = vmatpush1.msra.mxu0 0.0
        %7566 = vmatprep.subr.mxu0 0.0
        %7567 = vmatpush1.msra.mxu0 0.0
        %7568 = vmatprep.subr.mxu0 0.0
        %7569 = vmatpush1.msra.mxu0 0.0
        %7570 = vmatprep.subr.mxu0 0.0
        %7571 = vmatpush1.msra.mxu0 0.0
        %7572 = vmatprep.subr.mxu0 0.0
        %7573 = vmatpush1.msra.mxu0 0.0
        %7574 = vmatprep.subr.mxu0 0.0
        %7575 = vmatpush1.msra.mxu0 0.0
        %7576 = vmatprep.subr.mxu0 0.0
        %7577 = vmatpush1.msra.mxu0 0.0
        %7578 = vmatprep.subr.mxu0 0.0
        %7579 = vmatpush1.msra.mxu0 0.0
        %7580 = vmatprep.subr.mxu0 0.0
        %7581 = vmatpush1.msra.mxu0 0.0
        %7582 = vmatprep.subr.mxu0 0.0
        %7583 = vmatpush1.msra.mxu0 0.0
        %7584 = vmatprep.subr.mxu0 0.0
        %7585 = vmatpush1.msra.mxu0 0.0
        %7586 = vmatprep.subr.mxu0 0.0
        %7587 = vmatpush1.msra.mxu0 0.0
        %7588 = vmatprep.subr.mxu0 0.0
        %7589 = vmatpush1.msra.mxu0 0.0
        %7590 = vmatprep.subr.mxu0 0.0
        %7591 = vmatpush1.msra.mxu0 0.0
        %7592 = vmatprep.subr.mxu0 0.0
        %7593 = vmatpush1.msra.mxu0 0.0
        %7594 = vmatprep.subr.mxu0 0.0
        %7595 = vmatpush1.msra.mxu0 0.0
        %7596 = vmatprep.subr.mxu0 0.0
        %7597 = vmatpush1.msra.mxu0 0.0
        %7598 = vmatprep.subr.mxu0 0.0
        %7599 = vmatpush1.msra.mxu0 0.0
        %7600 = vmatprep.subr.mxu0 0.0
        %7601 = vmatpush1.msra.mxu0 0.0
        %7602 = vmatprep.subr.mxu0 0.0
        %7603 = vmatpush1.msra.mxu0 0.0
        %7604 = vmatprep.subr.mxu0 0.0
        %7605 = vmatpush1.msra.mxu0 0.0
        %7606 = vmatprep.mubr.f32.mxu0 0.0
        %v7607 = vand.u32 %v7301, 4294901760
        %v7608 = vsub.f32 %v7301, %v7607
        %v7609 = vand.u32 %v7608, 4294901760
        %7610 = vmatmul.mubr.f32.gmra.mrb[0].mxu0 %v7609
        %v7611 = vpop.f32.mrb[0].mxu0
        %v7612 = vadd.f32 %v7536, %v7611
        %v7613 = vpop.f32.mrb[0].mxu0
        %v7614 = vadd.f32 %v7538, %v7613
        %7615 = vdwg.mxu0
        %v7616 = vand.u32 %v7297, 4294901760
        %v7617 = vsub.f32 %v7297, %v7616
        %v7618 = vand.u32 %v7617, 4294901760
        %7619 = vmatprep.subr.mxu0 %v7618
        %v7620 = vand.u32 %v7296, 4294901760
        %v7621 = vsub.f32 %v7296, %v7620
        %v7622 = vand.u32 %v7621, 4294901760
        %7623 = vmatpush1.msra.mxu0 %v7622
        %7624 = vmatprep.subr.mxu0 0.0
        %7625 = vmatpush1.msra.mxu0 0.0
        %7626 = vmatprep.subr.mxu0 0.0
        %7627 = vmatpush1.msra.mxu0 0.0
        %7628 = vmatprep.subr.mxu0 0.0
        %7629 = vmatpush1.msra.mxu0 0.0
        %7630 = vmatprep.subr.mxu0 0.0
        %7631 = vmatpush1.msra.mxu0 0.0
        %7632 = vmatprep.subr.mxu0 0.0
        %7633 = vmatpush1.msra.mxu0 0.0
        %7634 = vmatprep.subr.mxu0 0.0
        %7635 = vmatpush1.msra.mxu0 0.0
        %7636 = vmatprep.subr.mxu0 0.0
        %7637 = vmatpush1.msra.mxu0 0.0
        %7638 = vmatprep.subr.mxu0 0.0
        %7639 = vmatpush1.msra.mxu0 0.0
        %7640 = vmatprep.subr.mxu0 0.0
        %7641 = vmatpush1.msra.mxu0 0.0
        %7642 = vmatprep.subr.mxu0 0.0
        %7643 = vmatpush1.msra.mxu0 0.0
        %7644 = vmatprep.subr.mxu0 0.0
        %7645 = vmatpush1.msra.mxu0 0.0
        %7646 = vmatprep.subr.mxu0 0.0
        %7647 = vmatpush1.msra.mxu0 0.0
        %7648 = vmatprep.subr.mxu0 0.0
        %7649 = vmatpush1.msra.mxu0 0.0
        %7650 = vmatprep.subr.mxu0 0.0
        %7651 = vmatpush1.msra.mxu0 0.0
        %7652 = vmatprep.subr.mxu0 0.0
        %7653 = vmatpush1.msra.mxu0 0.0
        %7654 = vmatprep.subr.mxu0 0.0
        %7655 = vmatpush1.msra.mxu0 0.0
        %7656 = vmatprep.subr.mxu0 0.0
        %7657 = vmatpush1.msra.mxu0 0.0
        %7658 = vmatprep.subr.mxu0 0.0
        %7659 = vmatpush1.msra.mxu0 0.0
        %7660 = vmatprep.subr.mxu0 0.0
        %7661 = vmatpush1.msra.mxu0 0.0
        %7662 = vmatprep.subr.mxu0 0.0
        %7663 = vmatpush1.msra.mxu0 0.0
        %7664 = vmatprep.subr.mxu0 0.0
        %7665 = vmatpush1.msra.mxu0 0.0
        %7666 = vmatprep.subr.mxu0 0.0
        %7667 = vmatpush1.msra.mxu0 0.0
        %7668 = vmatprep.subr.mxu0 0.0
        %7669 = vmatpush1.msra.mxu0 0.0
        %7670 = vmatprep.subr.mxu0 0.0
        %7671 = vmatpush1.msra.mxu0 0.0
        %7672 = vmatprep.subr.mxu0 0.0
        %7673 = vmatpush1.msra.mxu0 0.0
        %7674 = vmatprep.subr.mxu0 0.0
        %7675 = vmatpush1.msra.mxu0 0.0
        %7676 = vmatprep.subr.mxu0 0.0
        %7677 = vmatpush1.msra.mxu0 0.0
        %7678 = vmatprep.subr.mxu0 0.0
        %7679 = vmatpush1.msra.mxu0 0.0
        %7680 = vmatprep.subr.mxu0 0.0
        %7681 = vmatpush1.msra.mxu0 0.0
        %7682 = vmatprep.subr.mxu0 0.0
        %7683 = vmatpush1.msra.mxu0 0.0
        %7684 = vmatprep.subr.mxu0 0.0
        %7685 = vmatpush1.msra.mxu0 0.0
        %7686 = vmatprep.mubr.f32.mxu0 0.0
        %v7687 = vand.u32 %v7301, 4294901760
        %7688 = vmatmul.mubr.f32.gmra.mrb[0].mxu0 %v7687
        %v7689 = vpop.f32.mrb[0].mxu0
        %v7690 = vadd.f32 %v7612, %v7689
        %v7691 = vpop.f32.mrb[0].mxu0
        %v7692 = vadd.f32 %v7614, %v7691
        %7693 = vdwg.mxu0
        %v7694 = vand.u32 %v7297, 4294901760
        %7695 = vmatprep.subr.mxu0 %v7694
        %v7696 = vand.u32 %v7296, 4294901760
        %7697 = vmatpush1.msra.mxu0 %v7696
        %7698 = vmatprep.subr.mxu0 0.0
        %7699 = vmatpush1.msra.mxu0 0.0
        %7700 = vmatprep.subr.mxu0 0.0
        %7701 = vmatpush1.msra.mxu0 0.0
        %7702 = vmatprep.subr.mxu0 0.0
        %7703 = vmatpush1.msra.mxu0 0.0
        %7704 = vmatprep.subr.mxu0 0.0
        %7705 = vmatpush1.msra.mxu0 0.0
        %7706 = vmatprep.subr.mxu0 0.0
        %7707 = vmatpush1.msra.mxu0 0.0
        %7708 = vmatprep.subr.mxu0 0.0
        %7709 = vmatpush1.msra.mxu0 0.0
        %7710 = vmatprep.subr.mxu0 0.0
        %7711 = vmatpush1.msra.mxu0 0.0
        %7712 = vmatprep.subr.mxu0 0.0
        %7713 = vmatpush1.msra.mxu0 0.0
        %7714 = vmatprep.subr.mxu0 0.0
        %7715 = vmatpush1.msra.mxu0 0.0
        %7716 = vmatprep.subr.mxu0 0.0
        %7717 = vmatpush1.msra.mxu0 0.0
        %7718 = vmatprep.subr.mxu0 0.0
        %7719 = vmatpush1.msra.mxu0 0.0
        %7720 = vmatprep.subr.mxu0 0.0
        %7721 = vmatpush1.msra.mxu0 0.0
        %7722 = vmatprep.subr.mxu0 0.0
        %7723 = vmatpush1.msra.mxu0 0.0
        %7724 = vmatprep.subr.mxu0 0.0
        %7725 = vmatpush1.msra.mxu0 0.0
        %7726 = vmatprep.subr.mxu0 0.0
        %7727 = vmatpush1.msra.mxu0 0.0
        %7728 = vmatprep.subr.mxu0 0.0
        %7729 = vmatpush1.msra.mxu0 0.0
        %7730 = vmatprep.subr.mxu0 0.0
        %7731 = vmatpush1.msra.mxu0 0.0
        %7732 = vmatprep.subr.mxu0 0.0
        %7733 = vmatpush1.msra.mxu0 0.0
        %7734 = vmatprep.subr.mxu0 0.0
        %7735 = vmatpush1.msra.mxu0 0.0
        %7736 = vmatprep.subr.mxu0 0.0
        %7737 = vmatpush1.msra.mxu0 0.0
        %7738 = vmatprep.subr.mxu0 0.0
        %7739 = vmatpush1.msra.mxu0 0.0
        %7740 = vmatprep.subr.mxu0 0.0
        %7741 = vmatpush1.msra.mxu0 0.0
        %7742 = vmatprep.subr.mxu0 0.0
        %7743 = vmatpush1.msra.mxu0 0.0
        %7744 = vmatprep.subr.mxu0 0.0
        %7745 = vmatpush1.msra.mxu0 0.0
        %7746 = vmatprep.subr.mxu0 0.0
        %7747 = vmatpush1.msra.mxu0 0.0
        %7748 = vmatprep.subr.mxu0 0.0
        %7749 = vmatpush1.msra.mxu0 0.0
        %7750 = vmatprep.subr.mxu0 0.0
        %7751 = vmatpush1.msra.mxu0 0.0
        %7752 = vmatprep.subr.mxu0 0.0
        %7753 = vmatpush1.msra.mxu0 0.0
        %7754 = vmatprep.subr.mxu0 0.0
        %7755 = vmatpush1.msra.mxu0 0.0
        %7756 = vmatprep.subr.mxu0 0.0
        %7757 = vmatpush1.msra.mxu0 0.0
        %7758 = vmatprep.subr.mxu0 0.0
        %7759 = vmatpush1.msra.mxu0 0.0
        %7760 = vmatprep.mubr.f32.mxu0 0.0
        %v7761 = vand.u32 %v7301, 4294901760
        %7762 = vmatmul.mubr.f32.gmra.mrb[0].mxu0 %v7761
        %v7763 = vpop.f32.mrb[0].mxu0
        %v7764 = vadd.f32 %v7690, %v7763
        %v7765 = vpop.f32.mrb[0].mxu0
        %v7766 = vadd.f32 %v7692, %v7765
        %7767 = vdwg.mxu0
        %v7768 = vadd.f32 %v7285, %v7764
        %v7769 = vadd.f32 %v7286, %v7766
        %7770 = vrot.lane.b32.xlu0 %v4883, 113
        %v7771 = vpop.permute.xlu0 %7770
        %7772 = vrot.lane.b32.xlu0 %v4884, 113
        %v7773 = vpop.permute.xlu0 %7772
        %v7774 = vsel %vm3339, %v7771, %v7773
        %v7778 = vsel %vm3339, %v7773, %v7771
        %v7779 = vmul.f32 %v7774, %v3351
        %v7780 = vmul.f32 %v7778, %v3355
        %s7781 = scalar_lea.vmem %s8, 48
        %v7782 = vld [vmem:[%s7781] sm:$0xff]
        %v7784 = vsel %vm4912, %v7782, 0
        %v7786 = vand.u32 %v7780, 4294901760
        %7787 = vmatprep.subr.mxu0 %v7786
        %v7788 = vand.u32 %v7779, 4294901760
        %7789 = vmatpush1.msra.mxu0 %v7788
        %7790 = vmatprep.subr.mxu0 0.0
        %7791 = vmatpush1.msra.mxu0 0.0
        %7792 = vmatprep.subr.mxu0 0.0
        %7793 = vmatpush1.msra.mxu0 0.0
        %7794 = vmatprep.subr.mxu0 0.0
        %7795 = vmatpush1.msra.mxu0 0.0
        %7796 = vmatprep.subr.mxu0 0.0
        %7797 = vmatpush1.msra.mxu0 0.0
        %7798 = vmatprep.subr.mxu0 0.0
        %7799 = vmatpush1.msra.mxu0 0.0
        %7800 = vmatprep.subr.mxu0 0.0
        %7801 = vmatpush1.msra.mxu0 0.0
        %7802 = vmatprep.subr.mxu0 0.0
        %7803 = vmatpush1.msra.mxu0 0.0
        %7804 = vmatprep.subr.mxu0 0.0
        %7805 = vmatpush1.msra.mxu0 0.0
        %7806 = vmatprep.subr.mxu0 0.0
        %7807 = vmatpush1.msra.mxu0 0.0
        %7808 = vmatprep.subr.mxu0 0.0
        %7809 = vmatpush1.msra.mxu0 0.0
        %7810 = vmatprep.subr.mxu0 0.0
        %7811 = vmatpush1.msra.mxu0 0.0
        %7812 = vmatprep.subr.mxu0 0.0
        %7813 = vmatpush1.msra.mxu0 0.0
        %7814 = vmatprep.subr.mxu0 0.0
        %7815 = vmatpush1.msra.mxu0 0.0
        %7816 = vmatprep.subr.mxu0 0.0
        %7817 = vmatpush1.msra.mxu0 0.0
        %7818 = vmatprep.subr.mxu0 0.0
        %7819 = vmatpush1.msra.mxu0 0.0
        %7820 = vmatprep.subr.mxu0 0.0
        %7821 = vmatpush1.msra.mxu0 0.0
        %7822 = vmatprep.subr.mxu0 0.0
        %7823 = vmatpush1.msra.mxu0 0.0
        %7824 = vmatprep.subr.mxu0 0.0
        %7825 = vmatpush1.msra.mxu0 0.0
        %7826 = vmatprep.subr.mxu0 0.0
        %7827 = vmatpush1.msra.mxu0 0.0
        %7828 = vmatprep.subr.mxu0 0.0
        %7829 = vmatpush1.msra.mxu0 0.0
        %7830 = vmatprep.subr.mxu0 0.0
        %7831 = vmatpush1.msra.mxu0 0.0
        %7832 = vmatprep.subr.mxu0 0.0
        %7833 = vmatpush1.msra.mxu0 0.0
        %7834 = vmatprep.subr.mxu0 0.0
        %7835 = vmatpush1.msra.mxu0 0.0
        %7836 = vmatprep.subr.mxu0 0.0
        %7837 = vmatpush1.msra.mxu0 0.0
        %7838 = vmatprep.subr.mxu0 0.0
        %7839 = vmatpush1.msra.mxu0 0.0
        %7840 = vmatprep.subr.mxu0 0.0
        %7841 = vmatpush1.msra.mxu0 0.0
        %7842 = vmatprep.subr.mxu0 0.0
        %7843 = vmatpush1.msra.mxu0 0.0
        %7844 = vmatprep.subr.mxu0 0.0
        %7845 = vmatpush1.msra.mxu0 0.0
        %7846 = vmatprep.subr.mxu0 0.0
        %7847 = vmatpush1.msra.mxu0 0.0
        %7848 = vmatprep.subr.mxu0 0.0
        %7849 = vmatpush1.msra.mxu0 0.0
        %7850 = vmatprep.subr.mxu0 0.0
        %7851 = vmatpush1.msra.mxu0 0.0
        %7852 = vmatprep.mubr.f32.mxu0 0.0
        %v7853 = vand.u32 %v7784, 4294901760
        %v7854 = vsub.f32 %v7784, %v7853
        %v7855 = vand.u32 %v7854, 4294901760
        %v7856 = vsub.f32 %v7854, %v7855
        %v7857 = vand.u32 %v7856, 4294901760
        %7858 = vmatmul.mubr.f32.gmra.mrb[0].mxu0 %v7857
        %v7859 = vpop.f32.mrb[0].mxu0
        %v7860 = vadd.f32 0.0, %v7859
        %v7861 = vpop.f32.mrb[0].mxu0
        %v7862 = vadd.f32 0.0, %v7861
        %7863 = vdwg.mxu0
        %v7864 = vand.u32 %v7780, 4294901760
        %v7865 = vsub.f32 %v7780, %v7864
        %v7866 = vand.u32 %v7865, 4294901760
        %v7867 = vsub.f32 %v7865, %v7866
        %v7868 = vand.u32 %v7867, 4294901760
        %7869 = vmatprep.subr.mxu0 %v7868
        %v7870 = vand.u32 %v7779, 4294901760
        %v7871 = vsub.f32 %v7779, %v7870
        %v7872 = vand.u32 %v7871, 4294901760
        %v7873 = vsub.f32 %v7871, %v7872
        %v7874 = vand.u32 %v7873, 4294901760
        %7875 = vmatpush1.msra.mxu0 %v7874
        %7876 = vmatprep.subr.mxu0 0.0
        %7877 = vmatpush1.msra.mxu0 0.0
        %7878 = vmatprep.subr.mxu0 0.0
        %7879 = vmatpush1.msra.mxu0 0.0
        %7880 = vmatprep.subr.mxu0 0.0
        %7881 = vmatpush1.msra.mxu0 0.0
        %7882 = vmatprep.subr.mxu0 0.0
        %7883 = vmatpush1.msra.mxu0 0.0
        %7884 = vmatprep.subr.mxu0 0.0
        %7885 = vmatpush1.msra.mxu0 0.0
        %7886 = vmatprep.subr.mxu0 0.0
        %7887 = vmatpush1.msra.mxu0 0.0
        %7888 = vmatprep.subr.mxu0 0.0
        %7889 = vmatpush1.msra.mxu0 0.0
        %7890 = vmatprep.subr.mxu0 0.0
        %7891 = vmatpush1.msra.mxu0 0.0
        %7892 = vmatprep.subr.mxu0 0.0
        %7893 = vmatpush1.msra.mxu0 0.0
        %7894 = vmatprep.subr.mxu0 0.0
        %7895 = vmatpush1.msra.mxu0 0.0
        %7896 = vmatprep.subr.mxu0 0.0
        %7897 = vmatpush1.msra.mxu0 0.0
        %7898 = vmatprep.subr.mxu0 0.0
        %7899 = vmatpush1.msra.mxu0 0.0
        %7900 = vmatprep.subr.mxu0 0.0
        %7901 = vmatpush1.msra.mxu0 0.0
        %7902 = vmatprep.subr.mxu0 0.0
        %7903 = vmatpush1.msra.mxu0 0.0
        %7904 = vmatprep.subr.mxu0 0.0
        %7905 = vmatpush1.msra.mxu0 0.0
        %7906 = vmatprep.subr.mxu0 0.0
        %7907 = vmatpush1.msra.mxu0 0.0
        %7908 = vmatprep.subr.mxu0 0.0
        %7909 = vmatpush1.msra.mxu0 0.0
        %7910 = vmatprep.subr.mxu0 0.0
        %7911 = vmatpush1.msra.mxu0 0.0
        %7912 = vmatprep.subr.mxu0 0.0
        %7913 = vmatpush1.msra.mxu0 0.0
        %7914 = vmatprep.subr.mxu0 0.0
        %7915 = vmatpush1.msra.mxu0 0.0
        %7916 = vmatprep.subr.mxu0 0.0
        %7917 = vmatpush1.msra.mxu0 0.0
        %7918 = vmatprep.subr.mxu0 0.0
        %7919 = vmatpush1.msra.mxu0 0.0
        %7920 = vmatprep.subr.mxu0 0.0
        %7921 = vmatpush1.msra.mxu0 0.0
        %7922 = vmatprep.subr.mxu0 0.0
        %7923 = vmatpush1.msra.mxu0 0.0
        %7924 = vmatprep.subr.mxu0 0.0
        %7925 = vmatpush1.msra.mxu0 0.0
        %7926 = vmatprep.subr.mxu0 0.0
        %7927 = vmatpush1.msra.mxu0 0.0
        %7928 = vmatprep.subr.mxu0 0.0
        %7929 = vmatpush1.msra.mxu0 0.0
        %7930 = vmatprep.subr.mxu0 0.0
        %7931 = vmatpush1.msra.mxu0 0.0
        %7932 = vmatprep.subr.mxu0 0.0
        %7933 = vmatpush1.msra.mxu0 0.0
        %7934 = vmatprep.subr.mxu0 0.0
        %7935 = vmatpush1.msra.mxu0 0.0
        %7936 = vmatprep.subr.mxu0 0.0
        %7937 = vmatpush1.msra.mxu0 0.0
        %7938 = vmatprep.mubr.f32.mxu0 0.0
        %v7939 = vand.u32 %v7784, 4294901760
        %7940 = vmatmul.mubr.f32.gmra.mrb[0].mxu0 %v7939
        %v7941 = vpop.f32.mrb[0].mxu0
        %v7942 = vadd.f32 %v7860, %v7941
        %v7943 = vpop.f32.mrb[0].mxu0
        %v7944 = vadd.f32 %v7862, %v7943
        %7945 = vdwg.mxu0
        %v7946 = vand.u32 %v7780, 4294901760
        %v7947 = vsub.f32 %v7780, %v7946
        %7948 = vmatprep.subr.mxu0 %v7947
        %v7949 = vand.u32 %v7779, 4294901760
        %v7950 = vsub.f32 %v7779, %v7949
        %7951 = vmatpush1.msra.mxu0 %v7950
        %7952 = vmatprep.subr.mxu0 0.0
        %7953 = vmatpush1.msra.mxu0 0.0
        %7954 = vmatprep.subr.mxu0 0.0
        %7955 = vmatpush1.msra.mxu0 0.0
        %7956 = vmatprep.subr.mxu0 0.0
        %7957 = vmatpush1.msra.mxu0 0.0
        %7958 = vmatprep.subr.mxu0 0.0
        %7959 = vmatpush1.msra.mxu0 0.0
        %7960 = vmatprep.subr.mxu0 0.0
        %7961 = vmatpush1.msra.mxu0 0.0
        %7962 = vmatprep.subr.mxu0 0.0
        %7963 = vmatpush1.msra.mxu0 0.0
        %7964 = vmatprep.subr.mxu0 0.0
        %7965 = vmatpush1.msra.mxu0 0.0
        %7966 = vmatprep.subr.mxu0 0.0
        %7967 = vmatpush1.msra.mxu0 0.0
        %7968 = vmatprep.subr.mxu0 0.0
        %7969 = vmatpush1.msra.mxu0 0.0
        %7970 = vmatprep.subr.mxu0 0.0
        %7971 = vmatpush1.msra.mxu0 0.0
        %7972 = vmatprep.subr.mxu0 0.0
        %7973 = vmatpush1.msra.mxu0 0.0
        %7974 = vmatprep.subr.mxu0 0.0
        %7975 = vmatpush1.msra.mxu0 0.0
        %7976 = vmatprep.subr.mxu0 0.0
        %7977 = vmatpush1.msra.mxu0 0.0
        %7978 = vmatprep.subr.mxu0 0.0
        %7979 = vmatpush1.msra.mxu0 0.0
        %7980 = vmatprep.subr.mxu0 0.0
        %7981 = vmatpush1.msra.mxu0 0.0
        %7982 = vmatprep.subr.mxu0 0.0
        %7983 = vmatpush1.msra.mxu0 0.0
        %7984 = vmatprep.subr.mxu0 0.0
        %7985 = vmatpush1.msra.mxu0 0.0
        %7986 = vmatprep.subr.mxu0 0.0
        %7987 = vmatpush1.msra.mxu0 0.0
        %7988 = vmatprep.subr.mxu0 0.0
        %7989 = vmatpush1.msra.mxu0 0.0
        %7990 = vmatprep.subr.mxu0 0.0
        %7991 = vmatpush1.msra.mxu0 0.0
        %7992 = vmatprep.subr.mxu0 0.0
        %7993 = vmatpush1.msra.mxu0 0.0
        %7994 = vmatprep.subr.mxu0 0.0
        %7995 = vmatpush1.msra.mxu0 0.0
        %7996 = vmatprep.subr.mxu0 0.0
        %7997 = vmatpush1.msra.mxu0 0.0
        %7998 = vmatprep.subr.mxu0 0.0
        %7999 = vmatpush1.msra.mxu0 0.0
        %8000 = vmatprep.subr.mxu0 0.0
        %8001 = vmatpush1.msra.mxu0 0.0
        %8002 = vmatprep.subr.mxu0 0.0
        %8003 = vmatpush1.msra.mxu0 0.0
        %8004 = vmatprep.subr.mxu0 0.0
        %8005 = vmatpush1.msra.mxu0 0.0
        %8006 = vmatprep.subr.mxu0 0.0
        %8007 = vmatpush1.msra.mxu0 0.0
        %8008 = vmatprep.subr.mxu0 0.0
        %8009 = vmatpush1.msra.mxu0 0.0
        %8010 = vmatprep.subr.mxu0 0.0
        %8011 = vmatpush1.msra.mxu0 0.0
        %8012 = vmatprep.subr.mxu0 0.0
        %8013 = vmatpush1.msra.mxu0 0.0
        %8014 = vmatprep.mubr.f32.mxu0 0.0
        %v8015 = vand.u32 %v7784, 4294901760
        %v8016 = vsub.f32 %v7784, %v8015
        %8017 = vmatmul.mubr.f32.gmra.mrb[0].mxu0 %v8016
        %v8018 = vpop.f32.mrb[0].mxu0
        %v8019 = vadd.f32 %v7942, %v8018
        %v8020 = vpop.f32.mrb[0].mxu0
        %v8021 = vadd.f32 %v7944, %v8020
        %8022 = vdwg.mxu0
        %v8023 = vand.u32 %v7780, 4294901760
        %8024 = vmatprep.subr.mxu0 %v8023
        %v8025 = vand.u32 %v7779, 4294901760
        %8026 = vmatpush1.msra.mxu0 %v8025
        %8027 = vmatprep.subr.mxu0 0.0
        %8028 = vmatpush1.msra.mxu0 0.0
        %8029 = vmatprep.subr.mxu0 0.0
        %8030 = vmatpush1.msra.mxu0 0.0
        %8031 = vmatprep.subr.mxu0 0.0
        %8032 = vmatpush1.msra.mxu0 0.0
        %8033 = vmatprep.subr.mxu0 0.0
        %8034 = vmatpush1.msra.mxu0 0.0
        %8035 = vmatprep.subr.mxu0 0.0
        %8036 = vmatpush1.msra.mxu0 0.0
        %8037 = vmatprep.subr.mxu0 0.0
        %8038 = vmatpush1.msra.mxu0 0.0
        %8039 = vmatprep.subr.mxu0 0.0
        %8040 = vmatpush1.msra.mxu0 0.0
        %8041 = vmatprep.subr.mxu0 0.0
        %8042 = vmatpush1.msra.mxu0 0.0
        %8043 = vmatprep.subr.mxu0 0.0
        %8044 = vmatpush1.msra.mxu0 0.0
        %8045 = vmatprep.subr.mxu0 0.0
        %8046 = vmatpush1.msra.mxu0 0.0
        %8047 = vmatprep.subr.mxu0 0.0
        %8048 = vmatpush1.msra.mxu0 0.0
        %8049 = vmatprep.subr.mxu0 0.0
        %8050 = vmatpush1.msra.mxu0 0.0
        %8051 = vmatprep.subr.mxu0 0.0
        %8052 = vmatpush1.msra.mxu0 0.0
        %8053 = vmatprep.subr.mxu0 0.0
        %8054 = vmatpush1.msra.mxu0 0.0
        %8055 = vmatprep.subr.mxu0 0.0
        %8056 = vmatpush1.msra.mxu0 0.0
        %8057 = vmatprep.subr.mxu0 0.0
        %8058 = vmatpush1.msra.mxu0 0.0
        %8059 = vmatprep.subr.mxu0 0.0
        %8060 = vmatpush1.msra.mxu0 0.0
        %8061 = vmatprep.subr.mxu0 0.0
        %8062 = vmatpush1.msra.mxu0 0.0
        %8063 = vmatprep.subr.mxu0 0.0
        %8064 = vmatpush1.msra.mxu0 0.0
        %8065 = vmatprep.subr.mxu0 0.0
        %8066 = vmatpush1.msra.mxu0 0.0
        %8067 = vmatprep.subr.mxu0 0.0
        %8068 = vmatpush1.msra.mxu0 0.0
        %8069 = vmatprep.subr.mxu0 0.0
        %8070 = vmatpush1.msra.mxu0 0.0
        %8071 = vmatprep.subr.mxu0 0.0
        %8072 = vmatpush1.msra.mxu0 0.0
        %8073 = vmatprep.subr.mxu0 0.0
        %8074 = vmatpush1.msra.mxu0 0.0
        %8075 = vmatprep.subr.mxu0 0.0
        %8076 = vmatpush1.msra.mxu0 0.0
        %8077 = vmatprep.subr.mxu0 0.0
        %8078 = vmatpush1.msra.mxu0 0.0
        %8079 = vmatprep.subr.mxu0 0.0
        %8080 = vmatpush1.msra.mxu0 0.0
        %8081 = vmatprep.subr.mxu0 0.0
        %8082 = vmatpush1.msra.mxu0 0.0
        %8083 = vmatprep.subr.mxu0 0.0
        %8084 = vmatpush1.msra.mxu0 0.0
        %8085 = vmatprep.subr.mxu0 0.0
        %8086 = vmatpush1.msra.mxu0 0.0
        %8087 = vmatprep.subr.mxu0 0.0
        %8088 = vmatpush1.msra.mxu0 0.0
        %8089 = vmatprep.mubr.f32.mxu0 0.0
        %v8090 = vand.u32 %v7784, 4294901760
        %v8091 = vsub.f32 %v7784, %v8090
        %v8092 = vand.u32 %v8091, 4294901760
        %8093 = vmatmul.mubr.f32.gmra.mrb[0].mxu0 %v8092
        %v8094 = vpop.f32.mrb[0].mxu0
        %v8095 = vadd.f32 %v8019, %v8094
        %v8096 = vpop.f32.mrb[0].mxu0
        %v8097 = vadd.f32 %v8021, %v8096
        %8098 = vdwg.mxu0
        %v8099 = vand.u32 %v7780, 4294901760
        %v8100 = vsub.f32 %v7780, %v8099
        %v8101 = vand.u32 %v8100, 4294901760
        %8102 = vmatprep.subr.mxu0 %v8101
        %v8103 = vand.u32 %v7779, 4294901760
        %v8104 = vsub.f32 %v7779, %v8103
        %v8105 = vand.u32 %v8104, 4294901760
        %8106 = vmatpush1.msra.mxu0 %v8105
        %8107 = vmatprep.subr.mxu0 0.0
        %8108 = vmatpush1.msra.mxu0 0.0
        %8109 = vmatprep.subr.mxu0 0.0
        %8110 = vmatpush1.msra.mxu0 0.0
        %8111 = vmatprep.subr.mxu0 0.0
        %8112 = vmatpush1.msra.mxu0 0.0
        %8113 = vmatprep.subr.mxu0 0.0
        %8114 = vmatpush1.msra.mxu0 0.0
        %8115 = vmatprep.subr.mxu0 0.0
        %8116 = vmatpush1.msra.mxu0 0.0
        %8117 = vmatprep.subr.mxu0 0.0
        %8118 = vmatpush1.msra.mxu0 0.0
        %8119 = vmatprep.subr.mxu0 0.0
        %8120 = vmatpush1.msra.mxu0 0.0
        %8121 = vmatprep.subr.mxu0 0.0
        %8122 = vmatpush1.msra.mxu0 0.0
        %8123 = vmatprep.subr.mxu0 0.0
        %8124 = vmatpush1.msra.mxu0 0.0
        %8125 = vmatprep.subr.mxu0 0.0
        %8126 = vmatpush1.msra.mxu0 0.0
        %8127 = vmatprep.subr.mxu0 0.0
        %8128 = vmatpush1.msra.mxu0 0.0
        %8129 = vmatprep.subr.mxu0 0.0
        %8130 = vmatpush1.msra.mxu0 0.0
        %8131 = vmatprep.subr.mxu0 0.0
        %8132 = vmatpush1.msra.mxu0 0.0
        %8133 = vmatprep.subr.mxu0 0.0
        %8134 = vmatpush1.msra.mxu0 0.0
        %8135 = vmatprep.subr.mxu0 0.0
        %8136 = vmatpush1.msra.mxu0 0.0
        %8137 = vmatprep.subr.mxu0 0.0
        %8138 = vmatpush1.msra.mxu0 0.0
        %8139 = vmatprep.subr.mxu0 0.0
        %8140 = vmatpush1.msra.mxu0 0.0
        %8141 = vmatprep.subr.mxu0 0.0
        %8142 = vmatpush1.msra.mxu0 0.0
        %8143 = vmatprep.subr.mxu0 0.0
        %8144 = vmatpush1.msra.mxu0 0.0
        %8145 = vmatprep.subr.mxu0 0.0
        %8146 = vmatpush1.msra.mxu0 0.0
        %8147 = vmatprep.subr.mxu0 0.0
        %8148 = vmatpush1.msra.mxu0 0.0
        %8149 = vmatprep.subr.mxu0 0.0
        %8150 = vmatpush1.msra.mxu0 0.0
        %8151 = vmatprep.subr.mxu0 0.0
        %8152 = vmatpush1.msra.mxu0 0.0
        %8153 = vmatprep.subr.mxu0 0.0
        %8154 = vmatpush1.msra.mxu0 0.0
        %8155 = vmatprep.subr.mxu0 0.0
        %8156 = vmatpush1.msra.mxu0 0.0
        %8157 = vmatprep.subr.mxu0 0.0
        %8158 = vmatpush1.msra.mxu0 0.0
        %8159 = vmatprep.subr.mxu0 0.0
        %8160 = vmatpush1.msra.mxu0 0.0
        %8161 = vmatprep.subr.mxu0 0.0
        %8162 = vmatpush1.msra.mxu0 0.0
        %8163 = vmatprep.subr.mxu0 0.0
        %8164 = vmatpush1.msra.mxu0 0.0
        %8165 = vmatprep.subr.mxu0 0.0
        %8166 = vmatpush1.msra.mxu0 0.0
        %8167 = vmatprep.subr.mxu0 0.0
        %8168 = vmatpush1.msra.mxu0 0.0
        %8169 = vmatprep.mubr.f32.mxu0 0.0
        %v8170 = vand.u32 %v7784, 4294901760
        %8171 = vmatmul.mubr.f32.gmra.mrb[0].mxu0 %v8170
        %v8172 = vpop.f32.mrb[0].mxu0
        %v8173 = vadd.f32 %v8095, %v8172
        %v8174 = vpop.f32.mrb[0].mxu0
        %v8175 = vadd.f32 %v8097, %v8174
        %8176 = vdwg.mxu0
        %v8177 = vand.u32 %v7780, 4294901760
        %8178 = vmatprep.subr.mxu0 %v8177
        %v8179 = vand.u32 %v7779, 4294901760
        %8180 = vmatpush1.msra.mxu0 %v8179
        %8181 = vmatprep.subr.mxu0 0.0
        %8182 = vmatpush1.msra.mxu0 0.0
        %8183 = vmatprep.subr.mxu0 0.0
        %8184 = vmatpush1.msra.mxu0 0.0
        %8185 = vmatprep.subr.mxu0 0.0
        %8186 = vmatpush1.msra.mxu0 0.0
        %8187 = vmatprep.subr.mxu0 0.0
        %8188 = vmatpush1.msra.mxu0 0.0
        %8189 = vmatprep.subr.mxu0 0.0
        %8190 = vmatpush1.msra.mxu0 0.0
        %8191 = vmatprep.subr.mxu0 0.0
        %8192 = vmatpush1.msra.mxu0 0.0
        %8193 = vmatprep.subr.mxu0 0.0
        %8194 = vmatpush1.msra.mxu0 0.0
        %8195 = vmatprep.subr.mxu0 0.0
        %8196 = vmatpush1.msra.mxu0 0.0
        %8197 = vmatprep.subr.mxu0 0.0
        %8198 = vmatpush1.msra.mxu0 0.0
        %8199 = vmatprep.subr.mxu0 0.0
        %8200 = vmatpush1.msra.mxu0 0.0
        %8201 = vmatprep.subr.mxu0 0.0
        %8202 = vmatpush1.msra.mxu0 0.0
        %8203 = vmatprep.subr.mxu0 0.0
        %8204 = vmatpush1.msra.mxu0 0.0
        %8205 = vmatprep.subr.mxu0 0.0
        %8206 = vmatpush1.msra.mxu0 0.0
        %8207 = vmatprep.subr.mxu0 0.0
        %8208 = vmatpush1.msra.mxu0 0.0
        %8209 = vmatprep.subr.mxu0 0.0
        %8210 = vmatpush1.msra.mxu0 0.0
        %8211 = vmatprep.subr.mxu0 0.0
        %8212 = vmatpush1.msra.mxu0 0.0
        %8213 = vmatprep.subr.mxu0 0.0
        %8214 = vmatpush1.msra.mxu0 0.0
        %8215 = vmatprep.subr.mxu0 0.0
        %8216 = vmatpush1.msra.mxu0 0.0
        %8217 = vmatprep.subr.mxu0 0.0
        %8218 = vmatpush1.msra.mxu0 0.0
        %8219 = vmatprep.subr.mxu0 0.0
        %8220 = vmatpush1.msra.mxu0 0.0
        %8221 = vmatprep.subr.mxu0 0.0
        %8222 = vmatpush1.msra.mxu0 0.0
        %8223 = vmatprep.subr.mxu0 0.0
        %8224 = vmatpush1.msra.mxu0 0.0
        %8225 = vmatprep.subr.mxu0 0.0
        %8226 = vmatpush1.msra.mxu0 0.0
        %8227 = vmatprep.subr.mxu0 0.0
        %8228 = vmatpush1.msra.mxu0 0.0
        %8229 = vmatprep.subr.mxu0 0.0
        %8230 = vmatpush1.msra.mxu0 0.0
        %8231 = vmatprep.subr.mxu0 0.0
        %8232 = vmatpush1.msra.mxu0 0.0
        %8233 = vmatprep.subr.mxu0 0.0
        %8234 = vmatpush1.msra.mxu0 0.0
        %8235 = vmatprep.subr.mxu0 0.0
        %8236 = vmatpush1.msra.mxu0 0.0
        %8237 = vmatprep.subr.mxu0 0.0
        %8238 = vmatpush1.msra.mxu0 0.0
        %8239 = vmatprep.subr.mxu0 0.0
        %8240 = vmatpush1.msra.mxu0 0.0
        %8241 = vmatprep.subr.mxu0 0.0
        %8242 = vmatpush1.msra.mxu0 0.0
        %8243 = vmatprep.mubr.f32.mxu0 0.0
        %v8244 = vand.u32 %v7784, 4294901760
        %8245 = vmatmul.mubr.f32.gmra.mrb[0].mxu0 %v8244
        %v8246 = vpop.f32.mrb[0].mxu0
        %v8247 = vadd.f32 %v8173, %v8246
        %v8248 = vpop.f32.mrb[0].mxu0
        %v8249 = vadd.f32 %v8175, %v8248
        %8250 = vdwg.mxu0
        %v8251 = vadd.f32 %v7768, %v8247
        %v8252 = vadd.f32 %v7769, %v8249
        %8253 = vrot.lane.b32.xlu0 %v4883, 112
        %v8254 = vpop.permute.xlu0 %8253
        %8255 = vrot.lane.b32.xlu0 %v4884, 112
        %v8256 = vpop.permute.xlu0 %8255
        %v8257 = vsel %vm3842, %v8254, %v8256
        %v8261 = vsel %vm3842, %v8256, %v8254
        %v8262 = vmul.f32 %v8257, %v3854
        %v8263 = vmul.f32 %v8261, %v3858
        %s8264 = scalar_lea.vmem %s8, 56
        %v8265 = vld [vmem:[%s8264] sm:$0xff]
        %v8267 = vsel %vm4912, %v8265, 0
        %v8269 = vand.u32 %v8263, 4294901760
        %8270 = vmatprep.subr.mxu0 %v8269
        %v8271 = vand.u32 %v8262, 4294901760
        %8272 = vmatpush1.msra.mxu0 %v8271
        %8273 = vmatprep.subr.mxu0 0.0
        %8274 = vmatpush1.msra.mxu0 0.0
        %8275 = vmatprep.subr.mxu0 0.0
        %8276 = vmatpush1.msra.mxu0 0.0
        %8277 = vmatprep.subr.mxu0 0.0
        %8278 = vmatpush1.msra.mxu0 0.0
        %8279 = vmatprep.subr.mxu0 0.0
        %8280 = vmatpush1.msra.mxu0 0.0
        %8281 = vmatprep.subr.mxu0 0.0
        %8282 = vmatpush1.msra.mxu0 0.0
        %8283 = vmatprep.subr.mxu0 0.0
        %8284 = vmatpush1.msra.mxu0 0.0
        %8285 = vmatprep.subr.mxu0 0.0
        %8286 = vmatpush1.msra.mxu0 0.0
        %8287 = vmatprep.subr.mxu0 0.0
        %8288 = vmatpush1.msra.mxu0 0.0
        %8289 = vmatprep.subr.mxu0 0.0
        %8290 = vmatpush1.msra.mxu0 0.0
        %8291 = vmatprep.subr.mxu0 0.0
        %8292 = vmatpush1.msra.mxu0 0.0
        %8293 = vmatprep.subr.mxu0 0.0
        %8294 = vmatpush1.msra.mxu0 0.0
        %8295 = vmatprep.subr.mxu0 0.0
        %8296 = vmatpush1.msra.mxu0 0.0
        %8297 = vmatprep.subr.mxu0 0.0
        %8298 = vmatpush1.msra.mxu0 0.0
        %8299 = vmatprep.subr.mxu0 0.0
        %8300 = vmatpush1.msra.mxu0 0.0
        %8301 = vmatprep.subr.mxu0 0.0
        %8302 = vmatpush1.msra.mxu0 0.0
        %8303 = vmatprep.subr.mxu0 0.0
        %8304 = vmatpush1.msra.mxu0 0.0
        %8305 = vmatprep.subr.mxu0 0.0
        %8306 = vmatpush1.msra.mxu0 0.0
        %8307 = vmatprep.subr.mxu0 0.0
        %8308 = vmatpush1.msra.mxu0 0.0
        %8309 = vmatprep.subr.mxu0 0.0
        %8310 = vmatpush1.msra.mxu0 0.0
        %8311 = vmatprep.subr.mxu0 0.0
        %8312 = vmatpush1.msra.mxu0 0.0
        %8313 = vmatprep.subr.mxu0 0.0
        %8314 = vmatpush1.msra.mxu0 0.0
        %8315 = vmatprep.subr.mxu0 0.0
        %8316 = vmatpush1.msra.mxu0 0.0
        %8317 = vmatprep.subr.mxu0 0.0
        %8318 = vmatpush1.msra.mxu0 0.0
        %8319 = vmatprep.subr.mxu0 0.0
        %8320 = vmatpush1.msra.mxu0 0.0
        %8321 = vmatprep.subr.mxu0 0.0
        %8322 = vmatpush1.msra.mxu0 0.0
        %8323 = vmatprep.subr.mxu0 0.0
        %8324 = vmatpush1.msra.mxu0 0.0
        %8325 = vmatprep.subr.mxu0 0.0
        %8326 = vmatpush1.msra.mxu0 0.0
        %8327 = vmatprep.subr.mxu0 0.0
        %8328 = vmatpush1.msra.mxu0 0.0
        %8329 = vmatprep.subr.mxu0 0.0
        %8330 = vmatpush1.msra.mxu0 0.0
        %8331 = vmatprep.subr.mxu0 0.0
        %8332 = vmatpush1.msra.mxu0 0.0
        %8333 = vmatprep.subr.mxu0 0.0
        %8334 = vmatpush1.msra.mxu0 0.0
        %8335 = vmatprep.mubr.f32.mxu0 0.0
        %v8336 = vand.u32 %v8267, 4294901760
        %v8337 = vsub.f32 %v8267, %v8336
        %v8338 = vand.u32 %v8337, 4294901760
        %v8339 = vsub.f32 %v8337, %v8338
        %v8340 = vand.u32 %v8339, 4294901760
        %8341 = vmatmul.mubr.f32.gmra.mrb[0].mxu0 %v8340
        %v8342 = vpop.f32.mrb[0].mxu0
        %v8343 = vadd.f32 0.0, %v8342
        %v8344 = vpop.f32.mrb[0].mxu0
        %v8345 = vadd.f32 0.0, %v8344
        %8346 = vdwg.mxu0
        %v8347 = vand.u32 %v8263, 4294901760
        %v8348 = vsub.f32 %v8263, %v8347
        %v8349 = vand.u32 %v8348, 4294901760
        %v8350 = vsub.f32 %v8348, %v8349
        %v8351 = vand.u32 %v8350, 4294901760
        %8352 = vmatprep.subr.mxu0 %v8351
        %v8353 = vand.u32 %v8262, 4294901760
        %v8354 = vsub.f32 %v8262, %v8353
        %v8355 = vand.u32 %v8354, 4294901760
        %v8356 = vsub.f32 %v8354, %v8355
        %v8357 = vand.u32 %v8356, 4294901760
        %8358 = vmatpush1.msra.mxu0 %v8357
        %8359 = vmatprep.subr.mxu0 0.0
        %8360 = vmatpush1.msra.mxu0 0.0
        %8361 = vmatprep.subr.mxu0 0.0
        %8362 = vmatpush1.msra.mxu0 0.0
        %8363 = vmatprep.subr.mxu0 0.0
        %8364 = vmatpush1.msra.mxu0 0.0
        %8365 = vmatprep.subr.mxu0 0.0
        %8366 = vmatpush1.msra.mxu0 0.0
        %8367 = vmatprep.subr.mxu0 0.0
        %8368 = vmatpush1.msra.mxu0 0.0
        %8369 = vmatprep.subr.mxu0 0.0
        %8370 = vmatpush1.msra.mxu0 0.0
        %8371 = vmatprep.subr.mxu0 0.0
        %8372 = vmatpush1.msra.mxu0 0.0
        %8373 = vmatprep.subr.mxu0 0.0
        %8374 = vmatpush1.msra.mxu0 0.0
        %8375 = vmatprep.subr.mxu0 0.0
        %8376 = vmatpush1.msra.mxu0 0.0
        %8377 = vmatprep.subr.mxu0 0.0
        %8378 = vmatpush1.msra.mxu0 0.0
        %8379 = vmatprep.subr.mxu0 0.0
        %8380 = vmatpush1.msra.mxu0 0.0
        %8381 = vmatprep.subr.mxu0 0.0
        %8382 = vmatpush1.msra.mxu0 0.0
        %8383 = vmatprep.subr.mxu0 0.0
        %8384 = vmatpush1.msra.mxu0 0.0
        %8385 = vmatprep.subr.mxu0 0.0
        %8386 = vmatpush1.msra.mxu0 0.0
        %8387 = vmatprep.subr.mxu0 0.0
        %8388 = vmatpush1.msra.mxu0 0.0
        %8389 = vmatprep.subr.mxu0 0.0
        %8390 = vmatpush1.msra.mxu0 0.0
        %8391 = vmatprep.subr.mxu0 0.0
        %8392 = vmatpush1.msra.mxu0 0.0
        %8393 = vmatprep.subr.mxu0 0.0
        %8394 = vmatpush1.msra.mxu0 0.0
        %8395 = vmatprep.subr.mxu0 0.0
        %8396 = vmatpush1.msra.mxu0 0.0
        %8397 = vmatprep.subr.mxu0 0.0
        %8398 = vmatpush1.msra.mxu0 0.0
        %8399 = vmatprep.subr.mxu0 0.0
        %8400 = vmatpush1.msra.mxu0 0.0
        %8401 = vmatprep.subr.mxu0 0.0
        %8402 = vmatpush1.msra.mxu0 0.0
        %8403 = vmatprep.subr.mxu0 0.0
        %8404 = vmatpush1.msra.mxu0 0.0
        %8405 = vmatprep.subr.mxu0 0.0
        %8406 = vmatpush1.msra.mxu0 0.0
        %8407 = vmatprep.subr.mxu0 0.0
        %8408 = vmatpush1.msra.mxu0 0.0
        %8409 = vmatprep.subr.mxu0 0.0
        %8410 = vmatpush1.msra.mxu0 0.0
        %8411 = vmatprep.subr.mxu0 0.0
        %8412 = vmatpush1.msra.mxu0 0.0
        %8413 = vmatprep.subr.mxu0 0.0
        %8414 = vmatpush1.msra.mxu0 0.0
        %8415 = vmatprep.subr.mxu0 0.0
        %8416 = vmatpush1.msra.mxu0 0.0
        %8417 = vmatprep.subr.mxu0 0.0
        %8418 = vmatpush1.msra.mxu0 0.0
        %8419 = vmatprep.subr.mxu0 0.0
        %8420 = vmatpush1.msra.mxu0 0.0
        %8421 = vmatprep.mubr.f32.mxu0 0.0
        %v8422 = vand.u32 %v8267, 4294901760
        %8423 = vmatmul.mubr.f32.gmra.mrb[0].mxu0 %v8422
        %v8424 = vpop.f32.mrb[0].mxu0
        %v8425 = vadd.f32 %v8343, %v8424
        %v8426 = vpop.f32.mrb[0].mxu0
        %v8427 = vadd.f32 %v8345, %v8426
        %8428 = vdwg.mxu0
        %v8429 = vand.u32 %v8263, 4294901760
        %v8430 = vsub.f32 %v8263, %v8429
        %8431 = vmatprep.subr.mxu0 %v8430
        %v8432 = vand.u32 %v8262, 4294901760
        %v8433 = vsub.f32 %v8262, %v8432
        %8434 = vmatpush1.msra.mxu0 %v8433
        %8435 = vmatprep.subr.mxu0 0.0
        %8436 = vmatpush1.msra.mxu0 0.0
        %8437 = vmatprep.subr.mxu0 0.0
        %8438 = vmatpush1.msra.mxu0 0.0
        %8439 = vmatprep.subr.mxu0 0.0
        %8440 = vmatpush1.msra.mxu0 0.0
        %8441 = vmatprep.subr.mxu0 0.0
        %8442 = vmatpush1.msra.mxu0 0.0
        %8443 = vmatprep.subr.mxu0 0.0
        %8444 = vmatpush1.msra.mxu0 0.0
        %8445 = vmatprep.subr.mxu0 0.0
        %8446 = vmatpush1.msra.mxu0 0.0
        %8447 = vmatprep.subr.mxu0 0.0
        %8448 = vmatpush1.msra.mxu0 0.0
        %8449 = vmatprep.subr.mxu0 0.0
        %8450 = vmatpush1.msra.mxu0 0.0
        %8451 = vmatprep.subr.mxu0 0.0
        %8452 = vmatpush1.msra.mxu0 0.0
        %8453 = vmatprep.subr.mxu0 0.0
        %8454 = vmatpush1.msra.mxu0 0.0
        %8455 = vmatprep.subr.mxu0 0.0
        %8456 = vmatpush1.msra.mxu0 0.0
        %8457 = vmatprep.subr.mxu0 0.0
        %8458 = vmatpush1.msra.mxu0 0.0
        %8459 = vmatprep.subr.mxu0 0.0
        %8460 = vmatpush1.msra.mxu0 0.0
        %8461 = vmatprep.subr.mxu0 0.0
        %8462 = vmatpush1.msra.mxu0 0.0
        %8463 = vmatprep.subr.mxu0 0.0
        %8464 = vmatpush1.msra.mxu0 0.0
        %8465 = vmatprep.subr.mxu0 0.0
        %8466 = vmatpush1.msra.mxu0 0.0
        %8467 = vmatprep.subr.mxu0 0.0
        %8468 = vmatpush1.msra.mxu0 0.0
        %8469 = vmatprep.subr.mxu0 0.0
        %8470 = vmatpush1.msra.mxu0 0.0
        %8471 = vmatprep.subr.mxu0 0.0
        %8472 = vmatpush1.msra.mxu0 0.0
        %8473 = vmatprep.subr.mxu0 0.0
        %8474 = vmatpush1.msra.mxu0 0.0
        %8475 = vmatprep.subr.mxu0 0.0
        %8476 = vmatpush1.msra.mxu0 0.0
        %8477 = vmatprep.subr.mxu0 0.0
        %8478 = vmatpush1.msra.mxu0 0.0
        %8479 = vmatprep.subr.mxu0 0.0
        %8480 = vmatpush1.msra.mxu0 0.0
        %8481 = vmatprep.subr.mxu0 0.0
        %8482 = vmatpush1.msra.mxu0 0.0
        %8483 = vmatprep.subr.mxu0 0.0
        %8484 = vmatpush1.msra.mxu0 0.0
        %8485 = vmatprep.subr.mxu0 0.0
        %8486 = vmatpush1.msra.mxu0 0.0
        %8487 = vmatprep.subr.mxu0 0.0
        %8488 = vmatpush1.msra.mxu0 0.0
        %8489 = vmatprep.subr.mxu0 0.0
        %8490 = vmatpush1.msra.mxu0 0.0
        %8491 = vmatprep.subr.mxu0 0.0
        %8492 = vmatpush1.msra.mxu0 0.0
        %8493 = vmatprep.subr.mxu0 0.0
        %8494 = vmatpush1.msra.mxu0 0.0
        %8495 = vmatprep.subr.mxu0 0.0
        %8496 = vmatpush1.msra.mxu0 0.0
        %8497 = vmatprep.mubr.f32.mxu0 0.0
        %v8498 = vand.u32 %v8267, 4294901760
        %v8499 = vsub.f32 %v8267, %v8498
        %8500 = vmatmul.mubr.f32.gmra.mrb[0].mxu0 %v8499
        %v8501 = vpop.f32.mrb[0].mxu0
        %v8502 = vadd.f32 %v8425, %v8501
        %v8503 = vpop.f32.mrb[0].mxu0
        %v8504 = vadd.f32 %v8427, %v8503
        %8505 = vdwg.mxu0
        %v8506 = vand.u32 %v8263, 4294901760
        %8507 = vmatprep.subr.mxu0 %v8506
        %v8508 = vand.u32 %v8262, 4294901760
        %8509 = vmatpush1.msra.mxu0 %v8508
        %8510 = vmatprep.subr.mxu0 0.0
        %8511 = vmatpush1.msra.mxu0 0.0
        %8512 = vmatprep.subr.mxu0 0.0
        %8513 = vmatpush1.msra.mxu0 0.0
        %8514 = vmatprep.subr.mxu0 0.0
        %8515 = vmatpush1.msra.mxu0 0.0
        %8516 = vmatprep.subr.mxu0 0.0
        %8517 = vmatpush1.msra.mxu0 0.0
        %8518 = vmatprep.subr.mxu0 0.0
        %8519 = vmatpush1.msra.mxu0 0.0
        %8520 = vmatprep.subr.mxu0 0.0
        %8521 = vmatpush1.msra.mxu0 0.0
        %8522 = vmatprep.subr.mxu0 0.0
        %8523 = vmatpush1.msra.mxu0 0.0
        %8524 = vmatprep.subr.mxu0 0.0
        %8525 = vmatpush1.msra.mxu0 0.0
        %8526 = vmatprep.subr.mxu0 0.0
        %8527 = vmatpush1.msra.mxu0 0.0
        %8528 = vmatprep.subr.mxu0 0.0
        %8529 = vmatpush1.msra.mxu0 0.0
        %8530 = vmatprep.subr.mxu0 0.0
        %8531 = vmatpush1.msra.mxu0 0.0
        %8532 = vmatprep.subr.mxu0 0.0
        %8533 = vmatpush1.msra.mxu0 0.0
        %8534 = vmatprep.subr.mxu0 0.0
        %8535 = vmatpush1.msra.mxu0 0.0
        %8536 = vmatprep.subr.mxu0 0.0
        %8537 = vmatpush1.msra.mxu0 0.0
        %8538 = vmatprep.subr.mxu0 0.0
        %8539 = vmatpush1.msra.mxu0 0.0
        %8540 = vmatprep.subr.mxu0 0.0
        %8541 = vmatpush1.msra.mxu0 0.0
        %8542 = vmatprep.subr.mxu0 0.0
        %8543 = vmatpush1.msra.mxu0 0.0
        %8544 = vmatprep.subr.mxu0 0.0
        %8545 = vmatpush1.msra.mxu0 0.0
        %8546 = vmatprep.subr.mxu0 0.0
        %8547 = vmatpush1.msra.mxu0 0.0
        %8548 = vmatprep.subr.mxu0 0.0
        %8549 = vmatpush1.msra.mxu0 0.0
        %8550 = vmatprep.subr.mxu0 0.0
        %8551 = vmatpush1.msra.mxu0 0.0
        %8552 = vmatprep.subr.mxu0 0.0
        %8553 = vmatpush1.msra.mxu0 0.0
        %8554 = vmatprep.subr.mxu0 0.0
        %8555 = vmatpush1.msra.mxu0 0.0
        %8556 = vmatprep.subr.mxu0 0.0
        %8557 = vmatpush1.msra.mxu0 0.0
        %8558 = vmatprep.subr.mxu0 0.0
        %8559 = vmatpush1.msra.mxu0 0.0
        %8560 = vmatprep.subr.mxu0 0.0
        %8561 = vmatpush1.msra.mxu0 0.0
        %8562 = vmatprep.subr.mxu0 0.0
        %8563 = vmatpush1.msra.mxu0 0.0
        %8564 = vmatprep.subr.mxu0 0.0
        %8565 = vmatpush1.msra.mxu0 0.0
        %8566 = vmatprep.subr.mxu0 0.0
        %8567 = vmatpush1.msra.mxu0 0.0
        %8568 = vmatprep.subr.mxu0 0.0
        %8569 = vmatpush1.msra.mxu0 0.0
        %8570 = vmatprep.subr.mxu0 0.0
        %8571 = vmatpush1.msra.mxu0 0.0
        %8572 = vmatprep.mubr.f32.mxu0 0.0
        %v8573 = vand.u32 %v8267, 4294901760
        %v8574 = vsub.f32 %v8267, %v8573
        %v8575 = vand.u32 %v8574, 4294901760
        %8576 = vmatmul.mubr.f32.gmra.mrb[0].mxu0 %v8575
        %v8577 = vpop.f32.mrb[0].mxu0
        %v8578 = vadd.f32 %v8502, %v8577
        %v8579 = vpop.f32.mrb[0].mxu0
        %v8580 = vadd.f32 %v8504, %v8579
        %8581 = vdwg.mxu0
        %v8582 = vand.u32 %v8263, 4294901760
        %v8583 = vsub.f32 %v8263, %v8582
        %v8584 = vand.u32 %v8583, 4294901760
        %8585 = vmatprep.subr.mxu0 %v8584
        %v8586 = vand.u32 %v8262, 4294901760
        %v8587 = vsub.f32 %v8262, %v8586
        %v8588 = vand.u32 %v8587, 4294901760
        %8589 = vmatpush1.msra.mxu0 %v8588
        %8590 = vmatprep.subr.mxu0 0.0
        %8591 = vmatpush1.msra.mxu0 0.0
        %8592 = vmatprep.subr.mxu0 0.0
        %8593 = vmatpush1.msra.mxu0 0.0
        %8594 = vmatprep.subr.mxu0 0.0
        %8595 = vmatpush1.msra.mxu0 0.0
        %8596 = vmatprep.subr.mxu0 0.0
        %8597 = vmatpush1.msra.mxu0 0.0
        %8598 = vmatprep.subr.mxu0 0.0
        %8599 = vmatpush1.msra.mxu0 0.0
        %8600 = vmatprep.subr.mxu0 0.0
        %8601 = vmatpush1.msra.mxu0 0.0
        %8602 = vmatprep.subr.mxu0 0.0
        %8603 = vmatpush1.msra.mxu0 0.0
        %8604 = vmatprep.subr.mxu0 0.0
        %8605 = vmatpush1.msra.mxu0 0.0
        %8606 = vmatprep.subr.mxu0 0.0
        %8607 = vmatpush1.msra.mxu0 0.0
        %8608 = vmatprep.subr.mxu0 0.0
        %8609 = vmatpush1.msra.mxu0 0.0
        %8610 = vmatprep.subr.mxu0 0.0
        %8611 = vmatpush1.msra.mxu0 0.0
        %8612 = vmatprep.subr.mxu0 0.0
        %8613 = vmatpush1.msra.mxu0 0.0
        %8614 = vmatprep.subr.mxu0 0.0
        %8615 = vmatpush1.msra.mxu0 0.0
        %8616 = vmatprep.subr.mxu0 0.0
        %8617 = vmatpush1.msra.mxu0 0.0
        %8618 = vmatprep.subr.mxu0 0.0
        %8619 = vmatpush1.msra.mxu0 0.0
        %8620 = vmatprep.subr.mxu0 0.0
        %8621 = vmatpush1.msra.mxu0 0.0
        %8622 = vmatprep.subr.mxu0 0.0
        %8623 = vmatpush1.msra.mxu0 0.0
        %8624 = vmatprep.subr.mxu0 0.0
        %8625 = vmatpush1.msra.mxu0 0.0
        %8626 = vmatprep.subr.mxu0 0.0
        %8627 = vmatpush1.msra.mxu0 0.0
        %8628 = vmatprep.subr.mxu0 0.0
        %8629 = vmatpush1.msra.mxu0 0.0
        %8630 = vmatprep.subr.mxu0 0.0
        %8631 = vmatpush1.msra.mxu0 0.0
        %8632 = vmatprep.subr.mxu0 0.0
        %8633 = vmatpush1.msra.mxu0 0.0
        %8634 = vmatprep.subr.mxu0 0.0
        %8635 = vmatpush1.msra.mxu0 0.0
        %8636 = vmatprep.subr.mxu0 0.0
        %8637 = vmatpush1.msra.mxu0 0.0
        %8638 = vmatprep.subr.mxu0 0.0
        %8639 = vmatpush1.msra.mxu0 0.0
        %8640 = vmatprep.subr.mxu0 0.0
        %8641 = vmatpush1.msra.mxu0 0.0
        %8642 = vmatprep.subr.mxu0 0.0
        %8643 = vmatpush1.msra.mxu0 0.0
        %8644 = vmatprep.subr.mxu0 0.0
        %8645 = vmatpush1.msra.mxu0 0.0
        %8646 = vmatprep.subr.mxu0 0.0
        %8647 = vmatpush1.msra.mxu0 0.0
        %8648 = vmatprep.subr.mxu0 0.0
        %8649 = vmatpush1.msra.mxu0 0.0
        %8650 = vmatprep.subr.mxu0 0.0
        %8651 = vmatpush1.msra.mxu0 0.0
        %8652 = vmatprep.mubr.f32.mxu0 0.0
        %v8653 = vand.u32 %v8267, 4294901760
        %8654 = vmatmul.mubr.f32.gmra.mrb[0].mxu0 %v8653
        %v8655 = vpop.f32.mrb[0].mxu0
        %v8656 = vadd.f32 %v8578, %v8655
        %v8657 = vpop.f32.mrb[0].mxu0
        %v8658 = vadd.f32 %v8580, %v8657
        %8659 = vdwg.mxu0
        %v8660 = vand.u32 %v8263, 4294901760
        %8661 = vmatprep.subr.mxu0 %v8660
        %v8662 = vand.u32 %v8262, 4294901760
        %8663 = vmatpush1.msra.mxu0 %v8662
        %8664 = vmatprep.subr.mxu0 0.0
        %8665 = vmatpush1.msra.mxu0 0.0
        %8666 = vmatprep.subr.mxu0 0.0
        %8667 = vmatpush1.msra.mxu0 0.0
        %8668 = vmatprep.subr.mxu0 0.0
        %8669 = vmatpush1.msra.mxu0 0.0
        %8670 = vmatprep.subr.mxu0 0.0
        %8671 = vmatpush1.msra.mxu0 0.0
        %8672 = vmatprep.subr.mxu0 0.0
        %8673 = vmatpush1.msra.mxu0 0.0
        %8674 = vmatprep.subr.mxu0 0.0
        %8675 = vmatpush1.msra.mxu0 0.0
        %8676 = vmatprep.subr.mxu0 0.0
        %8677 = vmatpush1.msra.mxu0 0.0
        %8678 = vmatprep.subr.mxu0 0.0
        %8679 = vmatpush1.msra.mxu0 0.0
        %8680 = vmatprep.subr.mxu0 0.0
        %8681 = vmatpush1.msra.mxu0 0.0
        %8682 = vmatprep.subr.mxu0 0.0
        %8683 = vmatpush1.msra.mxu0 0.0
        %8684 = vmatprep.subr.mxu0 0.0
        %8685 = vmatpush1.msra.mxu0 0.0
        %8686 = vmatprep.subr.mxu0 0.0
        %8687 = vmatpush1.msra.mxu0 0.0
        %8688 = vmatprep.subr.mxu0 0.0
        %8689 = vmatpush1.msra.mxu0 0.0
        %8690 = vmatprep.subr.mxu0 0.0
        %8691 = vmatpush1.msra.mxu0 0.0
        %8692 = vmatprep.subr.mxu0 0.0
        %8693 = vmatpush1.msra.mxu0 0.0
        %8694 = vmatprep.subr.mxu0 0.0
        %8695 = vmatpush1.msra.mxu0 0.0
        %8696 = vmatprep.subr.mxu0 0.0
        %8697 = vmatpush1.msra.mxu0 0.0
        %8698 = vmatprep.subr.mxu0 0.0
        %8699 = vmatpush1.msra.mxu0 0.0
        %8700 = vmatprep.subr.mxu0 0.0
        %8701 = vmatpush1.msra.mxu0 0.0
        %8702 = vmatprep.subr.mxu0 0.0
        %8703 = vmatpush1.msra.mxu0 0.0
        %8704 = vmatprep.subr.mxu0 0.0
        %8705 = vmatpush1.msra.mxu0 0.0
        %8706 = vmatprep.subr.mxu0 0.0
        %8707 = vmatpush1.msra.mxu0 0.0
        %8708 = vmatprep.subr.mxu0 0.0
        %8709 = vmatpush1.msra.mxu0 0.0
        %8710 = vmatprep.subr.mxu0 0.0
        %8711 = vmatpush1.msra.mxu0 0.0
        %8712 = vmatprep.subr.mxu0 0.0
        %8713 = vmatpush1.msra.mxu0 0.0
        %8714 = vmatprep.subr.mxu0 0.0
        %8715 = vmatpush1.msra.mxu0 0.0
        %8716 = vmatprep.subr.mxu0 0.0
        %8717 = vmatpush1.msra.mxu0 0.0
        %8718 = vmatprep.subr.mxu0 0.0
        %8719 = vmatpush1.msra.mxu0 0.0
        %8720 = vmatprep.subr.mxu0 0.0
        %8721 = vmatpush1.msra.mxu0 0.0
        %8722 = vmatprep.subr.mxu0 0.0
        %8723 = vmatpush1.msra.mxu0 0.0
        %8724 = vmatprep.subr.mxu0 0.0
        %8725 = vmatpush1.msra.mxu0 0.0
        %8726 = vmatprep.mubr.f32.mxu0 0.0
        %v8727 = vand.u32 %v8267, 4294901760
        %8728 = vmatmul.mubr.f32.gmra.mrb[0].mxu0 %v8727
        %v8729 = vpop.f32.mrb[0].mxu0
        %v8730 = vadd.f32 %v8656, %v8729
        %v8731 = vpop.f32.mrb[0].mxu0
        %v8732 = vadd.f32 %v8658, %v8731
        %8733 = vdwg.mxu0
        %v8734 = vadd.f32 %v8251, %v8730
        %v8735 = vadd.f32 %v8252, %v8732
        %8736 = vrot.lane.b32.xlu0 %v4883, 111
        %v8737 = vpop.permute.xlu0 %8736
        %8738 = vrot.lane.b32.xlu0 %v4884, 111
        %v8739 = vpop.permute.xlu0 %8738
        %v8740 = vsel %vm4345, %v8737, %v8739
        %v8744 = vsel %vm4345, %v8739, %v8737
        %v8745 = vmul.f32 %v8740, %v4357
        %v8746 = vmul.f32 %v8744, %v4361
        %s8747 = scalar_lea.vmem %s8, 64
        %v8748 = vld [vmem:[%s8747] sm:$0xff]
        %v8750 = vsel %vm4912, %v8748, 0
        %v8752 = vand.u32 %v8746, 4294901760
        %8753 = vmatprep.subr.mxu0 %v8752
        %v8754 = vand.u32 %v8745, 4294901760
        %8755 = vmatpush1.msra.mxu0 %v8754
        %8756 = vmatprep.subr.mxu0 0.0
        %8757 = vmatpush1.msra.mxu0 0.0
        %8758 = vmatprep.subr.mxu0 0.0
        %8759 = vmatpush1.msra.mxu0 0.0
        %8760 = vmatprep.subr.mxu0 0.0
        %8761 = vmatpush1.msra.mxu0 0.0
        %8762 = vmatprep.subr.mxu0 0.0
        %8763 = vmatpush1.msra.mxu0 0.0
        %8764 = vmatprep.subr.mxu0 0.0
        %8765 = vmatpush1.msra.mxu0 0.0
        %8766 = vmatprep.subr.mxu0 0.0
        %8767 = vmatpush1.msra.mxu0 0.0
        %8768 = vmatprep.subr.mxu0 0.0
        %8769 = vmatpush1.msra.mxu0 0.0
        %8770 = vmatprep.subr.mxu0 0.0
        %8771 = vmatpush1.msra.mxu0 0.0
        %8772 = vmatprep.subr.mxu0 0.0
        %8773 = vmatpush1.msra.mxu0 0.0
        %8774 = vmatprep.subr.mxu0 0.0
        %8775 = vmatpush1.msra.mxu0 0.0
        %8776 = vmatprep.subr.mxu0 0.0
        %8777 = vmatpush1.msra.mxu0 0.0
        %8778 = vmatprep.subr.mxu0 0.0
        %8779 = vmatpush1.msra.mxu0 0.0
        %8780 = vmatprep.subr.mxu0 0.0
        %8781 = vmatpush1.msra.mxu0 0.0
        %8782 = vmatprep.subr.mxu0 0.0
        %8783 = vmatpush1.msra.mxu0 0.0
        %8784 = vmatprep.subr.mxu0 0.0
        %8785 = vmatpush1.msra.mxu0 0.0
        %8786 = vmatprep.subr.mxu0 0.0
        %8787 = vmatpush1.msra.mxu0 0.0
        %8788 = vmatprep.subr.mxu0 0.0
        %8789 = vmatpush1.msra.mxu0 0.0
        %8790 = vmatprep.subr.mxu0 0.0
        %8791 = vmatpush1.msra.mxu0 0.0
        %8792 = vmatprep.subr.mxu0 0.0
        %8793 = vmatpush1.msra.mxu0 0.0
        %8794 = vmatprep.subr.mxu0 0.0
        %8795 = vmatpush1.msra.mxu0 0.0
        %8796 = vmatprep.subr.mxu0 0.0
        %8797 = vmatpush1.msra.mxu0 0.0
        %8798 = vmatprep.subr.mxu0 0.0
        %8799 = vmatpush1.msra.mxu0 0.0
        %8800 = vmatprep.subr.mxu0 0.0
        %8801 = vmatpush1.msra.mxu0 0.0
        %8802 = vmatprep.subr.mxu0 0.0
        %8803 = vmatpush1.msra.mxu0 0.0
        %8804 = vmatprep.subr.mxu0 0.0
        %8805 = vmatpush1.msra.mxu0 0.0
        %8806 = vmatprep.subr.mxu0 0.0
        %8807 = vmatpush1.msra.mxu0 0.0
        %8808 = vmatprep.subr.mxu0 0.0
        %8809 = vmatpush1.msra.mxu0 0.0
        %8810 = vmatprep.subr.mxu0 0.0
        %8811 = vmatpush1.msra.mxu0 0.0
        %8812 = vmatprep.subr.mxu0 0.0
        %8813 = vmatpush1.msra.mxu0 0.0
        %8814 = vmatprep.subr.mxu0 0.0
        %8815 = vmatpush1.msra.mxu0 0.0
        %8816 = vmatprep.subr.mxu0 0.0
        %8817 = vmatpush1.msra.mxu0 0.0
        %8818 = vmatprep.mubr.f32.mxu0 0.0
        %v8819 = vand.u32 %v8750, 4294901760
        %v8820 = vsub.f32 %v8750, %v8819
        %v8821 = vand.u32 %v8820, 4294901760
        %v8822 = vsub.f32 %v8820, %v8821
        %v8823 = vand.u32 %v8822, 4294901760
        %8824 = vmatmul.mubr.f32.gmra.mrb[0].mxu0 %v8823
        %v8825 = vpop.f32.mrb[0].mxu0
        %v8826 = vadd.f32 0.0, %v8825
        %v8827 = vpop.f32.mrb[0].mxu0
        %v8828 = vadd.f32 0.0, %v8827
        %8829 = vdwg.mxu0
        %v8830 = vand.u32 %v8746, 4294901760
        %v8831 = vsub.f32 %v8746, %v8830
        %v8832 = vand.u32 %v8831, 4294901760
        %v8833 = vsub.f32 %v8831, %v8832
        %v8834 = vand.u32 %v8833, 4294901760
        %8835 = vmatprep.subr.mxu0 %v8834
        %v8836 = vand.u32 %v8745, 4294901760
        %v8837 = vsub.f32 %v8745, %v8836
        %v8838 = vand.u32 %v8837, 4294901760
        %v8839 = vsub.f32 %v8837, %v8838
        %v8840 = vand.u32 %v8839, 4294901760
        %8841 = vmatpush1.msra.mxu0 %v8840
        %8842 = vmatprep.subr.mxu0 0.0
        %8843 = vmatpush1.msra.mxu0 0.0
        %8844 = vmatprep.subr.mxu0 0.0
        %8845 = vmatpush1.msra.mxu0 0.0
        %8846 = vmatprep.subr.mxu0 0.0
        %8847 = vmatpush1.msra.mxu0 0.0
        %8848 = vmatprep.subr.mxu0 0.0
        %8849 = vmatpush1.msra.mxu0 0.0
        %8850 = vmatprep.subr.mxu0 0.0
        %8851 = vmatpush1.msra.mxu0 0.0
        %8852 = vmatprep.subr.mxu0 0.0
        %8853 = vmatpush1.msra.mxu0 0.0
        %8854 = vmatprep.subr.mxu0 0.0
        %8855 = vmatpush1.msra.mxu0 0.0
        %8856 = vmatprep.subr.mxu0 0.0
        %8857 = vmatpush1.msra.mxu0 0.0
        %8858 = vmatprep.subr.mxu0 0.0
        %8859 = vmatpush1.msra.mxu0 0.0
        %8860 = vmatprep.subr.mxu0 0.0
        %8861 = vmatpush1.msra.mxu0 0.0
        %8862 = vmatprep.subr.mxu0 0.0
        %8863 = vmatpush1.msra.mxu0 0.0
        %8864 = vmatprep.subr.mxu0 0.0
        %8865 = vmatpush1.msra.mxu0 0.0
        %8866 = vmatprep.subr.mxu0 0.0
        %8867 = vmatpush1.msra.mxu0 0.0
        %8868 = vmatprep.subr.mxu0 0.0
        %8869 = vmatpush1.msra.mxu0 0.0
        %8870 = vmatprep.subr.mxu0 0.0
        %8871 = vmatpush1.msra.mxu0 0.0
        %8872 = vmatprep.subr.mxu0 0.0
        %8873 = vmatpush1.msra.mxu0 0.0
        %8874 = vmatprep.subr.mxu0 0.0
        %8875 = vmatpush1.msra.mxu0 0.0
        %8876 = vmatprep.subr.mxu0 0.0
        %8877 = vmatpush1.msra.mxu0 0.0
        %8878 = vmatprep.subr.mxu0 0.0
        %8879 = vmatpush1.msra.mxu0 0.0
        %8880 = vmatprep.subr.mxu0 0.0
        %8881 = vmatpush1.msra.mxu0 0.0
        %8882 = vmatprep.subr.mxu0 0.0
        %8883 = vmatpush1.msra.mxu0 0.0
        %8884 = vmatprep.subr.mxu0 0.0
        %8885 = vmatpush1.msra.mxu0 0.0
        %8886 = vmatprep.subr.mxu0 0.0
        %8887 = vmatpush1.msra.mxu0 0.0
        %8888 = vmatprep.subr.mxu0 0.0
        %8889 = vmatpush1.msra.mxu0 0.0
        %8890 = vmatprep.subr.mxu0 0.0
        %8891 = vmatpush1.msra.mxu0 0.0
        %8892 = vmatprep.subr.mxu0 0.0
        %8893 = vmatpush1.msra.mxu0 0.0
        %8894 = vmatprep.subr.mxu0 0.0
        %8895 = vmatpush1.msra.mxu0 0.0
        %8896 = vmatprep.subr.mxu0 0.0
        %8897 = vmatpush1.msra.mxu0 0.0
        %8898 = vmatprep.subr.mxu0 0.0
        %8899 = vmatpush1.msra.mxu0 0.0
        %8900 = vmatprep.subr.mxu0 0.0
        %8901 = vmatpush1.msra.mxu0 0.0
        %8902 = vmatprep.subr.mxu0 0.0
        %8903 = vmatpush1.msra.mxu0 0.0
        %8904 = vmatprep.mubr.f32.mxu0 0.0
        %v8905 = vand.u32 %v8750, 4294901760
        %8906 = vmatmul.mubr.f32.gmra.mrb[0].mxu0 %v8905
        %v8907 = vpop.f32.mrb[0].mxu0
        %v8908 = vadd.f32 %v8826, %v8907
        %v8909 = vpop.f32.mrb[0].mxu0
        %v8910 = vadd.f32 %v8828, %v8909
        %8911 = vdwg.mxu0
        %v8912 = vand.u32 %v8746, 4294901760
        %v8913 = vsub.f32 %v8746, %v8912
        %8914 = vmatprep.subr.mxu0 %v8913
        %v8915 = vand.u32 %v8745, 4294901760
        %v8916 = vsub.f32 %v8745, %v8915
        %8917 = vmatpush1.msra.mxu0 %v8916
        %8918 = vmatprep.subr.mxu0 0.0
        %8919 = vmatpush1.msra.mxu0 0.0
        %8920 = vmatprep.subr.mxu0 0.0
        %8921 = vmatpush1.msra.mxu0 0.0
        %8922 = vmatprep.subr.mxu0 0.0
        %8923 = vmatpush1.msra.mxu0 0.0
        %8924 = vmatprep.subr.mxu0 0.0
        %8925 = vmatpush1.msra.mxu0 0.0
        %8926 = vmatprep.subr.mxu0 0.0
        %8927 = vmatpush1.msra.mxu0 0.0
        %8928 = vmatprep.subr.mxu0 0.0
        %8929 = vmatpush1.msra.mxu0 0.0
        %8930 = vmatprep.subr.mxu0 0.0
        %8931 = vmatpush1.msra.mxu0 0.0
        %8932 = vmatprep.subr.mxu0 0.0
        %8933 = vmatpush1.msra.mxu0 0.0
        %8934 = vmatprep.subr.mxu0 0.0
        %8935 = vmatpush1.msra.mxu0 0.0
        %8936 = vmatprep.subr.mxu0 0.0
        %8937 = vmatpush1.msra.mxu0 0.0
        %8938 = vmatprep.subr.mxu0 0.0
        %8939 = vmatpush1.msra.mxu0 0.0
        %8940 = vmatprep.subr.mxu0 0.0
        %8941 = vmatpush1.msra.mxu0 0.0
        %8942 = vmatprep.subr.mxu0 0.0
        %8943 = vmatpush1.msra.mxu0 0.0
        %8944 = vmatprep.subr.mxu0 0.0
        %8945 = vmatpush1.msra.mxu0 0.0
        %8946 = vmatprep.subr.mxu0 0.0
        %8947 = vmatpush1.msra.mxu0 0.0
        %8948 = vmatprep.subr.mxu0 0.0
        %8949 = vmatpush1.msra.mxu0 0.0
        %8950 = vmatprep.subr.mxu0 0.0
        %8951 = vmatpush1.msra.mxu0 0.0
        %8952 = vmatprep.subr.mxu0 0.0
        %8953 = vmatpush1.msra.mxu0 0.0
        %8954 = vmatprep.subr.mxu0 0.0
        %8955 = vmatpush1.msra.mxu0 0.0
        %8956 = vmatprep.subr.mxu0 0.0
        %8957 = vmatpush1.msra.mxu0 0.0
        %8958 = vmatprep.subr.mxu0 0.0
        %8959 = vmatpush1.msra.mxu0 0.0
        %8960 = vmatprep.subr.mxu0 0.0
        %8961 = vmatpush1.msra.mxu0 0.0
        %8962 = vmatprep.subr.mxu0 0.0
        %8963 = vmatpush1.msra.mxu0 0.0
        %8964 = vmatprep.subr.mxu0 0.0
        %8965 = vmatpush1.msra.mxu0 0.0
        %8966 = vmatprep.subr.mxu0 0.0
        %8967 = vmatpush1.msra.mxu0 0.0
        %8968 = vmatprep.subr.mxu0 0.0
        %8969 = vmatpush1.msra.mxu0 0.0
        %8970 = vmatprep.subr.mxu0 0.0
        %8971 = vmatpush1.msra.mxu0 0.0
        %8972 = vmatprep.subr.mxu0 0.0
        %8973 = vmatpush1.msra.mxu0 0.0
        %8974 = vmatprep.subr.mxu0 0.0
        %8975 = vmatpush1.msra.mxu0 0.0
        %8976 = vmatprep.subr.mxu0 0.0
        %8977 = vmatpush1.msra.mxu0 0.0
        %8978 = vmatprep.subr.mxu0 0.0
        %8979 = vmatpush1.msra.mxu0 0.0
        %8980 = vmatprep.mubr.f32.mxu0 0.0
        %v8981 = vand.u32 %v8750, 4294901760
        %v8982 = vsub.f32 %v8750, %v8981
        %8983 = vmatmul.mubr.f32.gmra.mrb[0].mxu0 %v8982
        %v8984 = vpop.f32.mrb[0].mxu0
        %v8985 = vadd.f32 %v8908, %v8984
        %v8986 = vpop.f32.mrb[0].mxu0
        %v8987 = vadd.f32 %v8910, %v8986
        %8988 = vdwg.mxu0
        %v8989 = vand.u32 %v8746, 4294901760
        %8990 = vmatprep.subr.mxu0 %v8989
        %v8991 = vand.u32 %v8745, 4294901760
        %8992 = vmatpush1.msra.mxu0 %v8991
        %8993 = vmatprep.subr.mxu0 0.0
        %8994 = vmatpush1.msra.mxu0 0.0
        %8995 = vmatprep.subr.mxu0 0.0
        %8996 = vmatpush1.msra.mxu0 0.0
        %8997 = vmatprep.subr.mxu0 0.0
        %8998 = vmatpush1.msra.mxu0 0.0
        %8999 = vmatprep.subr.mxu0 0.0
        %9000 = vmatpush1.msra.mxu0 0.0
        %9001 = vmatprep.subr.mxu0 0.0
        %9002 = vmatpush1.msra.mxu0 0.0
        %9003 = vmatprep.subr.mxu0 0.0
        %9004 = vmatpush1.msra.mxu0 0.0
        %9005 = vmatprep.subr.mxu0 0.0
        %9006 = vmatpush1.msra.mxu0 0.0
        %9007 = vmatprep.subr.mxu0 0.0
        %9008 = vmatpush1.msra.mxu0 0.0
        %9009 = vmatprep.subr.mxu0 0.0
        %9010 = vmatpush1.msra.mxu0 0.0
        %9011 = vmatprep.subr.mxu0 0.0
        %9012 = vmatpush1.msra.mxu0 0.0
        %9013 = vmatprep.subr.mxu0 0.0
        %9014 = vmatpush1.msra.mxu0 0.0
        %9015 = vmatprep.subr.mxu0 0.0
        %9016 = vmatpush1.msra.mxu0 0.0
        %9017 = vmatprep.subr.mxu0 0.0
        %9018 = vmatpush1.msra.mxu0 0.0
        %9019 = vmatprep.subr.mxu0 0.0
        %9020 = vmatpush1.msra.mxu0 0.0
        %9021 = vmatprep.subr.mxu0 0.0
        %9022 = vmatpush1.msra.mxu0 0.0
        %9023 = vmatprep.subr.mxu0 0.0
        %9024 = vmatpush1.msra.mxu0 0.0
        %9025 = vmatprep.subr.mxu0 0.0
        %9026 = vmatpush1.msra.mxu0 0.0
        %9027 = vmatprep.subr.mxu0 0.0
        %9028 = vmatpush1.msra.mxu0 0.0
        %9029 = vmatprep.subr.mxu0 0.0
        %9030 = vmatpush1.msra.mxu0 0.0
        %9031 = vmatprep.subr.mxu0 0.0
        %9032 = vmatpush1.msra.mxu0 0.0
        %9033 = vmatprep.subr.mxu0 0.0
        %9034 = vmatpush1.msra.mxu0 0.0
        %9035 = vmatprep.subr.mxu0 0.0
        %9036 = vmatpush1.msra.mxu0 0.0
        %9037 = vmatprep.subr.mxu0 0.0
        %9038 = vmatpush1.msra.mxu0 0.0
        %9039 = vmatprep.subr.mxu0 0.0
        %9040 = vmatpush1.msra.mxu0 0.0
        %9041 = vmatprep.subr.mxu0 0.0
        %9042 = vmatpush1.msra.mxu0 0.0
        %9043 = vmatprep.subr.mxu0 0.0
        %9044 = vmatpush1.msra.mxu0 0.0
        %9045 = vmatprep.subr.mxu0 0.0
        %9046 = vmatpush1.msra.mxu0 0.0
        %9047 = vmatprep.subr.mxu0 0.0
        %9048 = vmatpush1.msra.mxu0 0.0
        %9049 = vmatprep.subr.mxu0 0.0
        %9050 = vmatpush1.msra.mxu0 0.0
        %9051 = vmatprep.subr.mxu0 0.0
        %9052 = vmatpush1.msra.mxu0 0.0
        %9053 = vmatprep.subr.mxu0 0.0
        %9054 = vmatpush1.msra.mxu0 0.0
        %9055 = vmatprep.mubr.f32.mxu0 0.0
        %v9056 = vand.u32 %v8750, 4294901760
        %v9057 = vsub.f32 %v8750, %v9056
        %v9058 = vand.u32 %v9057, 4294901760
        %9059 = vmatmul.mubr.f32.gmra.mrb[0].mxu0 %v9058
        %v9060 = vpop.f32.mrb[0].mxu0
        %v9061 = vadd.f32 %v8985, %v9060
        %v9062 = vpop.f32.mrb[0].mxu0
        %v9063 = vadd.f32 %v8987, %v9062
        %9064 = vdwg.mxu0
        %v9065 = vand.u32 %v8746, 4294901760
        %v9066 = vsub.f32 %v8746, %v9065
        %v9067 = vand.u32 %v9066, 4294901760
        %9068 = vmatprep.subr.mxu0 %v9067
        %v9069 = vand.u32 %v8745, 4294901760
        %v9070 = vsub.f32 %v8745, %v9069
        %v9071 = vand.u32 %v9070, 4294901760
        %9072 = vmatpush1.msra.mxu0 %v9071
        %9073 = vmatprep.subr.mxu0 0.0
        %9074 = vmatpush1.msra.mxu0 0.0
        %9075 = vmatprep.subr.mxu0 0.0
        %9076 = vmatpush1.msra.mxu0 0.0
        %9077 = vmatprep.subr.mxu0 0.0
        %9078 = vmatpush1.msra.mxu0 0.0
        %9079 = vmatprep.subr.mxu0 0.0
        %9080 = vmatpush1.msra.mxu0 0.0
        %9081 = vmatprep.subr.mxu0 0.0
        %9082 = vmatpush1.msra.mxu0 0.0
        %9083 = vmatprep.subr.mxu0 0.0
        %9084 = vmatpush1.msra.mxu0 0.0
        %9085 = vmatprep.subr.mxu0 0.0
        %9086 = vmatpush1.msra.mxu0 0.0
        %9087 = vmatprep.subr.mxu0 0.0
        %9088 = vmatpush1.msra.mxu0 0.0
        %9089 = vmatprep.subr.mxu0 0.0
        %9090 = vmatpush1.msra.mxu0 0.0
        %9091 = vmatprep.subr.mxu0 0.0
        %9092 = vmatpush1.msra.mxu0 0.0
        %9093 = vmatprep.subr.mxu0 0.0
        %9094 = vmatpush1.msra.mxu0 0.0
        %9095 = vmatprep.subr.mxu0 0.0
        %9096 = vmatpush1.msra.mxu0 0.0
        %9097 = vmatprep.subr.mxu0 0.0
        %9098 = vmatpush1.msra.mxu0 0.0
        %9099 = vmatprep.subr.mxu0 0.0
        %9100 = vmatpush1.msra.mxu0 0.0
        %9101 = vmatprep.subr.mxu0 0.0
        %9102 = vmatpush1.msra.mxu0 0.0
        %9103 = vmatprep.subr.mxu0 0.0
        %9104 = vmatpush1.msra.mxu0 0.0
        %9105 = vmatprep.subr.mxu0 0.0
        %9106 = vmatpush1.msra.mxu0 0.0
        %9107 = vmatprep.subr.mxu0 0.0
        %9108 = vmatpush1.msra.mxu0 0.0
        %9109 = vmatprep.subr.mxu0 0.0
        %9110 = vmatpush1.msra.mxu0 0.0
        %9111 = vmatprep.subr.mxu0 0.0
        %9112 = vmatpush1.msra.mxu0 0.0
        %9113 = vmatprep.subr.mxu0 0.0
        %9114 = vmatpush1.msra.mxu0 0.0
        %9115 = vmatprep.subr.mxu0 0.0
        %9116 = vmatpush1.msra.mxu0 0.0
        %9117 = vmatprep.subr.mxu0 0.0
        %9118 = vmatpush1.msra.mxu0 0.0
        %9119 = vmatprep.subr.mxu0 0.0
        %9120 = vmatpush1.msra.mxu0 0.0
        %9121 = vmatprep.subr.mxu0 0.0
        %9122 = vmatpush1.msra.mxu0 0.0
        %9123 = vmatprep.subr.mxu0 0.0
        %9124 = vmatpush1.msra.mxu0 0.0
        %9125 = vmatprep.subr.mxu0 0.0
        %9126 = vmatpush1.msra.mxu0 0.0
        %9127 = vmatprep.subr.mxu0 0.0
        %9128 = vmatpush1.msra.mxu0 0.0
        %9129 = vmatprep.subr.mxu0 0.0
        %9130 = vmatpush1.msra.mxu0 0.0
        %9131 = vmatprep.subr.mxu0 0.0
        %9132 = vmatpush1.msra.mxu0 0.0
        %9133 = vmatprep.subr.mxu0 0.0
        %9134 = vmatpush1.msra.mxu0 0.0
        %9135 = vmatprep.mubr.f32.mxu0 0.0
        %v9136 = vand.u32 %v8750, 4294901760
        %9137 = vmatmul.mubr.f32.gmra.mrb[0].mxu0 %v9136
        %v9138 = vpop.f32.mrb[0].mxu0
        %v9139 = vadd.f32 %v9061, %v9138
        %v9140 = vpop.f32.mrb[0].mxu0
        %v9141 = vadd.f32 %v9063, %v9140
        %9142 = vdwg.mxu0
        %v9143 = vand.u32 %v8746, 4294901760
        %9144 = vmatprep.subr.mxu0 %v9143
        %v9145 = vand.u32 %v8745, 4294901760
        %9146 = vmatpush1.msra.mxu0 %v9145
        %9147 = vmatprep.subr.mxu0 0.0
        %9148 = vmatpush1.msra.mxu0 0.0
        %9149 = vmatprep.subr.mxu0 0.0
        %9150 = vmatpush1.msra.mxu0 0.0
        %9151 = vmatprep.subr.mxu0 0.0
        %9152 = vmatpush1.msra.mxu0 0.0
        %9153 = vmatprep.subr.mxu0 0.0
        %9154 = vmatpush1.msra.mxu0 0.0
        %9155 = vmatprep.subr.mxu0 0.0
        %9156 = vmatpush1.msra.mxu0 0.0
        %9157 = vmatprep.subr.mxu0 0.0
        %9158 = vmatpush1.msra.mxu0 0.0
        %9159 = vmatprep.subr.mxu0 0.0
        %9160 = vmatpush1.msra.mxu0 0.0
        %9161 = vmatprep.subr.mxu0 0.0
        %9162 = vmatpush1.msra.mxu0 0.0
        %9163 = vmatprep.subr.mxu0 0.0
        %9164 = vmatpush1.msra.mxu0 0.0
        %9165 = vmatprep.subr.mxu0 0.0
        %9166 = vmatpush1.msra.mxu0 0.0
        %9167 = vmatprep.subr.mxu0 0.0
        %9168 = vmatpush1.msra.mxu0 0.0
        %9169 = vmatprep.subr.mxu0 0.0
        %9170 = vmatpush1.msra.mxu0 0.0
        %9171 = vmatprep.subr.mxu0 0.0
        %9172 = vmatpush1.msra.mxu0 0.0
        %9173 = vmatprep.subr.mxu0 0.0
        %9174 = vmatpush1.msra.mxu0 0.0
        %9175 = vmatprep.subr.mxu0 0.0
        %9176 = vmatpush1.msra.mxu0 0.0
        %9177 = vmatprep.subr.mxu0 0.0
        %9178 = vmatpush1.msra.mxu0 0.0
        %9179 = vmatprep.subr.mxu0 0.0
        %9180 = vmatpush1.msra.mxu0 0.0
        %9181 = vmatprep.subr.mxu0 0.0
        %9182 = vmatpush1.msra.mxu0 0.0
        %9183 = vmatprep.subr.mxu0 0.0
        %9184 = vmatpush1.msra.mxu0 0.0
        %9185 = vmatprep.subr.mxu0 0.0
        %9186 = vmatpush1.msra.mxu0 0.0
        %9187 = vmatprep.subr.mxu0 0.0
        %9188 = vmatpush1.msra.mxu0 0.0
        %9189 = vmatprep.subr.mxu0 0.0
        %9190 = vmatpush1.msra.mxu0 0.0
        %9191 = vmatprep.subr.mxu0 0.0
        %9192 = vmatpush1.msra.mxu0 0.0
        %9193 = vmatprep.subr.mxu0 0.0
        %9194 = vmatpush1.msra.mxu0 0.0
        %9195 = vmatprep.subr.mxu0 0.0
        %9196 = vmatpush1.msra.mxu0 0.0
        %9197 = vmatprep.subr.mxu0 0.0
        %9198 = vmatpush1.msra.mxu0 0.0
        %9199 = vmatprep.subr.mxu0 0.0
        %9200 = vmatpush1.msra.mxu0 0.0
        %9201 = vmatprep.subr.mxu0 0.0
        %9202 = vmatpush1.msra.mxu0 0.0
        %9203 = vmatprep.subr.mxu0 0.0
        %9204 = vmatpush1.msra.mxu0 0.0
        %9205 = vmatprep.subr.mxu0 0.0
        %9206 = vmatpush1.msra.mxu0 0.0
        %9207 = vmatprep.subr.mxu0 0.0
        %9208 = vmatpush1.msra.mxu0 0.0
        %9209 = vmatprep.mubr.f32.mxu0 0.0
        %v9210 = vand.u32 %v8750, 4294901760
        %9211 = vmatmul.mubr.f32.gmra.mrb[0].mxu0 %v9210
        %v9212 = vpop.f32.mrb[0].mxu0
        %v9213 = vadd.f32 %v9139, %v9212
        %v9214 = vpop.f32.mrb[0].mxu0
        %v9215 = vadd.f32 %v9141, %v9214
        %9216 = vdwg.mxu0
        %v9217 = vadd.f32 %v8734, %v9213
        %v9218 = vadd.f32 %v8735, %v9215
        %v9219 = vmax.f32 %v9217, 0.0
        %v9220 = vmax.f32 %v9218, 0.0
        %9221 = vst [vmem:[%s336] sm:$0xff] %v9219
        %9222 = vst [vmem:[%s336 + $0x8] sm:$0xff] %v9220
        %s9223 = sand.u32 %s230, 1
        %s9224 = scalar_lea.sflag [#allocation3], %s9223
        %s9225 = sand.u32 %s230, 1
        %s9226 = smul.addr %s9225, 16
        %s9227 = scalar_lea.vmem [#allocation2], %s9226
        // Predicated region
        $region57: #{tpu_custom_call.1} parent=55 // pred_check
          %p9228 = pneg %p240
        $region58: #{tpu_custom_call.1} parent=55 // pred_check_branch
          %9230 = sbr.rel (%p9228) target = $region60
        $region59: #{tpu_custom_call.1} parent=55 // pred_region
          %s9232 = ssub.s32 256, 256
          %9233 = vsyncadd %s9224, %s9232
          %s9234 = smul.addr %s23, 2
          %s9235 = smul.addr %s9234, 128
          %s9236 = scalar_lea.hbm %s9, %s9235
          %s9238 = sshll.u32 %s9227, 4
          %s9239 = int_to_ptr.vmem [resolvable:$true] %s9238
          %9241 = dma.vmem_to_hbm [thread:$0]  %s9239, 256, %s9236, %s9224
        $region60: #{tpu_custom_call.1} parent=55 // pred_fallthru
          _
      $region56: #{tpu_custom_call.1} parent=5 // pred_fallthru
        _
      %p9242 = scmp.le.s32.totalorder 2, %s18
      // Predicated region
      $region61: #{tpu_custom_call.1} parent=5 // pred_check
        %p9243 = pneg %p9242
      $region62: #{tpu_custom_call.1} parent=5 // pred_check_branch
        %9245 = sbr.rel (%p9243) target = $region64
      $region63: #{tpu_custom_call.1} parent=5 // pred_region
        %s9246 = ssub.s32 %s18, 2
        // Predicated region
        $region65: #{tpu_custom_call.1} parent=63 // pred_check
          %p9247 = pneg %p246
        $region66: #{tpu_custom_call.1} parent=63 // pred_check_branch
          %9249 = sbr.rel (%p9247) target = $region68
        $region67: #{tpu_custom_call.1} parent=63 // pred_region
          %s9250 = sand.u32 %s231, 1
          %s9251 = scalar_lea.sflag [#allocation3], %s9250
          %s9252 = sand.u32 %s231, 1
          %s9253 = smul.addr %s9252, 16
          %s9254 = scalar_lea.vmem [#allocation2], %s9253
          %9255 = dma.done %s9251, 256
        $region68: #{tpu_custom_call.1} parent=63 // pred_fallthru
          _
      $region64: #{tpu_custom_call.1} parent=5 // pred_fallthru
        _
    $region6: #{tpu_custom_call.1} parent=1 // loop_footer
      %s22 = sadd.s32 1, %s18
    $region7: #{tpu_custom_call.1} parent=1 // loop_footer_branch
      %17 = sbr.rel target = $region3
    $region8: #{tpu_custom_call.1} parent=1 // loop_exit
      _
    %9256 = vsyncpa [#allocation3], 1
    %s9257 = scalar_lea.sflag [#allocation3], 1
    %9258 = vsyncpa %s9257, 1

</llo_original>
